<compile_context>
chip_gen: v7x
topology: tpu7x:2x2x1
jax: 0.10.0
libtpu: 0.0.40
codegen_flags: <defaults>
</compile_context>

<pallas_src>
import jax
import jax.numpy as jnp
from jax.experimental import pallas as pl
from jax.experimental.pallas import tpu as pltpu

_TILE_B = 8  # sublane-aligned batch tile


def _mapping_kernel(y_sm, z_ref,
                    sw0, sb0, sw1, sb1, sw2, sb2, sw3, sb3,
                    uw0, ub0, uw1, ub1, uw2, ub2, uw3, ub3,
                    out_ref, h_scratch):
    """One grid step = one batch tile of _TILE_B rows.

    All weights are full-array VMEM-resident blocks (constant index_map ->
    DMA'd once, re-used every step).  Each row's head is picked with a dynamic
    first-axis index into the stacked per-speaker tensors, so only the
    selected head is read/multiplied — no unused-head compute, no per-step
    head DMA.
    """
    tile_b = z_ref.shape[0]
    base = pl.program_id(0) * tile_b

    def lin(x, w, b):
        # bf16 MXU matmul with f32 accumulation; bias add stays f32.
        return jnp.dot(x.astype(w.dtype), w,
                       preferred_element_type=jnp.float32) + b

    def lin_relu(x, w, b):
        return jnp.maximum(lin(x, w, b), 0.0)

    # ---- shared trunk, batched over the whole tile (M = tile_b) ----
    h = z_ref[...].astype(jnp.float32)
    h = lin_relu(h, sw0[...], sb0[...])
    h = lin_relu(h, sw1[...], sb1[...])
    h = lin_relu(h, sw2[...], sb2[...])
    h = lin_relu(h, sw3[...], sb3[...])
    h_scratch[...] = h

    # ---- per-row speaker head (weights already resident in VMEM) ----
    for r in range(tile_b):                     # static unrolled, tile_b == 8
        s = y_sm[base + r]                      # SMEM scalar read
        x = h_scratch[r:r + 1, :]               # (1, hidden)
        x = lin_relu(x, uw0[s], ub0[s])         # dynamic first-axis select
        x = lin_relu(x, uw1[s], ub1[s])
        x = lin_relu(x, uw2[s], ub2[s])
        x = lin(x, uw3[s], ub3[s])              # final layer: no ReLU
        out_ref[r:r + 1, :] = x.astype(out_ref.dtype)


def mapping_network(z, y, params, *, style_dim):
    (sw0, sb0, sw1, sb1, sw2, sb2, sw3, sb3,
     uw0, ub0, uw1, ub1, uw2, ub2, uw3, ub3) = params
    B, latent_dim = z.shape
    hidden = sw0.shape[1]
    num_speakers = uw0.shape[0]

    # Pad batch to a sublane-aligned multiple of the tile.
    b_pad = ((B + _TILE_B - 1) // _TILE_B) * _TILE_B
    if b_pad != B:
        z = jnp.pad(z, ((0, b_pad - B), (0, 0)))
        y = jnp.pad(y, (0, b_pad - B))
    # An out-of-range speaker index would read garbage VMEM -> clamp.
    y = jnp.clip(y.astype(jnp.int32), 0, num_speakers - 1)

    grid = (b_pad // _TILE_B,)

    def const_spec(arr):
        # Full array, constant block index -> DMA'd once, resident in VMEM.
        nd = arr.ndim
        return pl.BlockSpec(arr.shape, lambda i, y_ref, _nd=nd: (0,) * _nd)

    in_specs = [
        pl.BlockSpec((_TILE_B, latent_dim), lambda i, y_ref: (i, 0)),
        const_spec(sw0), const_spec(sb0),
        const_spec(sw1), const_spec(sb1),
        const_spec(sw2), const_spec(sb2),
        const_spec(sw3), const_spec(sb3),
        const_spec(uw0), const_spec(ub0),
        const_spec(uw1), const_spec(ub1),
        const_spec(uw2), const_spec(ub2),
        const_spec(uw3), const_spec(ub3),
    ]
    out_spec = pl.BlockSpec((_TILE_B, style_dim), lambda i, y_ref: (i, 0))

    def nbytes(a):
        return int(a.size) * a.dtype.itemsize

    param_bytes = sum(nbytes(p) for p in params)
    io_bytes = _TILE_B * (latent_dim + style_dim) * 4
    scratch_bytes = _TILE_B * hidden * 4
    # Inputs are double-buffered by the pipeline; add a few MiB of headroom.
    vmem_limit = 2 * (param_bytes + io_bytes) + scratch_bytes + (4 << 20)

    # Advisory cost: trunk + the selected head per row; bytes = one pass over
    # the (bf16) weights + activations.
    flops = 2 * b_pad * (latent_dim * hidden + 3 * hidden * hidden)      # trunk
    flops += 2 * b_pad * (3 * hidden * hidden + hidden * style_dim)      # heads
    bytes_accessed = (param_bytes + nbytes(z)
                      + b_pad * style_dim * 4 + b_pad * 4)

    grid_spec = pltpu.PrefetchScalarGridSpec(
        num_scalar_prefetch=1,
        grid=grid,
        in_specs=in_specs,
        out_specs=out_spec,
        scratch_shapes=[pltpu.VMEM((_TILE_B, hidden), jnp.float32)],
    )

    out = pl.pallas_call(
        _mapping_kernel,
        out_shape=jax.ShapeDtypeStruct((b_pad, style_dim), jnp.float32),
        grid_spec=grid_spec,
        compiler_params=pltpu.CompilerParams(
            # No cross-step carry / shared output block anymore, so the batch
            # axis can be sharded across TensorCores (v7x megacore).
            dimension_semantics=("parallel",),
            vmem_limit_bytes=int(vmem_limit),
        ),
        cost_estimate=pl.CostEstimate(flops=flops, transcendentals=0,
                                      bytes_accessed=int(bytes_accessed)),
    )(y, z,
      sw0, sb0, sw1, sb1, sw2, sb2, sw3, sb3,
      uw0, ub0, uw1, ub1, uw2, ub2, uw3, ub3)

    return out[:B]


def init_params(key, latent_dim, style_dim, num_speakers, hidden=256,
                weight_dtype=jnp.bfloat16):
    """PyTorch-Linear-style U(-1/sqrt(fan_in), 1/sqrt(fan_in)) init.

    Weight matrices stored (in, out) in bf16 (halves HBM->VMEM DMA and the
    resident VMEM footprint); biases kept float32 so the f32 accumulate/ReLU
    path is exact.
    """
    keys = iter(jax.random.split(key, 64))

    def lin(fan_in, fan_out, lead=()):
        bound = 1.0 / (fan_in ** 0.5)
        w = jax.random.uniform(next(keys), lead + (fan_in, fan_out),
                               jnp.float32, -bound, bound).astype(weight_dtype)
        b = jax.random.uniform(next(keys), lead + (1, fan_out),
                               jnp.float32, -bound, bound)
        return w, b

    # shared: Linear(latent,256) + 3x Linear(256,256)
    sw0, sb0 = lin(latent_dim, hidden)
    sw1, sb1 = lin(hidden, hidden)
    sw2, sb2 = lin(hidden, hidden)
    sw3, sb3 = lin(hidden, hidden)
    # unshared: per speaker 3x Linear(256,256) + Linear(256,style_dim), stacked
    S = (num_speakers,)
    uw0, ub0 = lin(hidden, hidden, S)
    uw1, ub1 = lin(hidden, hidden, S)
    uw2, ub2 = lin(hidden, hidden, S)
    uw3, ub3 = lin(hidden, style_dim, S)
    return [sw0, sb0, sw1, sb1, sw2, sb2, sw3, sb3,
            uw0, ub0, uw1, ub1, uw2, ub2, uw3, ub3]


def reference_forward(z, y, params):
    """Pure-JAX reference mirroring the PyTorch module (same bf16/f32 numerics)."""
    (sw0, sb0, sw1, sb1, sw2, sb2, sw3, sb3,
     uw0, ub0, uw1, ub1, uw2, ub2, uw3, ub3) = params

    def lin(x, w, b):
        return jnp.dot(x.astype(w.dtype), w,
                       preferred_element_type=jnp.float32) + b

    relu = lambda t: jnp.maximum(t, 0.0)
    h = relu(lin(z, sw0, sb0))
    h = relu(lin(h, sw1, sb1))
    h = relu(lin(h, sw2, sb2))
    h = relu(lin(h, sw3, sb3))
    outs = []
    for s in range(uw0.shape[0]):
        x = relu(lin(h, uw0[s], ub0[s]))
        x = relu(lin(x, uw1[s], ub1[s]))
        x = relu(lin(x, uw2[s], ub2[s]))
        x = lin(x, uw3[s], ub3[s])
        outs.append(x)
    out = jnp.stack(outs, axis=1)                 # (B, num_speakers, style_dim)
    return out[jnp.arange(z.shape[0]), y]         # == torch out[idx, y]


if __name__ == "__main__":
    latent_dim, style_dim, num_speakers = 16, 64, 10
    B = 8

    key = jax.random.PRNGKey(0)
    kz, ky, kp = jax.random.split(key, 3)
    z = jax.random.normal(kz, (B, latent_dim), jnp.float32)
    y = jax.random.randint(ky, (B,), 0, num_speakers, jnp.int32)
    params = init_params(kp, latent_dim, style_dim, num_speakers)

    s = mapping_network(z, y, params, style_dim=style_dim)
    s = jax.block_until_ready(s)

    assert s.shape == (B, style_dim), s.shape
    s_ref = reference_forward(z, y, params)
    err = float(jnp.max(jnp.abs(s - s_ref)))
    assert jnp.allclose(s, s_ref, atol=1e-2, rtol=1e-2), err

    print("KERNEL_OK")
</pallas_src>

<mosaic_0001>
module attributes {stable_mosaic.version = 11 : i64} {
  func.func @_mapping_kernel(%arg0: i32, %arg1: memref<8xi32, #tpu.memory_space<smem>>, %arg2: memref<8x16xf32, #tpu.memory_space<vmem>>, %arg3: memref<16x256xbf16, #tpu.memory_space<vmem>>, %arg4: memref<1x256xf32, #tpu.memory_space<vmem>>, %arg5: memref<256x256xbf16, #tpu.memory_space<vmem>>, %arg6: memref<1x256xf32, #tpu.memory_space<vmem>>, %arg7: memref<256x256xbf16, #tpu.memory_space<vmem>>, %arg8: memref<1x256xf32, #tpu.memory_space<vmem>>, %arg9: memref<256x256xbf16, #tpu.memory_space<vmem>>, %arg10: memref<1x256xf32, #tpu.memory_space<vmem>>, %arg11: memref<10x256x256xbf16, #tpu.memory_space<vmem>>, %arg12: memref<10x1x256xf32, #tpu.memory_space<vmem>>, %arg13: memref<10x256x256xbf16, #tpu.memory_space<vmem>>, %arg14: memref<10x1x256xf32, #tpu.memory_space<vmem>>, %arg15: memref<10x256x256xbf16, #tpu.memory_space<vmem>>, %arg16: memref<10x1x256xf32, #tpu.memory_space<vmem>>, %arg17: memref<10x256x64xbf16, #tpu.memory_space<vmem>>, %arg18: memref<10x1x64xf32, #tpu.memory_space<vmem>>, %arg19: memref<8x64xf32, #tpu.memory_space<vmem>>, %arg20: memref<8x256xf32, #tpu.memory_space<vmem>>) attributes {dimension_semantics = [#tpu.dimension_semantics<parallel>], iteration_bounds = array<i64: 1>, scalar_prefetch = 1 : i64, scratch_operands = 1 : i64, tpu.core_type = #tpu.core_type<tc>, window_params = [{transform_indices = @transform_0, window_bounds = array<i64: 8, 16>}, {pipeline_mode = #tpu.pipeline_mode<synchronous>, transform_indices = @transform_1, window_bounds = array<i64: 16, 256>}, {pipeline_mode = #tpu.pipeline_mode<synchronous>, transform_indices = @transform_2, window_bounds = array<i64: 1, 256>}, {pipeline_mode = #tpu.pipeline_mode<synchronous>, transform_indices = @transform_3, window_bounds = array<i64: 256, 256>}, {pipeline_mode = #tpu.pipeline_mode<synchronous>, transform_indices = @transform_4, window_bounds = array<i64: 1, 256>}, {pipeline_mode = #tpu.pipeline_mode<synchronous>, transform_indices = @transform_5, window_bounds = array<i64: 256, 256>}, {pipeline_mode = #tpu.pipeline_mode<synchronous>, transform_indices = @transform_6, window_bounds = array<i64: 1, 256>}, {pipeline_mode = #tpu.pipeline_mode<synchronous>, transform_indices = @transform_7, window_bounds = array<i64: 256, 256>}, {pipeline_mode = #tpu.pipeline_mode<synchronous>, transform_indices = @transform_8, window_bounds = array<i64: 1, 256>}, {pipeline_mode = #tpu.pipeline_mode<synchronous>, transform_indices = @transform_9, window_bounds = array<i64: 10, 256, 256>}, {pipeline_mode = #tpu.pipeline_mode<synchronous>, transform_indices = @transform_10, window_bounds = array<i64: 10, 1, 256>}, {pipeline_mode = #tpu.pipeline_mode<synchronous>, transform_indices = @transform_11, window_bounds = array<i64: 10, 256, 256>}, {pipeline_mode = #tpu.pipeline_mode<synchronous>, transform_indices = @transform_12, window_bounds = array<i64: 10, 1, 256>}, {pipeline_mode = #tpu.pipeline_mode<synchronous>, transform_indices = @transform_13, window_bounds = array<i64: 10, 256, 256>}, {pipeline_mode = #tpu.pipeline_mode<synchronous>, transform_indices = @transform_14, window_bounds = array<i64: 10, 1, 256>}, {pipeline_mode = #tpu.pipeline_mode<synchronous>, transform_indices = @transform_15, window_bounds = array<i64: 10, 256, 64>}, {pipeline_mode = #tpu.pipeline_mode<synchronous>, transform_indices = @transform_16, window_bounds = array<i64: 10, 1, 64>}, {transform_indices = @transform_17, window_bounds = array<i64: 8, 64>}]} {
    %c8_i32 = arith.constant 8 : i32
    %0 = arith.muli %arg0, %c8_i32 : i32
    %c0 = arith.constant 0 : index
    %c0_0 = arith.constant 0 : index
    %1 = vector.load %arg2[%c0, %c0_0] : memref<8x16xf32, #tpu.memory_space<vmem>>, vector<8x16xf32>
    %c0_1 = arith.constant 0 : index
    %c0_2 = arith.constant 0 : index
    %2 = vector.load %arg3[%c0_1, %c0_2] : memref<16x256xbf16, #tpu.memory_space<vmem>>, vector<16x256xbf16>
    %c0_3 = arith.constant 0 : index
    %c0_4 = arith.constant 0 : index
    %3 = vector.load %arg4[%c0_3, %c0_4] : memref<1x256xf32, #tpu.memory_space<vmem>>, vector<1x256xf32>
    %4 = arith.truncf %1 : vector<8x16xf32> to vector<8x16xbf16>
    %cst = arith.constant dense<0.000000e+00> : vector<8x256xf32>
    %5 = tpu.matmul %4, %2, %cst {dimension_numbers = #tpu.dot_dimension_numbers<[1], [0], [0], [1], [0, 0, 1, 1], [], []>} : vector<8x16xbf16>, vector<16x256xbf16>, vector<8x256xf32> -> vector<8x256xf32>
    %6 = vector.broadcast %3 : vector<1x256xf32> to vector<8x256xf32>
    %7 = arith.addf %5, %6 : vector<8x256xf32>
    %cst_5 = arith.constant 0.000000e+00 : f32
    %8 = vector.broadcast %cst_5 : f32 to vector<8x256xf32>
    %9 = arith.maximumf %7, %8 : vector<8x256xf32>
    %c0_6 = arith.constant 0 : index
    %c0_7 = arith.constant 0 : index
    %10 = vector.load %arg5[%c0_6, %c0_7] : memref<256x256xbf16, #tpu.memory_space<vmem>>, vector<256x256xbf16>
    %c0_8 = arith.constant 0 : index
    %c0_9 = arith.constant 0 : index
    %11 = vector.load %arg6[%c0_8, %c0_9] : memref<1x256xf32, #tpu.memory_space<vmem>>, vector<1x256xf32>
    %12 = arith.truncf %9 : vector<8x256xf32> to vector<8x256xbf16>
    %cst_10 = arith.constant dense<0.000000e+00> : vector<8x256xf32>
    %13 = tpu.matmul %12, %10, %cst_10 {dimension_numbers = #tpu.dot_dimension_numbers<[1], [0], [0], [1], [0, 0, 1, 1], [], []>} : vector<8x256xbf16>, vector<256x256xbf16>, vector<8x256xf32> -> vector<8x256xf32>
    %14 = vector.broadcast %11 : vector<1x256xf32> to vector<8x256xf32>
    %15 = arith.addf %13, %14 : vector<8x256xf32>
    %cst_11 = arith.constant 0.000000e+00 : f32
    %16 = vector.broadcast %cst_11 : f32 to vector<8x256xf32>
    %17 = arith.maximumf %15, %16 : vector<8x256xf32>
    %c0_12 = arith.constant 0 : index
    %c0_13 = arith.constant 0 : index
    %18 = vector.load %arg7[%c0_12, %c0_13] : memref<256x256xbf16, #tpu.memory_space<vmem>>, vector<256x256xbf16>
    %c0_14 = arith.constant 0 : index
    %c0_15 = arith.constant 0 : index
    %19 = vector.load %arg8[%c0_14, %c0_15] : memref<1x256xf32, #tpu.memory_space<vmem>>, vector<1x256xf32>
    %20 = arith.truncf %17 : vector<8x256xf32> to vector<8x256xbf16>
    %cst_16 = arith.constant dense<0.000000e+00> : vector<8x256xf32>
    %21 = tpu.matmul %20, %18, %cst_16 {dimension_numbers = #tpu.dot_dimension_numbers<[1], [0], [0], [1], [0, 0, 1, 1], [], []>} : vector<8x256xbf16>, vector<256x256xbf16>, vector<8x256xf32> -> vector<8x256xf32>
    %22 = vector.broadcast %19 : vector<1x256xf32> to vector<8x256xf32>
    %23 = arith.addf %21, %22 : vector<8x256xf32>
    %cst_17 = arith.constant 0.000000e+00 : f32
    %24 = vector.broadcast %cst_17 : f32 to vector<8x256xf32>
    %25 = arith.maximumf %23, %24 : vector<8x256xf32>
    %c0_18 = arith.constant 0 : index
    %c0_19 = arith.constant 0 : index
    %26 = vector.load %arg9[%c0_18, %c0_19] : memref<256x256xbf16, #tpu.memory_space<vmem>>, vector<256x256xbf16>
    %c0_20 = arith.constant 0 : index
    %c0_21 = arith.constant 0 : index
    %27 = vector.load %arg10[%c0_20, %c0_21] : memref<1x256xf32, #tpu.memory_space<vmem>>, vector<1x256xf32>
    %28 = arith.truncf %25 : vector<8x256xf32> to vector<8x256xbf16>
    %cst_22 = arith.constant dense<0.000000e+00> : vector<8x256xf32>
    %29 = tpu.matmul %28, %26, %cst_22 {dimension_numbers = #tpu.dot_dimension_numbers<[1], [0], [0], [1], [0, 0, 1, 1], [], []>} : vector<8x256xbf16>, vector<256x256xbf16>, vector<8x256xf32> -> vector<8x256xf32>
    %30 = vector.broadcast %27 : vector<1x256xf32> to vector<8x256xf32>
    %31 = arith.addf %29, %30 : vector<8x256xf32>
    %cst_23 = arith.constant 0.000000e+00 : f32
    %32 = vector.broadcast %cst_23 : f32 to vector<8x256xf32>
    %33 = arith.maximumf %31, %32 : vector<8x256xf32>
    %c0_24 = arith.constant 0 : index
    %c0_25 = arith.constant 0 : index
    %34 = vector.load %arg20[%c0_24, %c0_25] : memref<8x256xf32, #tpu.memory_space<vmem>>, vector<8x256xf32>
    tpu.vector_store %arg20[%c0_24, %c0_25], %33 {strides = array<i32>} : memref<8x256xf32, #tpu.memory_space<vmem>>, vector<8x256xf32>,
    %c0_i32 = arith.constant 0 : i32
    %35 = arith.addi %0, %c0_i32 : i32
    %36 = arith.index_cast %35 : i32 to index
    %37 = memref.load %arg1[%36] : memref<8xi32, #tpu.memory_space<smem>>
    %c0_26 = arith.constant 0 : index
    %c0_27 = arith.constant 0 : index
    %38 = vector.load %arg20[%c0_26, %c0_27] : memref<8x256xf32, #tpu.memory_space<vmem>>, vector<1x256xf32>
    %39 = arith.index_cast %37 : i32 to index
    %c0_28 = arith.constant 0 : index
    %c0_29 = arith.constant 0 : index
    %40 = vector.load %arg11[%39, %c0_28, %c0_29] : memref<10x256x256xbf16, #tpu.memory_space<vmem>>, vector<1x256x256xbf16>
    %41 = vector.shape_cast %40 : vector<1x256x256xbf16> to vector<256x256xbf16>
    %42 = arith.index_cast %37 : i32 to index
    %c0_30 = arith.constant 0 : index
    %c0_31 = arith.constant 0 : index
    %43 = vector.load %arg12[%42, %c0_30, %c0_31] : memref<10x1x256xf32, #tpu.memory_space<vmem>>, vector<1x1x256xf32>
    %44 = vector.shape_cast %43 : vector<1x1x256xf32> to vector<1x256xf32>
    %45 = arith.truncf %38 : vector<1x256xf32> to vector<1x256xbf16>
    %cst_32 = arith.constant dense<0.000000e+00> : vector<1x256xf32>
    %46 = tpu.matmul %45, %41, %cst_32 {dimension_numbers = #tpu.dot_dimension_numbers<[1], [0], [0], [1], [0, 0, 1, 1], [], []>} : vector<1x256xbf16>, vector<256x256xbf16>, vector<1x256xf32> -> vector<1x256xf32>
    %47 = arith.addf %46, %44 : vector<1x256xf32>
    %cst_33 = arith.constant 0.000000e+00 : f32
    %48 = vector.broadcast %cst_33 : f32 to vector<1x256xf32>
    %49 = arith.maximumf %47, %48 : vector<1x256xf32>
    %50 = arith.index_cast %37 : i32 to index
    %c0_34 = arith.constant 0 : index
    %c0_35 = arith.constant 0 : index
    %51 = vector.load %arg13[%50, %c0_34, %c0_35] : memref<10x256x256xbf16, #tpu.memory_space<vmem>>, vector<1x256x256xbf16>
    %52 = vector.shape_cast %51 : vector<1x256x256xbf16> to vector<256x256xbf16>
    %53 = arith.index_cast %37 : i32 to index
    %c0_36 = arith.constant 0 : index
    %c0_37 = arith.constant 0 : index
    %54 = vector.load %arg14[%53, %c0_36, %c0_37] : memref<10x1x256xf32, #tpu.memory_space<vmem>>, vector<1x1x256xf32>
    %55 = vector.shape_cast %54 : vector<1x1x256xf32> to vector<1x256xf32>
    %56 = arith.truncf %49 : vector<1x256xf32> to vector<1x256xbf16>
    %cst_38 = arith.constant dense<0.000000e+00> : vector<1x256xf32>
    %57 = tpu.matmul %56, %52, %cst_38 {dimension_numbers = #tpu.dot_dimension_numbers<[1], [0], [0], [1], [0, 0, 1, 1], [], []>} : vector<1x256xbf16>, vector<256x256xbf16>, vector<1x256xf32> -> vector<1x256xf32>
    %58 = arith.addf %57, %55 : vector<1x256xf32>
    %cst_39 = arith.constant 0.000000e+00 : f32
    %59 = vector.broadcast %cst_39 : f32 to vector<1x256xf32>
    %60 = arith.maximumf %58, %59 : vector<1x256xf32>
    %61 = arith.index_cast %37 : i32 to index
    %c0_40 = arith.constant 0 : index
    %c0_41 = arith.constant 0 : index
    %62 = vector.load %arg15[%61, %c0_40, %c0_41] : memref<10x256x256xbf16, #tpu.memory_space<vmem>>, vector<1x256x256xbf16>
    %63 = vector.shape_cast %62 : vector<1x256x256xbf16> to vector<256x256xbf16>
    %64 = arith.index_cast %37 : i32 to index
    %c0_42 = arith.constant 0 : index
    %c0_43 = arith.constant 0 : index
    %65 = vector.load %arg16[%64, %c0_42, %c0_43] : memref<10x1x256xf32, #tpu.memory_space<vmem>>, vector<1x1x256xf32>
    %66 = vector.shape_cast %65 : vector<1x1x256xf32> to vector<1x256xf32>
    %67 = arith.truncf %60 : vector<1x256xf32> to vector<1x256xbf16>
    %cst_44 = arith.constant dense<0.000000e+00> : vector<1x256xf32>
    %68 = tpu.matmul %67, %63, %cst_44 {dimension_numbers = #tpu.dot_dimension_numbers<[1], [0], [0], [1], [0, 0, 1, 1], [], []>} : vector<1x256xbf16>, vector<256x256xbf16>, vector<1x256xf32> -> vector<1x256xf32>
    %69 = arith.addf %68, %66 : vector<1x256xf32>
    %cst_45 = arith.constant 0.000000e+00 : f32
    %70 = vector.broadcast %cst_45 : f32 to vector<1x256xf32>
    %71 = arith.maximumf %69, %70 : vector<1x256xf32>
    %72 = arith.index_cast %37 : i32 to index
    %c0_46 = arith.constant 0 : index
    %c0_47 = arith.constant 0 : index
    %73 = vector.load %arg17[%72, %c0_46, %c0_47] : memref<10x256x64xbf16, #tpu.memory_space<vmem>>, vector<1x256x64xbf16>
    %74 = vector.shape_cast %73 : vector<1x256x64xbf16> to vector<256x64xbf16>
    %75 = arith.index_cast %37 : i32 to index
    %c0_48 = arith.constant 0 : index
    %c0_49 = arith.constant 0 : index
    %76 = vector.load %arg18[%75, %c0_48, %c0_49] : memref<10x1x64xf32, #tpu.memory_space<vmem>>, vector<1x1x64xf32>
    %77 = vector.shape_cast %76 : vector<1x1x64xf32> to vector<1x64xf32>
    %78 = arith.truncf %71 : vector<1x256xf32> to vector<1x256xbf16>
    %cst_50 = arith.constant dense<0.000000e+00> : vector<1x64xf32>
    %79 = tpu.matmul %78, %74, %cst_50 {dimension_numbers = #tpu.dot_dimension_numbers<[1], [0], [0], [1], [0, 0, 1, 1], [], []>} : vector<1x256xbf16>, vector<256x64xbf16>, vector<1x64xf32> -> vector<1x64xf32>
    %80 = arith.addf %79, %77 : vector<1x64xf32>
    %c0_51 = arith.constant 0 : index
    %c0_52 = arith.constant 0 : index
    %81 = vector.load %arg19[%c0_51, %c0_52] : memref<8x64xf32, #tpu.memory_space<vmem>>, vector<1x64xf32>
    tpu.vector_store %arg19[%c0_51, %c0_52], %80 {strides = array<i32>} : memref<8x64xf32, #tpu.memory_space<vmem>>, vector<1x64xf32>,
    %c1_i32 = arith.constant 1 : i32
    %82 = arith.addi %0, %c1_i32 : i32
    %83 = arith.index_cast %82 : i32 to index
    %84 = memref.load %arg1[%83] : memref<8xi32, #tpu.memory_space<smem>>
    %c1 = arith.constant 1 : index
    %c0_53 = arith.constant 0 : index
    %85 = vector.load %arg20[%c1, %c0_53] : memref<8x256xf32, #tpu.memory_space<vmem>>, vector<1x256xf32>
    %86 = arith.index_cast %84 : i32 to index
    %c0_54 = arith.constant 0 : index
    %c0_55 = arith.constant 0 : index
    %87 = vector.load %arg11[%86, %c0_54, %c0_55] : memref<10x256x256xbf16, #tpu.memory_space<vmem>>, vector<1x256x256xbf16>
    %88 = vector.shape_cast %87 : vector<1x256x256xbf16> to vector<256x256xbf16>
    %89 = arith.index_cast %84 : i32 to index
    %c0_56 = arith.constant 0 : index
    %c0_57 = arith.constant 0 : index
    %90 = vector.load %arg12[%89, %c0_56, %c0_57] : memref<10x1x256xf32, #tpu.memory_space<vmem>>, vector<1x1x256xf32>
    %91 = vector.shape_cast %90 : vector<1x1x256xf32> to vector<1x256xf32>
    %92 = arith.truncf %85 : vector<1x256xf32> to vector<1x256xbf16>
    %cst_58 = arith.constant dense<0.000000e+00> : vector<1x256xf32>
    %93 = tpu.matmul %92, %88, %cst_58 {dimension_numbers = #tpu.dot_dimension_numbers<[1], [0], [0], [1], [0, 0, 1, 1], [], []>} : vector<1x256xbf16>, vector<256x256xbf16>, vector<1x256xf32> -> vector<1x256xf32>
    %94 = arith.addf %93, %91 : vector<1x256xf32>
    %cst_59 = arith.constant 0.000000e+00 : f32
    %95 = vector.broadcast %cst_59 : f32 to vector<1x256xf32>
    %96 = arith.maximumf %94, %95 : vector<1x256xf32>
    %97 = arith.index_cast %84 : i32 to index
    %c0_60 = arith.constant 0 : index
    %c0_61 = arith.constant 0 : index
    %98 = vector.load %arg13[%97, %c0_60, %c0_61] : memref<10x256x256xbf16, #tpu.memory_space<vmem>>, vector<1x256x256xbf16>
    %99 = vector.shape_cast %98 : vector<1x256x256xbf16> to vector<256x256xbf16>
    %100 = arith.index_cast %84 : i32 to index
    %c0_62 = arith.constant 0 : index
    %c0_63 = arith.constant 0 : index
    %101 = vector.load %arg14[%100, %c0_62, %c0_63] : memref<10x1x256xf32, #tpu.memory_space<vmem>>, vector<1x1x256xf32>
    %102 = vector.shape_cast %101 : vector<1x1x256xf32> to vector<1x256xf32>
    %103 = arith.truncf %96 : vector<1x256xf32> to vector<1x256xbf16>
    %cst_64 = arith.constant dense<0.000000e+00> : vector<1x256xf32>
    %104 = tpu.matmul %103, %99, %cst_64 {dimension_numbers = #tpu.dot_dimension_numbers<[1], [0], [0], [1], [0, 0, 1, 1], [], []>} : vector<1x256xbf16>, vector<256x256xbf16>, vector<1x256xf32> -> vector<1x256xf32>
    %105 = arith.addf %104, %102 : vector<1x256xf32>
    %cst_65 = arith.constant 0.000000e+00 : f32
    %106 = vector.broadcast %cst_65 : f32 to vector<1x256xf32>
    %107 = arith.maximumf %105, %106 : vector<1x256xf32>
    %108 = arith.index_cast %84 : i32 to index
    %c0_66 = arith.constant 0 : index
    %c0_67 = arith.constant 0 : index
    %109 = vector.load %arg15[%108, %c0_66, %c0_67] : memref<10x256x256xbf16, #tpu.memory_space<vmem>>, vector<1x256x256xbf16>
    %110 = vector.shape_cast %109 : vector<1x256x256xbf16> to vector<256x256xbf16>
    %111 = arith.index_cast %84 : i32 to index
    %c0_68 = arith.constant 0 : index
    %c0_69 = arith.constant 0 : index
    %112 = vector.load %arg16[%111, %c0_68, %c0_69] : memref<10x1x256xf32, #tpu.memory_space<vmem>>, vector<1x1x256xf32>
    %113 = vector.shape_cast %112 : vector<1x1x256xf32> to vector<1x256xf32>
    %114 = arith.truncf %107 : vector<1x256xf32> to vector<1x256xbf16>
    %cst_70 = arith.constant dense<0.000000e+00> : vector<1x256xf32>
    %115 = tpu.matmul %114, %110, %cst_70 {dimension_numbers = #tpu.dot_dimension_numbers<[1], [0], [0], [1], [0, 0, 1, 1], [], []>} : vector<1x256xbf16>, vector<256x256xbf16>, vector<1x256xf32> -> vector<1x256xf32>
    %116 = arith.addf %115, %113 : vector<1x256xf32>
    %cst_71 = arith.constant 0.000000e+00 : f32
    %117 = vector.broadcast %cst_71 : f32 to vector<1x256xf32>
    %118 = arith.maximumf %116, %117 : vector<1x256xf32>
    %119 = arith.index_cast %84 : i32 to index
    %c0_72 = arith.constant 0 : index
    %c0_73 = arith.constant 0 : index
    %120 = vector.load %arg17[%119, %c0_72, %c0_73] : memref<10x256x64xbf16, #tpu.memory_space<vmem>>, vector<1x256x64xbf16>
    %121 = vector.shape_cast %120 : vector<1x256x64xbf16> to vector<256x64xbf16>
    %122 = arith.index_cast %84 : i32 to index
    %c0_74 = arith.constant 0 : index
    %c0_75 = arith.constant 0 : index
    %123 = vector.load %arg18[%122, %c0_74, %c0_75] : memref<10x1x64xf32, #tpu.memory_space<vmem>>, vector<1x1x64xf32>
    %124 = vector.shape_cast %123 : vector<1x1x64xf32> to vector<1x64xf32>
    %125 = arith.truncf %118 : vector<1x256xf32> to vector<1x256xbf16>
    %cst_76 = arith.constant dense<0.000000e+00> : vector<1x64xf32>
    %126 = tpu.matmul %125, %121, %cst_76 {dimension_numbers = #tpu.dot_dimension_numbers<[1], [0], [0], [1], [0, 0, 1, 1], [], []>} : vector<1x256xbf16>, vector<256x64xbf16>, vector<1x64xf32> -> vector<1x64xf32>
    %127 = arith.addf %126, %124 : vector<1x64xf32>
    %c1_77 = arith.constant 1 : index
    %c0_78 = arith.constant 0 : index
    %128 = vector.load %arg19[%c1_77, %c0_78] : memref<8x64xf32, #tpu.memory_space<vmem>>, vector<1x64xf32>
    tpu.vector_store %arg19[%c1_77, %c0_78], %127 {strides = array<i32>} : memref<8x64xf32, #tpu.memory_space<vmem>>, vector<1x64xf32>,
    %c2_i32 = arith.constant 2 : i32
    %129 = arith.addi %0, %c2_i32 : i32
    %130 = arith.index_cast %129 : i32 to index
    %131 = memref.load %arg1[%130] : memref<8xi32, #tpu.memory_space<smem>>
    %c2 = arith.constant 2 : index
    %c0_79 = arith.constant 0 : index
    %132 = vector.load %arg20[%c2, %c0_79] : memref<8x256xf32, #tpu.memory_space<vmem>>, vector<1x256xf32>
    %133 = arith.index_cast %131 : i32 to index
    %c0_80 = arith.constant 0 : index
    %c0_81 = arith.constant 0 : index
    %134 = vector.load %arg11[%133, %c0_80, %c0_81] : memref<10x256x256xbf16, #tpu.memory_space<vmem>>, vector<1x256x256xbf16>
    %135 = vector.shape_cast %134 : vector<1x256x256xbf16> to vector<256x256xbf16>
    %136 = arith.index_cast %131 : i32 to index
    %c0_82 = arith.constant 0 : index
    %c0_83 = arith.constant 0 : index
    %137 = vector.load %arg12[%136, %c0_82, %c0_83] : memref<10x1x256xf32, #tpu.memory_space<vmem>>, vector<1x1x256xf32>
    %138 = vector.shape_cast %137 : vector<1x1x256xf32> to vector<1x256xf32>
    %139 = arith.truncf %132 : vector<1x256xf32> to vector<1x256xbf16>
    %cst_84 = arith.constant dense<0.000000e+00> : vector<1x256xf32>
    %140 = tpu.matmul %139, %135, %cst_84 {dimension_numbers = #tpu.dot_dimension_numbers<[1], [0], [0], [1], [0, 0, 1, 1], [], []>} : vector<1x256xbf16>, vector<256x256xbf16>, vector<1x256xf32> -> vector<1x256xf32>
    %141 = arith.addf %140, %138 : vector<1x256xf32>
    %cst_85 = arith.constant 0.000000e+00 : f32
    %142 = vector.broadcast %cst_85 : f32 to vector<1x256xf32>
    %143 = arith.maximumf %141, %142 : vector<1x256xf32>
    %144 = arith.index_cast %131 : i32 to index
    %c0_86 = arith.constant 0 : index
    %c0_87 = arith.constant 0 : index
    %145 = vector.load %arg13[%144, %c0_86, %c0_87] : memref<10x256x256xbf16, #tpu.memory_space<vmem>>, vector<1x256x256xbf16>
    %146 = vector.shape_cast %145 : vector<1x256x256xbf16> to vector<256x256xbf16>
    %147 = arith.index_cast %131 : i32 to index
    %c0_88 = arith.constant 0 : index
    %c0_89 = arith.constant 0 : index
    %148 = vector.load %arg14[%147, %c0_88, %c0_89] : memref<10x1x256xf32, #tpu.memory_space<vmem>>, vector<1x1x256xf32>
    %149 = vector.shape_cast %148 : vector<1x1x256xf32> to vector<1x256xf32>
    %150 = arith.truncf %143 : vector<1x256xf32> to vector<1x256xbf16>
    %cst_90 = arith.constant dense<0.000000e+00> : vector<1x256xf32>
    %151 = tpu.matmul %150, %146, %cst_90 {dimension_numbers = #tpu.dot_dimension_numbers<[1], [0], [0], [1], [0, 0, 1, 1], [], []>} : vector<1x256xbf16>, vector<256x256xbf16>, vector<1x256xf32> -> vector<1x256xf32>
    %152 = arith.addf %151, %149 : vector<1x256xf32>
    %cst_91 = arith.constant 0.000000e+00 : f32
    %153 = vector.broadcast %cst_91 : f32 to vector<1x256xf32>
    %154 = arith.maximumf %152, %153 : vector<1x256xf32>
    %155 = arith.index_cast %131 : i32 to index
    %c0_92 = arith.constant 0 : index
    %c0_93 = arith.constant 0 : index
    %156 = vector.load %arg15[%155, %c0_92, %c0_93] : memref<10x256x256xbf16, #tpu.memory_space<vmem>>, vector<1x256x256xbf16>
    %157 = vector.shape_cast %156 : vector<1x256x256xbf16> to vector<256x256xbf16>
    %158 = arith.index_cast %131 : i32 to index
    %c0_94 = arith.constant 0 : index
    %c0_95 = arith.constant 0 : index
    %159 = vector.load %arg16[%158, %c0_94, %c0_95] : memref<10x1x256xf32, #tpu.memory_space<vmem>>, vector<1x1x256xf32>
    %160 = vector.shape_cast %159 : vector<1x1x256xf32> to vector<1x256xf32>
    %161 = arith.truncf %154 : vector<1x256xf32> to vector<1x256xbf16>
    %cst_96 = arith.constant dense<0.000000e+00> : vector<1x256xf32>
    %162 = tpu.matmul %161, %157, %cst_96 {dimension_numbers = #tpu.dot_dimension_numbers<[1], [0], [0], [1], [0, 0, 1, 1], [], []>} : vector<1x256xbf16>, vector<256x256xbf16>, vector<1x256xf32> -> vector<1x256xf32>
    %163 = arith.addf %162, %160 : vector<1x256xf32>
    %cst_97 = arith.constant 0.000000e+00 : f32
    %164 = vector.broadcast %cst_97 : f32 to vector<1x256xf32>
    %165 = arith.maximumf %163, %164 : vector<1x256xf32>
    %166 = arith.index_cast %131 : i32 to index
    %c0_98 = arith.constant 0 : index
    %c0_99 = arith.constant 0 : index
    %167 = vector.load %arg17[%166, %c0_98, %c0_99] : memref<10x256x64xbf16, #tpu.memory_space<vmem>>, vector<1x256x64xbf16>
    %168 = vector.shape_cast %167 : vector<1x256x64xbf16> to vector<256x64xbf16>
    %169 = arith.index_cast %131 : i32 to index
    %c0_100 = arith.constant 0 : index
    %c0_101 = arith.constant 0 : index
    %170 = vector.load %arg18[%169, %c0_100, %c0_101] : memref<10x1x64xf32, #tpu.memory_space<vmem>>, vector<1x1x64xf32>
    %171 = vector.shape_cast %170 : vector<1x1x64xf32> to vector<1x64xf32>
    %172 = arith.truncf %165 : vector<1x256xf32> to vector<1x256xbf16>
    %cst_102 = arith.constant dense<0.000000e+00> : vector<1x64xf32>
    %173 = tpu.matmul %172, %168, %cst_102 {dimension_numbers = #tpu.dot_dimension_numbers<[1], [0], [0], [1], [0, 0, 1, 1], [], []>} : vector<1x256xbf16>, vector<256x64xbf16>, vector<1x64xf32> -> vector<1x64xf32>
    %174 = arith.addf %173, %171 : vector<1x64xf32>
    %c2_103 = arith.constant 2 : index
    %c0_104 = arith.constant 0 : index
    %175 = vector.load %arg19[%c2_103, %c0_104] : memref<8x64xf32, #tpu.memory_space<vmem>>, vector<1x64xf32>
    tpu.vector_store %arg19[%c2_103, %c0_104], %174 {strides = array<i32>} : memref<8x64xf32, #tpu.memory_space<vmem>>, vector<1x64xf32>,
    %c3_i32 = arith.constant 3 : i32
    %176 = arith.addi %0, %c3_i32 : i32
    %177 = arith.index_cast %176 : i32 to index
    %178 = memref.load %arg1[%177] : memref<8xi32, #tpu.memory_space<smem>>
    %c3 = arith.constant 3 : index
    %c0_105 = arith.constant 0 : index
    %179 = vector.load %arg20[%c3, %c0_105] : memref<8x256xf32, #tpu.memory_space<vmem>>, vector<1x256xf32>
    %180 = arith.index_cast %178 : i32 to index
    %c0_106 = arith.constant 0 : index
    %c0_107 = arith.constant 0 : index
    %181 = vector.load %arg11[%180, %c0_106, %c0_107] : memref<10x256x256xbf16, #tpu.memory_space<vmem>>, vector<1x256x256xbf16>
    %182 = vector.shape_cast %181 : vector<1x256x256xbf16> to vector<256x256xbf16>
    %183 = arith.index_cast %178 : i32 to index
    %c0_108 = arith.constant 0 : index
    %c0_109 = arith.constant 0 : index
    %184 = vector.load %arg12[%183, %c0_108, %c0_109] : memref<10x1x256xf32, #tpu.memory_space<vmem>>, vector<1x1x256xf32>
    %185 = vector.shape_cast %184 : vector<1x1x256xf32> to vector<1x256xf32>
    %186 = arith.truncf %179 : vector<1x256xf32> to vector<1x256xbf16>
    %cst_110 = arith.constant dense<0.000000e+00> : vector<1x256xf32>
    %187 = tpu.matmul %186, %182, %cst_110 {dimension_numbers = #tpu.dot_dimension_numbers<[1], [0], [0], [1], [0, 0, 1, 1], [], []>} : vector<1x256xbf16>, vector<256x256xbf16>, vector<1x256xf32> -> vector<1x256xf32>
    %188 = arith.addf %187, %185 : vector<1x256xf32>
    %cst_111 = arith.constant 0.000000e+00 : f32
    %189 = vector.broadcast %cst_111 : f32 to vector<1x256xf32>
    %190 = arith.maximumf %188, %189 : vector<1x256xf32>
    %191 = arith.index_cast %178 : i32 to index
    %c0_112 = arith.constant 0 : index
    %c0_113 = arith.constant 0 : index
    %192 = vector.load %arg13[%191, %c0_112, %c0_113] : memref<10x256x256xbf16, #tpu.memory_space<vmem>>, vector<1x256x256xbf16>
    %193 = vector.shape_cast %192 : vector<1x256x256xbf16> to vector<256x256xbf16>
    %194 = arith.index_cast %178 : i32 to index
    %c0_114 = arith.constant 0 : index
    %c0_115 = arith.constant 0 : index
    %195 = vector.load %arg14[%194, %c0_114, %c0_115] : memref<10x1x256xf32, #tpu.memory_space<vmem>>, vector<1x1x256xf32>
    %196 = vector.shape_cast %195 : vector<1x1x256xf32> to vector<1x256xf32>
    %197 = arith.truncf %190 : vector<1x256xf32> to vector<1x256xbf16>
    %cst_116 = arith.constant dense<0.000000e+00> : vector<1x256xf32>
    %198 = tpu.matmul %197, %193, %cst_116 {dimension_numbers = #tpu.dot_dimension_numbers<[1], [0], [0], [1], [0, 0, 1, 1], [], []>} : vector<1x256xbf16>, vector<256x256xbf16>, vector<1x256xf32> -> vector<1x256xf32>
    %199 = arith.addf %198, %196 : vector<1x256xf32>
    %cst_117 = arith.constant 0.000000e+00 : f32
    %200 = vector.broadcast %cst_117 : f32 to vector<1x256xf32>
    %201 = arith.maximumf %199, %200 : vector<1x256xf32>
    %202 = arith.index_cast %178 : i32 to index
    %c0_118 = arith.constant 0 : index
    %c0_119 = arith.constant 0 : index
    %203 = vector.load %arg15[%202, %c0_118, %c0_119] : memref<10x256x256xbf16, #tpu.memory_space<vmem>>, vector<1x256x256xbf16>
    %204 = vector.shape_cast %203 : vector<1x256x256xbf16> to vector<256x256xbf16>
    %205 = arith.index_cast %178 : i32 to index
    %c0_120 = arith.constant 0 : index
    %c0_121 = arith.constant 0 : index
    %206 = vector.load %arg16[%205, %c0_120, %c0_121] : memref<10x1x256xf32, #tpu.memory_space<vmem>>, vector<1x1x256xf32>
    %207 = vector.shape_cast %206 : vector<1x1x256xf32> to vector<1x256xf32>
    %208 = arith.truncf %201 : vector<1x256xf32> to vector<1x256xbf16>
    %cst_122 = arith.constant dense<0.000000e+00> : vector<1x256xf32>
    %209 = tpu.matmul %208, %204, %cst_122 {dimension_numbers = #tpu.dot_dimension_numbers<[1], [0], [0], [1], [0, 0, 1, 1], [], []>} : vector<1x256xbf16>, vector<256x256xbf16>, vector<1x256xf32> -> vector<1x256xf32>
    %210 = arith.addf %209, %207 : vector<1x256xf32>
    %cst_123 = arith.constant 0.000000e+00 : f32
    %211 = vector.broadcast %cst_123 : f32 to vector<1x256xf32>
    %212 = arith.maximumf %210, %211 : vector<1x256xf32>
    %213 = arith.index_cast %178 : i32 to index
    %c0_124 = arith.constant 0 : index
    %c0_125 = arith.constant 0 : index
    %214 = vector.load %arg17[%213, %c0_124, %c0_125] : memref<10x256x64xbf16, #tpu.memory_space<vmem>>, vector<1x256x64xbf16>
    %215 = vector.shape_cast %214 : vector<1x256x64xbf16> to vector<256x64xbf16>
    %216 = arith.index_cast %178 : i32 to index
    %c0_126 = arith.constant 0 : index
    %c0_127 = arith.constant 0 : index
    %217 = vector.load %arg18[%216, %c0_126, %c0_127] : memref<10x1x64xf32, #tpu.memory_space<vmem>>, vector<1x1x64xf32>
    %218 = vector.shape_cast %217 : vector<1x1x64xf32> to vector<1x64xf32>
    %219 = arith.truncf %212 : vector<1x256xf32> to vector<1x256xbf16>
    %cst_128 = arith.constant dense<0.000000e+00> : vector<1x64xf32>
    %220 = tpu.matmul %219, %215, %cst_128 {dimension_numbers = #tpu.dot_dimension_numbers<[1], [0], [0], [1], [0, 0, 1, 1], [], []>} : vector<1x256xbf16>, vector<256x64xbf16>, vector<1x64xf32> -> vector<1x64xf32>
    %221 = arith.addf %220, %218 : vector<1x64xf32>
    %c3_129 = arith.constant 3 : index
    %c0_130 = arith.constant 0 : index
    %222 = vector.load %arg19[%c3_129, %c0_130] : memref<8x64xf32, #tpu.memory_space<vmem>>, vector<1x64xf32>
    tpu.vector_store %arg19[%c3_129, %c0_130], %221 {strides = array<i32>} : memref<8x64xf32, #tpu.memory_space<vmem>>, vector<1x64xf32>,
    %c4_i32 = arith.constant 4 : i32
    %223 = arith.addi %0, %c4_i32 : i32
    %224 = arith.index_cast %223 : i32 to index
    %225 = memref.load %arg1[%224] : memref<8xi32, #tpu.memory_space<smem>>
    %c4 = arith.constant 4 : index
    %c0_131 = arith.constant 0 : index
    %226 = vector.load %arg20[%c4, %c0_131] : memref<8x256xf32, #tpu.memory_space<vmem>>, vector<1x256xf32>
    %227 = arith.index_cast %225 : i32 to index
    %c0_132 = arith.constant 0 : index
    %c0_133 = arith.constant 0 : index
    %228 = vector.load %arg11[%227, %c0_132, %c0_133] : memref<10x256x256xbf16, #tpu.memory_space<vmem>>, vector<1x256x256xbf16>
    %229 = vector.shape_cast %228 : vector<1x256x256xbf16> to vector<256x256xbf16>
    %230 = arith.index_cast %225 : i32 to index
    %c0_134 = arith.constant 0 : index
    %c0_135 = arith.constant 0 : index
    %231 = vector.load %arg12[%230, %c0_134, %c0_135] : memref<10x1x256xf32, #tpu.memory_space<vmem>>, vector<1x1x256xf32>
    %232 = vector.shape_cast %231 : vector<1x1x256xf32> to vector<1x256xf32>
    %233 = arith.truncf %226 : vector<1x256xf32> to vector<1x256xbf16>
    %cst_136 = arith.constant dense<0.000000e+00> : vector<1x256xf32>
    %234 = tpu.matmul %233, %229, %cst_136 {dimension_numbers = #tpu.dot_dimension_numbers<[1], [0], [0], [1], [0, 0, 1, 1], [], []>} : vector<1x256xbf16>, vector<256x256xbf16>, vector<1x256xf32> -> vector<1x256xf32>
    %235 = arith.addf %234, %232 : vector<1x256xf32>
    %cst_137 = arith.constant 0.000000e+00 : f32
    %236 = vector.broadcast %cst_137 : f32 to vector<1x256xf32>
    %237 = arith.maximumf %235, %236 : vector<1x256xf32>
    %238 = arith.index_cast %225 : i32 to index
    %c0_138 = arith.constant 0 : index
    %c0_139 = arith.constant 0 : index
    %239 = vector.load %arg13[%238, %c0_138, %c0_139] : memref<10x256x256xbf16, #tpu.memory_space<vmem>>, vector<1x256x256xbf16>
    %240 = vector.shape_cast %239 : vector<1x256x256xbf16> to vector<256x256xbf16>
    %241 = arith.index_cast %225 : i32 to index
    %c0_140 = arith.constant 0 : index
    %c0_141 = arith.constant 0 : index
    %242 = vector.load %arg14[%241, %c0_140, %c0_141] : memref<10x1x256xf32, #tpu.memory_space<vmem>>, vector<1x1x256xf32>
    %243 = vector.shape_cast %242 : vector<1x1x256xf32> to vector<1x256xf32>
    %244 = arith.truncf %237 : vector<1x256xf32> to vector<1x256xbf16>
    %cst_142 = arith.constant dense<0.000000e+00> : vector<1x256xf32>
    %245 = tpu.matmul %244, %240, %cst_142 {dimension_numbers = #tpu.dot_dimension_numbers<[1], [0], [0], [1], [0, 0, 1, 1], [], []>} : vector<1x256xbf16>, vector<256x256xbf16>, vector<1x256xf32> -> vector<1x256xf32>
    %246 = arith.addf %245, %243 : vector<1x256xf32>
    %cst_143 = arith.constant 0.000000e+00 : f32
    %247 = vector.broadcast %cst_143 : f32 to vector<1x256xf32>
    %248 = arith.maximumf %246, %247 : vector<1x256xf32>
    %249 = arith.index_cast %225 : i32 to index
    %c0_144 = arith.constant 0 : index
    %c0_145 = arith.constant 0 : index
    %250 = vector.load %arg15[%249, %c0_144, %c0_145] : memref<10x256x256xbf16, #tpu.memory_space<vmem>>, vector<1x256x256xbf16>
    %251 = vector.shape_cast %250 : vector<1x256x256xbf16> to vector<256x256xbf16>
    %252 = arith.index_cast %225 : i32 to index
    %c0_146 = arith.constant 0 : index
    %c0_147 = arith.constant 0 : index
    %253 = vector.load %arg16[%252, %c0_146, %c0_147] : memref<10x1x256xf32, #tpu.memory_space<vmem>>, vector<1x1x256xf32>
    %254 = vector.shape_cast %253 : vector<1x1x256xf32> to vector<1x256xf32>
    %255 = arith.truncf %248 : vector<1x256xf32> to vector<1x256xbf16>
    %cst_148 = arith.constant dense<0.000000e+00> : vector<1x256xf32>
    %256 = tpu.matmul %255, %251, %cst_148 {dimension_numbers = #tpu.dot_dimension_numbers<[1], [0], [0], [1], [0, 0, 1, 1], [], []>} : vector<1x256xbf16>, vector<256x256xbf16>, vector<1x256xf32> -> vector<1x256xf32>
    %257 = arith.addf %256, %254 : vector<1x256xf32>
    %cst_149 = arith.constant 0.000000e+00 : f32
    %258 = vector.broadcast %cst_149 : f32 to vector<1x256xf32>
    %259 = arith.maximumf %257, %258 : vector<1x256xf32>
    %260 = arith.index_cast %225 : i32 to index
    %c0_150 = arith.constant 0 : index
    %c0_151 = arith.constant 0 : index
    %261 = vector.load %arg17[%260, %c0_150, %c0_151] : memref<10x256x64xbf16, #tpu.memory_space<vmem>>, vector<1x256x64xbf16>
    %262 = vector.shape_cast %261 : vector<1x256x64xbf16> to vector<256x64xbf16>
    %263 = arith.index_cast %225 : i32 to index
    %c0_152 = arith.constant 0 : index
    %c0_153 = arith.constant 0 : index
    %264 = vector.load %arg18[%263, %c0_152, %c0_153] : memref<10x1x64xf32, #tpu.memory_space<vmem>>, vector<1x1x64xf32>
    %265 = vector.shape_cast %264 : vector<1x1x64xf32> to vector<1x64xf32>
    %266 = arith.truncf %259 : vector<1x256xf32> to vector<1x256xbf16>
    %cst_154 = arith.constant dense<0.000000e+00> : vector<1x64xf32>
    %267 = tpu.matmul %266, %262, %cst_154 {dimension_numbers = #tpu.dot_dimension_numbers<[1], [0], [0], [1], [0, 0, 1, 1], [], []>} : vector<1x256xbf16>, vector<256x64xbf16>, vector<1x64xf32> -> vector<1x64xf32>
    %268 = arith.addf %267, %265 : vector<1x64xf32>
    %c4_155 = arith.constant 4 : index
    %c0_156 = arith.constant 0 : index
    %269 = vector.load %arg19[%c4_155, %c0_156] : memref<8x64xf32, #tpu.memory_space<vmem>>, vector<1x64xf32>
    tpu.vector_store %arg19[%c4_155, %c0_156], %268 {strides = array<i32>} : memref<8x64xf32, #tpu.memory_space<vmem>>, vector<1x64xf32>,
    %c5_i32 = arith.constant 5 : i32
    %270 = arith.addi %0, %c5_i32 : i32
    %271 = arith.index_cast %270 : i32 to index
    %272 = memref.load %arg1[%271] : memref<8xi32, #tpu.memory_space<smem>>
    %c5 = arith.constant 5 : index
    %c0_157 = arith.constant 0 : index
    %273 = vector.load %arg20[%c5, %c0_157] : memref<8x256xf32, #tpu.memory_space<vmem>>, vector<1x256xf32>
    %274 = arith.index_cast %272 : i32 to index
    %c0_158 = arith.constant 0 : index
    %c0_159 = arith.constant 0 : index
    %275 = vector.load %arg11[%274, %c0_158, %c0_159] : memref<10x256x256xbf16, #tpu.memory_space<vmem>>, vector<1x256x256xbf16>
    %276 = vector.shape_cast %275 : vector<1x256x256xbf16> to vector<256x256xbf16>
    %277 = arith.index_cast %272 : i32 to index
    %c0_160 = arith.constant 0 : index
    %c0_161 = arith.constant 0 : index
    %278 = vector.load %arg12[%277, %c0_160, %c0_161] : memref<10x1x256xf32, #tpu.memory_space<vmem>>, vector<1x1x256xf32>
    %279 = vector.shape_cast %278 : vector<1x1x256xf32> to vector<1x256xf32>
    %280 = arith.truncf %273 : vector<1x256xf32> to vector<1x256xbf16>
    %cst_162 = arith.constant dense<0.000000e+00> : vector<1x256xf32>
    %281 = tpu.matmul %280, %276, %cst_162 {dimension_numbers = #tpu.dot_dimension_numbers<[1], [0], [0], [1], [0, 0, 1, 1], [], []>} : vector<1x256xbf16>, vector<256x256xbf16>, vector<1x256xf32> -> vector<1x256xf32>
    %282 = arith.addf %281, %279 : vector<1x256xf32>
    %cst_163 = arith.constant 0.000000e+00 : f32
    %283 = vector.broadcast %cst_163 : f32 to vector<1x256xf32>
    %284 = arith.maximumf %282, %283 : vector<1x256xf32>
    %285 = arith.index_cast %272 : i32 to index
    %c0_164 = arith.constant 0 : index
    %c0_165 = arith.constant 0 : index
    %286 = vector.load %arg13[%285, %c0_164, %c0_165] : memref<10x256x256xbf16, #tpu.memory_space<vmem>>, vector<1x256x256xbf16>
    %287 = vector.shape_cast %286 : vector<1x256x256xbf16> to vector<256x256xbf16>
    %288 = arith.index_cast %272 : i32 to index
    %c0_166 = arith.constant 0 : index
    %c0_167 = arith.constant 0 : index
    %289 = vector.load %arg14[%288, %c0_166, %c0_167] : memref<10x1x256xf32, #tpu.memory_space<vmem>>, vector<1x1x256xf32>
    %290 = vector.shape_cast %289 : vector<1x1x256xf32> to vector<1x256xf32>
    %291 = arith.truncf %284 : vector<1x256xf32> to vector<1x256xbf16>
    %cst_168 = arith.constant dense<0.000000e+00> : vector<1x256xf32>
    %292 = tpu.matmul %291, %287, %cst_168 {dimension_numbers = #tpu.dot_dimension_numbers<[1], [0], [0], [1], [0, 0, 1, 1], [], []>} : vector<1x256xbf16>, vector<256x256xbf16>, vector<1x256xf32> -> vector<1x256xf32>
    %293 = arith.addf %292, %290 : vector<1x256xf32>
    %cst_169 = arith.constant 0.000000e+00 : f32
    %294 = vector.broadcast %cst_169 : f32 to vector<1x256xf32>
    %295 = arith.maximumf %293, %294 : vector<1x256xf32>
    %296 = arith.index_cast %272 : i32 to index
    %c0_170 = arith.constant 0 : index
    %c0_171 = arith.constant 0 : index
    %297 = vector.load %arg15[%296, %c0_170, %c0_171] : memref<10x256x256xbf16, #tpu.memory_space<vmem>>, vector<1x256x256xbf16>
    %298 = vector.shape_cast %297 : vector<1x256x256xbf16> to vector<256x256xbf16>
    %299 = arith.index_cast %272 : i32 to index
    %c0_172 = arith.constant 0 : index
    %c0_173 = arith.constant 0 : index
    %300 = vector.load %arg16[%299, %c0_172, %c0_173] : memref<10x1x256xf32, #tpu.memory_space<vmem>>, vector<1x1x256xf32>
    %301 = vector.shape_cast %300 : vector<1x1x256xf32> to vector<1x256xf32>
    %302 = arith.truncf %295 : vector<1x256xf32> to vector<1x256xbf16>
    %cst_174 = arith.constant dense<0.000000e+00> : vector<1x256xf32>
    %303 = tpu.matmul %302, %298, %cst_174 {dimension_numbers = #tpu.dot_dimension_numbers<[1], [0], [0], [1], [0, 0, 1, 1], [], []>} : vector<1x256xbf16>, vector<256x256xbf16>, vector<1x256xf32> -> vector<1x256xf32>
    %304 = arith.addf %303, %301 : vector<1x256xf32>
    %cst_175 = arith.constant 0.000000e+00 : f32
    %305 = vector.broadcast %cst_175 : f32 to vector<1x256xf32>
    %306 = arith.maximumf %304, %305 : vector<1x256xf32>
    %307 = arith.index_cast %272 : i32 to index
    %c0_176 = arith.constant 0 : index
    %c0_177 = arith.constant 0 : index
    %308 = vector.load %arg17[%307, %c0_176, %c0_177] : memref<10x256x64xbf16, #tpu.memory_space<vmem>>, vector<1x256x64xbf16>
    %309 = vector.shape_cast %308 : vector<1x256x64xbf16> to vector<256x64xbf16>
    %310 = arith.index_cast %272 : i32 to index
    %c0_178 = arith.constant 0 : index
    %c0_179 = arith.constant 0 : index
    %311 = vector.load %arg18[%310, %c0_178, %c0_179] : memref<10x1x64xf32, #tpu.memory_space<vmem>>, vector<1x1x64xf32>
    %312 = vector.shape_cast %311 : vector<1x1x64xf32> to vector<1x64xf32>
    %313 = arith.truncf %306 : vector<1x256xf32> to vector<1x256xbf16>
    %cst_180 = arith.constant dense<0.000000e+00> : vector<1x64xf32>
    %314 = tpu.matmul %313, %309, %cst_180 {dimension_numbers = #tpu.dot_dimension_numbers<[1], [0], [0], [1], [0, 0, 1, 1], [], []>} : vector<1x256xbf16>, vector<256x64xbf16>, vector<1x64xf32> -> vector<1x64xf32>
    %315 = arith.addf %314, %312 : vector<1x64xf32>
    %c5_181 = arith.constant 5 : index
    %c0_182 = arith.constant 0 : index
    %316 = vector.load %arg19[%c5_181, %c0_182] : memref<8x64xf32, #tpu.memory_space<vmem>>, vector<1x64xf32>
    tpu.vector_store %arg19[%c5_181, %c0_182], %315 {strides = array<i32>} : memref<8x64xf32, #tpu.memory_space<vmem>>, vector<1x64xf32>,
    %c6_i32 = arith.constant 6 : i32
    %317 = arith.addi %0, %c6_i32 : i32
    %318 = arith.index_cast %317 : i32 to index
    %319 = memref.load %arg1[%318] : memref<8xi32, #tpu.memory_space<smem>>
    %c6 = arith.constant 6 : index
    %c0_183 = arith.constant 0 : index
    %320 = vector.load %arg20[%c6, %c0_183] : memref<8x256xf32, #tpu.memory_space<vmem>>, vector<1x256xf32>
    %321 = arith.index_cast %319 : i32 to index
    %c0_184 = arith.constant 0 : index
    %c0_185 = arith.constant 0 : index
    %322 = vector.load %arg11[%321, %c0_184, %c0_185] : memref<10x256x256xbf16, #tpu.memory_space<vmem>>, vector<1x256x256xbf16>
    %323 = vector.shape_cast %322 : vector<1x256x256xbf16> to vector<256x256xbf16>
    %324 = arith.index_cast %319 : i32 to index
    %c0_186 = arith.constant 0 : index
    %c0_187 = arith.constant 0 : index
    %325 = vector.load %arg12[%324, %c0_186, %c0_187] : memref<10x1x256xf32, #tpu.memory_space<vmem>>, vector<1x1x256xf32>
    %326 = vector.shape_cast %325 : vector<1x1x256xf32> to vector<1x256xf32>
    %327 = arith.truncf %320 : vector<1x256xf32> to vector<1x256xbf16>
    %cst_188 = arith.constant dense<0.000000e+00> : vector<1x256xf32>
    %328 = tpu.matmul %327, %323, %cst_188 {dimension_numbers = #tpu.dot_dimension_numbers<[1], [0], [0], [1], [0, 0, 1, 1], [], []>} : vector<1x256xbf16>, vector<256x256xbf16>, vector<1x256xf32> -> vector<1x256xf32>
    %329 = arith.addf %328, %326 : vector<1x256xf32>
    %cst_189 = arith.constant 0.000000e+00 : f32
    %330 = vector.broadcast %cst_189 : f32 to vector<1x256xf32>
    %331 = arith.maximumf %329, %330 : vector<1x256xf32>
    %332 = arith.index_cast %319 : i32 to index
    %c0_190 = arith.constant 0 : index
    %c0_191 = arith.constant 0 : index
    %333 = vector.load %arg13[%332, %c0_190, %c0_191] : memref<10x256x256xbf16, #tpu.memory_space<vmem>>, vector<1x256x256xbf16>
    %334 = vector.shape_cast %333 : vector<1x256x256xbf16> to vector<256x256xbf16>
    %335 = arith.index_cast %319 : i32 to index
    %c0_192 = arith.constant 0 : index
    %c0_193 = arith.constant 0 : index
    %336 = vector.load %arg14[%335, %c0_192, %c0_193] : memref<10x1x256xf32, #tpu.memory_space<vmem>>, vector<1x1x256xf32>
    %337 = vector.shape_cast %336 : vector<1x1x256xf32> to vector<1x256xf32>
    %338 = arith.truncf %331 : vector<1x256xf32> to vector<1x256xbf16>
    %cst_194 = arith.constant dense<0.000000e+00> : vector<1x256xf32>
    %339 = tpu.matmul %338, %334, %cst_194 {dimension_numbers = #tpu.dot_dimension_numbers<[1], [0], [0], [1], [0, 0, 1, 1], [], []>} : vector<1x256xbf16>, vector<256x256xbf16>, vector<1x256xf32> -> vector<1x256xf32>
    %340 = arith.addf %339, %337 : vector<1x256xf32>
    %cst_195 = arith.constant 0.000000e+00 : f32
    %341 = vector.broadcast %cst_195 : f32 to vector<1x256xf32>
    %342 = arith.maximumf %340, %341 : vector<1x256xf32>
    %343 = arith.index_cast %319 : i32 to index
    %c0_196 = arith.constant 0 : index
    %c0_197 = arith.constant 0 : index
    %344 = vector.load %arg15[%343, %c0_196, %c0_197] : memref<10x256x256xbf16, #tpu.memory_space<vmem>>, vector<1x256x256xbf16>
    %345 = vector.shape_cast %344 : vector<1x256x256xbf16> to vector<256x256xbf16>
    %346 = arith.index_cast %319 : i32 to index
    %c0_198 = arith.constant 0 : index
    %c0_199 = arith.constant 0 : index
    %347 = vector.load %arg16[%346, %c0_198, %c0_199] : memref<10x1x256xf32, #tpu.memory_space<vmem>>, vector<1x1x256xf32>
    %348 = vector.shape_cast %347 : vector<1x1x256xf32> to vector<1x256xf32>
    %349 = arith.truncf %342 : vector<1x256xf32> to vector<1x256xbf16>
    %cst_200 = arith.constant dense<0.000000e+00> : vector<1x256xf32>
    %350 = tpu.matmul %349, %345, %cst_200 {dimension_numbers = #tpu.dot_dimension_numbers<[1], [0], [0], [1], [0, 0, 1, 1], [], []>} : vector<1x256xbf16>, vector<256x256xbf16>, vector<1x256xf32> -> vector<1x256xf32>
    %351 = arith.addf %350, %348 : vector<1x256xf32>
    %cst_201 = arith.constant 0.000000e+00 : f32
    %352 = vector.broadcast %cst_201 : f32 to vector<1x256xf32>
    %353 = arith.maximumf %351, %352 : vector<1x256xf32>
    %354 = arith.index_cast %319 : i32 to index
    %c0_202 = arith.constant 0 : index
    %c0_203 = arith.constant 0 : index
    %355 = vector.load %arg17[%354, %c0_202, %c0_203] : memref<10x256x64xbf16, #tpu.memory_space<vmem>>, vector<1x256x64xbf16>
    %356 = vector.shape_cast %355 : vector<1x256x64xbf16> to vector<256x64xbf16>
    %357 = arith.index_cast %319 : i32 to index
    %c0_204 = arith.constant 0 : index
    %c0_205 = arith.constant 0 : index
    %358 = vector.load %arg18[%357, %c0_204, %c0_205] : memref<10x1x64xf32, #tpu.memory_space<vmem>>, vector<1x1x64xf32>
    %359 = vector.shape_cast %358 : vector<1x1x64xf32> to vector<1x64xf32>
    %360 = arith.truncf %353 : vector<1x256xf32> to vector<1x256xbf16>
    %cst_206 = arith.constant dense<0.000000e+00> : vector<1x64xf32>
    %361 = tpu.matmul %360, %356, %cst_206 {dimension_numbers = #tpu.dot_dimension_numbers<[1], [0], [0], [1], [0, 0, 1, 1], [], []>} : vector<1x256xbf16>, vector<256x64xbf16>, vector<1x64xf32> -> vector<1x64xf32>
    %362 = arith.addf %361, %359 : vector<1x64xf32>
    %c6_207 = arith.constant 6 : index
    %c0_208 = arith.constant 0 : index
    %363 = vector.load %arg19[%c6_207, %c0_208] : memref<8x64xf32, #tpu.memory_space<vmem>>, vector<1x64xf32>
    tpu.vector_store %arg19[%c6_207, %c0_208], %362 {strides = array<i32>} : memref<8x64xf32, #tpu.memory_space<vmem>>, vector<1x64xf32>,
    %c7_i32 = arith.constant 7 : i32
    %364 = arith.addi %0, %c7_i32 : i32
    %365 = arith.index_cast %364 : i32 to index
    %366 = memref.load %arg1[%365] : memref<8xi32, #tpu.memory_space<smem>>
    %c7 = arith.constant 7 : index
    %c0_209 = arith.constant 0 : index
    %367 = vector.load %arg20[%c7, %c0_209] : memref<8x256xf32, #tpu.memory_space<vmem>>, vector<1x256xf32>
    %368 = arith.index_cast %366 : i32 to index
    %c0_210 = arith.constant 0 : index
    %c0_211 = arith.constant 0 : index
    %369 = vector.load %arg11[%368, %c0_210, %c0_211] : memref<10x256x256xbf16, #tpu.memory_space<vmem>>, vector<1x256x256xbf16>
    %370 = vector.shape_cast %369 : vector<1x256x256xbf16> to vector<256x256xbf16>
    %371 = arith.index_cast %366 : i32 to index
    %c0_212 = arith.constant 0 : index
    %c0_213 = arith.constant 0 : index
    %372 = vector.load %arg12[%371, %c0_212, %c0_213] : memref<10x1x256xf32, #tpu.memory_space<vmem>>, vector<1x1x256xf32>
    %373 = vector.shape_cast %372 : vector<1x1x256xf32> to vector<1x256xf32>
    %374 = arith.truncf %367 : vector<1x256xf32> to vector<1x256xbf16>
    %cst_214 = arith.constant dense<0.000000e+00> : vector<1x256xf32>
    %375 = tpu.matmul %374, %370, %cst_214 {dimension_numbers = #tpu.dot_dimension_numbers<[1], [0], [0], [1], [0, 0, 1, 1], [], []>} : vector<1x256xbf16>, vector<256x256xbf16>, vector<1x256xf32> -> vector<1x256xf32>
    %376 = arith.addf %375, %373 : vector<1x256xf32>
    %cst_215 = arith.constant 0.000000e+00 : f32
    %377 = vector.broadcast %cst_215 : f32 to vector<1x256xf32>
    %378 = arith.maximumf %376, %377 : vector<1x256xf32>
    %379 = arith.index_cast %366 : i32 to index
    %c0_216 = arith.constant 0 : index
    %c0_217 = arith.constant 0 : index
    %380 = vector.load %arg13[%379, %c0_216, %c0_217] : memref<10x256x256xbf16, #tpu.memory_space<vmem>>, vector<1x256x256xbf16>
    %381 = vector.shape_cast %380 : vector<1x256x256xbf16> to vector<256x256xbf16>
    %382 = arith.index_cast %366 : i32 to index
    %c0_218 = arith.constant 0 : index
    %c0_219 = arith.constant 0 : index
    %383 = vector.load %arg14[%382, %c0_218, %c0_219] : memref<10x1x256xf32, #tpu.memory_space<vmem>>, vector<1x1x256xf32>
    %384 = vector.shape_cast %383 : vector<1x1x256xf32> to vector<1x256xf32>
    %385 = arith.truncf %378 : vector<1x256xf32> to vector<1x256xbf16>
    %cst_220 = arith.constant dense<0.000000e+00> : vector<1x256xf32>
    %386 = tpu.matmul %385, %381, %cst_220 {dimension_numbers = #tpu.dot_dimension_numbers<[1], [0], [0], [1], [0, 0, 1, 1], [], []>} : vector<1x256xbf16>, vector<256x256xbf16>, vector<1x256xf32> -> vector<1x256xf32>
    %387 = arith.addf %386, %384 : vector<1x256xf32>
    %cst_221 = arith.constant 0.000000e+00 : f32
    %388 = vector.broadcast %cst_221 : f32 to vector<1x256xf32>
    %389 = arith.maximumf %387, %388 : vector<1x256xf32>
    %390 = arith.index_cast %366 : i32 to index
    %c0_222 = arith.constant 0 : index
    %c0_223 = arith.constant 0 : index
    %391 = vector.load %arg15[%390, %c0_222, %c0_223] : memref<10x256x256xbf16, #tpu.memory_space<vmem>>, vector<1x256x256xbf16>
    %392 = vector.shape_cast %391 : vector<1x256x256xbf16> to vector<256x256xbf16>
    %393 = arith.index_cast %366 : i32 to index
    %c0_224 = arith.constant 0 : index
    %c0_225 = arith.constant 0 : index
    %394 = vector.load %arg16[%393, %c0_224, %c0_225] : memref<10x1x256xf32, #tpu.memory_space<vmem>>, vector<1x1x256xf32>
    %395 = vector.shape_cast %394 : vector<1x1x256xf32> to vector<1x256xf32>
    %396 = arith.truncf %389 : vector<1x256xf32> to vector<1x256xbf16>
    %cst_226 = arith.constant dense<0.000000e+00> : vector<1x256xf32>
    %397 = tpu.matmul %396, %392, %cst_226 {dimension_numbers = #tpu.dot_dimension_numbers<[1], [0], [0], [1], [0, 0, 1, 1], [], []>} : vector<1x256xbf16>, vector<256x256xbf16>, vector<1x256xf32> -> vector<1x256xf32>
    %398 = arith.addf %397, %395 : vector<1x256xf32>
    %cst_227 = arith.constant 0.000000e+00 : f32
    %399 = vector.broadcast %cst_227 : f32 to vector<1x256xf32>
    %400 = arith.maximumf %398, %399 : vector<1x256xf32>
    %401 = arith.index_cast %366 : i32 to index
    %c0_228 = arith.constant 0 : index
    %c0_229 = arith.constant 0 : index
    %402 = vector.load %arg17[%401, %c0_228, %c0_229] : memref<10x256x64xbf16, #tpu.memory_space<vmem>>, vector<1x256x64xbf16>
    %403 = vector.shape_cast %402 : vector<1x256x64xbf16> to vector<256x64xbf16>
    %404 = arith.index_cast %366 : i32 to index
    %c0_230 = arith.constant 0 : index
    %c0_231 = arith.constant 0 : index
    %405 = vector.load %arg18[%404, %c0_230, %c0_231] : memref<10x1x64xf32, #tpu.memory_space<vmem>>, vector<1x1x64xf32>
    %406 = vector.shape_cast %405 : vector<1x1x64xf32> to vector<1x64xf32>
    %407 = arith.truncf %400 : vector<1x256xf32> to vector<1x256xbf16>
    %cst_232 = arith.constant dense<0.000000e+00> : vector<1x64xf32>
    %408 = tpu.matmul %407, %403, %cst_232 {dimension_numbers = #tpu.dot_dimension_numbers<[1], [0], [0], [1], [0, 0, 1, 1], [], []>} : vector<1x256xbf16>, vector<256x64xbf16>, vector<1x64xf32> -> vector<1x64xf32>
    %409 = arith.addf %408, %406 : vector<1x64xf32>
    %c7_233 = arith.constant 7 : index
    %c0_234 = arith.constant 0 : index
    %410 = vector.load %arg19[%c7_233, %c0_234] : memref<8x64xf32, #tpu.memory_space<vmem>>, vector<1x64xf32>
    tpu.vector_store %arg19[%c7_233, %c0_234], %409 {strides = array<i32>} : memref<8x64xf32, #tpu.memory_space<vmem>>, vector<1x64xf32>,
    return
  }
  func.func @transform_0(%arg0: i32, %arg1: memref<8xi32, #tpu.memory_space<smem>>) -> (i32, i32) {
    %c0_i32 = arith.constant 0 : i32
    %c0_i32_0 = arith.constant 0 : i32
    return %arg0, %c0_i32 : i32, i32
  }
  func.func @transform_1(%arg0: i32, %arg1: memref<8xi32, #tpu.memory_space<smem>>) -> (i32, i32) {
    %c0_i32 = arith.constant 0 : i32
    %c0_i32_0 = arith.constant 0 : i32
    %c0_i32_1 = arith.constant 0 : i32
    return %c0_i32, %c0_i32_0 : i32, i32
  }
  func.func @transform_2(%arg0: i32, %arg1: memref<8xi32, #tpu.memory_space<smem>>) -> (i32, i32) {
    %c0_i32 = arith.constant 0 : i32
    %c0_i32_0 = arith.constant 0 : i32
    %c0_i32_1 = arith.constant 0 : i32
    return %c0_i32, %c0_i32_0 : i32, i32
  }
  func.func @transform_3(%arg0: i32, %arg1: memref<8xi32, #tpu.memory_space<smem>>) -> (i32, i32) {
    %c0_i32 = arith.constant 0 : i32
    %c0_i32_0 = arith.constant 0 : i32
    %c0_i32_1 = arith.constant 0 : i32
    return %c0_i32, %c0_i32_0 : i32, i32
  }
  func.func @transform_4(%arg0: i32, %arg1: memref<8xi32, #tpu.memory_space<smem>>) -> (i32, i32) {
    %c0_i32 = arith.constant 0 : i32
    %c0_i32_0 = arith.constant 0 : i32
    %c0_i32_1 = arith.constant 0 : i32
    return %c0_i32, %c0_i32_0 : i32, i32
  }
  func.func @transform_5(%arg0: i32, %arg1: memref<8xi32, #tpu.memory_space<smem>>) -> (i32, i32) {
    %c0_i32 = arith.constant 0 : i32
    %c0_i32_0 = arith.constant 0 : i32
    %c0_i32_1 = arith.constant 0 : i32
    return %c0_i32, %c0_i32_0 : i32, i32
  }
  func.func @transform_6(%arg0: i32, %arg1: memref<8xi32, #tpu.memory_space<smem>>) -> (i32, i32) {
    %c0_i32 = arith.constant 0 : i32
    %c0_i32_0 = arith.constant 0 : i32
    %c0_i32_1 = arith.constant 0 : i32
    return %c0_i32, %c0_i32_0 : i32, i32
  }
  func.func @transform_7(%arg0: i32, %arg1: memref<8xi32, #tpu.memory_space<smem>>) -> (i32, i32) {
    %c0_i32 = arith.constant 0 : i32
    %c0_i32_0 = arith.constant 0 : i32
    %c0_i32_1 = arith.constant 0 : i32
    return %c0_i32, %c0_i32_0 : i32, i32
  }
  func.func @transform_8(%arg0: i32, %arg1: memref<8xi32, #tpu.memory_space<smem>>) -> (i32, i32) {
    %c0_i32 = arith.constant 0 : i32
    %c0_i32_0 = arith.constant 0 : i32
    %c0_i32_1 = arith.constant 0 : i32
    return %c0_i32, %c0_i32_0 : i32, i32
  }
  func.func @transform_9(%arg0: i32, %arg1: memref<8xi32, #tpu.memory_space<smem>>) -> (i32, i32, i32) {
    %c0_i32 = arith.constant 0 : i32
    %c0_i32_0 = arith.constant 0 : i32
    %c0_i32_1 = arith.constant 0 : i32
    %c0_i32_2 = arith.constant 0 : i32
    return %c0_i32, %c0_i32_0, %c0_i32_1 : i32, i32, i32
  }
  func.func @transform_10(%arg0: i32, %arg1: memref<8xi32, #tpu.memory_space<smem>>) -> (i32, i32, i32) {
    %c0_i32 = arith.constant 0 : i32
    %c0_i32_0 = arith.constant 0 : i32
    %c0_i32_1 = arith.constant 0 : i32
    %c0_i32_2 = arith.constant 0 : i32
    return %c0_i32, %c0_i32_0, %c0_i32_1 : i32, i32, i32
  }
  func.func @transform_11(%arg0: i32, %arg1: memref<8xi32, #tpu.memory_space<smem>>) -> (i32, i32, i32) {
    %c0_i32 = arith.constant 0 : i32
    %c0_i32_0 = arith.constant 0 : i32
    %c0_i32_1 = arith.constant 0 : i32
    %c0_i32_2 = arith.constant 0 : i32
    return %c0_i32, %c0_i32_0, %c0_i32_1 : i32, i32, i32
  }
  func.func @transform_12(%arg0: i32, %arg1: memref<8xi32, #tpu.memory_space<smem>>) -> (i32, i32, i32) {
    %c0_i32 = arith.constant 0 : i32
    %c0_i32_0 = arith.constant 0 : i32
    %c0_i32_1 = arith.constant 0 : i32
    %c0_i32_2 = arith.constant 0 : i32
    return %c0_i32, %c0_i32_0, %c0_i32_1 : i32, i32, i32
  }
  func.func @transform_13(%arg0: i32, %arg1: memref<8xi32, #tpu.memory_space<smem>>) -> (i32, i32, i32) {
    %c0_i32 = arith.constant 0 : i32
    %c0_i32_0 = arith.constant 0 : i32
    %c0_i32_1 = arith.constant 0 : i32
    %c0_i32_2 = arith.constant 0 : i32
    return %c0_i32, %c0_i32_0, %c0_i32_1 : i32, i32, i32
  }
  func.func @transform_14(%arg0: i32, %arg1: memref<8xi32, #tpu.memory_space<smem>>) -> (i32, i32, i32) {
    %c0_i32 = arith.constant 0 : i32
    %c0_i32_0 = arith.constant 0 : i32
    %c0_i32_1 = arith.constant 0 : i32
    %c0_i32_2 = arith.constant 0 : i32
    return %c0_i32, %c0_i32_0, %c0_i32_1 : i32, i32, i32
  }
  func.func @transform_15(%arg0: i32, %arg1: memref<8xi32, #tpu.memory_space<smem>>) -> (i32, i32, i32) {
    %c0_i32 = arith.constant 0 : i32
    %c0_i32_0 = arith.constant 0 : i32
    %c0_i32_1 = arith.constant 0 : i32
    %c0_i32_2 = arith.constant 0 : i32
    return %c0_i32, %c0_i32_0, %c0_i32_1 : i32, i32, i32
  }
  func.func @transform_16(%arg0: i32, %arg1: memref<8xi32, #tpu.memory_space<smem>>) -> (i32, i32, i32) {
    %c0_i32 = arith.constant 0 : i32
    %c0_i32_0 = arith.constant 0 : i32
    %c0_i32_1 = arith.constant 0 : i32
    %c0_i32_2 = arith.constant 0 : i32
    return %c0_i32, %c0_i32_0, %c0_i32_1 : i32, i32, i32
  }
  func.func @transform_17(%arg0: i32, %arg1: memref<8xi32, #tpu.memory_space<smem>>) -> (i32, i32) {
    %c0_i32 = arith.constant 0 : i32
    %c0_i32_0 = arith.constant 0 : i32
    return %arg0, %c0_i32 : i32, i32
  }
}

</mosaic_0001>

<llo_original>
// kernel: tpu_custom_call.1
$region0: #{tpu_custom_call.1}
  #allocation0 [shape = 'u32[]', space=smem, size = 0x4, offset = 0x4, fixed_abs, tag = 'smem constant byte address 0x4 - core index']
  #allocation1 [shape = 'u32[144,128]{1,0:T(1,128)}', space=vmem, size = 0x12000, scoped, tag = 'internal scratch']
  #allocation2 [shape = 'f32[8,256]{1,0:T(8,128)}', space=vmem, size = 0x2000, scoped, tag = 'scratch operand']
  #allocation3 [shape = 's32[1]{0}', space=sflag, size = 0x4, scoped, tag = 'scoped memory for tpu_custom_call.1']
  #allocation4 [shape = 'u8[512]{0}', space=smem, size = 0x200, scoped, tag = 'prefetched SMEM operand 0']
  %s0 = inlined_call_operand.hbm [shape: s32[8], index: 0, kind: input, shape index: {}]
  %s1 = inlined_call_operand.hbm [shape: f32[8,16], index: 1, kind: input, shape index: {}]
  %s2 = inlined_call_operand.hbm [shape: bf16[16,256], index: 2, kind: input, shape index: {}]
  %s3 = inlined_call_operand.hbm [shape: f32[1,256], index: 3, kind: input, shape index: {}]
  %s4 = inlined_call_operand.hbm [shape: bf16[256,256], index: 4, kind: input, shape index: {}]
  %s5 = inlined_call_operand.hbm [shape: f32[1,256], index: 5, kind: input, shape index: {}]
  %s6 = inlined_call_operand.hbm [shape: bf16[256,256], index: 6, kind: input, shape index: {}]
  %s7 = inlined_call_operand.hbm [shape: f32[1,256], index: 7, kind: input, shape index: {}]
  %s8 = inlined_call_operand.hbm [shape: bf16[256,256], index: 8, kind: input, shape index: {}]
  %s9 = inlined_call_operand.hbm [shape: f32[1,256], index: 9, kind: input, shape index: {}]
  %s10 = inlined_call_operand.hbm [shape: bf16[10,256,256], index: 10, kind: input, shape index: {}]
  %s11 = inlined_call_operand.hbm [shape: f32[10,1,256], index: 11, kind: input, shape index: {}]
  %s12 = inlined_call_operand.hbm [shape: bf16[10,256,256], index: 12, kind: input, shape index: {}]
  %s13 = inlined_call_operand.hbm [shape: f32[10,1,256], index: 13, kind: input, shape index: {}]
  %s14 = inlined_call_operand.hbm [shape: bf16[10,256,256], index: 14, kind: input, shape index: {}]
  %s15 = inlined_call_operand.hbm [shape: f32[10,1,256], index: 15, kind: input, shape index: {}]
  %s16 = inlined_call_operand.vmem [shape: bf16[10,256,64], index: 16, kind: input, shape index: {}]
  %s17 = inlined_call_operand.hbm [shape: f32[10,1,64], index: 17, kind: input, shape index: {}]
  %s18 = inlined_call_operand.hbm [shape: f32[8,64], index: 18, kind: output, shape index: {}]
  %s19 = sld [smem:[#allocation0]]
  $region142: #{tpu_custom_call.1} parent=0
    _
  %s21 = ssub.s32 1, %s19
  %s22 = scalar_select 0, %s21, %s19
  %24 = dma.hbm_to_smem %s0, 16, [#allocation4], [#allocation3]
  %25 = dma.done [#allocation3], 16
  %26 = sfence
  $region1: #{tpu_custom_call.1} parent=0
    #allocation5 [shape = 'u8[4096]{0}', space=vmem, size = 0x1000, scoped, tag = 'input window, operand 1, single buffered']
    #allocation6 [shape = 's32[1]{0}', space=sflag, size = 0x4, scoped, tag = 'scoped memory for tpu_custom_call.1']
    #allocation7 [shape = 's32[1]{0}', space=sflag, size = 0x4, scoped, tag = 'scoped memory for tpu_custom_call.1']
    #allocation8 [shape = 'u8[8192]{0}', space=vmem, size = 0x2000, scoped, tag = 'input window, operand 2, single buffered']
    #allocation9 [shape = 's32[1]{0}', space=sflag, size = 0x4, scoped, tag = 'scoped memory for tpu_custom_call.1']
    #allocation10 [shape = 'u8[1024]{0}', space=vmem, size = 0x400, scoped, tag = 'input window, operand 3, single buffered']
    #allocation11 [shape = 'u8[131072]{0}', space=vmem, size = 0x20000, scoped, tag = 'input window, operand 4, single buffered']
    #allocation12 [shape = 's32[1]{0}', space=sflag, size = 0x4, scoped, tag = 'scoped memory for tpu_custom_call.1']
    #allocation13 [shape = 'u8[1024]{0}', space=vmem, size = 0x400, scoped, tag = 'input window, operand 5, single buffered']
    #allocation14 [shape = 'u8[131072]{0}', space=vmem, size = 0x20000, scoped, tag = 'input window, operand 6, single buffered']
    #allocation15 [shape = 's32[1]{0}', space=sflag, size = 0x4, scoped, tag = 'scoped memory for tpu_custom_call.1']
    #allocation16 [shape = 'u8[1024]{0}', space=vmem, size = 0x400, scoped, tag = 'input window, operand 7, single buffered']
    #allocation17 [shape = 'u8[131072]{0}', space=vmem, size = 0x20000, scoped, tag = 'input window, operand 8, single buffered']
    #allocation18 [shape = 's32[1]{0}', space=sflag, size = 0x4, scoped, tag = 'scoped memory for tpu_custom_call.1']
    #allocation19 [shape = 'u8[1024]{0}', space=vmem, size = 0x400, scoped, tag = 'input window, operand 9, single buffered']
    #allocation20 [shape = 'u8[1310720]{0}', space=vmem, size = 0x140000, scoped, tag = 'input window, operand 10, single buffered']
    #allocation21 [shape = 's32[1]{0}', space=sflag, size = 0x4, scoped, tag = 'scoped memory for tpu_custom_call.1']
    #allocation22 [shape = 'u8[10240]{0}', space=vmem, size = 0x2800, scoped, tag = 'input window, operand 11, single buffered']
    #allocation23 [shape = 'u8[1310720]{0}', space=vmem, size = 0x140000, scoped, tag = 'input window, operand 12, single buffered']
    #allocation24 [shape = 's32[1]{0}', space=sflag, size = 0x4, scoped, tag = 'scoped memory for tpu_custom_call.1']
    #allocation25 [shape = 'u8[10240]{0}', space=vmem, size = 0x2800, scoped, tag = 'input window, operand 13, single buffered']
    #allocation26 [shape = 'u8[1310720]{0}', space=vmem, size = 0x140000, scoped, tag = 'input window, operand 14, single buffered']
    #allocation27 [shape = 's32[1]{0}', space=sflag, size = 0x4, scoped, tag = 'scoped memory for tpu_custom_call.1']
    #allocation28 [shape = 'u8[10240]{0}', space=vmem, size = 0x2800, scoped, tag = 'input window, operand 15, single buffered']
    #allocation29 [shape = 'u8[5120]{0}', space=vmem, size = 0x1400, scoped, tag = 'input window, operand 17, single buffered']
    #allocation30 [shape = 's32[1]{0}', space=sflag, size = 0x4, scoped, tag = 'scoped memory for tpu_custom_call.1']
    #allocation31 [shape = 'u8[4096]{0}', space=vmem, size = 0x1000, scoped, tag = 'output window, operand 0, single buffered']
    %27 = vsyncpa [#allocation6], 0
    %28 = vsyncpa [#allocation9], 0
    %29 = vsyncpa [#allocation12], 0
    %30 = vsyncpa [#allocation15], 0
    %31 = vsyncpa [#allocation18], 0
    %32 = vsyncpa [#allocation21], 0
    %33 = vsyncpa [#allocation24], 0
    %34 = vsyncpa [#allocation27], 0
    %35 = vsyncpa [#allocation30], 0
    %36 = vsyncpa [#allocation7], 0
    // Predicated region
    $region2: #{tpu_custom_call.1} parent=1 // pred_check
      _
    $region3: #{tpu_custom_call.1} parent=1 // pred_check_branch
      %38 = sbr.rel (0) target = $region5
    $region4: #{tpu_custom_call.1} parent=1 // pred_region
      %s40 = ssub.s32 128, 128
      %41 = vsyncadd [#allocation6], %s40
      %s43 = sshll.u32 [#allocation5], 4
      %s44 = int_to_ptr.vmem [resolvable:$true] %s43
      %46 = dma.hbm_to_vmem [thread:$0]  %s1, 128, %s44, [#allocation6]
    $region5: #{tpu_custom_call.1} parent=1 // pred_fallthru
      _
    // Predicated region
    $region6: #{tpu_custom_call.1} parent=1 // pred_check
      _
    $region7: #{tpu_custom_call.1} parent=1 // pred_check_branch
      %48 = sbr.rel (0) target = $region9
    $region8: #{tpu_custom_call.1} parent=1 // pred_region
      %s50 = ssub.s32 256, 256
      %51 = vsyncadd [#allocation9], %s50
      %s52 = sshll.u32 [#allocation8], 4
      %s53 = int_to_ptr.vmem [resolvable:$true] %s52
      %58 = dma.hbm_to_vmem [thread:$0]  %s2, 256, %s53, [#allocation9], 128, 128, 8
    $region9: #{tpu_custom_call.1} parent=1 // pred_fallthru
      _
    // Predicated region
    $region10: #{tpu_custom_call.1} parent=1 // pred_check
      _
    $region11: #{tpu_custom_call.1} parent=1 // pred_check_branch
      %60 = sbr.rel (0) target = $region13
    $region12: #{tpu_custom_call.1} parent=1 // pred_region
      %s62 = ssub.s32 32, 32
      %63 = vsyncadd [#allocation9], %s62
      %s65 = sshll.u32 [#allocation10], 4
      %s66 = int_to_ptr.vmem [resolvable:$true] %s65
      %68 = dma.hbm_to_vmem [thread:$0]  %s3, 32, %s66, [#allocation9]
    $region13: #{tpu_custom_call.1} parent=1 // pred_fallthru
      _
    // Predicated region
    $region14: #{tpu_custom_call.1} parent=1 // pred_check
      _
    $region15: #{tpu_custom_call.1} parent=1 // pred_check_branch
      %70 = sbr.rel (0) target = $region17
    $region16: #{tpu_custom_call.1} parent=1 // pred_region
      %s72 = ssub.s32 4096, 4096
      %73 = vsyncadd [#allocation12], %s72
      %s74 = sshll.u32 [#allocation11], 4
      %s75 = int_to_ptr.vmem [resolvable:$true] %s74
      %80 = dma.hbm_to_vmem [thread:$0]  %s4, 4096, %s75, [#allocation12], 128, 128, 8
    $region17: #{tpu_custom_call.1} parent=1 // pred_fallthru
      _
    // Predicated region
    $region18: #{tpu_custom_call.1} parent=1 // pred_check
      _
    $region19: #{tpu_custom_call.1} parent=1 // pred_check_branch
      %82 = sbr.rel (0) target = $region21
    $region20: #{tpu_custom_call.1} parent=1 // pred_region
      %s84 = ssub.s32 32, 32
      %85 = vsyncadd [#allocation12], %s84
      %s87 = sshll.u32 [#allocation13], 4
      %s88 = int_to_ptr.vmem [resolvable:$true] %s87
      %90 = dma.hbm_to_vmem [thread:$0]  %s5, 32, %s88, [#allocation12]
    $region21: #{tpu_custom_call.1} parent=1 // pred_fallthru
      _
    // Predicated region
    $region22: #{tpu_custom_call.1} parent=1 // pred_check
      _
    $region23: #{tpu_custom_call.1} parent=1 // pred_check_branch
      %92 = sbr.rel (0) target = $region25
    $region24: #{tpu_custom_call.1} parent=1 // pred_region
      %s94 = ssub.s32 4096, 4096
      %95 = vsyncadd [#allocation15], %s94
      %s96 = sshll.u32 [#allocation14], 4
      %s97 = int_to_ptr.vmem [resolvable:$true] %s96
      %102 = dma.hbm_to_vmem [thread:$0]  %s6, 4096, %s97, [#allocation15], 128, 128, 8
    $region25: #{tpu_custom_call.1} parent=1 // pred_fallthru
      _
    // Predicated region
    $region26: #{tpu_custom_call.1} parent=1 // pred_check
      _
    $region27: #{tpu_custom_call.1} parent=1 // pred_check_branch
      %104 = sbr.rel (0) target = $region29
    $region28: #{tpu_custom_call.1} parent=1 // pred_region
      %s106 = ssub.s32 32, 32
      %107 = vsyncadd [#allocation15], %s106
      %s109 = sshll.u32 [#allocation16], 4
      %s110 = int_to_ptr.vmem [resolvable:$true] %s109
      %112 = dma.hbm_to_vmem [thread:$0]  %s7, 32, %s110, [#allocation15]
    $region29: #{tpu_custom_call.1} parent=1 // pred_fallthru
      _
    // Predicated region
    $region30: #{tpu_custom_call.1} parent=1 // pred_check
      _
    $region31: #{tpu_custom_call.1} parent=1 // pred_check_branch
      %114 = sbr.rel (0) target = $region33
    $region32: #{tpu_custom_call.1} parent=1 // pred_region
      %s116 = ssub.s32 4096, 4096
      %117 = vsyncadd [#allocation18], %s116
      %s118 = sshll.u32 [#allocation17], 4
      %s119 = int_to_ptr.vmem [resolvable:$true] %s118
      %124 = dma.hbm_to_vmem [thread:$0]  %s8, 4096, %s119, [#allocation18], 128, 128, 8
    $region33: #{tpu_custom_call.1} parent=1 // pred_fallthru
      _
    // Predicated region
    $region34: #{tpu_custom_call.1} parent=1 // pred_check
      _
    $region35: #{tpu_custom_call.1} parent=1 // pred_check_branch
      %126 = sbr.rel (0) target = $region37
    $region36: #{tpu_custom_call.1} parent=1 // pred_region
      %s128 = ssub.s32 32, 32
      %129 = vsyncadd [#allocation18], %s128
      %s131 = sshll.u32 [#allocation19], 4
      %s132 = int_to_ptr.vmem [resolvable:$true] %s131
      %134 = dma.hbm_to_vmem [thread:$0]  %s9, 32, %s132, [#allocation18]
    $region37: #{tpu_custom_call.1} parent=1 // pred_fallthru
      _
    // Predicated region
    $region38: #{tpu_custom_call.1} parent=1 // pred_check
      _
    $region39: #{tpu_custom_call.1} parent=1 // pred_check_branch
      %136 = sbr.rel (0) target = $region41
    $region40: #{tpu_custom_call.1} parent=1 // pred_region
      %s138 = ssub.s32 40960, 40960
      %139 = vsyncadd [#allocation21], %s138
      %s140 = sshll.u32 [#allocation20], 4
      %s141 = int_to_ptr.vmem [resolvable:$true] %s140
      %146 = dma.hbm_to_vmem [thread:$0]  %s10, 40960, %s141, [#allocation21], 128, 128, 8
    $region41: #{tpu_custom_call.1} parent=1 // pred_fallthru
      _
    // Predicated region
    $region42: #{tpu_custom_call.1} parent=1 // pred_check
      _
    $region43: #{tpu_custom_call.1} parent=1 // pred_check_branch
      %148 = sbr.rel (0) target = $region45
    $region44: #{tpu_custom_call.1} parent=1 // pred_region
      %s150 = ssub.s32 320, 320
      %151 = vsyncadd [#allocation21], %s150
      %s152 = sshll.u32 [#allocation22], 4
      %s153 = int_to_ptr.vmem [resolvable:$true] %s152
      %158 = dma.hbm_to_vmem [thread:$0]  %s11, 320, %s153, [#allocation21], 32, 32, 2
    $region45: #{tpu_custom_call.1} parent=1 // pred_fallthru
      _
    // Predicated region
    $region46: #{tpu_custom_call.1} parent=1 // pred_check
      _
    $region47: #{tpu_custom_call.1} parent=1 // pred_check_branch
      %160 = sbr.rel (0) target = $region49
    $region48: #{tpu_custom_call.1} parent=1 // pred_region
      %s162 = ssub.s32 40960, 40960
      %163 = vsyncadd [#allocation24], %s162
      %s164 = sshll.u32 [#allocation23], 4
      %s165 = int_to_ptr.vmem [resolvable:$true] %s164
      %170 = dma.hbm_to_vmem [thread:$0]  %s12, 40960, %s165, [#allocation24], 128, 128, 8
    $region49: #{tpu_custom_call.1} parent=1 // pred_fallthru
      _
    // Predicated region
    $region50: #{tpu_custom_call.1} parent=1 // pred_check
      _
    $region51: #{tpu_custom_call.1} parent=1 // pred_check_branch
      %172 = sbr.rel (0) target = $region53
    $region52: #{tpu_custom_call.1} parent=1 // pred_region
      %s174 = ssub.s32 320, 320
      %175 = vsyncadd [#allocation24], %s174
      %s176 = sshll.u32 [#allocation25], 4
      %s177 = int_to_ptr.vmem [resolvable:$true] %s176
      %182 = dma.hbm_to_vmem [thread:$0]  %s13, 320, %s177, [#allocation24], 32, 32, 2
    $region53: #{tpu_custom_call.1} parent=1 // pred_fallthru
      _
    // Predicated region
    $region54: #{tpu_custom_call.1} parent=1 // pred_check
      _
    $region55: #{tpu_custom_call.1} parent=1 // pred_check_branch
      %184 = sbr.rel (0) target = $region57
    $region56: #{tpu_custom_call.1} parent=1 // pred_region
      %s186 = ssub.s32 40960, 40960
      %187 = vsyncadd [#allocation27], %s186
      %s188 = sshll.u32 [#allocation26], 4
      %s189 = int_to_ptr.vmem [resolvable:$true] %s188
      %194 = dma.hbm_to_vmem [thread:$0]  %s14, 40960, %s189, [#allocation27], 128, 128, 8
    $region57: #{tpu_custom_call.1} parent=1 // pred_fallthru
      _
    // Predicated region
    $region58: #{tpu_custom_call.1} parent=1 // pred_check
      _
    $region59: #{tpu_custom_call.1} parent=1 // pred_check_branch
      %196 = sbr.rel (0) target = $region61
    $region60: #{tpu_custom_call.1} parent=1 // pred_region
      %s198 = ssub.s32 320, 320
      %199 = vsyncadd [#allocation27], %s198
      %s200 = sshll.u32 [#allocation28], 4
      %s201 = int_to_ptr.vmem [resolvable:$true] %s200
      %206 = dma.hbm_to_vmem [thread:$0]  %s15, 320, %s201, [#allocation27], 32, 32, 2
    $region61: #{tpu_custom_call.1} parent=1 // pred_fallthru
      _
    // Predicated region
    $region62: #{tpu_custom_call.1} parent=1 // pred_check
      _
    $region63: #{tpu_custom_call.1} parent=1 // pred_check_branch
      %208 = sbr.rel (0) target = $region65
    $region64: #{tpu_custom_call.1} parent=1 // pred_region
      _
    $region65: #{tpu_custom_call.1} parent=1 // pred_fallthru
      _
    // Predicated region
    $region66: #{tpu_custom_call.1} parent=1 // pred_check
      _
    $region67: #{tpu_custom_call.1} parent=1 // pred_check_branch
      %210 = sbr.rel (0) target = $region69
    $region68: #{tpu_custom_call.1} parent=1 // pred_region
      %s212 = ssub.s32 160, 160
      %213 = vsyncadd [#allocation30], %s212
      %s214 = sshll.u32 [#allocation29], 4
      %s215 = int_to_ptr.vmem [resolvable:$true] %s214
      %220 = dma.hbm_to_vmem [thread:$0]  %s17, 160, %s215, [#allocation30], 16, 16, 1
    $region69: #{tpu_custom_call.1} parent=1 // pred_fallthru
      _
    // Predicated region
    $region70: #{tpu_custom_call.1} parent=1 // pred_check
      _
    $region71: #{tpu_custom_call.1} parent=1 // pred_check_branch
      %222 = sbr.rel (0) target = $region73
    $region72: #{tpu_custom_call.1} parent=1 // pred_region
      %223 = dma.done [#allocation6], 128
    $region73: #{tpu_custom_call.1} parent=1 // pred_fallthru
      _
    // Predicated region
    $region74: #{tpu_custom_call.1} parent=1 // pred_check
      _
    $region75: #{tpu_custom_call.1} parent=1 // pred_check_branch
      %225 = sbr.rel (0) target = $region77
    $region76: #{tpu_custom_call.1} parent=1 // pred_region
      %226 = dma.done [#allocation9], 256
    $region77: #{tpu_custom_call.1} parent=1 // pred_fallthru
      _
    // Predicated region
    $region78: #{tpu_custom_call.1} parent=1 // pred_check
      _
    $region79: #{tpu_custom_call.1} parent=1 // pred_check_branch
      %228 = sbr.rel (0) target = $region81
    $region80: #{tpu_custom_call.1} parent=1 // pred_region
      %229 = dma.done [#allocation9], 32
    $region81: #{tpu_custom_call.1} parent=1 // pred_fallthru
      _
    // Predicated region
    $region82: #{tpu_custom_call.1} parent=1 // pred_check
      _
    $region83: #{tpu_custom_call.1} parent=1 // pred_check_branch
      %231 = sbr.rel (0) target = $region85
    $region84: #{tpu_custom_call.1} parent=1 // pred_region
      %232 = dma.done [#allocation12], 4096
    $region85: #{tpu_custom_call.1} parent=1 // pred_fallthru
      _
    // Predicated region
    $region86: #{tpu_custom_call.1} parent=1 // pred_check
      _
    $region87: #{tpu_custom_call.1} parent=1 // pred_check_branch
      %234 = sbr.rel (0) target = $region89
    $region88: #{tpu_custom_call.1} parent=1 // pred_region
      %235 = dma.done [#allocation12], 32
    $region89: #{tpu_custom_call.1} parent=1 // pred_fallthru
      _
    // Predicated region
    $region90: #{tpu_custom_call.1} parent=1 // pred_check
      _
    $region91: #{tpu_custom_call.1} parent=1 // pred_check_branch
      %237 = sbr.rel (0) target = $region93
    $region92: #{tpu_custom_call.1} parent=1 // pred_region
      %238 = dma.done [#allocation15], 4096
    $region93: #{tpu_custom_call.1} parent=1 // pred_fallthru
      _
    // Predicated region
    $region94: #{tpu_custom_call.1} parent=1 // pred_check
      _
    $region95: #{tpu_custom_call.1} parent=1 // pred_check_branch
      %240 = sbr.rel (0) target = $region97
    $region96: #{tpu_custom_call.1} parent=1 // pred_region
      %241 = dma.done [#allocation15], 32
    $region97: #{tpu_custom_call.1} parent=1 // pred_fallthru
      _
    // Predicated region
    $region98: #{tpu_custom_call.1} parent=1 // pred_check
      _
    $region99: #{tpu_custom_call.1} parent=1 // pred_check_branch
      %243 = sbr.rel (0) target = $region101
    $region100: #{tpu_custom_call.1} parent=1 // pred_region
      %244 = dma.done [#allocation18], 4096
    $region101: #{tpu_custom_call.1} parent=1 // pred_fallthru
      _
    // Predicated region
    $region102: #{tpu_custom_call.1} parent=1 // pred_check
      _
    $region103: #{tpu_custom_call.1} parent=1 // pred_check_branch
      %246 = sbr.rel (0) target = $region105
    $region104: #{tpu_custom_call.1} parent=1 // pred_region
      %247 = dma.done [#allocation18], 32
    $region105: #{tpu_custom_call.1} parent=1 // pred_fallthru
      _
    // Predicated region
    $region106: #{tpu_custom_call.1} parent=1 // pred_check
      _
    $region107: #{tpu_custom_call.1} parent=1 // pred_check_branch
      %249 = sbr.rel (0) target = $region109
    $region108: #{tpu_custom_call.1} parent=1 // pred_region
      %250 = dma.done [#allocation21], 40960
    $region109: #{tpu_custom_call.1} parent=1 // pred_fallthru
      _
    // Predicated region
    $region110: #{tpu_custom_call.1} parent=1 // pred_check
      _
    $region111: #{tpu_custom_call.1} parent=1 // pred_check_branch
      %252 = sbr.rel (0) target = $region113
    $region112: #{tpu_custom_call.1} parent=1 // pred_region
      %253 = dma.done [#allocation21], 320
    $region113: #{tpu_custom_call.1} parent=1 // pred_fallthru
      _
    // Predicated region
    $region114: #{tpu_custom_call.1} parent=1 // pred_check
      _
    $region115: #{tpu_custom_call.1} parent=1 // pred_check_branch
      %255 = sbr.rel (0) target = $region117
    $region116: #{tpu_custom_call.1} parent=1 // pred_region
      %256 = dma.done [#allocation24], 40960
    $region117: #{tpu_custom_call.1} parent=1 // pred_fallthru
      _
    // Predicated region
    $region118: #{tpu_custom_call.1} parent=1 // pred_check
      _
    $region119: #{tpu_custom_call.1} parent=1 // pred_check_branch
      %258 = sbr.rel (0) target = $region121
    $region120: #{tpu_custom_call.1} parent=1 // pred_region
      %259 = dma.done [#allocation24], 320
    $region121: #{tpu_custom_call.1} parent=1 // pred_fallthru
      _
    // Predicated region
    $region122: #{tpu_custom_call.1} parent=1 // pred_check
      _
    $region123: #{tpu_custom_call.1} parent=1 // pred_check_branch
      %261 = sbr.rel (0) target = $region125
    $region124: #{tpu_custom_call.1} parent=1 // pred_region
      %262 = dma.done [#allocation27], 40960
    $region125: #{tpu_custom_call.1} parent=1 // pred_fallthru
      _
    // Predicated region
    $region126: #{tpu_custom_call.1} parent=1 // pred_check
      _
    $region127: #{tpu_custom_call.1} parent=1 // pred_check_branch
      %264 = sbr.rel (0) target = $region129
    $region128: #{tpu_custom_call.1} parent=1 // pred_region
      %265 = dma.done [#allocation27], 320
    $region129: #{tpu_custom_call.1} parent=1 // pred_fallthru
      _
    // Predicated region
    $region130: #{tpu_custom_call.1} parent=1 // pred_check
      _
    $region131: #{tpu_custom_call.1} parent=1 // pred_check_branch
      %267 = sbr.rel (0) target = $region133
    $region132: #{tpu_custom_call.1} parent=1 // pred_region
      %268 = dma.done [#allocation30], 160
    $region133: #{tpu_custom_call.1} parent=1 // pred_fallthru
      _
    %s270 = smul.u32 0, 8
    %v271 = vld [vmem:[#allocation5] sm:$0xff]
    %v272 = vld [vmem:[#allocation8] sm:$0xff]
    %v273 = vld [vmem:[#allocation8 + $0x8] sm:$0xff]
    %v274 = vld [vmem:[#allocation10] sm:$0x3]
    %v275 = vpack.c.bf16 %v271, %v271
    %v277 = vlaneseq
    %v278 = vshrl.u32 %v277, 7
    %v279 = vsub.s32 0, %v278
    %v280 = vrot.slane %v274, %v279
    %v281 = vlaneseq
    %v282 = vshrl.u32 %v281, 7
    %v283 = vsub.s32 1, %v282
    %v284 = vrot.slane %v274, %v283
    %v289 = vunpack.c.l.b16 %v272
    %v290 = vunpack.c.h.b16 %v272
    %v291 = vunpack.c.l.b16 %v273
    %v292 = vunpack.c.h.b16 %v273
    %v293 = vpack.c.b16 %v291, %v289
    %v294 = vpack.c.b16 %v292, %v290
    %vm297 = vcmask 130048
    %v299 = vsel %vm297, %v275, 0
    %301 = vmatprep.subr.bf16.mxu0 %v294
    %302 = vmatpush1.bf16.msra.mxu0 %v293
    %303 = vmatprep.subr.bf16.mxu0 0
    %304 = vmatpush1.bf16.msra.mxu0 0
    %305 = vmatprep.subr.bf16.mxu0 0
    %306 = vmatpush1.bf16.msra.mxu0 0
    %307 = vmatprep.subr.bf16.mxu0 0
    %308 = vmatpush1.bf16.msra.mxu0 0
    %309 = vmatprep.subr.bf16.mxu0 0
    %310 = vmatpush1.bf16.msra.mxu0 0
    %311 = vmatprep.subr.bf16.mxu0 0
    %312 = vmatpush1.bf16.msra.mxu0 0
    %313 = vmatprep.subr.bf16.mxu0 0
    %314 = vmatpush1.bf16.msra.mxu0 0
    %315 = vmatprep.subr.bf16.mxu0 0
    %316 = vmatpush1.bf16.msra.mxu0 0
    %317 = vmatprep.subr.bf16.mxu0 0
    %318 = vmatpush1.bf16.msra.mxu0 0
    %319 = vmatprep.subr.bf16.mxu0 0
    %320 = vmatpush1.bf16.msra.mxu0 0
    %321 = vmatprep.subr.bf16.mxu0 0
    %322 = vmatpush1.bf16.msra.mxu0 0
    %323 = vmatprep.subr.bf16.mxu0 0
    %324 = vmatpush1.bf16.msra.mxu0 0
    %325 = vmatprep.subr.bf16.mxu0 0
    %326 = vmatpush1.bf16.msra.mxu0 0
    %327 = vmatprep.subr.bf16.mxu0 0
    %328 = vmatpush1.bf16.msra.mxu0 0
    %329 = vmatprep.subr.bf16.mxu0 0
    %330 = vmatpush1.bf16.msra.mxu0 0
    %331 = vmatprep.subr.bf16.mxu0 0
    %332 = vmatpush1.bf16.msra.mxu0 0
    %333 = vmatprep.mubr.bf16.mxu0 0
    %334 = vmatmul.mubr.bf16.gmra.mrb[0].mxu0 %v299
    %v335 = vpop.f32.mrb[0].mxu0
    %v336 = vadd.f32 %v280, %v335
    %v337 = vpop.f32.mrb[0].mxu0
    %v338 = vadd.f32 %v284, %v337
    %v339 = vpop.f32.mrb[0].mxu0
    %v340 = vpop.f32.mrb[0].mxu0
    %341 = vdwg.mxu0
    %v342 = vmax.f32 %v336, 0.0
    %v343 = vmax.f32 %v338, 0.0
    %v344 = vld [vmem:[#allocation11] sm:$0xff]
    %v345 = vld [vmem:[#allocation11 + $0x8] sm:$0xff]
    %v346 = vld [vmem:[#allocation11 + $0x10] sm:$0xff]
    %v347 = vld [vmem:[#allocation11 + $0x18] sm:$0xff]
    %v348 = vld [vmem:[#allocation11 + $0x20] sm:$0xff]
    %v349 = vld [vmem:[#allocation11 + $0x28] sm:$0xff]
    %v350 = vld [vmem:[#allocation11 + $0x30] sm:$0xff]
    %v351 = vld [vmem:[#allocation11 + $0x38] sm:$0xff]
    %v352 = vld [vmem:[#allocation11 + $0x40] sm:$0xff]
    %v353 = vld [vmem:[#allocation11 + $0x48] sm:$0xff]
    %v354 = vld [vmem:[#allocation11 + $0x50] sm:$0xff]
    %v355 = vld [vmem:[#allocation11 + $0x58] sm:$0xff]
    %v356 = vld [vmem:[#allocation11 + $0x60] sm:$0xff]
    %v357 = vld [vmem:[#allocation11 + $0x68] sm:$0xff]
    %v358 = vld [vmem:[#allocation11 + $0x70] sm:$0xff]
    %v359 = vld [vmem:[#allocation11 + $0x78] sm:$0xff]
    %v360 = vld [vmem:[#allocation11 + $0x80] sm:$0xff]
    %v361 = vld [vmem:[#allocation11 + $0x88] sm:$0xff]
    %v362 = vld [vmem:[#allocation11 + $0x90] sm:$0xff]
    %v363 = vld [vmem:[#allocation11 + $0x98] sm:$0xff]
    %v364 = vld [vmem:[#allocation11 + $0xa0] sm:$0xff]
    %v365 = vld [vmem:[#allocation11 + $0xa8] sm:$0xff]
    %v366 = vld [vmem:[#allocation11 + $0xb0] sm:$0xff]
    %v367 = vld [vmem:[#allocation11 + $0xb8] sm:$0xff]
    %v368 = vld [vmem:[#allocation11 + $0xc0] sm:$0xff]
    %v369 = vld [vmem:[#allocation11 + $0xc8] sm:$0xff]
    %v370 = vld [vmem:[#allocation11 + $0xd0] sm:$0xff]
    %v371 = vld [vmem:[#allocation11 + $0xd8] sm:$0xff]
    %v372 = vld [vmem:[#allocation11 + $0xe0] sm:$0xff]
    %v373 = vld [vmem:[#allocation11 + $0xe8] sm:$0xff]
    %v374 = vld [vmem:[#allocation11 + $0xf0] sm:$0xff]
    %v375 = vld [vmem:[#allocation11 + $0xf8] sm:$0xff]
    %v376 = vld [vmem:[#allocation13] sm:$0x3]
    %v377 = vpack.c.bf16 %v342, %v342
    %v378 = vpack.c.bf16 %v343, %v343
    %v380 = vlaneseq
    %v381 = vshrl.u32 %v380, 7
    %v382 = vsub.s32 0, %v381
    %v383 = vrot.slane %v376, %v382
    %v384 = vlaneseq
    %v385 = vshrl.u32 %v384, 7
    %v386 = vsub.s32 1, %v385
    %v387 = vrot.slane %v376, %v386
    %v422 = vunpack.c.l.b16 %v344
    %v423 = vunpack.c.h.b16 %v344
    %v424 = vunpack.c.l.b16 %v345
    %v425 = vunpack.c.h.b16 %v345
    %v426 = vunpack.c.l.b16 %v346
    %v427 = vunpack.c.h.b16 %v346
    %v428 = vunpack.c.l.b16 %v347
    %v429 = vunpack.c.h.b16 %v347
    %v430 = vunpack.c.l.b16 %v348
    %v431 = vunpack.c.h.b16 %v348
    %v432 = vunpack.c.l.b16 %v349
    %v433 = vunpack.c.h.b16 %v349
    %v434 = vunpack.c.l.b16 %v350
    %v435 = vunpack.c.h.b16 %v350
    %v436 = vunpack.c.l.b16 %v351
    %v437 = vunpack.c.h.b16 %v351
    %v438 = vunpack.c.l.b16 %v352
    %v439 = vunpack.c.h.b16 %v352
    %v440 = vunpack.c.l.b16 %v353
    %v441 = vunpack.c.h.b16 %v353
    %v442 = vunpack.c.l.b16 %v354
    %v443 = vunpack.c.h.b16 %v354
    %v444 = vunpack.c.l.b16 %v355
    %v445 = vunpack.c.h.b16 %v355
    %v446 = vunpack.c.l.b16 %v356
    %v447 = vunpack.c.h.b16 %v356
    %v448 = vunpack.c.l.b16 %v357
    %v449 = vunpack.c.h.b16 %v357
    %v450 = vunpack.c.l.b16 %v358
    %v451 = vunpack.c.h.b16 %v358
    %v452 = vunpack.c.l.b16 %v359
    %v453 = vunpack.c.h.b16 %v359
    %v454 = vunpack.c.l.b16 %v360
    %v455 = vunpack.c.h.b16 %v360
    %v456 = vunpack.c.l.b16 %v361
    %v457 = vunpack.c.h.b16 %v361
    %v458 = vunpack.c.l.b16 %v362
    %v459 = vunpack.c.h.b16 %v362
    %v460 = vunpack.c.l.b16 %v363
    %v461 = vunpack.c.h.b16 %v363
    %v462 = vunpack.c.l.b16 %v364
    %v463 = vunpack.c.h.b16 %v364
    %v464 = vunpack.c.l.b16 %v365
    %v465 = vunpack.c.h.b16 %v365
    %v466 = vunpack.c.l.b16 %v366
    %v467 = vunpack.c.h.b16 %v366
    %v468 = vunpack.c.l.b16 %v367
    %v469 = vunpack.c.h.b16 %v367
    %v470 = vunpack.c.l.b16 %v368
    %v471 = vunpack.c.h.b16 %v368
    %v472 = vunpack.c.l.b16 %v369
    %v473 = vunpack.c.h.b16 %v369
    %v474 = vunpack.c.l.b16 %v370
    %v475 = vunpack.c.h.b16 %v370
    %v476 = vunpack.c.l.b16 %v371
    %v477 = vunpack.c.h.b16 %v371
    %v478 = vunpack.c.l.b16 %v372
    %v479 = vunpack.c.h.b16 %v372
    %v480 = vunpack.c.l.b16 %v373
    %v481 = vunpack.c.h.b16 %v373
    %v482 = vunpack.c.l.b16 %v374
    %v483 = vunpack.c.h.b16 %v374
    %v484 = vunpack.c.l.b16 %v375
    %v485 = vunpack.c.h.b16 %v375
    %v486 = vpack.c.b16 %v424, %v422
    %v487 = vpack.c.b16 %v425, %v423
    %v488 = vpack.c.b16 %v428, %v426
    %v489 = vpack.c.b16 %v429, %v427
    %v490 = vpack.c.b16 %v432, %v430
    %v491 = vpack.c.b16 %v433, %v431
    %v492 = vpack.c.b16 %v436, %v434
    %v493 = vpack.c.b16 %v437, %v435
    %v494 = vpack.c.b16 %v440, %v438
    %v495 = vpack.c.b16 %v441, %v439
    %v496 = vpack.c.b16 %v444, %v442
    %v497 = vpack.c.b16 %v445, %v443
    %v498 = vpack.c.b16 %v448, %v446
    %v499 = vpack.c.b16 %v449, %v447
    %v500 = vpack.c.b16 %v452, %v450
    %v501 = vpack.c.b16 %v453, %v451
    %v502 = vpack.c.b16 %v456, %v454
    %v503 = vpack.c.b16 %v457, %v455
    %v504 = vpack.c.b16 %v460, %v458
    %v505 = vpack.c.b16 %v461, %v459
    %v506 = vpack.c.b16 %v464, %v462
    %v507 = vpack.c.b16 %v465, %v463
    %v508 = vpack.c.b16 %v468, %v466
    %v509 = vpack.c.b16 %v469, %v467
    %v510 = vpack.c.b16 %v472, %v470
    %v511 = vpack.c.b16 %v473, %v471
    %v512 = vpack.c.b16 %v476, %v474
    %v513 = vpack.c.b16 %v477, %v475
    %v514 = vpack.c.b16 %v480, %v478
    %v515 = vpack.c.b16 %v481, %v479
    %v516 = vpack.c.b16 %v484, %v482
    %v517 = vpack.c.b16 %v485, %v483
    %550 = vmatprep.subr.bf16.mxu0 %v487
    %551 = vmatpush1.bf16.msra.mxu0 %v486
    %552 = vmatprep.subr.bf16.mxu0 %v489
    %553 = vmatpush1.bf16.msra.mxu0 %v488
    %554 = vmatprep.subr.bf16.mxu0 %v491
    %555 = vmatpush1.bf16.msra.mxu0 %v490
    %556 = vmatprep.subr.bf16.mxu0 %v493
    %557 = vmatpush1.bf16.msra.mxu0 %v492
    %558 = vmatprep.subr.bf16.mxu0 %v495
    %559 = vmatpush1.bf16.msra.mxu0 %v494
    %560 = vmatprep.subr.bf16.mxu0 %v497
    %561 = vmatpush1.bf16.msra.mxu0 %v496
    %562 = vmatprep.subr.bf16.mxu0 %v499
    %563 = vmatpush1.bf16.msra.mxu0 %v498
    %564 = vmatprep.subr.bf16.mxu0 %v501
    %565 = vmatpush1.bf16.msra.mxu0 %v500
    %566 = vmatprep.subr.bf16.mxu0 %v503
    %567 = vmatpush1.bf16.msra.mxu0 %v502
    %568 = vmatprep.subr.bf16.mxu0 %v505
    %569 = vmatpush1.bf16.msra.mxu0 %v504
    %570 = vmatprep.subr.bf16.mxu0 %v507
    %571 = vmatpush1.bf16.msra.mxu0 %v506
    %572 = vmatprep.subr.bf16.mxu0 %v509
    %573 = vmatpush1.bf16.msra.mxu0 %v508
    %574 = vmatprep.subr.bf16.mxu0 %v511
    %575 = vmatpush1.bf16.msra.mxu0 %v510
    %576 = vmatprep.subr.bf16.mxu0 %v513
    %577 = vmatpush1.bf16.msra.mxu0 %v512
    %578 = vmatprep.subr.bf16.mxu0 %v515
    %579 = vmatpush1.bf16.msra.mxu0 %v514
    %580 = vmatprep.subr.bf16.mxu0 %v517
    %581 = vmatpush1.bf16.msra.mxu0 %v516
    %582 = vmatprep.mubr.bf16.mxu0 %v378
    %583 = vmatmul.mubr.bf16.gmra.mrb[0].mxu0 %v377
    %v584 = vpop.f32.mrb[0].mxu0
    %v585 = vadd.f32 %v383, %v584
    %v586 = vpop.f32.mrb[0].mxu0
    %v587 = vadd.f32 %v387, %v586
    %v588 = vpop.f32.mrb[0].mxu0
    %v589 = vpop.f32.mrb[0].mxu0
    %590 = vdwg.mxu0
    %v591 = vmax.f32 %v585, 0.0
    %v592 = vmax.f32 %v587, 0.0
    %v593 = vld [vmem:[#allocation14] sm:$0xff]
    %v594 = vld [vmem:[#allocation14 + $0x8] sm:$0xff]
    %v595 = vld [vmem:[#allocation14 + $0x10] sm:$0xff]
    %v596 = vld [vmem:[#allocation14 + $0x18] sm:$0xff]
    %v597 = vld [vmem:[#allocation14 + $0x20] sm:$0xff]
    %v598 = vld [vmem:[#allocation14 + $0x28] sm:$0xff]
    %v599 = vld [vmem:[#allocation14 + $0x30] sm:$0xff]
    %v600 = vld [vmem:[#allocation14 + $0x38] sm:$0xff]
    %v601 = vld [vmem:[#allocation14 + $0x40] sm:$0xff]
    %v602 = vld [vmem:[#allocation14 + $0x48] sm:$0xff]
    %v603 = vld [vmem:[#allocation14 + $0x50] sm:$0xff]
    %v604 = vld [vmem:[#allocation14 + $0x58] sm:$0xff]
    %v605 = vld [vmem:[#allocation14 + $0x60] sm:$0xff]
    %v606 = vld [vmem:[#allocation14 + $0x68] sm:$0xff]
    %v607 = vld [vmem:[#allocation14 + $0x70] sm:$0xff]
    %v608 = vld [vmem:[#allocation14 + $0x78] sm:$0xff]
    %v609 = vld [vmem:[#allocation14 + $0x80] sm:$0xff]
    %v610 = vld [vmem:[#allocation14 + $0x88] sm:$0xff]
    %v611 = vld [vmem:[#allocation14 + $0x90] sm:$0xff]
    %v612 = vld [vmem:[#allocation14 + $0x98] sm:$0xff]
    %v613 = vld [vmem:[#allocation14 + $0xa0] sm:$0xff]
    %v614 = vld [vmem:[#allocation14 + $0xa8] sm:$0xff]
    %v615 = vld [vmem:[#allocation14 + $0xb0] sm:$0xff]
    %v616 = vld [vmem:[#allocation14 + $0xb8] sm:$0xff]
    %v617 = vld [vmem:[#allocation14 + $0xc0] sm:$0xff]
    %v618 = vld [vmem:[#allocation14 + $0xc8] sm:$0xff]
    %v619 = vld [vmem:[#allocation14 + $0xd0] sm:$0xff]
    %v620 = vld [vmem:[#allocation14 + $0xd8] sm:$0xff]
    %v621 = vld [vmem:[#allocation14 + $0xe0] sm:$0xff]
    %v622 = vld [vmem:[#allocation14 + $0xe8] sm:$0xff]
    %v623 = vld [vmem:[#allocation14 + $0xf0] sm:$0xff]
    %v624 = vld [vmem:[#allocation14 + $0xf8] sm:$0xff]
    %v625 = vld [vmem:[#allocation16] sm:$0x3]
    %v626 = vpack.c.bf16 %v591, %v591
    %v627 = vpack.c.bf16 %v592, %v592
    %v629 = vlaneseq
    %v630 = vshrl.u32 %v629, 7
    %v631 = vsub.s32 0, %v630
    %v632 = vrot.slane %v625, %v631
    %v633 = vlaneseq
    %v634 = vshrl.u32 %v633, 7
    %v635 = vsub.s32 1, %v634
    %v636 = vrot.slane %v625, %v635
    %v671 = vunpack.c.l.b16 %v593
    %v672 = vunpack.c.h.b16 %v593
    %v673 = vunpack.c.l.b16 %v594
    %v674 = vunpack.c.h.b16 %v594
    %v675 = vunpack.c.l.b16 %v595
    %v676 = vunpack.c.h.b16 %v595
    %v677 = vunpack.c.l.b16 %v596
    %v678 = vunpack.c.h.b16 %v596
    %v679 = vunpack.c.l.b16 %v597
    %v680 = vunpack.c.h.b16 %v597
    %v681 = vunpack.c.l.b16 %v598
    %v682 = vunpack.c.h.b16 %v598
    %v683 = vunpack.c.l.b16 %v599
    %v684 = vunpack.c.h.b16 %v599
    %v685 = vunpack.c.l.b16 %v600
    %v686 = vunpack.c.h.b16 %v600
    %v687 = vunpack.c.l.b16 %v601
    %v688 = vunpack.c.h.b16 %v601
    %v689 = vunpack.c.l.b16 %v602
    %v690 = vunpack.c.h.b16 %v602
    %v691 = vunpack.c.l.b16 %v603
    %v692 = vunpack.c.h.b16 %v603
    %v693 = vunpack.c.l.b16 %v604
    %v694 = vunpack.c.h.b16 %v604
    %v695 = vunpack.c.l.b16 %v605
    %v696 = vunpack.c.h.b16 %v605
    %v697 = vunpack.c.l.b16 %v606
    %v698 = vunpack.c.h.b16 %v606
    %v699 = vunpack.c.l.b16 %v607
    %v700 = vunpack.c.h.b16 %v607
    %v701 = vunpack.c.l.b16 %v608
    %v702 = vunpack.c.h.b16 %v608
    %v703 = vunpack.c.l.b16 %v609
    %v704 = vunpack.c.h.b16 %v609
    %v705 = vunpack.c.l.b16 %v610
    %v706 = vunpack.c.h.b16 %v610
    %v707 = vunpack.c.l.b16 %v611
    %v708 = vunpack.c.h.b16 %v611
    %v709 = vunpack.c.l.b16 %v612
    %v710 = vunpack.c.h.b16 %v612
    %v711 = vunpack.c.l.b16 %v613
    %v712 = vunpack.c.h.b16 %v613
    %v713 = vunpack.c.l.b16 %v614
    %v714 = vunpack.c.h.b16 %v614
    %v715 = vunpack.c.l.b16 %v615
    %v716 = vunpack.c.h.b16 %v615
    %v717 = vunpack.c.l.b16 %v616
    %v718 = vunpack.c.h.b16 %v616
    %v719 = vunpack.c.l.b16 %v617
    %v720 = vunpack.c.h.b16 %v617
    %v721 = vunpack.c.l.b16 %v618
    %v722 = vunpack.c.h.b16 %v618
    %v723 = vunpack.c.l.b16 %v619
    %v724 = vunpack.c.h.b16 %v619
    %v725 = vunpack.c.l.b16 %v620
    %v726 = vunpack.c.h.b16 %v620
    %v727 = vunpack.c.l.b16 %v621
    %v728 = vunpack.c.h.b16 %v621
    %v729 = vunpack.c.l.b16 %v622
    %v730 = vunpack.c.h.b16 %v622
    %v731 = vunpack.c.l.b16 %v623
    %v732 = vunpack.c.h.b16 %v623
    %v733 = vunpack.c.l.b16 %v624
    %v734 = vunpack.c.h.b16 %v624
    %v735 = vpack.c.b16 %v673, %v671
    %v736 = vpack.c.b16 %v674, %v672
    %v737 = vpack.c.b16 %v677, %v675
    %v738 = vpack.c.b16 %v678, %v676
    %v739 = vpack.c.b16 %v681, %v679
    %v740 = vpack.c.b16 %v682, %v680
    %v741 = vpack.c.b16 %v685, %v683
    %v742 = vpack.c.b16 %v686, %v684
    %v743 = vpack.c.b16 %v689, %v687
    %v744 = vpack.c.b16 %v690, %v688
    %v745 = vpack.c.b16 %v693, %v691
    %v746 = vpack.c.b16 %v694, %v692
    %v747 = vpack.c.b16 %v697, %v695
    %v748 = vpack.c.b16 %v698, %v696
    %v749 = vpack.c.b16 %v701, %v699
    %v750 = vpack.c.b16 %v702, %v700
    %v751 = vpack.c.b16 %v705, %v703
    %v752 = vpack.c.b16 %v706, %v704
    %v753 = vpack.c.b16 %v709, %v707
    %v754 = vpack.c.b16 %v710, %v708
    %v755 = vpack.c.b16 %v713, %v711
    %v756 = vpack.c.b16 %v714, %v712
    %v757 = vpack.c.b16 %v717, %v715
    %v758 = vpack.c.b16 %v718, %v716
    %v759 = vpack.c.b16 %v721, %v719
    %v760 = vpack.c.b16 %v722, %v720
    %v761 = vpack.c.b16 %v725, %v723
    %v762 = vpack.c.b16 %v726, %v724
    %v763 = vpack.c.b16 %v729, %v727
    %v764 = vpack.c.b16 %v730, %v728
    %v765 = vpack.c.b16 %v733, %v731
    %v766 = vpack.c.b16 %v734, %v732
    %799 = vmatprep.subr.bf16.mxu0 %v736
    %800 = vmatpush1.bf16.msra.mxu0 %v735
    %801 = vmatprep.subr.bf16.mxu0 %v738
    %802 = vmatpush1.bf16.msra.mxu0 %v737
    %803 = vmatprep.subr.bf16.mxu0 %v740
    %804 = vmatpush1.bf16.msra.mxu0 %v739
    %805 = vmatprep.subr.bf16.mxu0 %v742
    %806 = vmatpush1.bf16.msra.mxu0 %v741
    %807 = vmatprep.subr.bf16.mxu0 %v744
    %808 = vmatpush1.bf16.msra.mxu0 %v743
    %809 = vmatprep.subr.bf16.mxu0 %v746
    %810 = vmatpush1.bf16.msra.mxu0 %v745
    %811 = vmatprep.subr.bf16.mxu0 %v748
    %812 = vmatpush1.bf16.msra.mxu0 %v747
    %813 = vmatprep.subr.bf16.mxu0 %v750
    %814 = vmatpush1.bf16.msra.mxu0 %v749
    %815 = vmatprep.subr.bf16.mxu0 %v752
    %816 = vmatpush1.bf16.msra.mxu0 %v751
    %817 = vmatprep.subr.bf16.mxu0 %v754
    %818 = vmatpush1.bf16.msra.mxu0 %v753
    %819 = vmatprep.subr.bf16.mxu0 %v756
    %820 = vmatpush1.bf16.msra.mxu0 %v755
    %821 = vmatprep.subr.bf16.mxu0 %v758
    %822 = vmatpush1.bf16.msra.mxu0 %v757
    %823 = vmatprep.subr.bf16.mxu0 %v760
    %824 = vmatpush1.bf16.msra.mxu0 %v759
    %825 = vmatprep.subr.bf16.mxu0 %v762
    %826 = vmatpush1.bf16.msra.mxu0 %v761
    %827 = vmatprep.subr.bf16.mxu0 %v764
    %828 = vmatpush1.bf16.msra.mxu0 %v763
    %829 = vmatprep.subr.bf16.mxu0 %v766
    %830 = vmatpush1.bf16.msra.mxu0 %v765
    %831 = vmatprep.mubr.bf16.mxu0 %v627
    %832 = vmatmul.mubr.bf16.gmra.mrb[0].mxu0 %v626
    %v833 = vpop.f32.mrb[0].mxu0
    %v834 = vadd.f32 %v632, %v833
    %v835 = vpop.f32.mrb[0].mxu0
    %v836 = vadd.f32 %v636, %v835
    %v837 = vpop.f32.mrb[0].mxu0
    %v838 = vpop.f32.mrb[0].mxu0
    %839 = vdwg.mxu0
    %v840 = vmax.f32 %v834, 0.0
    %v841 = vmax.f32 %v836, 0.0
    %v842 = vld [vmem:[#allocation17] sm:$0xff]
    %v843 = vld [vmem:[#allocation17 + $0x8] sm:$0xff]
    %v844 = vld [vmem:[#allocation17 + $0x10] sm:$0xff]
    %v845 = vld [vmem:[#allocation17 + $0x18] sm:$0xff]
    %v846 = vld [vmem:[#allocation17 + $0x20] sm:$0xff]
    %v847 = vld [vmem:[#allocation17 + $0x28] sm:$0xff]
    %v848 = vld [vmem:[#allocation17 + $0x30] sm:$0xff]
    %v849 = vld [vmem:[#allocation17 + $0x38] sm:$0xff]
    %v850 = vld [vmem:[#allocation17 + $0x40] sm:$0xff]
    %v851 = vld [vmem:[#allocation17 + $0x48] sm:$0xff]
    %v852 = vld [vmem:[#allocation17 + $0x50] sm:$0xff]
    %v853 = vld [vmem:[#allocation17 + $0x58] sm:$0xff]
    %v854 = vld [vmem:[#allocation17 + $0x60] sm:$0xff]
    %v855 = vld [vmem:[#allocation17 + $0x68] sm:$0xff]
    %v856 = vld [vmem:[#allocation17 + $0x70] sm:$0xff]
    %v857 = vld [vmem:[#allocation17 + $0x78] sm:$0xff]
    %v858 = vld [vmem:[#allocation17 + $0x80] sm:$0xff]
    %v859 = vld [vmem:[#allocation17 + $0x88] sm:$0xff]
    %v860 = vld [vmem:[#allocation17 + $0x90] sm:$0xff]
    %v861 = vld [vmem:[#allocation17 + $0x98] sm:$0xff]
    %v862 = vld [vmem:[#allocation17 + $0xa0] sm:$0xff]
    %v863 = vld [vmem:[#allocation17 + $0xa8] sm:$0xff]
    %v864 = vld [vmem:[#allocation17 + $0xb0] sm:$0xff]
    %v865 = vld [vmem:[#allocation17 + $0xb8] sm:$0xff]
    %v866 = vld [vmem:[#allocation17 + $0xc0] sm:$0xff]
    %v867 = vld [vmem:[#allocation17 + $0xc8] sm:$0xff]
    %v868 = vld [vmem:[#allocation17 + $0xd0] sm:$0xff]
    %v869 = vld [vmem:[#allocation17 + $0xd8] sm:$0xff]
    %v870 = vld [vmem:[#allocation17 + $0xe0] sm:$0xff]
    %v871 = vld [vmem:[#allocation17 + $0xe8] sm:$0xff]
    %v872 = vld [vmem:[#allocation17 + $0xf0] sm:$0xff]
    %v873 = vld [vmem:[#allocation17 + $0xf8] sm:$0xff]
    %v874 = vld [vmem:[#allocation19] sm:$0x3]
    %v875 = vpack.c.bf16 %v840, %v840
    %v876 = vpack.c.bf16 %v841, %v841
    %v878 = vlaneseq
    %v879 = vshrl.u32 %v878, 7
    %v880 = vsub.s32 0, %v879
    %v881 = vrot.slane %v874, %v880
    %v882 = vlaneseq
    %v883 = vshrl.u32 %v882, 7
    %v884 = vsub.s32 1, %v883
    %v885 = vrot.slane %v874, %v884
    %v920 = vunpack.c.l.b16 %v842
    %v921 = vunpack.c.h.b16 %v842
    %v922 = vunpack.c.l.b16 %v843
    %v923 = vunpack.c.h.b16 %v843
    %v924 = vunpack.c.l.b16 %v844
    %v925 = vunpack.c.h.b16 %v844
    %v926 = vunpack.c.l.b16 %v845
    %v927 = vunpack.c.h.b16 %v845
    %v928 = vunpack.c.l.b16 %v846
    %v929 = vunpack.c.h.b16 %v846
    %v930 = vunpack.c.l.b16 %v847
    %v931 = vunpack.c.h.b16 %v847
    %v932 = vunpack.c.l.b16 %v848
    %v933 = vunpack.c.h.b16 %v848
    %v934 = vunpack.c.l.b16 %v849
    %v935 = vunpack.c.h.b16 %v849
    %v936 = vunpack.c.l.b16 %v850
    %v937 = vunpack.c.h.b16 %v850
    %v938 = vunpack.c.l.b16 %v851
    %v939 = vunpack.c.h.b16 %v851
    %v940 = vunpack.c.l.b16 %v852
    %v941 = vunpack.c.h.b16 %v852
    %v942 = vunpack.c.l.b16 %v853
    %v943 = vunpack.c.h.b16 %v853
    %v944 = vunpack.c.l.b16 %v854
    %v945 = vunpack.c.h.b16 %v854
    %v946 = vunpack.c.l.b16 %v855
    %v947 = vunpack.c.h.b16 %v855
    %v948 = vunpack.c.l.b16 %v856
    %v949 = vunpack.c.h.b16 %v856
    %v950 = vunpack.c.l.b16 %v857
    %v951 = vunpack.c.h.b16 %v857
    %v952 = vunpack.c.l.b16 %v858
    %v953 = vunpack.c.h.b16 %v858
    %v954 = vunpack.c.l.b16 %v859
    %v955 = vunpack.c.h.b16 %v859
    %v956 = vunpack.c.l.b16 %v860
    %v957 = vunpack.c.h.b16 %v860
    %v958 = vunpack.c.l.b16 %v861
    %v959 = vunpack.c.h.b16 %v861
    %v960 = vunpack.c.l.b16 %v862
    %v961 = vunpack.c.h.b16 %v862
    %v962 = vunpack.c.l.b16 %v863
    %v963 = vunpack.c.h.b16 %v863
    %v964 = vunpack.c.l.b16 %v864
    %v965 = vunpack.c.h.b16 %v864
    %v966 = vunpack.c.l.b16 %v865
    %v967 = vunpack.c.h.b16 %v865
    %v968 = vunpack.c.l.b16 %v866
    %v969 = vunpack.c.h.b16 %v866
    %v970 = vunpack.c.l.b16 %v867
    %v971 = vunpack.c.h.b16 %v867
    %v972 = vunpack.c.l.b16 %v868
    %v973 = vunpack.c.h.b16 %v868
    %v974 = vunpack.c.l.b16 %v869
    %v975 = vunpack.c.h.b16 %v869
    %v976 = vunpack.c.l.b16 %v870
    %v977 = vunpack.c.h.b16 %v870
    %v978 = vunpack.c.l.b16 %v871
    %v979 = vunpack.c.h.b16 %v871
    %v980 = vunpack.c.l.b16 %v872
    %v981 = vunpack.c.h.b16 %v872
    %v982 = vunpack.c.l.b16 %v873
    %v983 = vunpack.c.h.b16 %v873
    %v984 = vpack.c.b16 %v922, %v920
    %v985 = vpack.c.b16 %v923, %v921
    %v986 = vpack.c.b16 %v926, %v924
    %v987 = vpack.c.b16 %v927, %v925
    %v988 = vpack.c.b16 %v930, %v928
    %v989 = vpack.c.b16 %v931, %v929
    %v990 = vpack.c.b16 %v934, %v932
    %v991 = vpack.c.b16 %v935, %v933
    %v992 = vpack.c.b16 %v938, %v936
    %v993 = vpack.c.b16 %v939, %v937
    %v994 = vpack.c.b16 %v942, %v940
    %v995 = vpack.c.b16 %v943, %v941
    %v996 = vpack.c.b16 %v946, %v944
    %v997 = vpack.c.b16 %v947, %v945
    %v998 = vpack.c.b16 %v950, %v948
    %v999 = vpack.c.b16 %v951, %v949
    %v1000 = vpack.c.b16 %v954, %v952
    %v1001 = vpack.c.b16 %v955, %v953
    %v1002 = vpack.c.b16 %v958, %v956
    %v1003 = vpack.c.b16 %v959, %v957
    %v1004 = vpack.c.b16 %v962, %v960
    %v1005 = vpack.c.b16 %v963, %v961
    %v1006 = vpack.c.b16 %v966, %v964
    %v1007 = vpack.c.b16 %v967, %v965
    %v1008 = vpack.c.b16 %v970, %v968
    %v1009 = vpack.c.b16 %v971, %v969
    %v1010 = vpack.c.b16 %v974, %v972
    %v1011 = vpack.c.b16 %v975, %v973
    %v1012 = vpack.c.b16 %v978, %v976
    %v1013 = vpack.c.b16 %v979, %v977
    %v1014 = vpack.c.b16 %v982, %v980
    %v1015 = vpack.c.b16 %v983, %v981
    %1048 = vmatprep.subr.bf16.mxu0 %v985
    %1049 = vmatpush1.bf16.msra.mxu0 %v984
    %1050 = vmatprep.subr.bf16.mxu0 %v987
    %1051 = vmatpush1.bf16.msra.mxu0 %v986
    %1052 = vmatprep.subr.bf16.mxu0 %v989
    %1053 = vmatpush1.bf16.msra.mxu0 %v988
    %1054 = vmatprep.subr.bf16.mxu0 %v991
    %1055 = vmatpush1.bf16.msra.mxu0 %v990
    %1056 = vmatprep.subr.bf16.mxu0 %v993
    %1057 = vmatpush1.bf16.msra.mxu0 %v992
    %1058 = vmatprep.subr.bf16.mxu0 %v995
    %1059 = vmatpush1.bf16.msra.mxu0 %v994
    %1060 = vmatprep.subr.bf16.mxu0 %v997
    %1061 = vmatpush1.bf16.msra.mxu0 %v996
    %1062 = vmatprep.subr.bf16.mxu0 %v999
    %1063 = vmatpush1.bf16.msra.mxu0 %v998
    %1064 = vmatprep.subr.bf16.mxu0 %v1001
    %1065 = vmatpush1.bf16.msra.mxu0 %v1000
    %1066 = vmatprep.subr.bf16.mxu0 %v1003
    %1067 = vmatpush1.bf16.msra.mxu0 %v1002
    %1068 = vmatprep.subr.bf16.mxu0 %v1005
    %1069 = vmatpush1.bf16.msra.mxu0 %v1004
    %1070 = vmatprep.subr.bf16.mxu0 %v1007
    %1071 = vmatpush1.bf16.msra.mxu0 %v1006
    %1072 = vmatprep.subr.bf16.mxu0 %v1009
    %1073 = vmatpush1.bf16.msra.mxu0 %v1008
    %1074 = vmatprep.subr.bf16.mxu0 %v1011
    %1075 = vmatpush1.bf16.msra.mxu0 %v1010
    %1076 = vmatprep.subr.bf16.mxu0 %v1013
    %1077 = vmatpush1.bf16.msra.mxu0 %v1012
    %1078 = vmatprep.subr.bf16.mxu0 %v1015
    %1079 = vmatpush1.bf16.msra.mxu0 %v1014
    %1080 = vmatprep.mubr.bf16.mxu0 %v876
    %1081 = vmatmul.mubr.bf16.gmra.mrb[0].mxu0 %v875
    %v1082 = vpop.f32.mrb[0].mxu0
    %v1083 = vadd.f32 %v881, %v1082
    %v1084 = vpop.f32.mrb[0].mxu0
    %v1085 = vadd.f32 %v885, %v1084
    %v1086 = vpop.f32.mrb[0].mxu0
    %v1087 = vpop.f32.mrb[0].mxu0
    %1088 = vdwg.mxu0
    %v1089 = vmax.f32 %v1083, 0.0
    %v1090 = vmax.f32 %v1085, 0.0
    %1091 = vst [vmem:[#allocation2] sm:$0xff] %v1089
    %1092 = vst [vmem:[#allocation2 + $0x8] sm:$0xff] %v1090
    %s1093 = sld [smem:[#allocation4 + %s270]]
    %v1094 = vld [vmem:[#allocation2] ss:$8 sm:$0x3]
    %s1095 = smul.u32 %s1093, 64
    %s1096 = smul.addr %s1095, 4
    %s1097 = scalar_lea.vmem [#allocation20], %s1096
    %v1098 = vld [vmem:[%s1097] sm:$0xff]
    %v1099 = vld [vmem:[%s1097 + $0x8] sm:$0xff]
    %v1100 = vld [vmem:[%s1097 + $0x10] sm:$0xff]
    %v1101 = vld [vmem:[%s1097 + $0x18] sm:$0xff]
    %v1102 = vld [vmem:[%s1097 + $0x20] sm:$0xff]
    %v1103 = vld [vmem:[%s1097 + $0x28] sm:$0xff]
    %v1104 = vld [vmem:[%s1097 + $0x30] sm:$0xff]
    %v1105 = vld [vmem:[%s1097 + $0x38] sm:$0xff]
    %v1106 = vld [vmem:[%s1097 + $0x40] sm:$0xff]
    %v1107 = vld [vmem:[%s1097 + $0x48] sm:$0xff]
    %v1108 = vld [vmem:[%s1097 + $0x50] sm:$0xff]
    %v1109 = vld [vmem:[%s1097 + $0x58] sm:$0xff]
    %v1110 = vld [vmem:[%s1097 + $0x60] sm:$0xff]
    %v1111 = vld [vmem:[%s1097 + $0x68] sm:$0xff]
    %v1112 = vld [vmem:[%s1097 + $0x70] sm:$0xff]
    %v1113 = vld [vmem:[%s1097 + $0x78] sm:$0xff]
    %v1114 = vld [vmem:[%s1097 + $0x80] sm:$0xff]
    %v1115 = vld [vmem:[%s1097 + $0x88] sm:$0xff]
    %v1116 = vld [vmem:[%s1097 + $0x90] sm:$0xff]
    %v1117 = vld [vmem:[%s1097 + $0x98] sm:$0xff]
    %v1118 = vld [vmem:[%s1097 + $0xa0] sm:$0xff]
    %v1119 = vld [vmem:[%s1097 + $0xa8] sm:$0xff]
    %v1120 = vld [vmem:[%s1097 + $0xb0] sm:$0xff]
    %v1121 = vld [vmem:[%s1097 + $0xb8] sm:$0xff]
    %v1122 = vld [vmem:[%s1097 + $0xc0] sm:$0xff]
    %v1123 = vld [vmem:[%s1097 + $0xc8] sm:$0xff]
    %v1124 = vld [vmem:[%s1097 + $0xd0] sm:$0xff]
    %v1125 = vld [vmem:[%s1097 + $0xd8] sm:$0xff]
    %v1126 = vld [vmem:[%s1097 + $0xe0] sm:$0xff]
    %v1127 = vld [vmem:[%s1097 + $0xe8] sm:$0xff]
    %v1128 = vld [vmem:[%s1097 + $0xf0] sm:$0xff]
    %v1129 = vld [vmem:[%s1097 + $0xf8] sm:$0xff]
    %s1130 = smul.u32 %s1093, 2
    %s1131 = scalar_lea.vmem [#allocation22], %s1130
    %v1132 = vld [vmem:[%s1131] sm:$0x3]
    %v1134 = vlaneseq
    %v1135 = vshrl.u32 %v1134, 7
    %v1136 = vsub.s32 0, %v1135
    %v1137 = vrot.slane %v1094, %v1136
    %v1138 = vlaneseq
    %v1139 = vshrl.u32 %v1138, 7
    %v1140 = vsub.s32 1, %v1139
    %v1141 = vrot.slane %v1094, %v1140
    %v1144 = vpack.c.bf16 %v1137, %v1137
    %v1145 = vpack.c.bf16 %v1141, %v1141
    %v1178 = vunpack.c.l.b16 %v1098
    %v1179 = vunpack.c.h.b16 %v1098
    %v1180 = vunpack.c.l.b16 %v1099
    %v1181 = vunpack.c.h.b16 %v1099
    %v1182 = vunpack.c.l.b16 %v1100
    %v1183 = vunpack.c.h.b16 %v1100
    %v1184 = vunpack.c.l.b16 %v1101
    %v1185 = vunpack.c.h.b16 %v1101
    %v1186 = vunpack.c.l.b16 %v1102
    %v1187 = vunpack.c.h.b16 %v1102
    %v1188 = vunpack.c.l.b16 %v1103
    %v1189 = vunpack.c.h.b16 %v1103
    %v1190 = vunpack.c.l.b16 %v1104
    %v1191 = vunpack.c.h.b16 %v1104
    %v1192 = vunpack.c.l.b16 %v1105
    %v1193 = vunpack.c.h.b16 %v1105
    %v1194 = vunpack.c.l.b16 %v1106
    %v1195 = vunpack.c.h.b16 %v1106
    %v1196 = vunpack.c.l.b16 %v1107
    %v1197 = vunpack.c.h.b16 %v1107
    %v1198 = vunpack.c.l.b16 %v1108
    %v1199 = vunpack.c.h.b16 %v1108
    %v1200 = vunpack.c.l.b16 %v1109
    %v1201 = vunpack.c.h.b16 %v1109
    %v1202 = vunpack.c.l.b16 %v1110
    %v1203 = vunpack.c.h.b16 %v1110
    %v1204 = vunpack.c.l.b16 %v1111
    %v1205 = vunpack.c.h.b16 %v1111
    %v1206 = vunpack.c.l.b16 %v1112
    %v1207 = vunpack.c.h.b16 %v1112
    %v1208 = vunpack.c.l.b16 %v1113
    %v1209 = vunpack.c.h.b16 %v1113
    %v1210 = vunpack.c.l.b16 %v1114
    %v1211 = vunpack.c.h.b16 %v1114
    %v1212 = vunpack.c.l.b16 %v1115
    %v1213 = vunpack.c.h.b16 %v1115
    %v1214 = vunpack.c.l.b16 %v1116
    %v1215 = vunpack.c.h.b16 %v1116
    %v1216 = vunpack.c.l.b16 %v1117
    %v1217 = vunpack.c.h.b16 %v1117
    %v1218 = vunpack.c.l.b16 %v1118
    %v1219 = vunpack.c.h.b16 %v1118
    %v1220 = vunpack.c.l.b16 %v1119
    %v1221 = vunpack.c.h.b16 %v1119
    %v1222 = vunpack.c.l.b16 %v1120
    %v1223 = vunpack.c.h.b16 %v1120
    %v1224 = vunpack.c.l.b16 %v1121
    %v1225 = vunpack.c.h.b16 %v1121
    %v1226 = vunpack.c.l.b16 %v1122
    %v1227 = vunpack.c.h.b16 %v1122
    %v1228 = vunpack.c.l.b16 %v1123
    %v1229 = vunpack.c.h.b16 %v1123
    %v1230 = vunpack.c.l.b16 %v1124
    %v1231 = vunpack.c.h.b16 %v1124
    %v1232 = vunpack.c.l.b16 %v1125
    %v1233 = vunpack.c.h.b16 %v1125
    %v1234 = vunpack.c.l.b16 %v1126
    %v1235 = vunpack.c.h.b16 %v1126
    %v1236 = vunpack.c.l.b16 %v1127
    %v1237 = vunpack.c.h.b16 %v1127
    %v1238 = vunpack.c.l.b16 %v1128
    %v1239 = vunpack.c.h.b16 %v1128
    %v1240 = vunpack.c.l.b16 %v1129
    %v1241 = vunpack.c.h.b16 %v1129
    %v1242 = vpack.c.b16 %v1180, %v1178
    %v1243 = vpack.c.b16 %v1181, %v1179
    %v1244 = vpack.c.b16 %v1184, %v1182
    %v1245 = vpack.c.b16 %v1185, %v1183
    %v1246 = vpack.c.b16 %v1188, %v1186
    %v1247 = vpack.c.b16 %v1189, %v1187
    %v1248 = vpack.c.b16 %v1192, %v1190
    %v1249 = vpack.c.b16 %v1193, %v1191
    %v1250 = vpack.c.b16 %v1196, %v1194
    %v1251 = vpack.c.b16 %v1197, %v1195
    %v1252 = vpack.c.b16 %v1200, %v1198
    %v1253 = vpack.c.b16 %v1201, %v1199
    %v1254 = vpack.c.b16 %v1204, %v1202
    %v1255 = vpack.c.b16 %v1205, %v1203
    %v1256 = vpack.c.b16 %v1208, %v1206
    %v1257 = vpack.c.b16 %v1209, %v1207
    %v1258 = vpack.c.b16 %v1212, %v1210
    %v1259 = vpack.c.b16 %v1213, %v1211
    %v1260 = vpack.c.b16 %v1216, %v1214
    %v1261 = vpack.c.b16 %v1217, %v1215
    %v1262 = vpack.c.b16 %v1220, %v1218
    %v1263 = vpack.c.b16 %v1221, %v1219
    %v1264 = vpack.c.b16 %v1224, %v1222
    %v1265 = vpack.c.b16 %v1225, %v1223
    %v1266 = vpack.c.b16 %v1228, %v1226
    %v1267 = vpack.c.b16 %v1229, %v1227
    %v1268 = vpack.c.b16 %v1232, %v1230
    %v1269 = vpack.c.b16 %v1233, %v1231
    %v1270 = vpack.c.b16 %v1236, %v1234
    %v1271 = vpack.c.b16 %v1237, %v1235
    %v1272 = vpack.c.b16 %v1240, %v1238
    %v1273 = vpack.c.b16 %v1241, %v1239
    %v1307 = vlaneseq
    %v1308 = vshrl.u32 %v1307, 7
    %v1309 = vsub.s32 0, %v1308
    %v1310 = vrot.slane %v1132, %v1309
    %v1311 = vlaneseq
    %v1312 = vshrl.u32 %v1311, 7
    %v1313 = vsub.s32 1, %v1312
    %v1314 = vrot.slane %v1132, %v1313
    %1317 = vmatprep.subr.bf16.mxu0 %v1243
    %1318 = vmatpush1.bf16.msra.mxu0 %v1242
    %1319 = vmatprep.subr.bf16.mxu0 %v1245
    %1320 = vmatpush1.bf16.msra.mxu0 %v1244
    %1321 = vmatprep.subr.bf16.mxu0 %v1247
    %1322 = vmatpush1.bf16.msra.mxu0 %v1246
    %1323 = vmatprep.subr.bf16.mxu0 %v1249
    %1324 = vmatpush1.bf16.msra.mxu0 %v1248
    %1325 = vmatprep.subr.bf16.mxu0 %v1251
    %1326 = vmatpush1.bf16.msra.mxu0 %v1250
    %1327 = vmatprep.subr.bf16.mxu0 %v1253
    %1328 = vmatpush1.bf16.msra.mxu0 %v1252
    %1329 = vmatprep.subr.bf16.mxu0 %v1255
    %1330 = vmatpush1.bf16.msra.mxu0 %v1254
    %1331 = vmatprep.subr.bf16.mxu0 %v1257
    %1332 = vmatpush1.bf16.msra.mxu0 %v1256
    %1333 = vmatprep.subr.bf16.mxu0 %v1259
    %1334 = vmatpush1.bf16.msra.mxu0 %v1258
    %1335 = vmatprep.subr.bf16.mxu0 %v1261
    %1336 = vmatpush1.bf16.msra.mxu0 %v1260
    %1337 = vmatprep.subr.bf16.mxu0 %v1263
    %1338 = vmatpush1.bf16.msra.mxu0 %v1262
    %1339 = vmatprep.subr.bf16.mxu0 %v1265
    %1340 = vmatpush1.bf16.msra.mxu0 %v1264
    %1341 = vmatprep.subr.bf16.mxu0 %v1267
    %1342 = vmatpush1.bf16.msra.mxu0 %v1266
    %1343 = vmatprep.subr.bf16.mxu0 %v1269
    %1344 = vmatpush1.bf16.msra.mxu0 %v1268
    %1345 = vmatprep.subr.bf16.mxu0 %v1271
    %1346 = vmatpush1.bf16.msra.mxu0 %v1270
    %1347 = vmatprep.subr.bf16.mxu0 %v1273
    %1348 = vmatpush1.bf16.msra.mxu0 %v1272
    %1349 = vmatprep.mubr.bf16.mxu0 %v1145
    %1350 = vmatmul.mubr.bf16.gmra.mrb[0].mxu0 %v1144
    %v1351 = vpop.f32.mrb[0].mxu0
    %v1352 = vadd.f32 %v1310, %v1351
    %v1353 = vpop.f32.mrb[0].mxu0
    %v1354 = vadd.f32 %v1314, %v1353
    %v1355 = vpop.f32.mrb[0].mxu0
    %v1356 = vpop.f32.mrb[0].mxu0
    %1357 = vdwg.mxu0
    %v1358 = vmax.f32 %v1352, 0.0
    %v1359 = vmax.f32 %v1354, 0.0
    %s1360 = smul.addr %s1095, 4
    %s1361 = scalar_lea.vmem [#allocation23], %s1360
    %v1362 = vld [vmem:[%s1361] sm:$0xff]
    %v1363 = vld [vmem:[%s1361 + $0x8] sm:$0xff]
    %v1364 = vld [vmem:[%s1361 + $0x10] sm:$0xff]
    %v1365 = vld [vmem:[%s1361 + $0x18] sm:$0xff]
    %v1366 = vld [vmem:[%s1361 + $0x20] sm:$0xff]
    %v1367 = vld [vmem:[%s1361 + $0x28] sm:$0xff]
    %v1368 = vld [vmem:[%s1361 + $0x30] sm:$0xff]
    %v1369 = vld [vmem:[%s1361 + $0x38] sm:$0xff]
    %v1370 = vld [vmem:[%s1361 + $0x40] sm:$0xff]
    %v1371 = vld [vmem:[%s1361 + $0x48] sm:$0xff]
    %v1372 = vld [vmem:[%s1361 + $0x50] sm:$0xff]
    %v1373 = vld [vmem:[%s1361 + $0x58] sm:$0xff]
    %v1374 = vld [vmem:[%s1361 + $0x60] sm:$0xff]
    %v1375 = vld [vmem:[%s1361 + $0x68] sm:$0xff]
    %v1376 = vld [vmem:[%s1361 + $0x70] sm:$0xff]
    %v1377 = vld [vmem:[%s1361 + $0x78] sm:$0xff]
    %v1378 = vld [vmem:[%s1361 + $0x80] sm:$0xff]
    %v1379 = vld [vmem:[%s1361 + $0x88] sm:$0xff]
    %v1380 = vld [vmem:[%s1361 + $0x90] sm:$0xff]
    %v1381 = vld [vmem:[%s1361 + $0x98] sm:$0xff]
    %v1382 = vld [vmem:[%s1361 + $0xa0] sm:$0xff]
    %v1383 = vld [vmem:[%s1361 + $0xa8] sm:$0xff]
    %v1384 = vld [vmem:[%s1361 + $0xb0] sm:$0xff]
    %v1385 = vld [vmem:[%s1361 + $0xb8] sm:$0xff]
    %v1386 = vld [vmem:[%s1361 + $0xc0] sm:$0xff]
    %v1387 = vld [vmem:[%s1361 + $0xc8] sm:$0xff]
    %v1388 = vld [vmem:[%s1361 + $0xd0] sm:$0xff]
    %v1389 = vld [vmem:[%s1361 + $0xd8] sm:$0xff]
    %v1390 = vld [vmem:[%s1361 + $0xe0] sm:$0xff]
    %v1391 = vld [vmem:[%s1361 + $0xe8] sm:$0xff]
    %v1392 = vld [vmem:[%s1361 + $0xf0] sm:$0xff]
    %v1393 = vld [vmem:[%s1361 + $0xf8] sm:$0xff]
    %s1394 = scalar_lea.vmem [#allocation25], %s1130
    %v1395 = vld [vmem:[%s1394] sm:$0x3]
    %v1396 = vpack.c.bf16 %v1358, %v1358
    %v1397 = vpack.c.bf16 %v1359, %v1359
    %v1430 = vunpack.c.l.b16 %v1362
    %v1431 = vunpack.c.h.b16 %v1362
    %v1432 = vunpack.c.l.b16 %v1363
    %v1433 = vunpack.c.h.b16 %v1363
    %v1434 = vunpack.c.l.b16 %v1364
    %v1435 = vunpack.c.h.b16 %v1364
    %v1436 = vunpack.c.l.b16 %v1365
    %v1437 = vunpack.c.h.b16 %v1365
    %v1438 = vunpack.c.l.b16 %v1366
    %v1439 = vunpack.c.h.b16 %v1366
    %v1440 = vunpack.c.l.b16 %v1367
    %v1441 = vunpack.c.h.b16 %v1367
    %v1442 = vunpack.c.l.b16 %v1368
    %v1443 = vunpack.c.h.b16 %v1368
    %v1444 = vunpack.c.l.b16 %v1369
    %v1445 = vunpack.c.h.b16 %v1369
    %v1446 = vunpack.c.l.b16 %v1370
    %v1447 = vunpack.c.h.b16 %v1370
    %v1448 = vunpack.c.l.b16 %v1371
    %v1449 = vunpack.c.h.b16 %v1371
    %v1450 = vunpack.c.l.b16 %v1372
    %v1451 = vunpack.c.h.b16 %v1372
    %v1452 = vunpack.c.l.b16 %v1373
    %v1453 = vunpack.c.h.b16 %v1373
    %v1454 = vunpack.c.l.b16 %v1374
    %v1455 = vunpack.c.h.b16 %v1374
    %v1456 = vunpack.c.l.b16 %v1375
    %v1457 = vunpack.c.h.b16 %v1375
    %v1458 = vunpack.c.l.b16 %v1376
    %v1459 = vunpack.c.h.b16 %v1376
    %v1460 = vunpack.c.l.b16 %v1377
    %v1461 = vunpack.c.h.b16 %v1377
    %v1462 = vunpack.c.l.b16 %v1378
    %v1463 = vunpack.c.h.b16 %v1378
    %v1464 = vunpack.c.l.b16 %v1379
    %v1465 = vunpack.c.h.b16 %v1379
    %v1466 = vunpack.c.l.b16 %v1380
    %v1467 = vunpack.c.h.b16 %v1380
    %v1468 = vunpack.c.l.b16 %v1381
    %v1469 = vunpack.c.h.b16 %v1381
    %v1470 = vunpack.c.l.b16 %v1382
    %v1471 = vunpack.c.h.b16 %v1382
    %v1472 = vunpack.c.l.b16 %v1383
    %v1473 = vunpack.c.h.b16 %v1383
    %v1474 = vunpack.c.l.b16 %v1384
    %v1475 = vunpack.c.h.b16 %v1384
    %v1476 = vunpack.c.l.b16 %v1385
    %v1477 = vunpack.c.h.b16 %v1385
    %v1478 = vunpack.c.l.b16 %v1386
    %v1479 = vunpack.c.h.b16 %v1386
    %v1480 = vunpack.c.l.b16 %v1387
    %v1481 = vunpack.c.h.b16 %v1387
    %v1482 = vunpack.c.l.b16 %v1388
    %v1483 = vunpack.c.h.b16 %v1388
    %v1484 = vunpack.c.l.b16 %v1389
    %v1485 = vunpack.c.h.b16 %v1389
    %v1486 = vunpack.c.l.b16 %v1390
    %v1487 = vunpack.c.h.b16 %v1390
    %v1488 = vunpack.c.l.b16 %v1391
    %v1489 = vunpack.c.h.b16 %v1391
    %v1490 = vunpack.c.l.b16 %v1392
    %v1491 = vunpack.c.h.b16 %v1392
    %v1492 = vunpack.c.l.b16 %v1393
    %v1493 = vunpack.c.h.b16 %v1393
    %v1494 = vpack.c.b16 %v1432, %v1430
    %v1495 = vpack.c.b16 %v1433, %v1431
    %v1496 = vpack.c.b16 %v1436, %v1434
    %v1497 = vpack.c.b16 %v1437, %v1435
    %v1498 = vpack.c.b16 %v1440, %v1438
    %v1499 = vpack.c.b16 %v1441, %v1439
    %v1500 = vpack.c.b16 %v1444, %v1442
    %v1501 = vpack.c.b16 %v1445, %v1443
    %v1502 = vpack.c.b16 %v1448, %v1446
    %v1503 = vpack.c.b16 %v1449, %v1447
    %v1504 = vpack.c.b16 %v1452, %v1450
    %v1505 = vpack.c.b16 %v1453, %v1451
    %v1506 = vpack.c.b16 %v1456, %v1454
    %v1507 = vpack.c.b16 %v1457, %v1455
    %v1508 = vpack.c.b16 %v1460, %v1458
    %v1509 = vpack.c.b16 %v1461, %v1459
    %v1510 = vpack.c.b16 %v1464, %v1462
    %v1511 = vpack.c.b16 %v1465, %v1463
    %v1512 = vpack.c.b16 %v1468, %v1466
    %v1513 = vpack.c.b16 %v1469, %v1467
    %v1514 = vpack.c.b16 %v1472, %v1470
    %v1515 = vpack.c.b16 %v1473, %v1471
    %v1516 = vpack.c.b16 %v1476, %v1474
    %v1517 = vpack.c.b16 %v1477, %v1475
    %v1518 = vpack.c.b16 %v1480, %v1478
    %v1519 = vpack.c.b16 %v1481, %v1479
    %v1520 = vpack.c.b16 %v1484, %v1482
    %v1521 = vpack.c.b16 %v1485, %v1483
    %v1522 = vpack.c.b16 %v1488, %v1486
    %v1523 = vpack.c.b16 %v1489, %v1487
    %v1524 = vpack.c.b16 %v1492, %v1490
    %v1525 = vpack.c.b16 %v1493, %v1491
    %v1559 = vlaneseq
    %v1560 = vshrl.u32 %v1559, 7
    %v1561 = vsub.s32 0, %v1560
    %v1562 = vrot.slane %v1395, %v1561
    %v1563 = vlaneseq
    %v1564 = vshrl.u32 %v1563, 7
    %v1565 = vsub.s32 1, %v1564
    %v1566 = vrot.slane %v1395, %v1565
    %1569 = vmatprep.subr.bf16.mxu0 %v1495
    %1570 = vmatpush1.bf16.msra.mxu0 %v1494
    %1571 = vmatprep.subr.bf16.mxu0 %v1497
    %1572 = vmatpush1.bf16.msra.mxu0 %v1496
    %1573 = vmatprep.subr.bf16.mxu0 %v1499
    %1574 = vmatpush1.bf16.msra.mxu0 %v1498
    %1575 = vmatprep.subr.bf16.mxu0 %v1501
    %1576 = vmatpush1.bf16.msra.mxu0 %v1500
    %1577 = vmatprep.subr.bf16.mxu0 %v1503
    %1578 = vmatpush1.bf16.msra.mxu0 %v1502
    %1579 = vmatprep.subr.bf16.mxu0 %v1505
    %1580 = vmatpush1.bf16.msra.mxu0 %v1504
    %1581 = vmatprep.subr.bf16.mxu0 %v1507
    %1582 = vmatpush1.bf16.msra.mxu0 %v1506
    %1583 = vmatprep.subr.bf16.mxu0 %v1509
    %1584 = vmatpush1.bf16.msra.mxu0 %v1508
    %1585 = vmatprep.subr.bf16.mxu0 %v1511
    %1586 = vmatpush1.bf16.msra.mxu0 %v1510
    %1587 = vmatprep.subr.bf16.mxu0 %v1513
    %1588 = vmatpush1.bf16.msra.mxu0 %v1512
    %1589 = vmatprep.subr.bf16.mxu0 %v1515
    %1590 = vmatpush1.bf16.msra.mxu0 %v1514
    %1591 = vmatprep.subr.bf16.mxu0 %v1517
    %1592 = vmatpush1.bf16.msra.mxu0 %v1516
    %1593 = vmatprep.subr.bf16.mxu0 %v1519
    %1594 = vmatpush1.bf16.msra.mxu0 %v1518
    %1595 = vmatprep.subr.bf16.mxu0 %v1521
    %1596 = vmatpush1.bf16.msra.mxu0 %v1520
    %1597 = vmatprep.subr.bf16.mxu0 %v1523
    %1598 = vmatpush1.bf16.msra.mxu0 %v1522
    %1599 = vmatprep.subr.bf16.mxu0 %v1525
    %1600 = vmatpush1.bf16.msra.mxu0 %v1524
    %1601 = vmatprep.mubr.bf16.mxu0 %v1397
    %1602 = vmatmul.mubr.bf16.gmra.mrb[0].mxu0 %v1396
    %v1603 = vpop.f32.mrb[0].mxu0
    %v1604 = vadd.f32 %v1562, %v1603
    %v1605 = vpop.f32.mrb[0].mxu0
    %v1606 = vadd.f32 %v1566, %v1605
    %v1607 = vpop.f32.mrb[0].mxu0
    %v1608 = vpop.f32.mrb[0].mxu0
    %1609 = vdwg.mxu0
    %v1610 = vmax.f32 %v1604, 0.0
    %v1611 = vmax.f32 %v1606, 0.0
    %s1612 = smul.addr %s1095, 4
    %s1613 = scalar_lea.vmem [#allocation26], %s1612
    %v1614 = vld [vmem:[%s1613] sm:$0xff]
    %v1615 = vld [vmem:[%s1613 + $0x8] sm:$0xff]
    %v1616 = vld [vmem:[%s1613 + $0x10] sm:$0xff]
    %v1617 = vld [vmem:[%s1613 + $0x18] sm:$0xff]
    %v1618 = vld [vmem:[%s1613 + $0x20] sm:$0xff]
    %v1619 = vld [vmem:[%s1613 + $0x28] sm:$0xff]
    %v1620 = vld [vmem:[%s1613 + $0x30] sm:$0xff]
    %v1621 = vld [vmem:[%s1613 + $0x38] sm:$0xff]
    %v1622 = vld [vmem:[%s1613 + $0x40] sm:$0xff]
    %v1623 = vld [vmem:[%s1613 + $0x48] sm:$0xff]
    %v1624 = vld [vmem:[%s1613 + $0x50] sm:$0xff]
    %v1625 = vld [vmem:[%s1613 + $0x58] sm:$0xff]
    %v1626 = vld [vmem:[%s1613 + $0x60] sm:$0xff]
    %v1627 = vld [vmem:[%s1613 + $0x68] sm:$0xff]
    %v1628 = vld [vmem:[%s1613 + $0x70] sm:$0xff]
    %v1629 = vld [vmem:[%s1613 + $0x78] sm:$0xff]
    %v1630 = vld [vmem:[%s1613 + $0x80] sm:$0xff]
    %v1631 = vld [vmem:[%s1613 + $0x88] sm:$0xff]
    %v1632 = vld [vmem:[%s1613 + $0x90] sm:$0xff]
    %v1633 = vld [vmem:[%s1613 + $0x98] sm:$0xff]
    %v1634 = vld [vmem:[%s1613 + $0xa0] sm:$0xff]
    %v1635 = vld [vmem:[%s1613 + $0xa8] sm:$0xff]
    %v1636 = vld [vmem:[%s1613 + $0xb0] sm:$0xff]
    %v1637 = vld [vmem:[%s1613 + $0xb8] sm:$0xff]
    %v1638 = vld [vmem:[%s1613 + $0xc0] sm:$0xff]
    %v1639 = vld [vmem:[%s1613 + $0xc8] sm:$0xff]
    %v1640 = vld [vmem:[%s1613 + $0xd0] sm:$0xff]
    %v1641 = vld [vmem:[%s1613 + $0xd8] sm:$0xff]
    %v1642 = vld [vmem:[%s1613 + $0xe0] sm:$0xff]
    %v1643 = vld [vmem:[%s1613 + $0xe8] sm:$0xff]
    %v1644 = vld [vmem:[%s1613 + $0xf0] sm:$0xff]
    %v1645 = vld [vmem:[%s1613 + $0xf8] sm:$0xff]
    %s1646 = scalar_lea.vmem [#allocation28], %s1130
    %v1647 = vld [vmem:[%s1646] sm:$0x3]
    %v1648 = vpack.c.bf16 %v1610, %v1610
    %v1649 = vpack.c.bf16 %v1611, %v1611
    %v1682 = vunpack.c.l.b16 %v1614
    %v1683 = vunpack.c.h.b16 %v1614
    %v1684 = vunpack.c.l.b16 %v1615
    %v1685 = vunpack.c.h.b16 %v1615
    %v1686 = vunpack.c.l.b16 %v1616
    %v1687 = vunpack.c.h.b16 %v1616
    %v1688 = vunpack.c.l.b16 %v1617
    %v1689 = vunpack.c.h.b16 %v1617
    %v1690 = vunpack.c.l.b16 %v1618
    %v1691 = vunpack.c.h.b16 %v1618
    %v1692 = vunpack.c.l.b16 %v1619
    %v1693 = vunpack.c.h.b16 %v1619
    %v1694 = vunpack.c.l.b16 %v1620
    %v1695 = vunpack.c.h.b16 %v1620
    %v1696 = vunpack.c.l.b16 %v1621
    %v1697 = vunpack.c.h.b16 %v1621
    %v1698 = vunpack.c.l.b16 %v1622
    %v1699 = vunpack.c.h.b16 %v1622
    %v1700 = vunpack.c.l.b16 %v1623
    %v1701 = vunpack.c.h.b16 %v1623
    %v1702 = vunpack.c.l.b16 %v1624
    %v1703 = vunpack.c.h.b16 %v1624
    %v1704 = vunpack.c.l.b16 %v1625
    %v1705 = vunpack.c.h.b16 %v1625
    %v1706 = vunpack.c.l.b16 %v1626
    %v1707 = vunpack.c.h.b16 %v1626
    %v1708 = vunpack.c.l.b16 %v1627
    %v1709 = vunpack.c.h.b16 %v1627
    %v1710 = vunpack.c.l.b16 %v1628
    %v1711 = vunpack.c.h.b16 %v1628
    %v1712 = vunpack.c.l.b16 %v1629
    %v1713 = vunpack.c.h.b16 %v1629
    %v1714 = vunpack.c.l.b16 %v1630
    %v1715 = vunpack.c.h.b16 %v1630
    %v1716 = vunpack.c.l.b16 %v1631
    %v1717 = vunpack.c.h.b16 %v1631
    %v1718 = vunpack.c.l.b16 %v1632
    %v1719 = vunpack.c.h.b16 %v1632
    %v1720 = vunpack.c.l.b16 %v1633
    %v1721 = vunpack.c.h.b16 %v1633
    %v1722 = vunpack.c.l.b16 %v1634
    %v1723 = vunpack.c.h.b16 %v1634
    %v1724 = vunpack.c.l.b16 %v1635
    %v1725 = vunpack.c.h.b16 %v1635
    %v1726 = vunpack.c.l.b16 %v1636
    %v1727 = vunpack.c.h.b16 %v1636
    %v1728 = vunpack.c.l.b16 %v1637
    %v1729 = vunpack.c.h.b16 %v1637
    %v1730 = vunpack.c.l.b16 %v1638
    %v1731 = vunpack.c.h.b16 %v1638
    %v1732 = vunpack.c.l.b16 %v1639
    %v1733 = vunpack.c.h.b16 %v1639
    %v1734 = vunpack.c.l.b16 %v1640
    %v1735 = vunpack.c.h.b16 %v1640
    %v1736 = vunpack.c.l.b16 %v1641
    %v1737 = vunpack.c.h.b16 %v1641
    %v1738 = vunpack.c.l.b16 %v1642
    %v1739 = vunpack.c.h.b16 %v1642
    %v1740 = vunpack.c.l.b16 %v1643
    %v1741 = vunpack.c.h.b16 %v1643
    %v1742 = vunpack.c.l.b16 %v1644
    %v1743 = vunpack.c.h.b16 %v1644
    %v1744 = vunpack.c.l.b16 %v1645
    %v1745 = vunpack.c.h.b16 %v1645
    %v1746 = vpack.c.b16 %v1684, %v1682
    %v1747 = vpack.c.b16 %v1685, %v1683
    %v1748 = vpack.c.b16 %v1688, %v1686
    %v1749 = vpack.c.b16 %v1689, %v1687
    %v1750 = vpack.c.b16 %v1692, %v1690
    %v1751 = vpack.c.b16 %v1693, %v1691
    %v1752 = vpack.c.b16 %v1696, %v1694
    %v1753 = vpack.c.b16 %v1697, %v1695
    %v1754 = vpack.c.b16 %v1700, %v1698
    %v1755 = vpack.c.b16 %v1701, %v1699
    %v1756 = vpack.c.b16 %v1704, %v1702
    %v1757 = vpack.c.b16 %v1705, %v1703
    %v1758 = vpack.c.b16 %v1708, %v1706
    %v1759 = vpack.c.b16 %v1709, %v1707
    %v1760 = vpack.c.b16 %v1712, %v1710
    %v1761 = vpack.c.b16 %v1713, %v1711
    %v1762 = vpack.c.b16 %v1716, %v1714
    %v1763 = vpack.c.b16 %v1717, %v1715
    %v1764 = vpack.c.b16 %v1720, %v1718
    %v1765 = vpack.c.b16 %v1721, %v1719
    %v1766 = vpack.c.b16 %v1724, %v1722
    %v1767 = vpack.c.b16 %v1725, %v1723
    %v1768 = vpack.c.b16 %v1728, %v1726
    %v1769 = vpack.c.b16 %v1729, %v1727
    %v1770 = vpack.c.b16 %v1732, %v1730
    %v1771 = vpack.c.b16 %v1733, %v1731
    %v1772 = vpack.c.b16 %v1736, %v1734
    %v1773 = vpack.c.b16 %v1737, %v1735
    %v1774 = vpack.c.b16 %v1740, %v1738
    %v1775 = vpack.c.b16 %v1741, %v1739
    %v1776 = vpack.c.b16 %v1744, %v1742
    %v1777 = vpack.c.b16 %v1745, %v1743
    %v1811 = vlaneseq
    %v1812 = vshrl.u32 %v1811, 7
    %v1813 = vsub.s32 0, %v1812
    %v1814 = vrot.slane %v1647, %v1813
    %v1815 = vlaneseq
    %v1816 = vshrl.u32 %v1815, 7
    %v1817 = vsub.s32 1, %v1816
    %v1818 = vrot.slane %v1647, %v1817
    %1821 = vmatprep.subr.bf16.mxu0 %v1747
    %1822 = vmatpush1.bf16.msra.mxu0 %v1746
    %1823 = vmatprep.subr.bf16.mxu0 %v1749
    %1824 = vmatpush1.bf16.msra.mxu0 %v1748
    %1825 = vmatprep.subr.bf16.mxu0 %v1751
    %1826 = vmatpush1.bf16.msra.mxu0 %v1750
    %1827 = vmatprep.subr.bf16.mxu0 %v1753
    %1828 = vmatpush1.bf16.msra.mxu0 %v1752
    %1829 = vmatprep.subr.bf16.mxu0 %v1755
    %1830 = vmatpush1.bf16.msra.mxu0 %v1754
    %1831 = vmatprep.subr.bf16.mxu0 %v1757
    %1832 = vmatpush1.bf16.msra.mxu0 %v1756
    %1833 = vmatprep.subr.bf16.mxu0 %v1759
    %1834 = vmatpush1.bf16.msra.mxu0 %v1758
    %1835 = vmatprep.subr.bf16.mxu0 %v1761
    %1836 = vmatpush1.bf16.msra.mxu0 %v1760
    %1837 = vmatprep.subr.bf16.mxu0 %v1763
    %1838 = vmatpush1.bf16.msra.mxu0 %v1762
    %1839 = vmatprep.subr.bf16.mxu0 %v1765
    %1840 = vmatpush1.bf16.msra.mxu0 %v1764
    %1841 = vmatprep.subr.bf16.mxu0 %v1767
    %1842 = vmatpush1.bf16.msra.mxu0 %v1766
    %1843 = vmatprep.subr.bf16.mxu0 %v1769
    %1844 = vmatpush1.bf16.msra.mxu0 %v1768
    %1845 = vmatprep.subr.bf16.mxu0 %v1771
    %1846 = vmatpush1.bf16.msra.mxu0 %v1770
    %1847 = vmatprep.subr.bf16.mxu0 %v1773
    %1848 = vmatpush1.bf16.msra.mxu0 %v1772
    %1849 = vmatprep.subr.bf16.mxu0 %v1775
    %1850 = vmatpush1.bf16.msra.mxu0 %v1774
    %1851 = vmatprep.subr.bf16.mxu0 %v1777
    %1852 = vmatpush1.bf16.msra.mxu0 %v1776
    %1853 = vmatprep.mubr.bf16.mxu0 %v1649
    %1854 = vmatmul.mubr.bf16.gmra.mrb[0].mxu0 %v1648
    %v1855 = vpop.f32.mrb[0].mxu0
    %v1856 = vadd.f32 %v1814, %v1855
    %v1857 = vpop.f32.mrb[0].mxu0
    %v1858 = vadd.f32 %v1818, %v1857
    %v1859 = vpop.f32.mrb[0].mxu0
    %v1860 = vpop.f32.mrb[0].mxu0
    %1861 = vdwg.mxu0
    %v1862 = vmax.f32 %v1856, 0.0
    %v1863 = vmax.f32 %v1858, 0.0
    %s1864 = smul.u32 %s1093, 32
    %s1865 = smul.addr %s1864, 4
    %s1866 = scalar_lea.vmem %s16, %s1865
    %v1867 = vld [vmem:[%s1866] sm:$0xf]
    %v1868 = vld [vmem:[%s1866 + $0x4] sm:$0xf]
    %v1869 = vld [vmem:[%s1866 + $0x8] sm:$0xf]
    %v1870 = vld [vmem:[%s1866 + $0xc] sm:$0xf]
    %v1871 = vld [vmem:[%s1866 + $0x10] sm:$0xf]
    %v1872 = vld [vmem:[%s1866 + $0x14] sm:$0xf]
    %v1873 = vld [vmem:[%s1866 + $0x18] sm:$0xf]
    %v1874 = vld [vmem:[%s1866 + $0x1c] sm:$0xf]
    %v1875 = vld [vmem:[%s1866 + $0x20] sm:$0xf]
    %v1876 = vld [vmem:[%s1866 + $0x24] sm:$0xf]
    %v1877 = vld [vmem:[%s1866 + $0x28] sm:$0xf]
    %v1878 = vld [vmem:[%s1866 + $0x2c] sm:$0xf]
    %v1879 = vld [vmem:[%s1866 + $0x30] sm:$0xf]
    %v1880 = vld [vmem:[%s1866 + $0x34] sm:$0xf]
    %v1881 = vld [vmem:[%s1866 + $0x38] sm:$0xf]
    %v1882 = vld [vmem:[%s1866 + $0x3c] sm:$0xf]
    %v1883 = vld [vmem:[%s1866 + $0x40] sm:$0xf]
    %v1884 = vld [vmem:[%s1866 + $0x44] sm:$0xf]
    %v1885 = vld [vmem:[%s1866 + $0x48] sm:$0xf]
    %v1886 = vld [vmem:[%s1866 + $0x4c] sm:$0xf]
    %v1887 = vld [vmem:[%s1866 + $0x50] sm:$0xf]
    %v1888 = vld [vmem:[%s1866 + $0x54] sm:$0xf]
    %v1889 = vld [vmem:[%s1866 + $0x58] sm:$0xf]
    %v1890 = vld [vmem:[%s1866 + $0x5c] sm:$0xf]
    %v1891 = vld [vmem:[%s1866 + $0x60] sm:$0xf]
    %v1892 = vld [vmem:[%s1866 + $0x64] sm:$0xf]
    %v1893 = vld [vmem:[%s1866 + $0x68] sm:$0xf]
    %v1894 = vld [vmem:[%s1866 + $0x6c] sm:$0xf]
    %v1895 = vld [vmem:[%s1866 + $0x70] sm:$0xf]
    %v1896 = vld [vmem:[%s1866 + $0x74] sm:$0xf]
    %v1897 = vld [vmem:[%s1866 + $0x78] sm:$0xf]
    %v1898 = vld [vmem:[%s1866 + $0x7c] sm:$0xf]
    %s1899 = scalar_lea.vmem [#allocation29], %s1093
    %v1900 = vld [vmem:[%s1899] sm:$0x1]
    %v1901 = vpack.c.bf16 %v1862, %v1862
    %v1902 = vpack.c.bf16 %v1863, %v1863
    %v1935 = vunpack.c.l.b16 %v1867
    %v1936 = vunpack.c.l.b16 %v1868
    %v1937 = vunpack.c.l.b16 %v1869
    %v1938 = vunpack.c.l.b16 %v1870
    %v1939 = vunpack.c.l.b16 %v1871
    %v1940 = vunpack.c.l.b16 %v1872
    %v1941 = vunpack.c.l.b16 %v1873
    %v1942 = vunpack.c.l.b16 %v1874
    %v1943 = vunpack.c.l.b16 %v1875
    %v1944 = vunpack.c.l.b16 %v1876
    %v1945 = vunpack.c.l.b16 %v1877
    %v1946 = vunpack.c.l.b16 %v1878
    %v1947 = vunpack.c.l.b16 %v1879
    %v1948 = vunpack.c.l.b16 %v1880
    %v1949 = vunpack.c.l.b16 %v1881
    %v1950 = vunpack.c.l.b16 %v1882
    %v1951 = vunpack.c.l.b16 %v1883
    %v1952 = vunpack.c.l.b16 %v1884
    %v1953 = vunpack.c.l.b16 %v1885
    %v1954 = vunpack.c.l.b16 %v1886
    %v1955 = vunpack.c.l.b16 %v1887
    %v1956 = vunpack.c.l.b16 %v1888
    %v1957 = vunpack.c.l.b16 %v1889
    %v1958 = vunpack.c.l.b16 %v1890
    %v1959 = vunpack.c.l.b16 %v1891
    %v1960 = vunpack.c.l.b16 %v1892
    %v1961 = vunpack.c.l.b16 %v1893
    %v1962 = vunpack.c.l.b16 %v1894
    %v1963 = vunpack.c.l.b16 %v1895
    %v1964 = vunpack.c.l.b16 %v1896
    %v1965 = vunpack.c.l.b16 %v1897
    %v1966 = vunpack.c.l.b16 %v1898
    %v1967 = vpack.c.b16 %v1936, %v1935
    %v1968 = vpack.c.b16 %v1938, %v1937
    %v1969 = vpack.c.b16 %v1940, %v1939
    %v1970 = vpack.c.b16 %v1942, %v1941
    %v1971 = vpack.c.b16 %v1944, %v1943
    %v1972 = vpack.c.b16 %v1946, %v1945
    %v1973 = vpack.c.b16 %v1948, %v1947
    %v1974 = vpack.c.b16 %v1950, %v1949
    %v1975 = vpack.c.b16 %v1952, %v1951
    %v1976 = vpack.c.b16 %v1954, %v1953
    %v1977 = vpack.c.b16 %v1956, %v1955
    %v1978 = vpack.c.b16 %v1958, %v1957
    %v1979 = vpack.c.b16 %v1960, %v1959
    %v1980 = vpack.c.b16 %v1962, %v1961
    %v1981 = vpack.c.b16 %v1964, %v1963
    %v1982 = vpack.c.b16 %v1966, %v1965
    %1999 = vmatprep.subr.bf16.mxu0 0
    %2000 = vmatpush1.bf16.msra.mxu0 %v1967
    %2001 = vmatprep.subr.bf16.mxu0 0
    %2002 = vmatpush1.bf16.msra.mxu0 %v1968
    %2003 = vmatprep.subr.bf16.mxu0 0
    %2004 = vmatpush1.bf16.msra.mxu0 %v1969
    %2005 = vmatprep.subr.bf16.mxu0 0
    %2006 = vmatpush1.bf16.msra.mxu0 %v1970
    %2007 = vmatprep.subr.bf16.mxu0 0
    %2008 = vmatpush1.bf16.msra.mxu0 %v1971
    %2009 = vmatprep.subr.bf16.mxu0 0
    %2010 = vmatpush1.bf16.msra.mxu0 %v1972
    %2011 = vmatprep.subr.bf16.mxu0 0
    %2012 = vmatpush1.bf16.msra.mxu0 %v1973
    %2013 = vmatprep.subr.bf16.mxu0 0
    %2014 = vmatpush1.bf16.msra.mxu0 %v1974
    %2015 = vmatprep.subr.bf16.mxu0 0
    %2016 = vmatpush1.bf16.msra.mxu0 %v1975
    %2017 = vmatprep.subr.bf16.mxu0 0
    %2018 = vmatpush1.bf16.msra.mxu0 %v1976
    %2019 = vmatprep.subr.bf16.mxu0 0
    %2020 = vmatpush1.bf16.msra.mxu0 %v1977
    %2021 = vmatprep.subr.bf16.mxu0 0
    %2022 = vmatpush1.bf16.msra.mxu0 %v1978
    %2023 = vmatprep.subr.bf16.mxu0 0
    %2024 = vmatpush1.bf16.msra.mxu0 %v1979
    %2025 = vmatprep.subr.bf16.mxu0 0
    %2026 = vmatpush1.bf16.msra.mxu0 %v1980
    %2027 = vmatprep.subr.bf16.mxu0 0
    %2028 = vmatpush1.bf16.msra.mxu0 %v1981
    %2029 = vmatprep.subr.bf16.mxu0 0
    %2030 = vmatpush1.bf16.msra.mxu0 %v1982
    %2031 = vmatprep.mubr.bf16.mxu0 %v1902
    %2032 = vmatmul.mubr.bf16.gmra.mrb[0].mxu0 %v1901
    %v2033 = vpop.f32.mrb[0].mxu0
    %v2034 = vadd.f32 %v1900, %v2033
    %v2035 = vpop.f32.mrb[0].mxu0
    %v2036 = vpop.f32.mrb[0].mxu0
    %v2037 = vpop.f32.mrb[0].mxu0
    %2038 = vdwg.mxu0
    %vm2039 = vcmask 516096
    %2040 = vst.msk [vmem:[#allocation31] sm:$0x1] %vm2039, %v2034
    %s2041 = sadd.s32 %s270, 1
    %s2042 = sld [smem:[#allocation4 + %s2041]]
    %s2043 = scalar_lea.vmem [#allocation2], 1
    %v2044 = vld [vmem:[%s2043] ss:$8 sm:$0x3]
    %s2045 = smul.u32 %s2042, 64
    %s2046 = smul.addr %s2045, 4
    %s2047 = scalar_lea.vmem [#allocation20], %s2046
    %v2048 = vld [vmem:[%s2047] sm:$0xff]
    %v2049 = vld [vmem:[%s2047 + $0x8] sm:$0xff]
    %v2050 = vld [vmem:[%s2047 + $0x10] sm:$0xff]
    %v2051 = vld [vmem:[%s2047 + $0x18] sm:$0xff]
    %v2052 = vld [vmem:[%s2047 + $0x20] sm:$0xff]
    %v2053 = vld [vmem:[%s2047 + $0x28] sm:$0xff]
    %v2054 = vld [vmem:[%s2047 + $0x30] sm:$0xff]
    %v2055 = vld [vmem:[%s2047 + $0x38] sm:$0xff]
    %v2056 = vld [vmem:[%s2047 + $0x40] sm:$0xff]
    %v2057 = vld [vmem:[%s2047 + $0x48] sm:$0xff]
    %v2058 = vld [vmem:[%s2047 + $0x50] sm:$0xff]
    %v2059 = vld [vmem:[%s2047 + $0x58] sm:$0xff]
    %v2060 = vld [vmem:[%s2047 + $0x60] sm:$0xff]
    %v2061 = vld [vmem:[%s2047 + $0x68] sm:$0xff]
    %v2062 = vld [vmem:[%s2047 + $0x70] sm:$0xff]
    %v2063 = vld [vmem:[%s2047 + $0x78] sm:$0xff]
    %v2064 = vld [vmem:[%s2047 + $0x80] sm:$0xff]
    %v2065 = vld [vmem:[%s2047 + $0x88] sm:$0xff]
    %v2066 = vld [vmem:[%s2047 + $0x90] sm:$0xff]
    %v2067 = vld [vmem:[%s2047 + $0x98] sm:$0xff]
    %v2068 = vld [vmem:[%s2047 + $0xa0] sm:$0xff]
    %v2069 = vld [vmem:[%s2047 + $0xa8] sm:$0xff]
    %v2070 = vld [vmem:[%s2047 + $0xb0] sm:$0xff]
    %v2071 = vld [vmem:[%s2047 + $0xb8] sm:$0xff]
    %v2072 = vld [vmem:[%s2047 + $0xc0] sm:$0xff]
    %v2073 = vld [vmem:[%s2047 + $0xc8] sm:$0xff]
    %v2074 = vld [vmem:[%s2047 + $0xd0] sm:$0xff]
    %v2075 = vld [vmem:[%s2047 + $0xd8] sm:$0xff]
    %v2076 = vld [vmem:[%s2047 + $0xe0] sm:$0xff]
    %v2077 = vld [vmem:[%s2047 + $0xe8] sm:$0xff]
    %v2078 = vld [vmem:[%s2047 + $0xf0] sm:$0xff]
    %v2079 = vld [vmem:[%s2047 + $0xf8] sm:$0xff]
    %s2080 = smul.u32 %s2042, 2
    %s2081 = scalar_lea.vmem [#allocation22], %s2080
    %v2082 = vld [vmem:[%s2081] sm:$0x3]
    %v2084 = vlaneseq
    %v2085 = vshrl.u32 %v2084, 7
    %v2086 = vsub.s32 0, %v2085
    %v2087 = vrot.slane %v2044, %v2086
    %v2088 = vlaneseq
    %v2089 = vshrl.u32 %v2088, 7
    %v2090 = vsub.s32 1, %v2089
    %v2091 = vrot.slane %v2044, %v2090
    %v2094 = vpack.c.bf16 %v2087, %v2087
    %v2095 = vpack.c.bf16 %v2091, %v2091
    %v2128 = vunpack.c.l.b16 %v2048
    %v2129 = vunpack.c.h.b16 %v2048
    %v2130 = vunpack.c.l.b16 %v2049
    %v2131 = vunpack.c.h.b16 %v2049
    %v2132 = vunpack.c.l.b16 %v2050
    %v2133 = vunpack.c.h.b16 %v2050
    %v2134 = vunpack.c.l.b16 %v2051
    %v2135 = vunpack.c.h.b16 %v2051
    %v2136 = vunpack.c.l.b16 %v2052
    %v2137 = vunpack.c.h.b16 %v2052
    %v2138 = vunpack.c.l.b16 %v2053
    %v2139 = vunpack.c.h.b16 %v2053
    %v2140 = vunpack.c.l.b16 %v2054
    %v2141 = vunpack.c.h.b16 %v2054
    %v2142 = vunpack.c.l.b16 %v2055
    %v2143 = vunpack.c.h.b16 %v2055
    %v2144 = vunpack.c.l.b16 %v2056
    %v2145 = vunpack.c.h.b16 %v2056
    %v2146 = vunpack.c.l.b16 %v2057
    %v2147 = vunpack.c.h.b16 %v2057
    %v2148 = vunpack.c.l.b16 %v2058
    %v2149 = vunpack.c.h.b16 %v2058
    %v2150 = vunpack.c.l.b16 %v2059
    %v2151 = vunpack.c.h.b16 %v2059
    %v2152 = vunpack.c.l.b16 %v2060
    %v2153 = vunpack.c.h.b16 %v2060
    %v2154 = vunpack.c.l.b16 %v2061
    %v2155 = vunpack.c.h.b16 %v2061
    %v2156 = vunpack.c.l.b16 %v2062
    %v2157 = vunpack.c.h.b16 %v2062
    %v2158 = vunpack.c.l.b16 %v2063
    %v2159 = vunpack.c.h.b16 %v2063
    %v2160 = vunpack.c.l.b16 %v2064
    %v2161 = vunpack.c.h.b16 %v2064
    %v2162 = vunpack.c.l.b16 %v2065
    %v2163 = vunpack.c.h.b16 %v2065
    %v2164 = vunpack.c.l.b16 %v2066
    %v2165 = vunpack.c.h.b16 %v2066
    %v2166 = vunpack.c.l.b16 %v2067
    %v2167 = vunpack.c.h.b16 %v2067
    %v2168 = vunpack.c.l.b16 %v2068
    %v2169 = vunpack.c.h.b16 %v2068
    %v2170 = vunpack.c.l.b16 %v2069
    %v2171 = vunpack.c.h.b16 %v2069
    %v2172 = vunpack.c.l.b16 %v2070
    %v2173 = vunpack.c.h.b16 %v2070
    %v2174 = vunpack.c.l.b16 %v2071
    %v2175 = vunpack.c.h.b16 %v2071
    %v2176 = vunpack.c.l.b16 %v2072
    %v2177 = vunpack.c.h.b16 %v2072
    %v2178 = vunpack.c.l.b16 %v2073
    %v2179 = vunpack.c.h.b16 %v2073
    %v2180 = vunpack.c.l.b16 %v2074
    %v2181 = vunpack.c.h.b16 %v2074
    %v2182 = vunpack.c.l.b16 %v2075
    %v2183 = vunpack.c.h.b16 %v2075
    %v2184 = vunpack.c.l.b16 %v2076
    %v2185 = vunpack.c.h.b16 %v2076
    %v2186 = vunpack.c.l.b16 %v2077
    %v2187 = vunpack.c.h.b16 %v2077
    %v2188 = vunpack.c.l.b16 %v2078
    %v2189 = vunpack.c.h.b16 %v2078
    %v2190 = vunpack.c.l.b16 %v2079
    %v2191 = vunpack.c.h.b16 %v2079
    %v2192 = vpack.c.b16 %v2130, %v2128
    %v2193 = vpack.c.b16 %v2131, %v2129
    %v2194 = vpack.c.b16 %v2134, %v2132
    %v2195 = vpack.c.b16 %v2135, %v2133
    %v2196 = vpack.c.b16 %v2138, %v2136
    %v2197 = vpack.c.b16 %v2139, %v2137
    %v2198 = vpack.c.b16 %v2142, %v2140
    %v2199 = vpack.c.b16 %v2143, %v2141
    %v2200 = vpack.c.b16 %v2146, %v2144
    %v2201 = vpack.c.b16 %v2147, %v2145
    %v2202 = vpack.c.b16 %v2150, %v2148
    %v2203 = vpack.c.b16 %v2151, %v2149
    %v2204 = vpack.c.b16 %v2154, %v2152
    %v2205 = vpack.c.b16 %v2155, %v2153
    %v2206 = vpack.c.b16 %v2158, %v2156
    %v2207 = vpack.c.b16 %v2159, %v2157
    %v2208 = vpack.c.b16 %v2162, %v2160
    %v2209 = vpack.c.b16 %v2163, %v2161
    %v2210 = vpack.c.b16 %v2166, %v2164
    %v2211 = vpack.c.b16 %v2167, %v2165
    %v2212 = vpack.c.b16 %v2170, %v2168
    %v2213 = vpack.c.b16 %v2171, %v2169
    %v2214 = vpack.c.b16 %v2174, %v2172
    %v2215 = vpack.c.b16 %v2175, %v2173
    %v2216 = vpack.c.b16 %v2178, %v2176
    %v2217 = vpack.c.b16 %v2179, %v2177
    %v2218 = vpack.c.b16 %v2182, %v2180
    %v2219 = vpack.c.b16 %v2183, %v2181
    %v2220 = vpack.c.b16 %v2186, %v2184
    %v2221 = vpack.c.b16 %v2187, %v2185
    %v2222 = vpack.c.b16 %v2190, %v2188
    %v2223 = vpack.c.b16 %v2191, %v2189
    %v2257 = vlaneseq
    %v2258 = vshrl.u32 %v2257, 7
    %v2259 = vsub.s32 0, %v2258
    %v2260 = vrot.slane %v2082, %v2259
    %v2261 = vlaneseq
    %v2262 = vshrl.u32 %v2261, 7
    %v2263 = vsub.s32 1, %v2262
    %v2264 = vrot.slane %v2082, %v2263
    %2267 = vmatprep.subr.bf16.mxu0 %v2193
    %2268 = vmatpush1.bf16.msra.mxu0 %v2192
    %2269 = vmatprep.subr.bf16.mxu0 %v2195
    %2270 = vmatpush1.bf16.msra.mxu0 %v2194
    %2271 = vmatprep.subr.bf16.mxu0 %v2197
    %2272 = vmatpush1.bf16.msra.mxu0 %v2196
    %2273 = vmatprep.subr.bf16.mxu0 %v2199
    %2274 = vmatpush1.bf16.msra.mxu0 %v2198
    %2275 = vmatprep.subr.bf16.mxu0 %v2201
    %2276 = vmatpush1.bf16.msra.mxu0 %v2200
    %2277 = vmatprep.subr.bf16.mxu0 %v2203
    %2278 = vmatpush1.bf16.msra.mxu0 %v2202
    %2279 = vmatprep.subr.bf16.mxu0 %v2205
    %2280 = vmatpush1.bf16.msra.mxu0 %v2204
    %2281 = vmatprep.subr.bf16.mxu0 %v2207
    %2282 = vmatpush1.bf16.msra.mxu0 %v2206
    %2283 = vmatprep.subr.bf16.mxu0 %v2209
    %2284 = vmatpush1.bf16.msra.mxu0 %v2208
    %2285 = vmatprep.subr.bf16.mxu0 %v2211
    %2286 = vmatpush1.bf16.msra.mxu0 %v2210
    %2287 = vmatprep.subr.bf16.mxu0 %v2213
    %2288 = vmatpush1.bf16.msra.mxu0 %v2212
    %2289 = vmatprep.subr.bf16.mxu0 %v2215
    %2290 = vmatpush1.bf16.msra.mxu0 %v2214
    %2291 = vmatprep.subr.bf16.mxu0 %v2217
    %2292 = vmatpush1.bf16.msra.mxu0 %v2216
    %2293 = vmatprep.subr.bf16.mxu0 %v2219
    %2294 = vmatpush1.bf16.msra.mxu0 %v2218
    %2295 = vmatprep.subr.bf16.mxu0 %v2221
    %2296 = vmatpush1.bf16.msra.mxu0 %v2220
    %2297 = vmatprep.subr.bf16.mxu0 %v2223
    %2298 = vmatpush1.bf16.msra.mxu0 %v2222
    %2299 = vmatprep.mubr.bf16.mxu0 %v2095
    %2300 = vmatmul.mubr.bf16.gmra.mrb[0].mxu0 %v2094
    %v2301 = vpop.f32.mrb[0].mxu0
    %v2302 = vadd.f32 %v2260, %v2301
    %v2303 = vpop.f32.mrb[0].mxu0
    %v2304 = vadd.f32 %v2264, %v2303
    %v2305 = vpop.f32.mrb[0].mxu0
    %v2306 = vpop.f32.mrb[0].mxu0
    %2307 = vdwg.mxu0
    %v2308 = vmax.f32 %v2302, 0.0
    %v2309 = vmax.f32 %v2304, 0.0
    %s2310 = smul.addr %s2045, 4
    %s2311 = scalar_lea.vmem [#allocation23], %s2310
    %v2312 = vld [vmem:[%s2311] sm:$0xff]
    %v2313 = vld [vmem:[%s2311 + $0x8] sm:$0xff]
    %v2314 = vld [vmem:[%s2311 + $0x10] sm:$0xff]
    %v2315 = vld [vmem:[%s2311 + $0x18] sm:$0xff]
    %v2316 = vld [vmem:[%s2311 + $0x20] sm:$0xff]
    %v2317 = vld [vmem:[%s2311 + $0x28] sm:$0xff]
    %v2318 = vld [vmem:[%s2311 + $0x30] sm:$0xff]
    %v2319 = vld [vmem:[%s2311 + $0x38] sm:$0xff]
    %v2320 = vld [vmem:[%s2311 + $0x40] sm:$0xff]
    %v2321 = vld [vmem:[%s2311 + $0x48] sm:$0xff]
    %v2322 = vld [vmem:[%s2311 + $0x50] sm:$0xff]
    %v2323 = vld [vmem:[%s2311 + $0x58] sm:$0xff]
    %v2324 = vld [vmem:[%s2311 + $0x60] sm:$0xff]
    %v2325 = vld [vmem:[%s2311 + $0x68] sm:$0xff]
    %v2326 = vld [vmem:[%s2311 + $0x70] sm:$0xff]
    %v2327 = vld [vmem:[%s2311 + $0x78] sm:$0xff]
    %v2328 = vld [vmem:[%s2311 + $0x80] sm:$0xff]
    %v2329 = vld [vmem:[%s2311 + $0x88] sm:$0xff]
    %v2330 = vld [vmem:[%s2311 + $0x90] sm:$0xff]
    %v2331 = vld [vmem:[%s2311 + $0x98] sm:$0xff]
    %v2332 = vld [vmem:[%s2311 + $0xa0] sm:$0xff]
    %v2333 = vld [vmem:[%s2311 + $0xa8] sm:$0xff]
    %v2334 = vld [vmem:[%s2311 + $0xb0] sm:$0xff]
    %v2335 = vld [vmem:[%s2311 + $0xb8] sm:$0xff]
    %v2336 = vld [vmem:[%s2311 + $0xc0] sm:$0xff]
    %v2337 = vld [vmem:[%s2311 + $0xc8] sm:$0xff]
    %v2338 = vld [vmem:[%s2311 + $0xd0] sm:$0xff]
    %v2339 = vld [vmem:[%s2311 + $0xd8] sm:$0xff]
    %v2340 = vld [vmem:[%s2311 + $0xe0] sm:$0xff]
    %v2341 = vld [vmem:[%s2311 + $0xe8] sm:$0xff]
    %v2342 = vld [vmem:[%s2311 + $0xf0] sm:$0xff]
    %v2343 = vld [vmem:[%s2311 + $0xf8] sm:$0xff]
    %s2344 = scalar_lea.vmem [#allocation25], %s2080
    %v2345 = vld [vmem:[%s2344] sm:$0x3]
    %v2346 = vpack.c.bf16 %v2308, %v2308
    %v2347 = vpack.c.bf16 %v2309, %v2309
    %v2380 = vunpack.c.l.b16 %v2312
    %v2381 = vunpack.c.h.b16 %v2312
    %v2382 = vunpack.c.l.b16 %v2313
    %v2383 = vunpack.c.h.b16 %v2313
    %v2384 = vunpack.c.l.b16 %v2314
    %v2385 = vunpack.c.h.b16 %v2314
    %v2386 = vunpack.c.l.b16 %v2315
    %v2387 = vunpack.c.h.b16 %v2315
    %v2388 = vunpack.c.l.b16 %v2316
    %v2389 = vunpack.c.h.b16 %v2316
    %v2390 = vunpack.c.l.b16 %v2317
    %v2391 = vunpack.c.h.b16 %v2317
    %v2392 = vunpack.c.l.b16 %v2318
    %v2393 = vunpack.c.h.b16 %v2318
    %v2394 = vunpack.c.l.b16 %v2319
    %v2395 = vunpack.c.h.b16 %v2319
    %v2396 = vunpack.c.l.b16 %v2320
    %v2397 = vunpack.c.h.b16 %v2320
    %v2398 = vunpack.c.l.b16 %v2321
    %v2399 = vunpack.c.h.b16 %v2321
    %v2400 = vunpack.c.l.b16 %v2322
    %v2401 = vunpack.c.h.b16 %v2322
    %v2402 = vunpack.c.l.b16 %v2323
    %v2403 = vunpack.c.h.b16 %v2323
    %v2404 = vunpack.c.l.b16 %v2324
    %v2405 = vunpack.c.h.b16 %v2324
    %v2406 = vunpack.c.l.b16 %v2325
    %v2407 = vunpack.c.h.b16 %v2325
    %v2408 = vunpack.c.l.b16 %v2326
    %v2409 = vunpack.c.h.b16 %v2326
    %v2410 = vunpack.c.l.b16 %v2327
    %v2411 = vunpack.c.h.b16 %v2327
    %v2412 = vunpack.c.l.b16 %v2328
    %v2413 = vunpack.c.h.b16 %v2328
    %v2414 = vunpack.c.l.b16 %v2329
    %v2415 = vunpack.c.h.b16 %v2329
    %v2416 = vunpack.c.l.b16 %v2330
    %v2417 = vunpack.c.h.b16 %v2330
    %v2418 = vunpack.c.l.b16 %v2331
    %v2419 = vunpack.c.h.b16 %v2331
    %v2420 = vunpack.c.l.b16 %v2332
    %v2421 = vunpack.c.h.b16 %v2332
    %v2422 = vunpack.c.l.b16 %v2333
    %v2423 = vunpack.c.h.b16 %v2333
    %v2424 = vunpack.c.l.b16 %v2334
    %v2425 = vunpack.c.h.b16 %v2334
    %v2426 = vunpack.c.l.b16 %v2335
    %v2427 = vunpack.c.h.b16 %v2335
    %v2428 = vunpack.c.l.b16 %v2336
    %v2429 = vunpack.c.h.b16 %v2336
    %v2430 = vunpack.c.l.b16 %v2337
    %v2431 = vunpack.c.h.b16 %v2337
    %v2432 = vunpack.c.l.b16 %v2338
    %v2433 = vunpack.c.h.b16 %v2338
    %v2434 = vunpack.c.l.b16 %v2339
    %v2435 = vunpack.c.h.b16 %v2339
    %v2436 = vunpack.c.l.b16 %v2340
    %v2437 = vunpack.c.h.b16 %v2340
    %v2438 = vunpack.c.l.b16 %v2341
    %v2439 = vunpack.c.h.b16 %v2341
    %v2440 = vunpack.c.l.b16 %v2342
    %v2441 = vunpack.c.h.b16 %v2342
    %v2442 = vunpack.c.l.b16 %v2343
    %v2443 = vunpack.c.h.b16 %v2343
    %v2444 = vpack.c.b16 %v2382, %v2380
    %v2445 = vpack.c.b16 %v2383, %v2381
    %v2446 = vpack.c.b16 %v2386, %v2384
    %v2447 = vpack.c.b16 %v2387, %v2385
    %v2448 = vpack.c.b16 %v2390, %v2388
    %v2449 = vpack.c.b16 %v2391, %v2389
    %v2450 = vpack.c.b16 %v2394, %v2392
    %v2451 = vpack.c.b16 %v2395, %v2393
    %v2452 = vpack.c.b16 %v2398, %v2396
    %v2453 = vpack.c.b16 %v2399, %v2397
    %v2454 = vpack.c.b16 %v2402, %v2400
    %v2455 = vpack.c.b16 %v2403, %v2401
    %v2456 = vpack.c.b16 %v2406, %v2404
    %v2457 = vpack.c.b16 %v2407, %v2405
    %v2458 = vpack.c.b16 %v2410, %v2408
    %v2459 = vpack.c.b16 %v2411, %v2409
    %v2460 = vpack.c.b16 %v2414, %v2412
    %v2461 = vpack.c.b16 %v2415, %v2413
    %v2462 = vpack.c.b16 %v2418, %v2416
    %v2463 = vpack.c.b16 %v2419, %v2417
    %v2464 = vpack.c.b16 %v2422, %v2420
    %v2465 = vpack.c.b16 %v2423, %v2421
    %v2466 = vpack.c.b16 %v2426, %v2424
    %v2467 = vpack.c.b16 %v2427, %v2425
    %v2468 = vpack.c.b16 %v2430, %v2428
    %v2469 = vpack.c.b16 %v2431, %v2429
    %v2470 = vpack.c.b16 %v2434, %v2432
    %v2471 = vpack.c.b16 %v2435, %v2433
    %v2472 = vpack.c.b16 %v2438, %v2436
    %v2473 = vpack.c.b16 %v2439, %v2437
    %v2474 = vpack.c.b16 %v2442, %v2440
    %v2475 = vpack.c.b16 %v2443, %v2441
    %v2509 = vlaneseq
    %v2510 = vshrl.u32 %v2509, 7
    %v2511 = vsub.s32 0, %v2510
    %v2512 = vrot.slane %v2345, %v2511
    %v2513 = vlaneseq
    %v2514 = vshrl.u32 %v2513, 7
    %v2515 = vsub.s32 1, %v2514
    %v2516 = vrot.slane %v2345, %v2515
    %2519 = vmatprep.subr.bf16.mxu0 %v2445
    %2520 = vmatpush1.bf16.msra.mxu0 %v2444
    %2521 = vmatprep.subr.bf16.mxu0 %v2447
    %2522 = vmatpush1.bf16.msra.mxu0 %v2446
    %2523 = vmatprep.subr.bf16.mxu0 %v2449
    %2524 = vmatpush1.bf16.msra.mxu0 %v2448
    %2525 = vmatprep.subr.bf16.mxu0 %v2451
    %2526 = vmatpush1.bf16.msra.mxu0 %v2450
    %2527 = vmatprep.subr.bf16.mxu0 %v2453
    %2528 = vmatpush1.bf16.msra.mxu0 %v2452
    %2529 = vmatprep.subr.bf16.mxu0 %v2455
    %2530 = vmatpush1.bf16.msra.mxu0 %v2454
    %2531 = vmatprep.subr.bf16.mxu0 %v2457
    %2532 = vmatpush1.bf16.msra.mxu0 %v2456
    %2533 = vmatprep.subr.bf16.mxu0 %v2459
    %2534 = vmatpush1.bf16.msra.mxu0 %v2458
    %2535 = vmatprep.subr.bf16.mxu0 %v2461
    %2536 = vmatpush1.bf16.msra.mxu0 %v2460
    %2537 = vmatprep.subr.bf16.mxu0 %v2463
    %2538 = vmatpush1.bf16.msra.mxu0 %v2462
    %2539 = vmatprep.subr.bf16.mxu0 %v2465
    %2540 = vmatpush1.bf16.msra.mxu0 %v2464
    %2541 = vmatprep.subr.bf16.mxu0 %v2467
    %2542 = vmatpush1.bf16.msra.mxu0 %v2466
    %2543 = vmatprep.subr.bf16.mxu0 %v2469
    %2544 = vmatpush1.bf16.msra.mxu0 %v2468
    %2545 = vmatprep.subr.bf16.mxu0 %v2471
    %2546 = vmatpush1.bf16.msra.mxu0 %v2470
    %2547 = vmatprep.subr.bf16.mxu0 %v2473
    %2548 = vmatpush1.bf16.msra.mxu0 %v2472
    %2549 = vmatprep.subr.bf16.mxu0 %v2475
    %2550 = vmatpush1.bf16.msra.mxu0 %v2474
    %2551 = vmatprep.mubr.bf16.mxu0 %v2347
    %2552 = vmatmul.mubr.bf16.gmra.mrb[0].mxu0 %v2346
    %v2553 = vpop.f32.mrb[0].mxu0
    %v2554 = vadd.f32 %v2512, %v2553
    %v2555 = vpop.f32.mrb[0].mxu0
    %v2556 = vadd.f32 %v2516, %v2555
    %v2557 = vpop.f32.mrb[0].mxu0
    %v2558 = vpop.f32.mrb[0].mxu0
    %2559 = vdwg.mxu0
    %v2560 = vmax.f32 %v2554, 0.0
    %v2561 = vmax.f32 %v2556, 0.0
    %s2562 = smul.addr %s2045, 4
    %s2563 = scalar_lea.vmem [#allocation26], %s2562
    %v2564 = vld [vmem:[%s2563] sm:$0xff]
    %v2565 = vld [vmem:[%s2563 + $0x8] sm:$0xff]
    %v2566 = vld [vmem:[%s2563 + $0x10] sm:$0xff]
    %v2567 = vld [vmem:[%s2563 + $0x18] sm:$0xff]
    %v2568 = vld [vmem:[%s2563 + $0x20] sm:$0xff]
    %v2569 = vld [vmem:[%s2563 + $0x28] sm:$0xff]
    %v2570 = vld [vmem:[%s2563 + $0x30] sm:$0xff]
    %v2571 = vld [vmem:[%s2563 + $0x38] sm:$0xff]
    %v2572 = vld [vmem:[%s2563 + $0x40] sm:$0xff]
    %v2573 = vld [vmem:[%s2563 + $0x48] sm:$0xff]
    %v2574 = vld [vmem:[%s2563 + $0x50] sm:$0xff]
    %v2575 = vld [vmem:[%s2563 + $0x58] sm:$0xff]
    %v2576 = vld [vmem:[%s2563 + $0x60] sm:$0xff]
    %v2577 = vld [vmem:[%s2563 + $0x68] sm:$0xff]
    %v2578 = vld [vmem:[%s2563 + $0x70] sm:$0xff]
    %v2579 = vld [vmem:[%s2563 + $0x78] sm:$0xff]
    %v2580 = vld [vmem:[%s2563 + $0x80] sm:$0xff]
    %v2581 = vld [vmem:[%s2563 + $0x88] sm:$0xff]
    %v2582 = vld [vmem:[%s2563 + $0x90] sm:$0xff]
    %v2583 = vld [vmem:[%s2563 + $0x98] sm:$0xff]
    %v2584 = vld [vmem:[%s2563 + $0xa0] sm:$0xff]
    %v2585 = vld [vmem:[%s2563 + $0xa8] sm:$0xff]
    %v2586 = vld [vmem:[%s2563 + $0xb0] sm:$0xff]
    %v2587 = vld [vmem:[%s2563 + $0xb8] sm:$0xff]
    %v2588 = vld [vmem:[%s2563 + $0xc0] sm:$0xff]
    %v2589 = vld [vmem:[%s2563 + $0xc8] sm:$0xff]
    %v2590 = vld [vmem:[%s2563 + $0xd0] sm:$0xff]
    %v2591 = vld [vmem:[%s2563 + $0xd8] sm:$0xff]
    %v2592 = vld [vmem:[%s2563 + $0xe0] sm:$0xff]
    %v2593 = vld [vmem:[%s2563 + $0xe8] sm:$0xff]
    %v2594 = vld [vmem:[%s2563 + $0xf0] sm:$0xff]
    %v2595 = vld [vmem:[%s2563 + $0xf8] sm:$0xff]
    %s2596 = scalar_lea.vmem [#allocation28], %s2080
    %v2597 = vld [vmem:[%s2596] sm:$0x3]
    %v2598 = vpack.c.bf16 %v2560, %v2560
    %v2599 = vpack.c.bf16 %v2561, %v2561
    %v2632 = vunpack.c.l.b16 %v2564
    %v2633 = vunpack.c.h.b16 %v2564
    %v2634 = vunpack.c.l.b16 %v2565
    %v2635 = vunpack.c.h.b16 %v2565
    %v2636 = vunpack.c.l.b16 %v2566
    %v2637 = vunpack.c.h.b16 %v2566
    %v2638 = vunpack.c.l.b16 %v2567
    %v2639 = vunpack.c.h.b16 %v2567
    %v2640 = vunpack.c.l.b16 %v2568
    %v2641 = vunpack.c.h.b16 %v2568
    %v2642 = vunpack.c.l.b16 %v2569
    %v2643 = vunpack.c.h.b16 %v2569
    %v2644 = vunpack.c.l.b16 %v2570
    %v2645 = vunpack.c.h.b16 %v2570
    %v2646 = vunpack.c.l.b16 %v2571
    %v2647 = vunpack.c.h.b16 %v2571
    %v2648 = vunpack.c.l.b16 %v2572
    %v2649 = vunpack.c.h.b16 %v2572
    %v2650 = vunpack.c.l.b16 %v2573
    %v2651 = vunpack.c.h.b16 %v2573
    %v2652 = vunpack.c.l.b16 %v2574
    %v2653 = vunpack.c.h.b16 %v2574
    %v2654 = vunpack.c.l.b16 %v2575
    %v2655 = vunpack.c.h.b16 %v2575
    %v2656 = vunpack.c.l.b16 %v2576
    %v2657 = vunpack.c.h.b16 %v2576
    %v2658 = vunpack.c.l.b16 %v2577
    %v2659 = vunpack.c.h.b16 %v2577
    %v2660 = vunpack.c.l.b16 %v2578
    %v2661 = vunpack.c.h.b16 %v2578
    %v2662 = vunpack.c.l.b16 %v2579
    %v2663 = vunpack.c.h.b16 %v2579
    %v2664 = vunpack.c.l.b16 %v2580
    %v2665 = vunpack.c.h.b16 %v2580
    %v2666 = vunpack.c.l.b16 %v2581
    %v2667 = vunpack.c.h.b16 %v2581
    %v2668 = vunpack.c.l.b16 %v2582
    %v2669 = vunpack.c.h.b16 %v2582
    %v2670 = vunpack.c.l.b16 %v2583
    %v2671 = vunpack.c.h.b16 %v2583
    %v2672 = vunpack.c.l.b16 %v2584
    %v2673 = vunpack.c.h.b16 %v2584
    %v2674 = vunpack.c.l.b16 %v2585
    %v2675 = vunpack.c.h.b16 %v2585
    %v2676 = vunpack.c.l.b16 %v2586
    %v2677 = vunpack.c.h.b16 %v2586
    %v2678 = vunpack.c.l.b16 %v2587
    %v2679 = vunpack.c.h.b16 %v2587
    %v2680 = vunpack.c.l.b16 %v2588
    %v2681 = vunpack.c.h.b16 %v2588
    %v2682 = vunpack.c.l.b16 %v2589
    %v2683 = vunpack.c.h.b16 %v2589
    %v2684 = vunpack.c.l.b16 %v2590
    %v2685 = vunpack.c.h.b16 %v2590
    %v2686 = vunpack.c.l.b16 %v2591
    %v2687 = vunpack.c.h.b16 %v2591
    %v2688 = vunpack.c.l.b16 %v2592
    %v2689 = vunpack.c.h.b16 %v2592
    %v2690 = vunpack.c.l.b16 %v2593
    %v2691 = vunpack.c.h.b16 %v2593
    %v2692 = vunpack.c.l.b16 %v2594
    %v2693 = vunpack.c.h.b16 %v2594
    %v2694 = vunpack.c.l.b16 %v2595
    %v2695 = vunpack.c.h.b16 %v2595
    %v2696 = vpack.c.b16 %v2634, %v2632
    %v2697 = vpack.c.b16 %v2635, %v2633
    %v2698 = vpack.c.b16 %v2638, %v2636
    %v2699 = vpack.c.b16 %v2639, %v2637
    %v2700 = vpack.c.b16 %v2642, %v2640
    %v2701 = vpack.c.b16 %v2643, %v2641
    %v2702 = vpack.c.b16 %v2646, %v2644
    %v2703 = vpack.c.b16 %v2647, %v2645
    %v2704 = vpack.c.b16 %v2650, %v2648
    %v2705 = vpack.c.b16 %v2651, %v2649
    %v2706 = vpack.c.b16 %v2654, %v2652
    %v2707 = vpack.c.b16 %v2655, %v2653
    %v2708 = vpack.c.b16 %v2658, %v2656
    %v2709 = vpack.c.b16 %v2659, %v2657
    %v2710 = vpack.c.b16 %v2662, %v2660
    %v2711 = vpack.c.b16 %v2663, %v2661
    %v2712 = vpack.c.b16 %v2666, %v2664
    %v2713 = vpack.c.b16 %v2667, %v2665
    %v2714 = vpack.c.b16 %v2670, %v2668
    %v2715 = vpack.c.b16 %v2671, %v2669
    %v2716 = vpack.c.b16 %v2674, %v2672
    %v2717 = vpack.c.b16 %v2675, %v2673
    %v2718 = vpack.c.b16 %v2678, %v2676
    %v2719 = vpack.c.b16 %v2679, %v2677
    %v2720 = vpack.c.b16 %v2682, %v2680
    %v2721 = vpack.c.b16 %v2683, %v2681
    %v2722 = vpack.c.b16 %v2686, %v2684
    %v2723 = vpack.c.b16 %v2687, %v2685
    %v2724 = vpack.c.b16 %v2690, %v2688
    %v2725 = vpack.c.b16 %v2691, %v2689
    %v2726 = vpack.c.b16 %v2694, %v2692
    %v2727 = vpack.c.b16 %v2695, %v2693
    %v2761 = vlaneseq
    %v2762 = vshrl.u32 %v2761, 7
    %v2763 = vsub.s32 0, %v2762
    %v2764 = vrot.slane %v2597, %v2763
    %v2765 = vlaneseq
    %v2766 = vshrl.u32 %v2765, 7
    %v2767 = vsub.s32 1, %v2766
    %v2768 = vrot.slane %v2597, %v2767
    %2771 = vmatprep.subr.bf16.mxu0 %v2697
    %2772 = vmatpush1.bf16.msra.mxu0 %v2696
    %2773 = vmatprep.subr.bf16.mxu0 %v2699
    %2774 = vmatpush1.bf16.msra.mxu0 %v2698
    %2775 = vmatprep.subr.bf16.mxu0 %v2701
    %2776 = vmatpush1.bf16.msra.mxu0 %v2700
    %2777 = vmatprep.subr.bf16.mxu0 %v2703
    %2778 = vmatpush1.bf16.msra.mxu0 %v2702
    %2779 = vmatprep.subr.bf16.mxu0 %v2705
    %2780 = vmatpush1.bf16.msra.mxu0 %v2704
    %2781 = vmatprep.subr.bf16.mxu0 %v2707
    %2782 = vmatpush1.bf16.msra.mxu0 %v2706
    %2783 = vmatprep.subr.bf16.mxu0 %v2709
    %2784 = vmatpush1.bf16.msra.mxu0 %v2708
    %2785 = vmatprep.subr.bf16.mxu0 %v2711
    %2786 = vmatpush1.bf16.msra.mxu0 %v2710
    %2787 = vmatprep.subr.bf16.mxu0 %v2713
    %2788 = vmatpush1.bf16.msra.mxu0 %v2712
    %2789 = vmatprep.subr.bf16.mxu0 %v2715
    %2790 = vmatpush1.bf16.msra.mxu0 %v2714
    %2791 = vmatprep.subr.bf16.mxu0 %v2717
    %2792 = vmatpush1.bf16.msra.mxu0 %v2716
    %2793 = vmatprep.subr.bf16.mxu0 %v2719
    %2794 = vmatpush1.bf16.msra.mxu0 %v2718
    %2795 = vmatprep.subr.bf16.mxu0 %v2721
    %2796 = vmatpush1.bf16.msra.mxu0 %v2720
    %2797 = vmatprep.subr.bf16.mxu0 %v2723
    %2798 = vmatpush1.bf16.msra.mxu0 %v2722
    %2799 = vmatprep.subr.bf16.mxu0 %v2725
    %2800 = vmatpush1.bf16.msra.mxu0 %v2724
    %2801 = vmatprep.subr.bf16.mxu0 %v2727
    %2802 = vmatpush1.bf16.msra.mxu0 %v2726
    %2803 = vmatprep.mubr.bf16.mxu0 %v2599
    %2804 = vmatmul.mubr.bf16.gmra.mrb[0].mxu0 %v2598
    %v2805 = vpop.f32.mrb[0].mxu0
    %v2806 = vadd.f32 %v2764, %v2805
    %v2807 = vpop.f32.mrb[0].mxu0
    %v2808 = vadd.f32 %v2768, %v2807
    %v2809 = vpop.f32.mrb[0].mxu0
    %v2810 = vpop.f32.mrb[0].mxu0
    %2811 = vdwg.mxu0
    %v2812 = vmax.f32 %v2806, 0.0
    %v2813 = vmax.f32 %v2808, 0.0
    %s2814 = smul.u32 %s2042, 32
    %s2815 = smul.addr %s2814, 4
    %s2816 = scalar_lea.vmem %s16, %s2815
    %v2817 = vld [vmem:[%s2816] sm:$0xf]
    %v2818 = vld [vmem:[%s2816 + $0x4] sm:$0xf]
    %v2819 = vld [vmem:[%s2816 + $0x8] sm:$0xf]
    %v2820 = vld [vmem:[%s2816 + $0xc] sm:$0xf]
    %v2821 = vld [vmem:[%s2816 + $0x10] sm:$0xf]
    %v2822 = vld [vmem:[%s2816 + $0x14] sm:$0xf]
    %v2823 = vld [vmem:[%s2816 + $0x18] sm:$0xf]
    %v2824 = vld [vmem:[%s2816 + $0x1c] sm:$0xf]
    %v2825 = vld [vmem:[%s2816 + $0x20] sm:$0xf]
    %v2826 = vld [vmem:[%s2816 + $0x24] sm:$0xf]
    %v2827 = vld [vmem:[%s2816 + $0x28] sm:$0xf]
    %v2828 = vld [vmem:[%s2816 + $0x2c] sm:$0xf]
    %v2829 = vld [vmem:[%s2816 + $0x30] sm:$0xf]
    %v2830 = vld [vmem:[%s2816 + $0x34] sm:$0xf]
    %v2831 = vld [vmem:[%s2816 + $0x38] sm:$0xf]
    %v2832 = vld [vmem:[%s2816 + $0x3c] sm:$0xf]
    %v2833 = vld [vmem:[%s2816 + $0x40] sm:$0xf]
    %v2834 = vld [vmem:[%s2816 + $0x44] sm:$0xf]
    %v2835 = vld [vmem:[%s2816 + $0x48] sm:$0xf]
    %v2836 = vld [vmem:[%s2816 + $0x4c] sm:$0xf]
    %v2837 = vld [vmem:[%s2816 + $0x50] sm:$0xf]
    %v2838 = vld [vmem:[%s2816 + $0x54] sm:$0xf]
    %v2839 = vld [vmem:[%s2816 + $0x58] sm:$0xf]
    %v2840 = vld [vmem:[%s2816 + $0x5c] sm:$0xf]
    %v2841 = vld [vmem:[%s2816 + $0x60] sm:$0xf]
    %v2842 = vld [vmem:[%s2816 + $0x64] sm:$0xf]
    %v2843 = vld [vmem:[%s2816 + $0x68] sm:$0xf]
    %v2844 = vld [vmem:[%s2816 + $0x6c] sm:$0xf]
    %v2845 = vld [vmem:[%s2816 + $0x70] sm:$0xf]
    %v2846 = vld [vmem:[%s2816 + $0x74] sm:$0xf]
    %v2847 = vld [vmem:[%s2816 + $0x78] sm:$0xf]
    %v2848 = vld [vmem:[%s2816 + $0x7c] sm:$0xf]
    %s2849 = scalar_lea.vmem [#allocation29], %s2042
    %v2850 = vld [vmem:[%s2849] sm:$0x1]
    %v2851 = vpack.c.bf16 %v2812, %v2812
    %v2852 = vpack.c.bf16 %v2813, %v2813
    %v2885 = vunpack.c.l.b16 %v2817
    %v2886 = vunpack.c.l.b16 %v2818
    %v2887 = vunpack.c.l.b16 %v2819
    %v2888 = vunpack.c.l.b16 %v2820
    %v2889 = vunpack.c.l.b16 %v2821
    %v2890 = vunpack.c.l.b16 %v2822
    %v2891 = vunpack.c.l.b16 %v2823
    %v2892 = vunpack.c.l.b16 %v2824
    %v2893 = vunpack.c.l.b16 %v2825
    %v2894 = vunpack.c.l.b16 %v2826
    %v2895 = vunpack.c.l.b16 %v2827
    %v2896 = vunpack.c.l.b16 %v2828
    %v2897 = vunpack.c.l.b16 %v2829
    %v2898 = vunpack.c.l.b16 %v2830
    %v2899 = vunpack.c.l.b16 %v2831
    %v2900 = vunpack.c.l.b16 %v2832
    %v2901 = vunpack.c.l.b16 %v2833
    %v2902 = vunpack.c.l.b16 %v2834
    %v2903 = vunpack.c.l.b16 %v2835
    %v2904 = vunpack.c.l.b16 %v2836
    %v2905 = vunpack.c.l.b16 %v2837
    %v2906 = vunpack.c.l.b16 %v2838
    %v2907 = vunpack.c.l.b16 %v2839
    %v2908 = vunpack.c.l.b16 %v2840
    %v2909 = vunpack.c.l.b16 %v2841
    %v2910 = vunpack.c.l.b16 %v2842
    %v2911 = vunpack.c.l.b16 %v2843
    %v2912 = vunpack.c.l.b16 %v2844
    %v2913 = vunpack.c.l.b16 %v2845
    %v2914 = vunpack.c.l.b16 %v2846
    %v2915 = vunpack.c.l.b16 %v2847
    %v2916 = vunpack.c.l.b16 %v2848
    %v2917 = vpack.c.b16 %v2886, %v2885
    %v2918 = vpack.c.b16 %v2888, %v2887
    %v2919 = vpack.c.b16 %v2890, %v2889
    %v2920 = vpack.c.b16 %v2892, %v2891
    %v2921 = vpack.c.b16 %v2894, %v2893
    %v2922 = vpack.c.b16 %v2896, %v2895
    %v2923 = vpack.c.b16 %v2898, %v2897
    %v2924 = vpack.c.b16 %v2900, %v2899
    %v2925 = vpack.c.b16 %v2902, %v2901
    %v2926 = vpack.c.b16 %v2904, %v2903
    %v2927 = vpack.c.b16 %v2906, %v2905
    %v2928 = vpack.c.b16 %v2908, %v2907
    %v2929 = vpack.c.b16 %v2910, %v2909
    %v2930 = vpack.c.b16 %v2912, %v2911
    %v2931 = vpack.c.b16 %v2914, %v2913
    %v2932 = vpack.c.b16 %v2916, %v2915
    %2949 = vmatprep.subr.bf16.mxu0 0
    %2950 = vmatpush1.bf16.msra.mxu0 %v2917
    %2951 = vmatprep.subr.bf16.mxu0 0
    %2952 = vmatpush1.bf16.msra.mxu0 %v2918
    %2953 = vmatprep.subr.bf16.mxu0 0
    %2954 = vmatpush1.bf16.msra.mxu0 %v2919
    %2955 = vmatprep.subr.bf16.mxu0 0
    %2956 = vmatpush1.bf16.msra.mxu0 %v2920
    %2957 = vmatprep.subr.bf16.mxu0 0
    %2958 = vmatpush1.bf16.msra.mxu0 %v2921
    %2959 = vmatprep.subr.bf16.mxu0 0
    %2960 = vmatpush1.bf16.msra.mxu0 %v2922
    %2961 = vmatprep.subr.bf16.mxu0 0
    %2962 = vmatpush1.bf16.msra.mxu0 %v2923
    %2963 = vmatprep.subr.bf16.mxu0 0
    %2964 = vmatpush1.bf16.msra.mxu0 %v2924
    %2965 = vmatprep.subr.bf16.mxu0 0
    %2966 = vmatpush1.bf16.msra.mxu0 %v2925
    %2967 = vmatprep.subr.bf16.mxu0 0
    %2968 = vmatpush1.bf16.msra.mxu0 %v2926
    %2969 = vmatprep.subr.bf16.mxu0 0
    %2970 = vmatpush1.bf16.msra.mxu0 %v2927
    %2971 = vmatprep.subr.bf16.mxu0 0
    %2972 = vmatpush1.bf16.msra.mxu0 %v2928
    %2973 = vmatprep.subr.bf16.mxu0 0
    %2974 = vmatpush1.bf16.msra.mxu0 %v2929
    %2975 = vmatprep.subr.bf16.mxu0 0
    %2976 = vmatpush1.bf16.msra.mxu0 %v2930
    %2977 = vmatprep.subr.bf16.mxu0 0
    %2978 = vmatpush1.bf16.msra.mxu0 %v2931
    %2979 = vmatprep.subr.bf16.mxu0 0
    %2980 = vmatpush1.bf16.msra.mxu0 %v2932
    %2981 = vmatprep.mubr.bf16.mxu0 %v2852
    %2982 = vmatmul.mubr.bf16.gmra.mrb[0].mxu0 %v2851
    %v2983 = vpop.f32.mrb[0].mxu0
    %v2984 = vadd.f32 %v2850, %v2983
    %v2985 = vpop.f32.mrb[0].mxu0
    %v2986 = vpop.f32.mrb[0].mxu0
    %v2987 = vpop.f32.mrb[0].mxu0
    %2988 = vdwg.mxu0
    %2989 = vst.msk [vmem:[#allocation31 + $0x1] sm:$0x1] %vm2039, %v2984
    %s2990 = sadd.s32 %s270, 2
    %s2991 = sld [smem:[#allocation4 + %s2990]]
    %s2992 = scalar_lea.vmem [#allocation2], 2
    %v2993 = vld [vmem:[%s2992] ss:$8 sm:$0x3]
    %s2994 = smul.u32 %s2991, 64
    %s2995 = smul.addr %s2994, 4
    %s2996 = scalar_lea.vmem [#allocation20], %s2995
    %v2997 = vld [vmem:[%s2996] sm:$0xff]
    %v2998 = vld [vmem:[%s2996 + $0x8] sm:$0xff]
    %v2999 = vld [vmem:[%s2996 + $0x10] sm:$0xff]
    %v3000 = vld [vmem:[%s2996 + $0x18] sm:$0xff]
    %v3001 = vld [vmem:[%s2996 + $0x20] sm:$0xff]
    %v3002 = vld [vmem:[%s2996 + $0x28] sm:$0xff]
    %v3003 = vld [vmem:[%s2996 + $0x30] sm:$0xff]
    %v3004 = vld [vmem:[%s2996 + $0x38] sm:$0xff]
    %v3005 = vld [vmem:[%s2996 + $0x40] sm:$0xff]
    %v3006 = vld [vmem:[%s2996 + $0x48] sm:$0xff]
    %v3007 = vld [vmem:[%s2996 + $0x50] sm:$0xff]
    %v3008 = vld [vmem:[%s2996 + $0x58] sm:$0xff]
    %v3009 = vld [vmem:[%s2996 + $0x60] sm:$0xff]
    %v3010 = vld [vmem:[%s2996 + $0x68] sm:$0xff]
    %v3011 = vld [vmem:[%s2996 + $0x70] sm:$0xff]
    %v3012 = vld [vmem:[%s2996 + $0x78] sm:$0xff]
    %v3013 = vld [vmem:[%s2996 + $0x80] sm:$0xff]
    %v3014 = vld [vmem:[%s2996 + $0x88] sm:$0xff]
    %v3015 = vld [vmem:[%s2996 + $0x90] sm:$0xff]
    %v3016 = vld [vmem:[%s2996 + $0x98] sm:$0xff]
    %v3017 = vld [vmem:[%s2996 + $0xa0] sm:$0xff]
    %v3018 = vld [vmem:[%s2996 + $0xa8] sm:$0xff]
    %v3019 = vld [vmem:[%s2996 + $0xb0] sm:$0xff]
    %v3020 = vld [vmem:[%s2996 + $0xb8] sm:$0xff]
    %v3021 = vld [vmem:[%s2996 + $0xc0] sm:$0xff]
    %v3022 = vld [vmem:[%s2996 + $0xc8] sm:$0xff]
    %v3023 = vld [vmem:[%s2996 + $0xd0] sm:$0xff]
    %v3024 = vld [vmem:[%s2996 + $0xd8] sm:$0xff]
    %v3025 = vld [vmem:[%s2996 + $0xe0] sm:$0xff]
    %v3026 = vld [vmem:[%s2996 + $0xe8] sm:$0xff]
    %v3027 = vld [vmem:[%s2996 + $0xf0] sm:$0xff]
    %v3028 = vld [vmem:[%s2996 + $0xf8] sm:$0xff]
    %s3029 = smul.u32 %s2991, 2
    %s3030 = scalar_lea.vmem [#allocation22], %s3029
    %v3031 = vld [vmem:[%s3030] sm:$0x3]
    %v3033 = vlaneseq
    %v3034 = vshrl.u32 %v3033, 7
    %v3035 = vsub.s32 0, %v3034
    %v3036 = vrot.slane %v2993, %v3035
    %v3037 = vlaneseq
    %v3038 = vshrl.u32 %v3037, 7
    %v3039 = vsub.s32 1, %v3038
    %v3040 = vrot.slane %v2993, %v3039
    %v3043 = vpack.c.bf16 %v3036, %v3036
    %v3044 = vpack.c.bf16 %v3040, %v3040
    %v3077 = vunpack.c.l.b16 %v2997
    %v3078 = vunpack.c.h.b16 %v2997
    %v3079 = vunpack.c.l.b16 %v2998
    %v3080 = vunpack.c.h.b16 %v2998
    %v3081 = vunpack.c.l.b16 %v2999
    %v3082 = vunpack.c.h.b16 %v2999
    %v3083 = vunpack.c.l.b16 %v3000
    %v3084 = vunpack.c.h.b16 %v3000
    %v3085 = vunpack.c.l.b16 %v3001
    %v3086 = vunpack.c.h.b16 %v3001
    %v3087 = vunpack.c.l.b16 %v3002
    %v3088 = vunpack.c.h.b16 %v3002
    %v3089 = vunpack.c.l.b16 %v3003
    %v3090 = vunpack.c.h.b16 %v3003
    %v3091 = vunpack.c.l.b16 %v3004
    %v3092 = vunpack.c.h.b16 %v3004
    %v3093 = vunpack.c.l.b16 %v3005
    %v3094 = vunpack.c.h.b16 %v3005
    %v3095 = vunpack.c.l.b16 %v3006
    %v3096 = vunpack.c.h.b16 %v3006
    %v3097 = vunpack.c.l.b16 %v3007
    %v3098 = vunpack.c.h.b16 %v3007
    %v3099 = vunpack.c.l.b16 %v3008
    %v3100 = vunpack.c.h.b16 %v3008
    %v3101 = vunpack.c.l.b16 %v3009
    %v3102 = vunpack.c.h.b16 %v3009
    %v3103 = vunpack.c.l.b16 %v3010
    %v3104 = vunpack.c.h.b16 %v3010
    %v3105 = vunpack.c.l.b16 %v3011
    %v3106 = vunpack.c.h.b16 %v3011
    %v3107 = vunpack.c.l.b16 %v3012
    %v3108 = vunpack.c.h.b16 %v3012
    %v3109 = vunpack.c.l.b16 %v3013
    %v3110 = vunpack.c.h.b16 %v3013
    %v3111 = vunpack.c.l.b16 %v3014
    %v3112 = vunpack.c.h.b16 %v3014
    %v3113 = vunpack.c.l.b16 %v3015
    %v3114 = vunpack.c.h.b16 %v3015
    %v3115 = vunpack.c.l.b16 %v3016
    %v3116 = vunpack.c.h.b16 %v3016
    %v3117 = vunpack.c.l.b16 %v3017
    %v3118 = vunpack.c.h.b16 %v3017
    %v3119 = vunpack.c.l.b16 %v3018
    %v3120 = vunpack.c.h.b16 %v3018
    %v3121 = vunpack.c.l.b16 %v3019
    %v3122 = vunpack.c.h.b16 %v3019
    %v3123 = vunpack.c.l.b16 %v3020
    %v3124 = vunpack.c.h.b16 %v3020
    %v3125 = vunpack.c.l.b16 %v3021
    %v3126 = vunpack.c.h.b16 %v3021
    %v3127 = vunpack.c.l.b16 %v3022
    %v3128 = vunpack.c.h.b16 %v3022
    %v3129 = vunpack.c.l.b16 %v3023
    %v3130 = vunpack.c.h.b16 %v3023
    %v3131 = vunpack.c.l.b16 %v3024
    %v3132 = vunpack.c.h.b16 %v3024
    %v3133 = vunpack.c.l.b16 %v3025
    %v3134 = vunpack.c.h.b16 %v3025
    %v3135 = vunpack.c.l.b16 %v3026
    %v3136 = vunpack.c.h.b16 %v3026
    %v3137 = vunpack.c.l.b16 %v3027
    %v3138 = vunpack.c.h.b16 %v3027
    %v3139 = vunpack.c.l.b16 %v3028
    %v3140 = vunpack.c.h.b16 %v3028
    %v3141 = vpack.c.b16 %v3079, %v3077
    %v3142 = vpack.c.b16 %v3080, %v3078
    %v3143 = vpack.c.b16 %v3083, %v3081
    %v3144 = vpack.c.b16 %v3084, %v3082
    %v3145 = vpack.c.b16 %v3087, %v3085
    %v3146 = vpack.c.b16 %v3088, %v3086
    %v3147 = vpack.c.b16 %v3091, %v3089
    %v3148 = vpack.c.b16 %v3092, %v3090
    %v3149 = vpack.c.b16 %v3095, %v3093
    %v3150 = vpack.c.b16 %v3096, %v3094
    %v3151 = vpack.c.b16 %v3099, %v3097
    %v3152 = vpack.c.b16 %v3100, %v3098
    %v3153 = vpack.c.b16 %v3103, %v3101
    %v3154 = vpack.c.b16 %v3104, %v3102
    %v3155 = vpack.c.b16 %v3107, %v3105
    %v3156 = vpack.c.b16 %v3108, %v3106
    %v3157 = vpack.c.b16 %v3111, %v3109
    %v3158 = vpack.c.b16 %v3112, %v3110
    %v3159 = vpack.c.b16 %v3115, %v3113
    %v3160 = vpack.c.b16 %v3116, %v3114
    %v3161 = vpack.c.b16 %v3119, %v3117
    %v3162 = vpack.c.b16 %v3120, %v3118
    %v3163 = vpack.c.b16 %v3123, %v3121
    %v3164 = vpack.c.b16 %v3124, %v3122
    %v3165 = vpack.c.b16 %v3127, %v3125
    %v3166 = vpack.c.b16 %v3128, %v3126
    %v3167 = vpack.c.b16 %v3131, %v3129
    %v3168 = vpack.c.b16 %v3132, %v3130
    %v3169 = vpack.c.b16 %v3135, %v3133
    %v3170 = vpack.c.b16 %v3136, %v3134
    %v3171 = vpack.c.b16 %v3139, %v3137
    %v3172 = vpack.c.b16 %v3140, %v3138
    %v3206 = vlaneseq
    %v3207 = vshrl.u32 %v3206, 7
    %v3208 = vsub.s32 0, %v3207
    %v3209 = vrot.slane %v3031, %v3208
    %v3210 = vlaneseq
    %v3211 = vshrl.u32 %v3210, 7
    %v3212 = vsub.s32 1, %v3211
    %v3213 = vrot.slane %v3031, %v3212
    %3216 = vmatprep.subr.bf16.mxu0 %v3142
    %3217 = vmatpush1.bf16.msra.mxu0 %v3141
    %3218 = vmatprep.subr.bf16.mxu0 %v3144
    %3219 = vmatpush1.bf16.msra.mxu0 %v3143
    %3220 = vmatprep.subr.bf16.mxu0 %v3146
    %3221 = vmatpush1.bf16.msra.mxu0 %v3145
    %3222 = vmatprep.subr.bf16.mxu0 %v3148
    %3223 = vmatpush1.bf16.msra.mxu0 %v3147
    %3224 = vmatprep.subr.bf16.mxu0 %v3150
    %3225 = vmatpush1.bf16.msra.mxu0 %v3149
    %3226 = vmatprep.subr.bf16.mxu0 %v3152
    %3227 = vmatpush1.bf16.msra.mxu0 %v3151
    %3228 = vmatprep.subr.bf16.mxu0 %v3154
    %3229 = vmatpush1.bf16.msra.mxu0 %v3153
    %3230 = vmatprep.subr.bf16.mxu0 %v3156
    %3231 = vmatpush1.bf16.msra.mxu0 %v3155
    %3232 = vmatprep.subr.bf16.mxu0 %v3158
    %3233 = vmatpush1.bf16.msra.mxu0 %v3157
    %3234 = vmatprep.subr.bf16.mxu0 %v3160
    %3235 = vmatpush1.bf16.msra.mxu0 %v3159
    %3236 = vmatprep.subr.bf16.mxu0 %v3162
    %3237 = vmatpush1.bf16.msra.mxu0 %v3161
    %3238 = vmatprep.subr.bf16.mxu0 %v3164
    %3239 = vmatpush1.bf16.msra.mxu0 %v3163
    %3240 = vmatprep.subr.bf16.mxu0 %v3166
    %3241 = vmatpush1.bf16.msra.mxu0 %v3165
    %3242 = vmatprep.subr.bf16.mxu0 %v3168
    %3243 = vmatpush1.bf16.msra.mxu0 %v3167
    %3244 = vmatprep.subr.bf16.mxu0 %v3170
    %3245 = vmatpush1.bf16.msra.mxu0 %v3169
    %3246 = vmatprep.subr.bf16.mxu0 %v3172
    %3247 = vmatpush1.bf16.msra.mxu0 %v3171
    %3248 = vmatprep.mubr.bf16.mxu0 %v3044
    %3249 = vmatmul.mubr.bf16.gmra.mrb[0].mxu0 %v3043
    %v3250 = vpop.f32.mrb[0].mxu0
    %v3251 = vadd.f32 %v3209, %v3250
    %v3252 = vpop.f32.mrb[0].mxu0
    %v3253 = vadd.f32 %v3213, %v3252
    %v3254 = vpop.f32.mrb[0].mxu0
    %v3255 = vpop.f32.mrb[0].mxu0
    %3256 = vdwg.mxu0
    %v3257 = vmax.f32 %v3251, 0.0
    %v3258 = vmax.f32 %v3253, 0.0
    %s3259 = smul.addr %s2994, 4
    %s3260 = scalar_lea.vmem [#allocation23], %s3259
    %v3261 = vld [vmem:[%s3260] sm:$0xff]
    %v3262 = vld [vmem:[%s3260 + $0x8] sm:$0xff]
    %v3263 = vld [vmem:[%s3260 + $0x10] sm:$0xff]
    %v3264 = vld [vmem:[%s3260 + $0x18] sm:$0xff]
    %v3265 = vld [vmem:[%s3260 + $0x20] sm:$0xff]
    %v3266 = vld [vmem:[%s3260 + $0x28] sm:$0xff]
    %v3267 = vld [vmem:[%s3260 + $0x30] sm:$0xff]
    %v3268 = vld [vmem:[%s3260 + $0x38] sm:$0xff]
    %v3269 = vld [vmem:[%s3260 + $0x40] sm:$0xff]
    %v3270 = vld [vmem:[%s3260 + $0x48] sm:$0xff]
    %v3271 = vld [vmem:[%s3260 + $0x50] sm:$0xff]
    %v3272 = vld [vmem:[%s3260 + $0x58] sm:$0xff]
    %v3273 = vld [vmem:[%s3260 + $0x60] sm:$0xff]
    %v3274 = vld [vmem:[%s3260 + $0x68] sm:$0xff]
    %v3275 = vld [vmem:[%s3260 + $0x70] sm:$0xff]
    %v3276 = vld [vmem:[%s3260 + $0x78] sm:$0xff]
    %v3277 = vld [vmem:[%s3260 + $0x80] sm:$0xff]
    %v3278 = vld [vmem:[%s3260 + $0x88] sm:$0xff]
    %v3279 = vld [vmem:[%s3260 + $0x90] sm:$0xff]
    %v3280 = vld [vmem:[%s3260 + $0x98] sm:$0xff]
    %v3281 = vld [vmem:[%s3260 + $0xa0] sm:$0xff]
    %v3282 = vld [vmem:[%s3260 + $0xa8] sm:$0xff]
    %v3283 = vld [vmem:[%s3260 + $0xb0] sm:$0xff]
    %v3284 = vld [vmem:[%s3260 + $0xb8] sm:$0xff]
    %v3285 = vld [vmem:[%s3260 + $0xc0] sm:$0xff]
    %v3286 = vld [vmem:[%s3260 + $0xc8] sm:$0xff]
    %v3287 = vld [vmem:[%s3260 + $0xd0] sm:$0xff]
    %v3288 = vld [vmem:[%s3260 + $0xd8] sm:$0xff]
    %v3289 = vld [vmem:[%s3260 + $0xe0] sm:$0xff]
    %v3290 = vld [vmem:[%s3260 + $0xe8] sm:$0xff]
    %v3291 = vld [vmem:[%s3260 + $0xf0] sm:$0xff]
    %v3292 = vld [vmem:[%s3260 + $0xf8] sm:$0xff]
    %s3293 = scalar_lea.vmem [#allocation25], %s3029
    %v3294 = vld [vmem:[%s3293] sm:$0x3]
    %v3295 = vpack.c.bf16 %v3257, %v3257
    %v3296 = vpack.c.bf16 %v3258, %v3258
    %v3329 = vunpack.c.l.b16 %v3261
    %v3330 = vunpack.c.h.b16 %v3261
    %v3331 = vunpack.c.l.b16 %v3262
    %v3332 = vunpack.c.h.b16 %v3262
    %v3333 = vunpack.c.l.b16 %v3263
    %v3334 = vunpack.c.h.b16 %v3263
    %v3335 = vunpack.c.l.b16 %v3264
    %v3336 = vunpack.c.h.b16 %v3264
    %v3337 = vunpack.c.l.b16 %v3265
    %v3338 = vunpack.c.h.b16 %v3265
    %v3339 = vunpack.c.l.b16 %v3266
    %v3340 = vunpack.c.h.b16 %v3266
    %v3341 = vunpack.c.l.b16 %v3267
    %v3342 = vunpack.c.h.b16 %v3267
    %v3343 = vunpack.c.l.b16 %v3268
    %v3344 = vunpack.c.h.b16 %v3268
    %v3345 = vunpack.c.l.b16 %v3269
    %v3346 = vunpack.c.h.b16 %v3269
    %v3347 = vunpack.c.l.b16 %v3270
    %v3348 = vunpack.c.h.b16 %v3270
    %v3349 = vunpack.c.l.b16 %v3271
    %v3350 = vunpack.c.h.b16 %v3271
    %v3351 = vunpack.c.l.b16 %v3272
    %v3352 = vunpack.c.h.b16 %v3272
    %v3353 = vunpack.c.l.b16 %v3273
    %v3354 = vunpack.c.h.b16 %v3273
    %v3355 = vunpack.c.l.b16 %v3274
    %v3356 = vunpack.c.h.b16 %v3274
    %v3357 = vunpack.c.l.b16 %v3275
    %v3358 = vunpack.c.h.b16 %v3275
    %v3359 = vunpack.c.l.b16 %v3276
    %v3360 = vunpack.c.h.b16 %v3276
    %v3361 = vunpack.c.l.b16 %v3277
    %v3362 = vunpack.c.h.b16 %v3277
    %v3363 = vunpack.c.l.b16 %v3278
    %v3364 = vunpack.c.h.b16 %v3278
    %v3365 = vunpack.c.l.b16 %v3279
    %v3366 = vunpack.c.h.b16 %v3279
    %v3367 = vunpack.c.l.b16 %v3280
    %v3368 = vunpack.c.h.b16 %v3280
    %v3369 = vunpack.c.l.b16 %v3281
    %v3370 = vunpack.c.h.b16 %v3281
    %v3371 = vunpack.c.l.b16 %v3282
    %v3372 = vunpack.c.h.b16 %v3282
    %v3373 = vunpack.c.l.b16 %v3283
    %v3374 = vunpack.c.h.b16 %v3283
    %v3375 = vunpack.c.l.b16 %v3284
    %v3376 = vunpack.c.h.b16 %v3284
    %v3377 = vunpack.c.l.b16 %v3285
    %v3378 = vunpack.c.h.b16 %v3285
    %v3379 = vunpack.c.l.b16 %v3286
    %v3380 = vunpack.c.h.b16 %v3286
    %v3381 = vunpack.c.l.b16 %v3287
    %v3382 = vunpack.c.h.b16 %v3287
    %v3383 = vunpack.c.l.b16 %v3288
    %v3384 = vunpack.c.h.b16 %v3288
    %v3385 = vunpack.c.l.b16 %v3289
    %v3386 = vunpack.c.h.b16 %v3289
    %v3387 = vunpack.c.l.b16 %v3290
    %v3388 = vunpack.c.h.b16 %v3290
    %v3389 = vunpack.c.l.b16 %v3291
    %v3390 = vunpack.c.h.b16 %v3291
    %v3391 = vunpack.c.l.b16 %v3292
    %v3392 = vunpack.c.h.b16 %v3292
    %v3393 = vpack.c.b16 %v3331, %v3329
    %v3394 = vpack.c.b16 %v3332, %v3330
    %v3395 = vpack.c.b16 %v3335, %v3333
    %v3396 = vpack.c.b16 %v3336, %v3334
    %v3397 = vpack.c.b16 %v3339, %v3337
    %v3398 = vpack.c.b16 %v3340, %v3338
    %v3399 = vpack.c.b16 %v3343, %v3341
    %v3400 = vpack.c.b16 %v3344, %v3342
    %v3401 = vpack.c.b16 %v3347, %v3345
    %v3402 = vpack.c.b16 %v3348, %v3346
    %v3403 = vpack.c.b16 %v3351, %v3349
    %v3404 = vpack.c.b16 %v3352, %v3350
    %v3405 = vpack.c.b16 %v3355, %v3353
    %v3406 = vpack.c.b16 %v3356, %v3354
    %v3407 = vpack.c.b16 %v3359, %v3357
    %v3408 = vpack.c.b16 %v3360, %v3358
    %v3409 = vpack.c.b16 %v3363, %v3361
    %v3410 = vpack.c.b16 %v3364, %v3362
    %v3411 = vpack.c.b16 %v3367, %v3365
    %v3412 = vpack.c.b16 %v3368, %v3366
    %v3413 = vpack.c.b16 %v3371, %v3369
    %v3414 = vpack.c.b16 %v3372, %v3370
    %v3415 = vpack.c.b16 %v3375, %v3373
    %v3416 = vpack.c.b16 %v3376, %v3374
    %v3417 = vpack.c.b16 %v3379, %v3377
    %v3418 = vpack.c.b16 %v3380, %v3378
    %v3419 = vpack.c.b16 %v3383, %v3381
    %v3420 = vpack.c.b16 %v3384, %v3382
    %v3421 = vpack.c.b16 %v3387, %v3385
    %v3422 = vpack.c.b16 %v3388, %v3386
    %v3423 = vpack.c.b16 %v3391, %v3389
    %v3424 = vpack.c.b16 %v3392, %v3390
    %v3458 = vlaneseq
    %v3459 = vshrl.u32 %v3458, 7
    %v3460 = vsub.s32 0, %v3459
    %v3461 = vrot.slane %v3294, %v3460
    %v3462 = vlaneseq
    %v3463 = vshrl.u32 %v3462, 7
    %v3464 = vsub.s32 1, %v3463
    %v3465 = vrot.slane %v3294, %v3464
    %3468 = vmatprep.subr.bf16.mxu0 %v3394
    %3469 = vmatpush1.bf16.msra.mxu0 %v3393
    %3470 = vmatprep.subr.bf16.mxu0 %v3396
    %3471 = vmatpush1.bf16.msra.mxu0 %v3395
    %3472 = vmatprep.subr.bf16.mxu0 %v3398
    %3473 = vmatpush1.bf16.msra.mxu0 %v3397
    %3474 = vmatprep.subr.bf16.mxu0 %v3400
    %3475 = vmatpush1.bf16.msra.mxu0 %v3399
    %3476 = vmatprep.subr.bf16.mxu0 %v3402
    %3477 = vmatpush1.bf16.msra.mxu0 %v3401
    %3478 = vmatprep.subr.bf16.mxu0 %v3404
    %3479 = vmatpush1.bf16.msra.mxu0 %v3403
    %3480 = vmatprep.subr.bf16.mxu0 %v3406
    %3481 = vmatpush1.bf16.msra.mxu0 %v3405
    %3482 = vmatprep.subr.bf16.mxu0 %v3408
    %3483 = vmatpush1.bf16.msra.mxu0 %v3407
    %3484 = vmatprep.subr.bf16.mxu0 %v3410
    %3485 = vmatpush1.bf16.msra.mxu0 %v3409
    %3486 = vmatprep.subr.bf16.mxu0 %v3412
    %3487 = vmatpush1.bf16.msra.mxu0 %v3411
    %3488 = vmatprep.subr.bf16.mxu0 %v3414
    %3489 = vmatpush1.bf16.msra.mxu0 %v3413
    %3490 = vmatprep.subr.bf16.mxu0 %v3416
    %3491 = vmatpush1.bf16.msra.mxu0 %v3415
    %3492 = vmatprep.subr.bf16.mxu0 %v3418
    %3493 = vmatpush1.bf16.msra.mxu0 %v3417
    %3494 = vmatprep.subr.bf16.mxu0 %v3420
    %3495 = vmatpush1.bf16.msra.mxu0 %v3419
    %3496 = vmatprep.subr.bf16.mxu0 %v3422
    %3497 = vmatpush1.bf16.msra.mxu0 %v3421
    %3498 = vmatprep.subr.bf16.mxu0 %v3424
    %3499 = vmatpush1.bf16.msra.mxu0 %v3423
    %3500 = vmatprep.mubr.bf16.mxu0 %v3296
    %3501 = vmatmul.mubr.bf16.gmra.mrb[0].mxu0 %v3295
    %v3502 = vpop.f32.mrb[0].mxu0
    %v3503 = vadd.f32 %v3461, %v3502
    %v3504 = vpop.f32.mrb[0].mxu0
    %v3505 = vadd.f32 %v3465, %v3504
    %v3506 = vpop.f32.mrb[0].mxu0
    %v3507 = vpop.f32.mrb[0].mxu0
    %3508 = vdwg.mxu0
    %v3509 = vmax.f32 %v3503, 0.0
    %v3510 = vmax.f32 %v3505, 0.0
    %s3511 = smul.addr %s2994, 4
    %s3512 = scalar_lea.vmem [#allocation26], %s3511
    %v3513 = vld [vmem:[%s3512] sm:$0xff]
    %v3514 = vld [vmem:[%s3512 + $0x8] sm:$0xff]
    %v3515 = vld [vmem:[%s3512 + $0x10] sm:$0xff]
    %v3516 = vld [vmem:[%s3512 + $0x18] sm:$0xff]
    %v3517 = vld [vmem:[%s3512 + $0x20] sm:$0xff]
    %v3518 = vld [vmem:[%s3512 + $0x28] sm:$0xff]
    %v3519 = vld [vmem:[%s3512 + $0x30] sm:$0xff]
    %v3520 = vld [vmem:[%s3512 + $0x38] sm:$0xff]
    %v3521 = vld [vmem:[%s3512 + $0x40] sm:$0xff]
    %v3522 = vld [vmem:[%s3512 + $0x48] sm:$0xff]
    %v3523 = vld [vmem:[%s3512 + $0x50] sm:$0xff]
    %v3524 = vld [vmem:[%s3512 + $0x58] sm:$0xff]
    %v3525 = vld [vmem:[%s3512 + $0x60] sm:$0xff]
    %v3526 = vld [vmem:[%s3512 + $0x68] sm:$0xff]
    %v3527 = vld [vmem:[%s3512 + $0x70] sm:$0xff]
    %v3528 = vld [vmem:[%s3512 + $0x78] sm:$0xff]
    %v3529 = vld [vmem:[%s3512 + $0x80] sm:$0xff]
    %v3530 = vld [vmem:[%s3512 + $0x88] sm:$0xff]
    %v3531 = vld [vmem:[%s3512 + $0x90] sm:$0xff]
    %v3532 = vld [vmem:[%s3512 + $0x98] sm:$0xff]
    %v3533 = vld [vmem:[%s3512 + $0xa0] sm:$0xff]
    %v3534 = vld [vmem:[%s3512 + $0xa8] sm:$0xff]
    %v3535 = vld [vmem:[%s3512 + $0xb0] sm:$0xff]
    %v3536 = vld [vmem:[%s3512 + $0xb8] sm:$0xff]
    %v3537 = vld [vmem:[%s3512 + $0xc0] sm:$0xff]
    %v3538 = vld [vmem:[%s3512 + $0xc8] sm:$0xff]
    %v3539 = vld [vmem:[%s3512 + $0xd0] sm:$0xff]
    %v3540 = vld [vmem:[%s3512 + $0xd8] sm:$0xff]
    %v3541 = vld [vmem:[%s3512 + $0xe0] sm:$0xff]
    %v3542 = vld [vmem:[%s3512 + $0xe8] sm:$0xff]
    %v3543 = vld [vmem:[%s3512 + $0xf0] sm:$0xff]
    %v3544 = vld [vmem:[%s3512 + $0xf8] sm:$0xff]
    %s3545 = scalar_lea.vmem [#allocation28], %s3029
    %v3546 = vld [vmem:[%s3545] sm:$0x3]
    %v3547 = vpack.c.bf16 %v3509, %v3509
    %v3548 = vpack.c.bf16 %v3510, %v3510
    %v3581 = vunpack.c.l.b16 %v3513
    %v3582 = vunpack.c.h.b16 %v3513
    %v3583 = vunpack.c.l.b16 %v3514
    %v3584 = vunpack.c.h.b16 %v3514
    %v3585 = vunpack.c.l.b16 %v3515
    %v3586 = vunpack.c.h.b16 %v3515
    %v3587 = vunpack.c.l.b16 %v3516
    %v3588 = vunpack.c.h.b16 %v3516
    %v3589 = vunpack.c.l.b16 %v3517
    %v3590 = vunpack.c.h.b16 %v3517
    %v3591 = vunpack.c.l.b16 %v3518
    %v3592 = vunpack.c.h.b16 %v3518
    %v3593 = vunpack.c.l.b16 %v3519
    %v3594 = vunpack.c.h.b16 %v3519
    %v3595 = vunpack.c.l.b16 %v3520
    %v3596 = vunpack.c.h.b16 %v3520
    %v3597 = vunpack.c.l.b16 %v3521
    %v3598 = vunpack.c.h.b16 %v3521
    %v3599 = vunpack.c.l.b16 %v3522
    %v3600 = vunpack.c.h.b16 %v3522
    %v3601 = vunpack.c.l.b16 %v3523
    %v3602 = vunpack.c.h.b16 %v3523
    %v3603 = vunpack.c.l.b16 %v3524
    %v3604 = vunpack.c.h.b16 %v3524
    %v3605 = vunpack.c.l.b16 %v3525
    %v3606 = vunpack.c.h.b16 %v3525
    %v3607 = vunpack.c.l.b16 %v3526
    %v3608 = vunpack.c.h.b16 %v3526
    %v3609 = vunpack.c.l.b16 %v3527
    %v3610 = vunpack.c.h.b16 %v3527
    %v3611 = vunpack.c.l.b16 %v3528
    %v3612 = vunpack.c.h.b16 %v3528
    %v3613 = vunpack.c.l.b16 %v3529
    %v3614 = vunpack.c.h.b16 %v3529
    %v3615 = vunpack.c.l.b16 %v3530
    %v3616 = vunpack.c.h.b16 %v3530
    %v3617 = vunpack.c.l.b16 %v3531
    %v3618 = vunpack.c.h.b16 %v3531
    %v3619 = vunpack.c.l.b16 %v3532
    %v3620 = vunpack.c.h.b16 %v3532
    %v3621 = vunpack.c.l.b16 %v3533
    %v3622 = vunpack.c.h.b16 %v3533
    %v3623 = vunpack.c.l.b16 %v3534
    %v3624 = vunpack.c.h.b16 %v3534
    %v3625 = vunpack.c.l.b16 %v3535
    %v3626 = vunpack.c.h.b16 %v3535
    %v3627 = vunpack.c.l.b16 %v3536
    %v3628 = vunpack.c.h.b16 %v3536
    %v3629 = vunpack.c.l.b16 %v3537
    %v3630 = vunpack.c.h.b16 %v3537
    %v3631 = vunpack.c.l.b16 %v3538
    %v3632 = vunpack.c.h.b16 %v3538
    %v3633 = vunpack.c.l.b16 %v3539
    %v3634 = vunpack.c.h.b16 %v3539
    %v3635 = vunpack.c.l.b16 %v3540
    %v3636 = vunpack.c.h.b16 %v3540
    %v3637 = vunpack.c.l.b16 %v3541
    %v3638 = vunpack.c.h.b16 %v3541
    %v3639 = vunpack.c.l.b16 %v3542
    %v3640 = vunpack.c.h.b16 %v3542
    %v3641 = vunpack.c.l.b16 %v3543
    %v3642 = vunpack.c.h.b16 %v3543
    %v3643 = vunpack.c.l.b16 %v3544
    %v3644 = vunpack.c.h.b16 %v3544
    %v3645 = vpack.c.b16 %v3583, %v3581
    %v3646 = vpack.c.b16 %v3584, %v3582
    %v3647 = vpack.c.b16 %v3587, %v3585
    %v3648 = vpack.c.b16 %v3588, %v3586
    %v3649 = vpack.c.b16 %v3591, %v3589
    %v3650 = vpack.c.b16 %v3592, %v3590
    %v3651 = vpack.c.b16 %v3595, %v3593
    %v3652 = vpack.c.b16 %v3596, %v3594
    %v3653 = vpack.c.b16 %v3599, %v3597
    %v3654 = vpack.c.b16 %v3600, %v3598
    %v3655 = vpack.c.b16 %v3603, %v3601
    %v3656 = vpack.c.b16 %v3604, %v3602
    %v3657 = vpack.c.b16 %v3607, %v3605
    %v3658 = vpack.c.b16 %v3608, %v3606
    %v3659 = vpack.c.b16 %v3611, %v3609
    %v3660 = vpack.c.b16 %v3612, %v3610
    %v3661 = vpack.c.b16 %v3615, %v3613
    %v3662 = vpack.c.b16 %v3616, %v3614
    %v3663 = vpack.c.b16 %v3619, %v3617
    %v3664 = vpack.c.b16 %v3620, %v3618
    %v3665 = vpack.c.b16 %v3623, %v3621
    %v3666 = vpack.c.b16 %v3624, %v3622
    %v3667 = vpack.c.b16 %v3627, %v3625
    %v3668 = vpack.c.b16 %v3628, %v3626
    %v3669 = vpack.c.b16 %v3631, %v3629
    %v3670 = vpack.c.b16 %v3632, %v3630
    %v3671 = vpack.c.b16 %v3635, %v3633
    %v3672 = vpack.c.b16 %v3636, %v3634
    %v3673 = vpack.c.b16 %v3639, %v3637
    %v3674 = vpack.c.b16 %v3640, %v3638
    %v3675 = vpack.c.b16 %v3643, %v3641
    %v3676 = vpack.c.b16 %v3644, %v3642
    %v3710 = vlaneseq
    %v3711 = vshrl.u32 %v3710, 7
    %v3712 = vsub.s32 0, %v3711
    %v3713 = vrot.slane %v3546, %v3712
    %v3714 = vlaneseq
    %v3715 = vshrl.u32 %v3714, 7
    %v3716 = vsub.s32 1, %v3715
    %v3717 = vrot.slane %v3546, %v3716
    %3720 = vmatprep.subr.bf16.mxu0 %v3646
    %3721 = vmatpush1.bf16.msra.mxu0 %v3645
    %3722 = vmatprep.subr.bf16.mxu0 %v3648
    %3723 = vmatpush1.bf16.msra.mxu0 %v3647
    %3724 = vmatprep.subr.bf16.mxu0 %v3650
    %3725 = vmatpush1.bf16.msra.mxu0 %v3649
    %3726 = vmatprep.subr.bf16.mxu0 %v3652
    %3727 = vmatpush1.bf16.msra.mxu0 %v3651
    %3728 = vmatprep.subr.bf16.mxu0 %v3654
    %3729 = vmatpush1.bf16.msra.mxu0 %v3653
    %3730 = vmatprep.subr.bf16.mxu0 %v3656
    %3731 = vmatpush1.bf16.msra.mxu0 %v3655
    %3732 = vmatprep.subr.bf16.mxu0 %v3658
    %3733 = vmatpush1.bf16.msra.mxu0 %v3657
    %3734 = vmatprep.subr.bf16.mxu0 %v3660
    %3735 = vmatpush1.bf16.msra.mxu0 %v3659
    %3736 = vmatprep.subr.bf16.mxu0 %v3662
    %3737 = vmatpush1.bf16.msra.mxu0 %v3661
    %3738 = vmatprep.subr.bf16.mxu0 %v3664
    %3739 = vmatpush1.bf16.msra.mxu0 %v3663
    %3740 = vmatprep.subr.bf16.mxu0 %v3666
    %3741 = vmatpush1.bf16.msra.mxu0 %v3665
    %3742 = vmatprep.subr.bf16.mxu0 %v3668
    %3743 = vmatpush1.bf16.msra.mxu0 %v3667
    %3744 = vmatprep.subr.bf16.mxu0 %v3670
    %3745 = vmatpush1.bf16.msra.mxu0 %v3669
    %3746 = vmatprep.subr.bf16.mxu0 %v3672
    %3747 = vmatpush1.bf16.msra.mxu0 %v3671
    %3748 = vmatprep.subr.bf16.mxu0 %v3674
    %3749 = vmatpush1.bf16.msra.mxu0 %v3673
    %3750 = vmatprep.subr.bf16.mxu0 %v3676
    %3751 = vmatpush1.bf16.msra.mxu0 %v3675
    %3752 = vmatprep.mubr.bf16.mxu0 %v3548
    %3753 = vmatmul.mubr.bf16.gmra.mrb[0].mxu0 %v3547
    %v3754 = vpop.f32.mrb[0].mxu0
    %v3755 = vadd.f32 %v3713, %v3754
    %v3756 = vpop.f32.mrb[0].mxu0
    %v3757 = vadd.f32 %v3717, %v3756
    %v3758 = vpop.f32.mrb[0].mxu0
    %v3759 = vpop.f32.mrb[0].mxu0
    %3760 = vdwg.mxu0
    %v3761 = vmax.f32 %v3755, 0.0
    %v3762 = vmax.f32 %v3757, 0.0
    %s3763 = smul.u32 %s2991, 32
    %s3764 = smul.addr %s3763, 4
    %s3765 = scalar_lea.vmem %s16, %s3764
    %v3766 = vld [vmem:[%s3765] sm:$0xf]
    %v3767 = vld [vmem:[%s3765 + $0x4] sm:$0xf]
    %v3768 = vld [vmem:[%s3765 + $0x8] sm:$0xf]
    %v3769 = vld [vmem:[%s3765 + $0xc] sm:$0xf]
    %v3770 = vld [vmem:[%s3765 + $0x10] sm:$0xf]
    %v3771 = vld [vmem:[%s3765 + $0x14] sm:$0xf]
    %v3772 = vld [vmem:[%s3765 + $0x18] sm:$0xf]
    %v3773 = vld [vmem:[%s3765 + $0x1c] sm:$0xf]
    %v3774 = vld [vmem:[%s3765 + $0x20] sm:$0xf]
    %v3775 = vld [vmem:[%s3765 + $0x24] sm:$0xf]
    %v3776 = vld [vmem:[%s3765 + $0x28] sm:$0xf]
    %v3777 = vld [vmem:[%s3765 + $0x2c] sm:$0xf]
    %v3778 = vld [vmem:[%s3765 + $0x30] sm:$0xf]
    %v3779 = vld [vmem:[%s3765 + $0x34] sm:$0xf]
    %v3780 = vld [vmem:[%s3765 + $0x38] sm:$0xf]
    %v3781 = vld [vmem:[%s3765 + $0x3c] sm:$0xf]
    %v3782 = vld [vmem:[%s3765 + $0x40] sm:$0xf]
    %v3783 = vld [vmem:[%s3765 + $0x44] sm:$0xf]
    %v3784 = vld [vmem:[%s3765 + $0x48] sm:$0xf]
    %v3785 = vld [vmem:[%s3765 + $0x4c] sm:$0xf]
    %v3786 = vld [vmem:[%s3765 + $0x50] sm:$0xf]
    %v3787 = vld [vmem:[%s3765 + $0x54] sm:$0xf]
    %v3788 = vld [vmem:[%s3765 + $0x58] sm:$0xf]
    %v3789 = vld [vmem:[%s3765 + $0x5c] sm:$0xf]
    %v3790 = vld [vmem:[%s3765 + $0x60] sm:$0xf]
    %v3791 = vld [vmem:[%s3765 + $0x64] sm:$0xf]
    %v3792 = vld [vmem:[%s3765 + $0x68] sm:$0xf]
    %v3793 = vld [vmem:[%s3765 + $0x6c] sm:$0xf]
    %v3794 = vld [vmem:[%s3765 + $0x70] sm:$0xf]
    %v3795 = vld [vmem:[%s3765 + $0x74] sm:$0xf]
    %v3796 = vld [vmem:[%s3765 + $0x78] sm:$0xf]
    %v3797 = vld [vmem:[%s3765 + $0x7c] sm:$0xf]
    %s3798 = scalar_lea.vmem [#allocation29], %s2991
    %v3799 = vld [vmem:[%s3798] sm:$0x1]
    %v3800 = vpack.c.bf16 %v3761, %v3761
    %v3801 = vpack.c.bf16 %v3762, %v3762
    %v3834 = vunpack.c.l.b16 %v3766
    %v3835 = vunpack.c.l.b16 %v3767
    %v3836 = vunpack.c.l.b16 %v3768
    %v3837 = vunpack.c.l.b16 %v3769
    %v3838 = vunpack.c.l.b16 %v3770
    %v3839 = vunpack.c.l.b16 %v3771
    %v3840 = vunpack.c.l.b16 %v3772
    %v3841 = vunpack.c.l.b16 %v3773
    %v3842 = vunpack.c.l.b16 %v3774
    %v3843 = vunpack.c.l.b16 %v3775
    %v3844 = vunpack.c.l.b16 %v3776
    %v3845 = vunpack.c.l.b16 %v3777
    %v3846 = vunpack.c.l.b16 %v3778
    %v3847 = vunpack.c.l.b16 %v3779
    %v3848 = vunpack.c.l.b16 %v3780
    %v3849 = vunpack.c.l.b16 %v3781
    %v3850 = vunpack.c.l.b16 %v3782
    %v3851 = vunpack.c.l.b16 %v3783
    %v3852 = vunpack.c.l.b16 %v3784
    %v3853 = vunpack.c.l.b16 %v3785
    %v3854 = vunpack.c.l.b16 %v3786
    %v3855 = vunpack.c.l.b16 %v3787
    %v3856 = vunpack.c.l.b16 %v3788
    %v3857 = vunpack.c.l.b16 %v3789
    %v3858 = vunpack.c.l.b16 %v3790
    %v3859 = vunpack.c.l.b16 %v3791
    %v3860 = vunpack.c.l.b16 %v3792
    %v3861 = vunpack.c.l.b16 %v3793
    %v3862 = vunpack.c.l.b16 %v3794
    %v3863 = vunpack.c.l.b16 %v3795
    %v3864 = vunpack.c.l.b16 %v3796
    %v3865 = vunpack.c.l.b16 %v3797
    %v3866 = vpack.c.b16 %v3835, %v3834
    %v3867 = vpack.c.b16 %v3837, %v3836
    %v3868 = vpack.c.b16 %v3839, %v3838
    %v3869 = vpack.c.b16 %v3841, %v3840
    %v3870 = vpack.c.b16 %v3843, %v3842
    %v3871 = vpack.c.b16 %v3845, %v3844
    %v3872 = vpack.c.b16 %v3847, %v3846
    %v3873 = vpack.c.b16 %v3849, %v3848
    %v3874 = vpack.c.b16 %v3851, %v3850
    %v3875 = vpack.c.b16 %v3853, %v3852
    %v3876 = vpack.c.b16 %v3855, %v3854
    %v3877 = vpack.c.b16 %v3857, %v3856
    %v3878 = vpack.c.b16 %v3859, %v3858
    %v3879 = vpack.c.b16 %v3861, %v3860
    %v3880 = vpack.c.b16 %v3863, %v3862
    %v3881 = vpack.c.b16 %v3865, %v3864
    %3898 = vmatprep.subr.bf16.mxu0 0
    %3899 = vmatpush1.bf16.msra.mxu0 %v3866
    %3900 = vmatprep.subr.bf16.mxu0 0
    %3901 = vmatpush1.bf16.msra.mxu0 %v3867
    %3902 = vmatprep.subr.bf16.mxu0 0
    %3903 = vmatpush1.bf16.msra.mxu0 %v3868
    %3904 = vmatprep.subr.bf16.mxu0 0
    %3905 = vmatpush1.bf16.msra.mxu0 %v3869
    %3906 = vmatprep.subr.bf16.mxu0 0
    %3907 = vmatpush1.bf16.msra.mxu0 %v3870
    %3908 = vmatprep.subr.bf16.mxu0 0
    %3909 = vmatpush1.bf16.msra.mxu0 %v3871
    %3910 = vmatprep.subr.bf16.mxu0 0
    %3911 = vmatpush1.bf16.msra.mxu0 %v3872
    %3912 = vmatprep.subr.bf16.mxu0 0
    %3913 = vmatpush1.bf16.msra.mxu0 %v3873
    %3914 = vmatprep.subr.bf16.mxu0 0
    %3915 = vmatpush1.bf16.msra.mxu0 %v3874
    %3916 = vmatprep.subr.bf16.mxu0 0
    %3917 = vmatpush1.bf16.msra.mxu0 %v3875
    %3918 = vmatprep.subr.bf16.mxu0 0
    %3919 = vmatpush1.bf16.msra.mxu0 %v3876
    %3920 = vmatprep.subr.bf16.mxu0 0
    %3921 = vmatpush1.bf16.msra.mxu0 %v3877
    %3922 = vmatprep.subr.bf16.mxu0 0
    %3923 = vmatpush1.bf16.msra.mxu0 %v3878
    %3924 = vmatprep.subr.bf16.mxu0 0
    %3925 = vmatpush1.bf16.msra.mxu0 %v3879
    %3926 = vmatprep.subr.bf16.mxu0 0
    %3927 = vmatpush1.bf16.msra.mxu0 %v3880
    %3928 = vmatprep.subr.bf16.mxu0 0
    %3929 = vmatpush1.bf16.msra.mxu0 %v3881
    %3930 = vmatprep.mubr.bf16.mxu0 %v3801
    %3931 = vmatmul.mubr.bf16.gmra.mrb[0].mxu0 %v3800
    %v3932 = vpop.f32.mrb[0].mxu0
    %v3933 = vadd.f32 %v3799, %v3932
    %v3934 = vpop.f32.mrb[0].mxu0
    %v3935 = vpop.f32.mrb[0].mxu0
    %v3936 = vpop.f32.mrb[0].mxu0
    %3937 = vdwg.mxu0
    %3938 = vst.msk [vmem:[#allocation31 + $0x2] sm:$0x1] %vm2039, %v3933
    %s3939 = sadd.s32 %s270, 3
    %s3940 = sld [smem:[#allocation4 + %s3939]]
    %s3941 = scalar_lea.vmem [#allocation2], 3
    %v3942 = vld [vmem:[%s3941] ss:$8 sm:$0x3]
    %s3943 = smul.u32 %s3940, 64
    %s3944 = smul.addr %s3943, 4
    %s3945 = scalar_lea.vmem [#allocation20], %s3944
    %v3946 = vld [vmem:[%s3945] sm:$0xff]
    %v3947 = vld [vmem:[%s3945 + $0x8] sm:$0xff]
    %v3948 = vld [vmem:[%s3945 + $0x10] sm:$0xff]
    %v3949 = vld [vmem:[%s3945 + $0x18] sm:$0xff]
    %v3950 = vld [vmem:[%s3945 + $0x20] sm:$0xff]
    %v3951 = vld [vmem:[%s3945 + $0x28] sm:$0xff]
    %v3952 = vld [vmem:[%s3945 + $0x30] sm:$0xff]
    %v3953 = vld [vmem:[%s3945 + $0x38] sm:$0xff]
    %v3954 = vld [vmem:[%s3945 + $0x40] sm:$0xff]
    %v3955 = vld [vmem:[%s3945 + $0x48] sm:$0xff]
    %v3956 = vld [vmem:[%s3945 + $0x50] sm:$0xff]
    %v3957 = vld [vmem:[%s3945 + $0x58] sm:$0xff]
    %v3958 = vld [vmem:[%s3945 + $0x60] sm:$0xff]
    %v3959 = vld [vmem:[%s3945 + $0x68] sm:$0xff]
    %v3960 = vld [vmem:[%s3945 + $0x70] sm:$0xff]
    %v3961 = vld [vmem:[%s3945 + $0x78] sm:$0xff]
    %v3962 = vld [vmem:[%s3945 + $0x80] sm:$0xff]
    %v3963 = vld [vmem:[%s3945 + $0x88] sm:$0xff]
    %v3964 = vld [vmem:[%s3945 + $0x90] sm:$0xff]
    %v3965 = vld [vmem:[%s3945 + $0x98] sm:$0xff]
    %v3966 = vld [vmem:[%s3945 + $0xa0] sm:$0xff]
    %v3967 = vld [vmem:[%s3945 + $0xa8] sm:$0xff]
    %v3968 = vld [vmem:[%s3945 + $0xb0] sm:$0xff]
    %v3969 = vld [vmem:[%s3945 + $0xb8] sm:$0xff]
    %v3970 = vld [vmem:[%s3945 + $0xc0] sm:$0xff]
    %v3971 = vld [vmem:[%s3945 + $0xc8] sm:$0xff]
    %v3972 = vld [vmem:[%s3945 + $0xd0] sm:$0xff]
    %v3973 = vld [vmem:[%s3945 + $0xd8] sm:$0xff]
    %v3974 = vld [vmem:[%s3945 + $0xe0] sm:$0xff]
    %v3975 = vld [vmem:[%s3945 + $0xe8] sm:$0xff]
    %v3976 = vld [vmem:[%s3945 + $0xf0] sm:$0xff]
    %v3977 = vld [vmem:[%s3945 + $0xf8] sm:$0xff]
    %s3978 = smul.u32 %s3940, 2
    %s3979 = scalar_lea.vmem [#allocation22], %s3978
    %v3980 = vld [vmem:[%s3979] sm:$0x3]
    %v3982 = vlaneseq
    %v3983 = vshrl.u32 %v3982, 7
    %v3984 = vsub.s32 0, %v3983
    %v3985 = vrot.slane %v3942, %v3984
    %v3986 = vlaneseq
    %v3987 = vshrl.u32 %v3986, 7
    %v3988 = vsub.s32 1, %v3987
    %v3989 = vrot.slane %v3942, %v3988
    %v3992 = vpack.c.bf16 %v3985, %v3985
    %v3993 = vpack.c.bf16 %v3989, %v3989
    %v4026 = vunpack.c.l.b16 %v3946
    %v4027 = vunpack.c.h.b16 %v3946
    %v4028 = vunpack.c.l.b16 %v3947
    %v4029 = vunpack.c.h.b16 %v3947
    %v4030 = vunpack.c.l.b16 %v3948
    %v4031 = vunpack.c.h.b16 %v3948
    %v4032 = vunpack.c.l.b16 %v3949
    %v4033 = vunpack.c.h.b16 %v3949
    %v4034 = vunpack.c.l.b16 %v3950
    %v4035 = vunpack.c.h.b16 %v3950
    %v4036 = vunpack.c.l.b16 %v3951
    %v4037 = vunpack.c.h.b16 %v3951
    %v4038 = vunpack.c.l.b16 %v3952
    %v4039 = vunpack.c.h.b16 %v3952
    %v4040 = vunpack.c.l.b16 %v3953
    %v4041 = vunpack.c.h.b16 %v3953
    %v4042 = vunpack.c.l.b16 %v3954
    %v4043 = vunpack.c.h.b16 %v3954
    %v4044 = vunpack.c.l.b16 %v3955
    %v4045 = vunpack.c.h.b16 %v3955
    %v4046 = vunpack.c.l.b16 %v3956
    %v4047 = vunpack.c.h.b16 %v3956
    %v4048 = vunpack.c.l.b16 %v3957
    %v4049 = vunpack.c.h.b16 %v3957
    %v4050 = vunpack.c.l.b16 %v3958
    %v4051 = vunpack.c.h.b16 %v3958
    %v4052 = vunpack.c.l.b16 %v3959
    %v4053 = vunpack.c.h.b16 %v3959
    %v4054 = vunpack.c.l.b16 %v3960
    %v4055 = vunpack.c.h.b16 %v3960
    %v4056 = vunpack.c.l.b16 %v3961
    %v4057 = vunpack.c.h.b16 %v3961
    %v4058 = vunpack.c.l.b16 %v3962
    %v4059 = vunpack.c.h.b16 %v3962
    %v4060 = vunpack.c.l.b16 %v3963
    %v4061 = vunpack.c.h.b16 %v3963
    %v4062 = vunpack.c.l.b16 %v3964
    %v4063 = vunpack.c.h.b16 %v3964
    %v4064 = vunpack.c.l.b16 %v3965
    %v4065 = vunpack.c.h.b16 %v3965
    %v4066 = vunpack.c.l.b16 %v3966
    %v4067 = vunpack.c.h.b16 %v3966
    %v4068 = vunpack.c.l.b16 %v3967
    %v4069 = vunpack.c.h.b16 %v3967
    %v4070 = vunpack.c.l.b16 %v3968
    %v4071 = vunpack.c.h.b16 %v3968
    %v4072 = vunpack.c.l.b16 %v3969
    %v4073 = vunpack.c.h.b16 %v3969
    %v4074 = vunpack.c.l.b16 %v3970
    %v4075 = vunpack.c.h.b16 %v3970
    %v4076 = vunpack.c.l.b16 %v3971
    %v4077 = vunpack.c.h.b16 %v3971
    %v4078 = vunpack.c.l.b16 %v3972
    %v4079 = vunpack.c.h.b16 %v3972
    %v4080 = vunpack.c.l.b16 %v3973
    %v4081 = vunpack.c.h.b16 %v3973
    %v4082 = vunpack.c.l.b16 %v3974
    %v4083 = vunpack.c.h.b16 %v3974
    %v4084 = vunpack.c.l.b16 %v3975
    %v4085 = vunpack.c.h.b16 %v3975
    %v4086 = vunpack.c.l.b16 %v3976
    %v4087 = vunpack.c.h.b16 %v3976
    %v4088 = vunpack.c.l.b16 %v3977
    %v4089 = vunpack.c.h.b16 %v3977
    %v4090 = vpack.c.b16 %v4028, %v4026
    %v4091 = vpack.c.b16 %v4029, %v4027
    %v4092 = vpack.c.b16 %v4032, %v4030
    %v4093 = vpack.c.b16 %v4033, %v4031
    %v4094 = vpack.c.b16 %v4036, %v4034
    %v4095 = vpack.c.b16 %v4037, %v4035
    %v4096 = vpack.c.b16 %v4040, %v4038
    %v4097 = vpack.c.b16 %v4041, %v4039
    %v4098 = vpack.c.b16 %v4044, %v4042
    %v4099 = vpack.c.b16 %v4045, %v4043
    %v4100 = vpack.c.b16 %v4048, %v4046
    %v4101 = vpack.c.b16 %v4049, %v4047
    %v4102 = vpack.c.b16 %v4052, %v4050
    %v4103 = vpack.c.b16 %v4053, %v4051
    %v4104 = vpack.c.b16 %v4056, %v4054
    %v4105 = vpack.c.b16 %v4057, %v4055
    %v4106 = vpack.c.b16 %v4060, %v4058
    %v4107 = vpack.c.b16 %v4061, %v4059
    %v4108 = vpack.c.b16 %v4064, %v4062
    %v4109 = vpack.c.b16 %v4065, %v4063
    %v4110 = vpack.c.b16 %v4068, %v4066
    %v4111 = vpack.c.b16 %v4069, %v4067
    %v4112 = vpack.c.b16 %v4072, %v4070
    %v4113 = vpack.c.b16 %v4073, %v4071
    %v4114 = vpack.c.b16 %v4076, %v4074
    %v4115 = vpack.c.b16 %v4077, %v4075
    %v4116 = vpack.c.b16 %v4080, %v4078
    %v4117 = vpack.c.b16 %v4081, %v4079
    %v4118 = vpack.c.b16 %v4084, %v4082
    %v4119 = vpack.c.b16 %v4085, %v4083
    %v4120 = vpack.c.b16 %v4088, %v4086
    %v4121 = vpack.c.b16 %v4089, %v4087
    %v4155 = vlaneseq
    %v4156 = vshrl.u32 %v4155, 7
    %v4157 = vsub.s32 0, %v4156
    %v4158 = vrot.slane %v3980, %v4157
    %v4159 = vlaneseq
    %v4160 = vshrl.u32 %v4159, 7
    %v4161 = vsub.s32 1, %v4160
    %v4162 = vrot.slane %v3980, %v4161
    %4165 = vmatprep.subr.bf16.mxu0 %v4091
    %4166 = vmatpush1.bf16.msra.mxu0 %v4090
    %4167 = vmatprep.subr.bf16.mxu0 %v4093
    %4168 = vmatpush1.bf16.msra.mxu0 %v4092
    %4169 = vmatprep.subr.bf16.mxu0 %v4095
    %4170 = vmatpush1.bf16.msra.mxu0 %v4094
    %4171 = vmatprep.subr.bf16.mxu0 %v4097
    %4172 = vmatpush1.bf16.msra.mxu0 %v4096
    %4173 = vmatprep.subr.bf16.mxu0 %v4099
    %4174 = vmatpush1.bf16.msra.mxu0 %v4098
    %4175 = vmatprep.subr.bf16.mxu0 %v4101
    %4176 = vmatpush1.bf16.msra.mxu0 %v4100
    %4177 = vmatprep.subr.bf16.mxu0 %v4103
    %4178 = vmatpush1.bf16.msra.mxu0 %v4102
    %4179 = vmatprep.subr.bf16.mxu0 %v4105
    %4180 = vmatpush1.bf16.msra.mxu0 %v4104
    %4181 = vmatprep.subr.bf16.mxu0 %v4107
    %4182 = vmatpush1.bf16.msra.mxu0 %v4106
    %4183 = vmatprep.subr.bf16.mxu0 %v4109
    %4184 = vmatpush1.bf16.msra.mxu0 %v4108
    %4185 = vmatprep.subr.bf16.mxu0 %v4111
    %4186 = vmatpush1.bf16.msra.mxu0 %v4110
    %4187 = vmatprep.subr.bf16.mxu0 %v4113
    %4188 = vmatpush1.bf16.msra.mxu0 %v4112
    %4189 = vmatprep.subr.bf16.mxu0 %v4115
    %4190 = vmatpush1.bf16.msra.mxu0 %v4114
    %4191 = vmatprep.subr.bf16.mxu0 %v4117
    %4192 = vmatpush1.bf16.msra.mxu0 %v4116
    %4193 = vmatprep.subr.bf16.mxu0 %v4119
    %4194 = vmatpush1.bf16.msra.mxu0 %v4118
    %4195 = vmatprep.subr.bf16.mxu0 %v4121
    %4196 = vmatpush1.bf16.msra.mxu0 %v4120
    %4197 = vmatprep.mubr.bf16.mxu0 %v3993
    %4198 = vmatmul.mubr.bf16.gmra.mrb[0].mxu0 %v3992
    %v4199 = vpop.f32.mrb[0].mxu0
    %v4200 = vadd.f32 %v4158, %v4199
    %v4201 = vpop.f32.mrb[0].mxu0
    %v4202 = vadd.f32 %v4162, %v4201
    %v4203 = vpop.f32.mrb[0].mxu0
    %v4204 = vpop.f32.mrb[0].mxu0
    %4205 = vdwg.mxu0
    %v4206 = vmax.f32 %v4200, 0.0
    %v4207 = vmax.f32 %v4202, 0.0
    %s4208 = smul.addr %s3943, 4
    %s4209 = scalar_lea.vmem [#allocation23], %s4208
    %v4210 = vld [vmem:[%s4209] sm:$0xff]
    %v4211 = vld [vmem:[%s4209 + $0x8] sm:$0xff]
    %v4212 = vld [vmem:[%s4209 + $0x10] sm:$0xff]
    %v4213 = vld [vmem:[%s4209 + $0x18] sm:$0xff]
    %v4214 = vld [vmem:[%s4209 + $0x20] sm:$0xff]
    %v4215 = vld [vmem:[%s4209 + $0x28] sm:$0xff]
    %v4216 = vld [vmem:[%s4209 + $0x30] sm:$0xff]
    %v4217 = vld [vmem:[%s4209 + $0x38] sm:$0xff]
    %v4218 = vld [vmem:[%s4209 + $0x40] sm:$0xff]
    %v4219 = vld [vmem:[%s4209 + $0x48] sm:$0xff]
    %v4220 = vld [vmem:[%s4209 + $0x50] sm:$0xff]
    %v4221 = vld [vmem:[%s4209 + $0x58] sm:$0xff]
    %v4222 = vld [vmem:[%s4209 + $0x60] sm:$0xff]
    %v4223 = vld [vmem:[%s4209 + $0x68] sm:$0xff]
    %v4224 = vld [vmem:[%s4209 + $0x70] sm:$0xff]
    %v4225 = vld [vmem:[%s4209 + $0x78] sm:$0xff]
    %v4226 = vld [vmem:[%s4209 + $0x80] sm:$0xff]
    %v4227 = vld [vmem:[%s4209 + $0x88] sm:$0xff]
    %v4228 = vld [vmem:[%s4209 + $0x90] sm:$0xff]
    %v4229 = vld [vmem:[%s4209 + $0x98] sm:$0xff]
    %v4230 = vld [vmem:[%s4209 + $0xa0] sm:$0xff]
    %v4231 = vld [vmem:[%s4209 + $0xa8] sm:$0xff]
    %v4232 = vld [vmem:[%s4209 + $0xb0] sm:$0xff]
    %v4233 = vld [vmem:[%s4209 + $0xb8] sm:$0xff]
    %v4234 = vld [vmem:[%s4209 + $0xc0] sm:$0xff]
    %v4235 = vld [vmem:[%s4209 + $0xc8] sm:$0xff]
    %v4236 = vld [vmem:[%s4209 + $0xd0] sm:$0xff]
    %v4237 = vld [vmem:[%s4209 + $0xd8] sm:$0xff]
    %v4238 = vld [vmem:[%s4209 + $0xe0] sm:$0xff]
    %v4239 = vld [vmem:[%s4209 + $0xe8] sm:$0xff]
    %v4240 = vld [vmem:[%s4209 + $0xf0] sm:$0xff]
    %v4241 = vld [vmem:[%s4209 + $0xf8] sm:$0xff]
    %s4242 = scalar_lea.vmem [#allocation25], %s3978
    %v4243 = vld [vmem:[%s4242] sm:$0x3]
    %v4244 = vpack.c.bf16 %v4206, %v4206
    %v4245 = vpack.c.bf16 %v4207, %v4207
    %v4278 = vunpack.c.l.b16 %v4210
    %v4279 = vunpack.c.h.b16 %v4210
    %v4280 = vunpack.c.l.b16 %v4211
    %v4281 = vunpack.c.h.b16 %v4211
    %v4282 = vunpack.c.l.b16 %v4212
    %v4283 = vunpack.c.h.b16 %v4212
    %v4284 = vunpack.c.l.b16 %v4213
    %v4285 = vunpack.c.h.b16 %v4213
    %v4286 = vunpack.c.l.b16 %v4214
    %v4287 = vunpack.c.h.b16 %v4214
    %v4288 = vunpack.c.l.b16 %v4215
    %v4289 = vunpack.c.h.b16 %v4215
    %v4290 = vunpack.c.l.b16 %v4216
    %v4291 = vunpack.c.h.b16 %v4216
    %v4292 = vunpack.c.l.b16 %v4217
    %v4293 = vunpack.c.h.b16 %v4217
    %v4294 = vunpack.c.l.b16 %v4218
    %v4295 = vunpack.c.h.b16 %v4218
    %v4296 = vunpack.c.l.b16 %v4219
    %v4297 = vunpack.c.h.b16 %v4219
    %v4298 = vunpack.c.l.b16 %v4220
    %v4299 = vunpack.c.h.b16 %v4220
    %v4300 = vunpack.c.l.b16 %v4221
    %v4301 = vunpack.c.h.b16 %v4221
    %v4302 = vunpack.c.l.b16 %v4222
    %v4303 = vunpack.c.h.b16 %v4222
    %v4304 = vunpack.c.l.b16 %v4223
    %v4305 = vunpack.c.h.b16 %v4223
    %v4306 = vunpack.c.l.b16 %v4224
    %v4307 = vunpack.c.h.b16 %v4224
    %v4308 = vunpack.c.l.b16 %v4225
    %v4309 = vunpack.c.h.b16 %v4225
    %v4310 = vunpack.c.l.b16 %v4226
    %v4311 = vunpack.c.h.b16 %v4226
    %v4312 = vunpack.c.l.b16 %v4227
    %v4313 = vunpack.c.h.b16 %v4227
    %v4314 = vunpack.c.l.b16 %v4228
    %v4315 = vunpack.c.h.b16 %v4228
    %v4316 = vunpack.c.l.b16 %v4229
    %v4317 = vunpack.c.h.b16 %v4229
    %v4318 = vunpack.c.l.b16 %v4230
    %v4319 = vunpack.c.h.b16 %v4230
    %v4320 = vunpack.c.l.b16 %v4231
    %v4321 = vunpack.c.h.b16 %v4231
    %v4322 = vunpack.c.l.b16 %v4232
    %v4323 = vunpack.c.h.b16 %v4232
    %v4324 = vunpack.c.l.b16 %v4233
    %v4325 = vunpack.c.h.b16 %v4233
    %v4326 = vunpack.c.l.b16 %v4234
    %v4327 = vunpack.c.h.b16 %v4234
    %v4328 = vunpack.c.l.b16 %v4235
    %v4329 = vunpack.c.h.b16 %v4235
    %v4330 = vunpack.c.l.b16 %v4236
    %v4331 = vunpack.c.h.b16 %v4236
    %v4332 = vunpack.c.l.b16 %v4237
    %v4333 = vunpack.c.h.b16 %v4237
    %v4334 = vunpack.c.l.b16 %v4238
    %v4335 = vunpack.c.h.b16 %v4238
    %v4336 = vunpack.c.l.b16 %v4239
    %v4337 = vunpack.c.h.b16 %v4239
    %v4338 = vunpack.c.l.b16 %v4240
    %v4339 = vunpack.c.h.b16 %v4240
    %v4340 = vunpack.c.l.b16 %v4241
    %v4341 = vunpack.c.h.b16 %v4241
    %v4342 = vpack.c.b16 %v4280, %v4278
    %v4343 = vpack.c.b16 %v4281, %v4279
    %v4344 = vpack.c.b16 %v4284, %v4282
    %v4345 = vpack.c.b16 %v4285, %v4283
    %v4346 = vpack.c.b16 %v4288, %v4286
    %v4347 = vpack.c.b16 %v4289, %v4287
    %v4348 = vpack.c.b16 %v4292, %v4290
    %v4349 = vpack.c.b16 %v4293, %v4291
    %v4350 = vpack.c.b16 %v4296, %v4294
    %v4351 = vpack.c.b16 %v4297, %v4295
    %v4352 = vpack.c.b16 %v4300, %v4298
    %v4353 = vpack.c.b16 %v4301, %v4299
    %v4354 = vpack.c.b16 %v4304, %v4302
    %v4355 = vpack.c.b16 %v4305, %v4303
    %v4356 = vpack.c.b16 %v4308, %v4306
    %v4357 = vpack.c.b16 %v4309, %v4307
    %v4358 = vpack.c.b16 %v4312, %v4310
    %v4359 = vpack.c.b16 %v4313, %v4311
    %v4360 = vpack.c.b16 %v4316, %v4314
    %v4361 = vpack.c.b16 %v4317, %v4315
    %v4362 = vpack.c.b16 %v4320, %v4318
    %v4363 = vpack.c.b16 %v4321, %v4319
    %v4364 = vpack.c.b16 %v4324, %v4322
    %v4365 = vpack.c.b16 %v4325, %v4323
    %v4366 = vpack.c.b16 %v4328, %v4326
    %v4367 = vpack.c.b16 %v4329, %v4327
    %v4368 = vpack.c.b16 %v4332, %v4330
    %v4369 = vpack.c.b16 %v4333, %v4331
    %v4370 = vpack.c.b16 %v4336, %v4334
    %v4371 = vpack.c.b16 %v4337, %v4335
    %v4372 = vpack.c.b16 %v4340, %v4338
    %v4373 = vpack.c.b16 %v4341, %v4339
    %v4407 = vlaneseq
    %v4408 = vshrl.u32 %v4407, 7
    %v4409 = vsub.s32 0, %v4408
    %v4410 = vrot.slane %v4243, %v4409
    %v4411 = vlaneseq
    %v4412 = vshrl.u32 %v4411, 7
    %v4413 = vsub.s32 1, %v4412
    %v4414 = vrot.slane %v4243, %v4413
    %4417 = vmatprep.subr.bf16.mxu0 %v4343
    %4418 = vmatpush1.bf16.msra.mxu0 %v4342
    %4419 = vmatprep.subr.bf16.mxu0 %v4345
    %4420 = vmatpush1.bf16.msra.mxu0 %v4344
    %4421 = vmatprep.subr.bf16.mxu0 %v4347
    %4422 = vmatpush1.bf16.msra.mxu0 %v4346
    %4423 = vmatprep.subr.bf16.mxu0 %v4349
    %4424 = vmatpush1.bf16.msra.mxu0 %v4348
    %4425 = vmatprep.subr.bf16.mxu0 %v4351
    %4426 = vmatpush1.bf16.msra.mxu0 %v4350
    %4427 = vmatprep.subr.bf16.mxu0 %v4353
    %4428 = vmatpush1.bf16.msra.mxu0 %v4352
    %4429 = vmatprep.subr.bf16.mxu0 %v4355
    %4430 = vmatpush1.bf16.msra.mxu0 %v4354
    %4431 = vmatprep.subr.bf16.mxu0 %v4357
    %4432 = vmatpush1.bf16.msra.mxu0 %v4356
    %4433 = vmatprep.subr.bf16.mxu0 %v4359
    %4434 = vmatpush1.bf16.msra.mxu0 %v4358
    %4435 = vmatprep.subr.bf16.mxu0 %v4361
    %4436 = vmatpush1.bf16.msra.mxu0 %v4360
    %4437 = vmatprep.subr.bf16.mxu0 %v4363
    %4438 = vmatpush1.bf16.msra.mxu0 %v4362
    %4439 = vmatprep.subr.bf16.mxu0 %v4365
    %4440 = vmatpush1.bf16.msra.mxu0 %v4364
    %4441 = vmatprep.subr.bf16.mxu0 %v4367
    %4442 = vmatpush1.bf16.msra.mxu0 %v4366
    %4443 = vmatprep.subr.bf16.mxu0 %v4369
    %4444 = vmatpush1.bf16.msra.mxu0 %v4368
    %4445 = vmatprep.subr.bf16.mxu0 %v4371
    %4446 = vmatpush1.bf16.msra.mxu0 %v4370
    %4447 = vmatprep.subr.bf16.mxu0 %v4373
    %4448 = vmatpush1.bf16.msra.mxu0 %v4372
    %4449 = vmatprep.mubr.bf16.mxu0 %v4245
    %4450 = vmatmul.mubr.bf16.gmra.mrb[0].mxu0 %v4244
    %v4451 = vpop.f32.mrb[0].mxu0
    %v4452 = vadd.f32 %v4410, %v4451
    %v4453 = vpop.f32.mrb[0].mxu0
    %v4454 = vadd.f32 %v4414, %v4453
    %v4455 = vpop.f32.mrb[0].mxu0
    %v4456 = vpop.f32.mrb[0].mxu0
    %4457 = vdwg.mxu0
    %v4458 = vmax.f32 %v4452, 0.0
    %v4459 = vmax.f32 %v4454, 0.0
    %s4460 = smul.addr %s3943, 4
    %s4461 = scalar_lea.vmem [#allocation26], %s4460
    %v4462 = vld [vmem:[%s4461] sm:$0xff]
    %v4463 = vld [vmem:[%s4461 + $0x8] sm:$0xff]
    %v4464 = vld [vmem:[%s4461 + $0x10] sm:$0xff]
    %v4465 = vld [vmem:[%s4461 + $0x18] sm:$0xff]
    %v4466 = vld [vmem:[%s4461 + $0x20] sm:$0xff]
    %v4467 = vld [vmem:[%s4461 + $0x28] sm:$0xff]
    %v4468 = vld [vmem:[%s4461 + $0x30] sm:$0xff]
    %v4469 = vld [vmem:[%s4461 + $0x38] sm:$0xff]
    %v4470 = vld [vmem:[%s4461 + $0x40] sm:$0xff]
    %v4471 = vld [vmem:[%s4461 + $0x48] sm:$0xff]
    %v4472 = vld [vmem:[%s4461 + $0x50] sm:$0xff]
    %v4473 = vld [vmem:[%s4461 + $0x58] sm:$0xff]
    %v4474 = vld [vmem:[%s4461 + $0x60] sm:$0xff]
    %v4475 = vld [vmem:[%s4461 + $0x68] sm:$0xff]
    %v4476 = vld [vmem:[%s4461 + $0x70] sm:$0xff]
    %v4477 = vld [vmem:[%s4461 + $0x78] sm:$0xff]
    %v4478 = vld [vmem:[%s4461 + $0x80] sm:$0xff]
    %v4479 = vld [vmem:[%s4461 + $0x88] sm:$0xff]
    %v4480 = vld [vmem:[%s4461 + $0x90] sm:$0xff]
    %v4481 = vld [vmem:[%s4461 + $0x98] sm:$0xff]
    %v4482 = vld [vmem:[%s4461 + $0xa0] sm:$0xff]
    %v4483 = vld [vmem:[%s4461 + $0xa8] sm:$0xff]
    %v4484 = vld [vmem:[%s4461 + $0xb0] sm:$0xff]
    %v4485 = vld [vmem:[%s4461 + $0xb8] sm:$0xff]
    %v4486 = vld [vmem:[%s4461 + $0xc0] sm:$0xff]
    %v4487 = vld [vmem:[%s4461 + $0xc8] sm:$0xff]
    %v4488 = vld [vmem:[%s4461 + $0xd0] sm:$0xff]
    %v4489 = vld [vmem:[%s4461 + $0xd8] sm:$0xff]
    %v4490 = vld [vmem:[%s4461 + $0xe0] sm:$0xff]
    %v4491 = vld [vmem:[%s4461 + $0xe8] sm:$0xff]
    %v4492 = vld [vmem:[%s4461 + $0xf0] sm:$0xff]
    %v4493 = vld [vmem:[%s4461 + $0xf8] sm:$0xff]
    %s4494 = scalar_lea.vmem [#allocation28], %s3978
    %v4495 = vld [vmem:[%s4494] sm:$0x3]
    %v4496 = vpack.c.bf16 %v4458, %v4458
    %v4497 = vpack.c.bf16 %v4459, %v4459
    %v4530 = vunpack.c.l.b16 %v4462
    %v4531 = vunpack.c.h.b16 %v4462
    %v4532 = vunpack.c.l.b16 %v4463
    %v4533 = vunpack.c.h.b16 %v4463
    %v4534 = vunpack.c.l.b16 %v4464
    %v4535 = vunpack.c.h.b16 %v4464
    %v4536 = vunpack.c.l.b16 %v4465
    %v4537 = vunpack.c.h.b16 %v4465
    %v4538 = vunpack.c.l.b16 %v4466
    %v4539 = vunpack.c.h.b16 %v4466
    %v4540 = vunpack.c.l.b16 %v4467
    %v4541 = vunpack.c.h.b16 %v4467
    %v4542 = vunpack.c.l.b16 %v4468
    %v4543 = vunpack.c.h.b16 %v4468
    %v4544 = vunpack.c.l.b16 %v4469
    %v4545 = vunpack.c.h.b16 %v4469
    %v4546 = vunpack.c.l.b16 %v4470
    %v4547 = vunpack.c.h.b16 %v4470
    %v4548 = vunpack.c.l.b16 %v4471
    %v4549 = vunpack.c.h.b16 %v4471
    %v4550 = vunpack.c.l.b16 %v4472
    %v4551 = vunpack.c.h.b16 %v4472
    %v4552 = vunpack.c.l.b16 %v4473
    %v4553 = vunpack.c.h.b16 %v4473
    %v4554 = vunpack.c.l.b16 %v4474
    %v4555 = vunpack.c.h.b16 %v4474
    %v4556 = vunpack.c.l.b16 %v4475
    %v4557 = vunpack.c.h.b16 %v4475
    %v4558 = vunpack.c.l.b16 %v4476
    %v4559 = vunpack.c.h.b16 %v4476
    %v4560 = vunpack.c.l.b16 %v4477
    %v4561 = vunpack.c.h.b16 %v4477
    %v4562 = vunpack.c.l.b16 %v4478
    %v4563 = vunpack.c.h.b16 %v4478
    %v4564 = vunpack.c.l.b16 %v4479
    %v4565 = vunpack.c.h.b16 %v4479
    %v4566 = vunpack.c.l.b16 %v4480
    %v4567 = vunpack.c.h.b16 %v4480
    %v4568 = vunpack.c.l.b16 %v4481
    %v4569 = vunpack.c.h.b16 %v4481
    %v4570 = vunpack.c.l.b16 %v4482
    %v4571 = vunpack.c.h.b16 %v4482
    %v4572 = vunpack.c.l.b16 %v4483
    %v4573 = vunpack.c.h.b16 %v4483
    %v4574 = vunpack.c.l.b16 %v4484
    %v4575 = vunpack.c.h.b16 %v4484
    %v4576 = vunpack.c.l.b16 %v4485
    %v4577 = vunpack.c.h.b16 %v4485
    %v4578 = vunpack.c.l.b16 %v4486
    %v4579 = vunpack.c.h.b16 %v4486
    %v4580 = vunpack.c.l.b16 %v4487
    %v4581 = vunpack.c.h.b16 %v4487
    %v4582 = vunpack.c.l.b16 %v4488
    %v4583 = vunpack.c.h.b16 %v4488
    %v4584 = vunpack.c.l.b16 %v4489
    %v4585 = vunpack.c.h.b16 %v4489
    %v4586 = vunpack.c.l.b16 %v4490
    %v4587 = vunpack.c.h.b16 %v4490
    %v4588 = vunpack.c.l.b16 %v4491
    %v4589 = vunpack.c.h.b16 %v4491
    %v4590 = vunpack.c.l.b16 %v4492
    %v4591 = vunpack.c.h.b16 %v4492
    %v4592 = vunpack.c.l.b16 %v4493
    %v4593 = vunpack.c.h.b16 %v4493
    %v4594 = vpack.c.b16 %v4532, %v4530
    %v4595 = vpack.c.b16 %v4533, %v4531
    %v4596 = vpack.c.b16 %v4536, %v4534
    %v4597 = vpack.c.b16 %v4537, %v4535
    %v4598 = vpack.c.b16 %v4540, %v4538
    %v4599 = vpack.c.b16 %v4541, %v4539
    %v4600 = vpack.c.b16 %v4544, %v4542
    %v4601 = vpack.c.b16 %v4545, %v4543
    %v4602 = vpack.c.b16 %v4548, %v4546
    %v4603 = vpack.c.b16 %v4549, %v4547
    %v4604 = vpack.c.b16 %v4552, %v4550
    %v4605 = vpack.c.b16 %v4553, %v4551
    %v4606 = vpack.c.b16 %v4556, %v4554
    %v4607 = vpack.c.b16 %v4557, %v4555
    %v4608 = vpack.c.b16 %v4560, %v4558
    %v4609 = vpack.c.b16 %v4561, %v4559
    %v4610 = vpack.c.b16 %v4564, %v4562
    %v4611 = vpack.c.b16 %v4565, %v4563
    %v4612 = vpack.c.b16 %v4568, %v4566
    %v4613 = vpack.c.b16 %v4569, %v4567
    %v4614 = vpack.c.b16 %v4572, %v4570
    %v4615 = vpack.c.b16 %v4573, %v4571
    %v4616 = vpack.c.b16 %v4576, %v4574
    %v4617 = vpack.c.b16 %v4577, %v4575
    %v4618 = vpack.c.b16 %v4580, %v4578
    %v4619 = vpack.c.b16 %v4581, %v4579
    %v4620 = vpack.c.b16 %v4584, %v4582
    %v4621 = vpack.c.b16 %v4585, %v4583
    %v4622 = vpack.c.b16 %v4588, %v4586
    %v4623 = vpack.c.b16 %v4589, %v4587
    %v4624 = vpack.c.b16 %v4592, %v4590
    %v4625 = vpack.c.b16 %v4593, %v4591
    %v4659 = vlaneseq
    %v4660 = vshrl.u32 %v4659, 7
    %v4661 = vsub.s32 0, %v4660
    %v4662 = vrot.slane %v4495, %v4661
    %v4663 = vlaneseq
    %v4664 = vshrl.u32 %v4663, 7
    %v4665 = vsub.s32 1, %v4664
    %v4666 = vrot.slane %v4495, %v4665
    %4669 = vmatprep.subr.bf16.mxu0 %v4595
    %4670 = vmatpush1.bf16.msra.mxu0 %v4594
    %4671 = vmatprep.subr.bf16.mxu0 %v4597
    %4672 = vmatpush1.bf16.msra.mxu0 %v4596
    %4673 = vmatprep.subr.bf16.mxu0 %v4599
    %4674 = vmatpush1.bf16.msra.mxu0 %v4598
    %4675 = vmatprep.subr.bf16.mxu0 %v4601
    %4676 = vmatpush1.bf16.msra.mxu0 %v4600
    %4677 = vmatprep.subr.bf16.mxu0 %v4603
    %4678 = vmatpush1.bf16.msra.mxu0 %v4602
    %4679 = vmatprep.subr.bf16.mxu0 %v4605
    %4680 = vmatpush1.bf16.msra.mxu0 %v4604
    %4681 = vmatprep.subr.bf16.mxu0 %v4607
    %4682 = vmatpush1.bf16.msra.mxu0 %v4606
    %4683 = vmatprep.subr.bf16.mxu0 %v4609
    %4684 = vmatpush1.bf16.msra.mxu0 %v4608
    %4685 = vmatprep.subr.bf16.mxu0 %v4611
    %4686 = vmatpush1.bf16.msra.mxu0 %v4610
    %4687 = vmatprep.subr.bf16.mxu0 %v4613
    %4688 = vmatpush1.bf16.msra.mxu0 %v4612
    %4689 = vmatprep.subr.bf16.mxu0 %v4615
    %4690 = vmatpush1.bf16.msra.mxu0 %v4614
    %4691 = vmatprep.subr.bf16.mxu0 %v4617
    %4692 = vmatpush1.bf16.msra.mxu0 %v4616
    %4693 = vmatprep.subr.bf16.mxu0 %v4619
    %4694 = vmatpush1.bf16.msra.mxu0 %v4618
    %4695 = vmatprep.subr.bf16.mxu0 %v4621
    %4696 = vmatpush1.bf16.msra.mxu0 %v4620
    %4697 = vmatprep.subr.bf16.mxu0 %v4623
    %4698 = vmatpush1.bf16.msra.mxu0 %v4622
    %4699 = vmatprep.subr.bf16.mxu0 %v4625
    %4700 = vmatpush1.bf16.msra.mxu0 %v4624
    %4701 = vmatprep.mubr.bf16.mxu0 %v4497
    %4702 = vmatmul.mubr.bf16.gmra.mrb[0].mxu0 %v4496
    %v4703 = vpop.f32.mrb[0].mxu0
    %v4704 = vadd.f32 %v4662, %v4703
    %v4705 = vpop.f32.mrb[0].mxu0
    %v4706 = vadd.f32 %v4666, %v4705
    %v4707 = vpop.f32.mrb[0].mxu0
    %v4708 = vpop.f32.mrb[0].mxu0
    %4709 = vdwg.mxu0
    %v4710 = vmax.f32 %v4704, 0.0
    %v4711 = vmax.f32 %v4706, 0.0
    %s4712 = smul.u32 %s3940, 32
    %s4713 = smul.addr %s4712, 4
    %s4714 = scalar_lea.vmem %s16, %s4713
    %v4715 = vld [vmem:[%s4714] sm:$0xf]
    %v4716 = vld [vmem:[%s4714 + $0x4] sm:$0xf]
    %v4717 = vld [vmem:[%s4714 + $0x8] sm:$0xf]
    %v4718 = vld [vmem:[%s4714 + $0xc] sm:$0xf]
    %v4719 = vld [vmem:[%s4714 + $0x10] sm:$0xf]
    %v4720 = vld [vmem:[%s4714 + $0x14] sm:$0xf]
    %v4721 = vld [vmem:[%s4714 + $0x18] sm:$0xf]
    %v4722 = vld [vmem:[%s4714 + $0x1c] sm:$0xf]
    %v4723 = vld [vmem:[%s4714 + $0x20] sm:$0xf]
    %v4724 = vld [vmem:[%s4714 + $0x24] sm:$0xf]
    %v4725 = vld [vmem:[%s4714 + $0x28] sm:$0xf]
    %v4726 = vld [vmem:[%s4714 + $0x2c] sm:$0xf]
    %v4727 = vld [vmem:[%s4714 + $0x30] sm:$0xf]
    %v4728 = vld [vmem:[%s4714 + $0x34] sm:$0xf]
    %v4729 = vld [vmem:[%s4714 + $0x38] sm:$0xf]
    %v4730 = vld [vmem:[%s4714 + $0x3c] sm:$0xf]
    %v4731 = vld [vmem:[%s4714 + $0x40] sm:$0xf]
    %v4732 = vld [vmem:[%s4714 + $0x44] sm:$0xf]
    %v4733 = vld [vmem:[%s4714 + $0x48] sm:$0xf]
    %v4734 = vld [vmem:[%s4714 + $0x4c] sm:$0xf]
    %v4735 = vld [vmem:[%s4714 + $0x50] sm:$0xf]
    %v4736 = vld [vmem:[%s4714 + $0x54] sm:$0xf]
    %v4737 = vld [vmem:[%s4714 + $0x58] sm:$0xf]
    %v4738 = vld [vmem:[%s4714 + $0x5c] sm:$0xf]
    %v4739 = vld [vmem:[%s4714 + $0x60] sm:$0xf]
    %v4740 = vld [vmem:[%s4714 + $0x64] sm:$0xf]
    %v4741 = vld [vmem:[%s4714 + $0x68] sm:$0xf]
    %v4742 = vld [vmem:[%s4714 + $0x6c] sm:$0xf]
    %v4743 = vld [vmem:[%s4714 + $0x70] sm:$0xf]
    %v4744 = vld [vmem:[%s4714 + $0x74] sm:$0xf]
    %v4745 = vld [vmem:[%s4714 + $0x78] sm:$0xf]
    %v4746 = vld [vmem:[%s4714 + $0x7c] sm:$0xf]
    %s4747 = scalar_lea.vmem [#allocation29], %s3940
    %v4748 = vld [vmem:[%s4747] sm:$0x1]
    %v4749 = vpack.c.bf16 %v4710, %v4710
    %v4750 = vpack.c.bf16 %v4711, %v4711
    %v4783 = vunpack.c.l.b16 %v4715
    %v4784 = vunpack.c.l.b16 %v4716
    %v4785 = vunpack.c.l.b16 %v4717
    %v4786 = vunpack.c.l.b16 %v4718
    %v4787 = vunpack.c.l.b16 %v4719
    %v4788 = vunpack.c.l.b16 %v4720
    %v4789 = vunpack.c.l.b16 %v4721
    %v4790 = vunpack.c.l.b16 %v4722
    %v4791 = vunpack.c.l.b16 %v4723
    %v4792 = vunpack.c.l.b16 %v4724
    %v4793 = vunpack.c.l.b16 %v4725
    %v4794 = vunpack.c.l.b16 %v4726
    %v4795 = vunpack.c.l.b16 %v4727
    %v4796 = vunpack.c.l.b16 %v4728
    %v4797 = vunpack.c.l.b16 %v4729
    %v4798 = vunpack.c.l.b16 %v4730
    %v4799 = vunpack.c.l.b16 %v4731
    %v4800 = vunpack.c.l.b16 %v4732
    %v4801 = vunpack.c.l.b16 %v4733
    %v4802 = vunpack.c.l.b16 %v4734
    %v4803 = vunpack.c.l.b16 %v4735
    %v4804 = vunpack.c.l.b16 %v4736
    %v4805 = vunpack.c.l.b16 %v4737
    %v4806 = vunpack.c.l.b16 %v4738
    %v4807 = vunpack.c.l.b16 %v4739
    %v4808 = vunpack.c.l.b16 %v4740
    %v4809 = vunpack.c.l.b16 %v4741
    %v4810 = vunpack.c.l.b16 %v4742
    %v4811 = vunpack.c.l.b16 %v4743
    %v4812 = vunpack.c.l.b16 %v4744
    %v4813 = vunpack.c.l.b16 %v4745
    %v4814 = vunpack.c.l.b16 %v4746
    %v4815 = vpack.c.b16 %v4784, %v4783
    %v4816 = vpack.c.b16 %v4786, %v4785
    %v4817 = vpack.c.b16 %v4788, %v4787
    %v4818 = vpack.c.b16 %v4790, %v4789
    %v4819 = vpack.c.b16 %v4792, %v4791
    %v4820 = vpack.c.b16 %v4794, %v4793
    %v4821 = vpack.c.b16 %v4796, %v4795
    %v4822 = vpack.c.b16 %v4798, %v4797
    %v4823 = vpack.c.b16 %v4800, %v4799
    %v4824 = vpack.c.b16 %v4802, %v4801
    %v4825 = vpack.c.b16 %v4804, %v4803
    %v4826 = vpack.c.b16 %v4806, %v4805
    %v4827 = vpack.c.b16 %v4808, %v4807
    %v4828 = vpack.c.b16 %v4810, %v4809
    %v4829 = vpack.c.b16 %v4812, %v4811
    %v4830 = vpack.c.b16 %v4814, %v4813
    %4847 = vmatprep.subr.bf16.mxu0 0
    %4848 = vmatpush1.bf16.msra.mxu0 %v4815
    %4849 = vmatprep.subr.bf16.mxu0 0
    %4850 = vmatpush1.bf16.msra.mxu0 %v4816
    %4851 = vmatprep.subr.bf16.mxu0 0
    %4852 = vmatpush1.bf16.msra.mxu0 %v4817
    %4853 = vmatprep.subr.bf16.mxu0 0
    %4854 = vmatpush1.bf16.msra.mxu0 %v4818
    %4855 = vmatprep.subr.bf16.mxu0 0
    %4856 = vmatpush1.bf16.msra.mxu0 %v4819
    %4857 = vmatprep.subr.bf16.mxu0 0
    %4858 = vmatpush1.bf16.msra.mxu0 %v4820
    %4859 = vmatprep.subr.bf16.mxu0 0
    %4860 = vmatpush1.bf16.msra.mxu0 %v4821
    %4861 = vmatprep.subr.bf16.mxu0 0
    %4862 = vmatpush1.bf16.msra.mxu0 %v4822
    %4863 = vmatprep.subr.bf16.mxu0 0
    %4864 = vmatpush1.bf16.msra.mxu0 %v4823
    %4865 = vmatprep.subr.bf16.mxu0 0
    %4866 = vmatpush1.bf16.msra.mxu0 %v4824
    %4867 = vmatprep.subr.bf16.mxu0 0
    %4868 = vmatpush1.bf16.msra.mxu0 %v4825
    %4869 = vmatprep.subr.bf16.mxu0 0
    %4870 = vmatpush1.bf16.msra.mxu0 %v4826
    %4871 = vmatprep.subr.bf16.mxu0 0
    %4872 = vmatpush1.bf16.msra.mxu0 %v4827
    %4873 = vmatprep.subr.bf16.mxu0 0
    %4874 = vmatpush1.bf16.msra.mxu0 %v4828
    %4875 = vmatprep.subr.bf16.mxu0 0
    %4876 = vmatpush1.bf16.msra.mxu0 %v4829
    %4877 = vmatprep.subr.bf16.mxu0 0
    %4878 = vmatpush1.bf16.msra.mxu0 %v4830
    %4879 = vmatprep.mubr.bf16.mxu0 %v4750
    %4880 = vmatmul.mubr.bf16.gmra.mrb[0].mxu0 %v4749
    %v4881 = vpop.f32.mrb[0].mxu0
    %v4882 = vadd.f32 %v4748, %v4881
    %v4883 = vpop.f32.mrb[0].mxu0
    %v4884 = vpop.f32.mrb[0].mxu0
    %v4885 = vpop.f32.mrb[0].mxu0
    %4886 = vdwg.mxu0
    %4887 = vst.msk [vmem:[#allocation31 + $0x3] sm:$0x1] %vm2039, %v4882
    %s4888 = sadd.s32 %s270, 4
    %s4889 = sld [smem:[#allocation4 + %s4888]]
    %s4890 = scalar_lea.vmem [#allocation2], 4
    %v4891 = vld [vmem:[%s4890] ss:$8 sm:$0x3]
    %s4892 = smul.u32 %s4889, 64
    %s4893 = smul.addr %s4892, 4
    %s4894 = scalar_lea.vmem [#allocation20], %s4893
    %v4895 = vld [vmem:[%s4894] sm:$0xff]
    %v4896 = vld [vmem:[%s4894 + $0x8] sm:$0xff]
    %v4897 = vld [vmem:[%s4894 + $0x10] sm:$0xff]
    %v4898 = vld [vmem:[%s4894 + $0x18] sm:$0xff]
    %v4899 = vld [vmem:[%s4894 + $0x20] sm:$0xff]
    %v4900 = vld [vmem:[%s4894 + $0x28] sm:$0xff]
    %v4901 = vld [vmem:[%s4894 + $0x30] sm:$0xff]
    %v4902 = vld [vmem:[%s4894 + $0x38] sm:$0xff]
    %v4903 = vld [vmem:[%s4894 + $0x40] sm:$0xff]
    %v4904 = vld [vmem:[%s4894 + $0x48] sm:$0xff]
    %v4905 = vld [vmem:[%s4894 + $0x50] sm:$0xff]
    %v4906 = vld [vmem:[%s4894 + $0x58] sm:$0xff]
    %v4907 = vld [vmem:[%s4894 + $0x60] sm:$0xff]
    %v4908 = vld [vmem:[%s4894 + $0x68] sm:$0xff]
    %v4909 = vld [vmem:[%s4894 + $0x70] sm:$0xff]
    %v4910 = vld [vmem:[%s4894 + $0x78] sm:$0xff]
    %v4911 = vld [vmem:[%s4894 + $0x80] sm:$0xff]
    %v4912 = vld [vmem:[%s4894 + $0x88] sm:$0xff]
    %v4913 = vld [vmem:[%s4894 + $0x90] sm:$0xff]
    %v4914 = vld [vmem:[%s4894 + $0x98] sm:$0xff]
    %v4915 = vld [vmem:[%s4894 + $0xa0] sm:$0xff]
    %v4916 = vld [vmem:[%s4894 + $0xa8] sm:$0xff]
    %v4917 = vld [vmem:[%s4894 + $0xb0] sm:$0xff]
    %v4918 = vld [vmem:[%s4894 + $0xb8] sm:$0xff]
    %v4919 = vld [vmem:[%s4894 + $0xc0] sm:$0xff]
    %v4920 = vld [vmem:[%s4894 + $0xc8] sm:$0xff]
    %v4921 = vld [vmem:[%s4894 + $0xd0] sm:$0xff]
    %v4922 = vld [vmem:[%s4894 + $0xd8] sm:$0xff]
    %v4923 = vld [vmem:[%s4894 + $0xe0] sm:$0xff]
    %v4924 = vld [vmem:[%s4894 + $0xe8] sm:$0xff]
    %v4925 = vld [vmem:[%s4894 + $0xf0] sm:$0xff]
    %v4926 = vld [vmem:[%s4894 + $0xf8] sm:$0xff]
    %s4927 = smul.u32 %s4889, 2
    %s4928 = scalar_lea.vmem [#allocation22], %s4927
    %v4929 = vld [vmem:[%s4928] sm:$0x3]
    %v4931 = vlaneseq
    %v4932 = vshrl.u32 %v4931, 7
    %v4933 = vsub.s32 0, %v4932
    %v4934 = vrot.slane %v4891, %v4933
    %v4935 = vlaneseq
    %v4936 = vshrl.u32 %v4935, 7
    %v4937 = vsub.s32 1, %v4936
    %v4938 = vrot.slane %v4891, %v4937
    %v4941 = vpack.c.bf16 %v4934, %v4934
    %v4942 = vpack.c.bf16 %v4938, %v4938
    %v4975 = vunpack.c.l.b16 %v4895
    %v4976 = vunpack.c.h.b16 %v4895
    %v4977 = vunpack.c.l.b16 %v4896
    %v4978 = vunpack.c.h.b16 %v4896
    %v4979 = vunpack.c.l.b16 %v4897
    %v4980 = vunpack.c.h.b16 %v4897
    %v4981 = vunpack.c.l.b16 %v4898
    %v4982 = vunpack.c.h.b16 %v4898
    %v4983 = vunpack.c.l.b16 %v4899
    %v4984 = vunpack.c.h.b16 %v4899
    %v4985 = vunpack.c.l.b16 %v4900
    %v4986 = vunpack.c.h.b16 %v4900
    %v4987 = vunpack.c.l.b16 %v4901
    %v4988 = vunpack.c.h.b16 %v4901
    %v4989 = vunpack.c.l.b16 %v4902
    %v4990 = vunpack.c.h.b16 %v4902
    %v4991 = vunpack.c.l.b16 %v4903
    %v4992 = vunpack.c.h.b16 %v4903
    %v4993 = vunpack.c.l.b16 %v4904
    %v4994 = vunpack.c.h.b16 %v4904
    %v4995 = vunpack.c.l.b16 %v4905
    %v4996 = vunpack.c.h.b16 %v4905
    %v4997 = vunpack.c.l.b16 %v4906
    %v4998 = vunpack.c.h.b16 %v4906
    %v4999 = vunpack.c.l.b16 %v4907
    %v5000 = vunpack.c.h.b16 %v4907
    %v5001 = vunpack.c.l.b16 %v4908
    %v5002 = vunpack.c.h.b16 %v4908
    %v5003 = vunpack.c.l.b16 %v4909
    %v5004 = vunpack.c.h.b16 %v4909
    %v5005 = vunpack.c.l.b16 %v4910
    %v5006 = vunpack.c.h.b16 %v4910
    %v5007 = vunpack.c.l.b16 %v4911
    %v5008 = vunpack.c.h.b16 %v4911
    %v5009 = vunpack.c.l.b16 %v4912
    %v5010 = vunpack.c.h.b16 %v4912
    %v5011 = vunpack.c.l.b16 %v4913
    %v5012 = vunpack.c.h.b16 %v4913
    %v5013 = vunpack.c.l.b16 %v4914
    %v5014 = vunpack.c.h.b16 %v4914
    %v5015 = vunpack.c.l.b16 %v4915
    %v5016 = vunpack.c.h.b16 %v4915
    %v5017 = vunpack.c.l.b16 %v4916
    %v5018 = vunpack.c.h.b16 %v4916
    %v5019 = vunpack.c.l.b16 %v4917
    %v5020 = vunpack.c.h.b16 %v4917
    %v5021 = vunpack.c.l.b16 %v4918
    %v5022 = vunpack.c.h.b16 %v4918
    %v5023 = vunpack.c.l.b16 %v4919
    %v5024 = vunpack.c.h.b16 %v4919
    %v5025 = vunpack.c.l.b16 %v4920
    %v5026 = vunpack.c.h.b16 %v4920
    %v5027 = vunpack.c.l.b16 %v4921
    %v5028 = vunpack.c.h.b16 %v4921
    %v5029 = vunpack.c.l.b16 %v4922
    %v5030 = vunpack.c.h.b16 %v4922
    %v5031 = vunpack.c.l.b16 %v4923
    %v5032 = vunpack.c.h.b16 %v4923
    %v5033 = vunpack.c.l.b16 %v4924
    %v5034 = vunpack.c.h.b16 %v4924
    %v5035 = vunpack.c.l.b16 %v4925
    %v5036 = vunpack.c.h.b16 %v4925
    %v5037 = vunpack.c.l.b16 %v4926
    %v5038 = vunpack.c.h.b16 %v4926
    %v5039 = vpack.c.b16 %v4977, %v4975
    %v5040 = vpack.c.b16 %v4978, %v4976
    %v5041 = vpack.c.b16 %v4981, %v4979
    %v5042 = vpack.c.b16 %v4982, %v4980
    %v5043 = vpack.c.b16 %v4985, %v4983
    %v5044 = vpack.c.b16 %v4986, %v4984
    %v5045 = vpack.c.b16 %v4989, %v4987
    %v5046 = vpack.c.b16 %v4990, %v4988
    %v5047 = vpack.c.b16 %v4993, %v4991
    %v5048 = vpack.c.b16 %v4994, %v4992
    %v5049 = vpack.c.b16 %v4997, %v4995
    %v5050 = vpack.c.b16 %v4998, %v4996
    %v5051 = vpack.c.b16 %v5001, %v4999
    %v5052 = vpack.c.b16 %v5002, %v5000
    %v5053 = vpack.c.b16 %v5005, %v5003
    %v5054 = vpack.c.b16 %v5006, %v5004
    %v5055 = vpack.c.b16 %v5009, %v5007
    %v5056 = vpack.c.b16 %v5010, %v5008
    %v5057 = vpack.c.b16 %v5013, %v5011
    %v5058 = vpack.c.b16 %v5014, %v5012
    %v5059 = vpack.c.b16 %v5017, %v5015
    %v5060 = vpack.c.b16 %v5018, %v5016
    %v5061 = vpack.c.b16 %v5021, %v5019
    %v5062 = vpack.c.b16 %v5022, %v5020
    %v5063 = vpack.c.b16 %v5025, %v5023
    %v5064 = vpack.c.b16 %v5026, %v5024
    %v5065 = vpack.c.b16 %v5029, %v5027
    %v5066 = vpack.c.b16 %v5030, %v5028
    %v5067 = vpack.c.b16 %v5033, %v5031
    %v5068 = vpack.c.b16 %v5034, %v5032
    %v5069 = vpack.c.b16 %v5037, %v5035
    %v5070 = vpack.c.b16 %v5038, %v5036
    %v5104 = vlaneseq
    %v5105 = vshrl.u32 %v5104, 7
    %v5106 = vsub.s32 0, %v5105
    %v5107 = vrot.slane %v4929, %v5106
    %v5108 = vlaneseq
    %v5109 = vshrl.u32 %v5108, 7
    %v5110 = vsub.s32 1, %v5109
    %v5111 = vrot.slane %v4929, %v5110
    %5114 = vmatprep.subr.bf16.mxu0 %v5040
    %5115 = vmatpush1.bf16.msra.mxu0 %v5039
    %5116 = vmatprep.subr.bf16.mxu0 %v5042
    %5117 = vmatpush1.bf16.msra.mxu0 %v5041
    %5118 = vmatprep.subr.bf16.mxu0 %v5044
    %5119 = vmatpush1.bf16.msra.mxu0 %v5043
    %5120 = vmatprep.subr.bf16.mxu0 %v5046
    %5121 = vmatpush1.bf16.msra.mxu0 %v5045
    %5122 = vmatprep.subr.bf16.mxu0 %v5048
    %5123 = vmatpush1.bf16.msra.mxu0 %v5047
    %5124 = vmatprep.subr.bf16.mxu0 %v5050
    %5125 = vmatpush1.bf16.msra.mxu0 %v5049
    %5126 = vmatprep.subr.bf16.mxu0 %v5052
    %5127 = vmatpush1.bf16.msra.mxu0 %v5051
    %5128 = vmatprep.subr.bf16.mxu0 %v5054
    %5129 = vmatpush1.bf16.msra.mxu0 %v5053
    %5130 = vmatprep.subr.bf16.mxu0 %v5056
    %5131 = vmatpush1.bf16.msra.mxu0 %v5055
    %5132 = vmatprep.subr.bf16.mxu0 %v5058
    %5133 = vmatpush1.bf16.msra.mxu0 %v5057
    %5134 = vmatprep.subr.bf16.mxu0 %v5060
    %5135 = vmatpush1.bf16.msra.mxu0 %v5059
    %5136 = vmatprep.subr.bf16.mxu0 %v5062
    %5137 = vmatpush1.bf16.msra.mxu0 %v5061
    %5138 = vmatprep.subr.bf16.mxu0 %v5064
    %5139 = vmatpush1.bf16.msra.mxu0 %v5063
    %5140 = vmatprep.subr.bf16.mxu0 %v5066
    %5141 = vmatpush1.bf16.msra.mxu0 %v5065
    %5142 = vmatprep.subr.bf16.mxu0 %v5068
    %5143 = vmatpush1.bf16.msra.mxu0 %v5067
    %5144 = vmatprep.subr.bf16.mxu0 %v5070
    %5145 = vmatpush1.bf16.msra.mxu0 %v5069
    %5146 = vmatprep.mubr.bf16.mxu0 %v4942
    %5147 = vmatmul.mubr.bf16.gmra.mrb[0].mxu0 %v4941
    %v5148 = vpop.f32.mrb[0].mxu0
    %v5149 = vadd.f32 %v5107, %v5148
    %v5150 = vpop.f32.mrb[0].mxu0
    %v5151 = vadd.f32 %v5111, %v5150
    %v5152 = vpop.f32.mrb[0].mxu0
    %v5153 = vpop.f32.mrb[0].mxu0
    %5154 = vdwg.mxu0
    %v5155 = vmax.f32 %v5149, 0.0
    %v5156 = vmax.f32 %v5151, 0.0
    %s5157 = smul.addr %s4892, 4
    %s5158 = scalar_lea.vmem [#allocation23], %s5157
    %v5159 = vld [vmem:[%s5158] sm:$0xff]
    %v5160 = vld [vmem:[%s5158 + $0x8] sm:$0xff]
    %v5161 = vld [vmem:[%s5158 + $0x10] sm:$0xff]
    %v5162 = vld [vmem:[%s5158 + $0x18] sm:$0xff]
    %v5163 = vld [vmem:[%s5158 + $0x20] sm:$0xff]
    %v5164 = vld [vmem:[%s5158 + $0x28] sm:$0xff]
    %v5165 = vld [vmem:[%s5158 + $0x30] sm:$0xff]
    %v5166 = vld [vmem:[%s5158 + $0x38] sm:$0xff]
    %v5167 = vld [vmem:[%s5158 + $0x40] sm:$0xff]
    %v5168 = vld [vmem:[%s5158 + $0x48] sm:$0xff]
    %v5169 = vld [vmem:[%s5158 + $0x50] sm:$0xff]
    %v5170 = vld [vmem:[%s5158 + $0x58] sm:$0xff]
    %v5171 = vld [vmem:[%s5158 + $0x60] sm:$0xff]
    %v5172 = vld [vmem:[%s5158 + $0x68] sm:$0xff]
    %v5173 = vld [vmem:[%s5158 + $0x70] sm:$0xff]
    %v5174 = vld [vmem:[%s5158 + $0x78] sm:$0xff]
    %v5175 = vld [vmem:[%s5158 + $0x80] sm:$0xff]
    %v5176 = vld [vmem:[%s5158 + $0x88] sm:$0xff]
    %v5177 = vld [vmem:[%s5158 + $0x90] sm:$0xff]
    %v5178 = vld [vmem:[%s5158 + $0x98] sm:$0xff]
    %v5179 = vld [vmem:[%s5158 + $0xa0] sm:$0xff]
    %v5180 = vld [vmem:[%s5158 + $0xa8] sm:$0xff]
    %v5181 = vld [vmem:[%s5158 + $0xb0] sm:$0xff]
    %v5182 = vld [vmem:[%s5158 + $0xb8] sm:$0xff]
    %v5183 = vld [vmem:[%s5158 + $0xc0] sm:$0xff]
    %v5184 = vld [vmem:[%s5158 + $0xc8] sm:$0xff]
    %v5185 = vld [vmem:[%s5158 + $0xd0] sm:$0xff]
    %v5186 = vld [vmem:[%s5158 + $0xd8] sm:$0xff]
    %v5187 = vld [vmem:[%s5158 + $0xe0] sm:$0xff]
    %v5188 = vld [vmem:[%s5158 + $0xe8] sm:$0xff]
    %v5189 = vld [vmem:[%s5158 + $0xf0] sm:$0xff]
    %v5190 = vld [vmem:[%s5158 + $0xf8] sm:$0xff]
    %s5191 = scalar_lea.vmem [#allocation25], %s4927
    %v5192 = vld [vmem:[%s5191] sm:$0x3]
    %v5193 = vpack.c.bf16 %v5155, %v5155
    %v5194 = vpack.c.bf16 %v5156, %v5156
    %v5227 = vunpack.c.l.b16 %v5159
    %v5228 = vunpack.c.h.b16 %v5159
    %v5229 = vunpack.c.l.b16 %v5160
    %v5230 = vunpack.c.h.b16 %v5160
    %v5231 = vunpack.c.l.b16 %v5161
    %v5232 = vunpack.c.h.b16 %v5161
    %v5233 = vunpack.c.l.b16 %v5162
    %v5234 = vunpack.c.h.b16 %v5162
    %v5235 = vunpack.c.l.b16 %v5163
    %v5236 = vunpack.c.h.b16 %v5163
    %v5237 = vunpack.c.l.b16 %v5164
    %v5238 = vunpack.c.h.b16 %v5164
    %v5239 = vunpack.c.l.b16 %v5165
    %v5240 = vunpack.c.h.b16 %v5165
    %v5241 = vunpack.c.l.b16 %v5166
    %v5242 = vunpack.c.h.b16 %v5166
    %v5243 = vunpack.c.l.b16 %v5167
    %v5244 = vunpack.c.h.b16 %v5167
    %v5245 = vunpack.c.l.b16 %v5168
    %v5246 = vunpack.c.h.b16 %v5168
    %v5247 = vunpack.c.l.b16 %v5169
    %v5248 = vunpack.c.h.b16 %v5169
    %v5249 = vunpack.c.l.b16 %v5170
    %v5250 = vunpack.c.h.b16 %v5170
    %v5251 = vunpack.c.l.b16 %v5171
    %v5252 = vunpack.c.h.b16 %v5171
    %v5253 = vunpack.c.l.b16 %v5172
    %v5254 = vunpack.c.h.b16 %v5172
    %v5255 = vunpack.c.l.b16 %v5173
    %v5256 = vunpack.c.h.b16 %v5173
    %v5257 = vunpack.c.l.b16 %v5174
    %v5258 = vunpack.c.h.b16 %v5174
    %v5259 = vunpack.c.l.b16 %v5175
    %v5260 = vunpack.c.h.b16 %v5175
    %v5261 = vunpack.c.l.b16 %v5176
    %v5262 = vunpack.c.h.b16 %v5176
    %v5263 = vunpack.c.l.b16 %v5177
    %v5264 = vunpack.c.h.b16 %v5177
    %v5265 = vunpack.c.l.b16 %v5178
    %v5266 = vunpack.c.h.b16 %v5178
    %v5267 = vunpack.c.l.b16 %v5179
    %v5268 = vunpack.c.h.b16 %v5179
    %v5269 = vunpack.c.l.b16 %v5180
    %v5270 = vunpack.c.h.b16 %v5180
    %v5271 = vunpack.c.l.b16 %v5181
    %v5272 = vunpack.c.h.b16 %v5181
    %v5273 = vunpack.c.l.b16 %v5182
    %v5274 = vunpack.c.h.b16 %v5182
    %v5275 = vunpack.c.l.b16 %v5183
    %v5276 = vunpack.c.h.b16 %v5183
    %v5277 = vunpack.c.l.b16 %v5184
    %v5278 = vunpack.c.h.b16 %v5184
    %v5279 = vunpack.c.l.b16 %v5185
    %v5280 = vunpack.c.h.b16 %v5185
    %v5281 = vunpack.c.l.b16 %v5186
    %v5282 = vunpack.c.h.b16 %v5186
    %v5283 = vunpack.c.l.b16 %v5187
    %v5284 = vunpack.c.h.b16 %v5187
    %v5285 = vunpack.c.l.b16 %v5188
    %v5286 = vunpack.c.h.b16 %v5188
    %v5287 = vunpack.c.l.b16 %v5189
    %v5288 = vunpack.c.h.b16 %v5189
    %v5289 = vunpack.c.l.b16 %v5190
    %v5290 = vunpack.c.h.b16 %v5190
    %v5291 = vpack.c.b16 %v5229, %v5227
    %v5292 = vpack.c.b16 %v5230, %v5228
    %v5293 = vpack.c.b16 %v5233, %v5231
    %v5294 = vpack.c.b16 %v5234, %v5232
    %v5295 = vpack.c.b16 %v5237, %v5235
    %v5296 = vpack.c.b16 %v5238, %v5236
    %v5297 = vpack.c.b16 %v5241, %v5239
    %v5298 = vpack.c.b16 %v5242, %v5240
    %v5299 = vpack.c.b16 %v5245, %v5243
    %v5300 = vpack.c.b16 %v5246, %v5244
    %v5301 = vpack.c.b16 %v5249, %v5247
    %v5302 = vpack.c.b16 %v5250, %v5248
    %v5303 = vpack.c.b16 %v5253, %v5251
    %v5304 = vpack.c.b16 %v5254, %v5252
    %v5305 = vpack.c.b16 %v5257, %v5255
    %v5306 = vpack.c.b16 %v5258, %v5256
    %v5307 = vpack.c.b16 %v5261, %v5259
    %v5308 = vpack.c.b16 %v5262, %v5260
    %v5309 = vpack.c.b16 %v5265, %v5263
    %v5310 = vpack.c.b16 %v5266, %v5264
    %v5311 = vpack.c.b16 %v5269, %v5267
    %v5312 = vpack.c.b16 %v5270, %v5268
    %v5313 = vpack.c.b16 %v5273, %v5271
    %v5314 = vpack.c.b16 %v5274, %v5272
    %v5315 = vpack.c.b16 %v5277, %v5275
    %v5316 = vpack.c.b16 %v5278, %v5276
    %v5317 = vpack.c.b16 %v5281, %v5279
    %v5318 = vpack.c.b16 %v5282, %v5280
    %v5319 = vpack.c.b16 %v5285, %v5283
    %v5320 = vpack.c.b16 %v5286, %v5284
    %v5321 = vpack.c.b16 %v5289, %v5287
    %v5322 = vpack.c.b16 %v5290, %v5288
    %v5356 = vlaneseq
    %v5357 = vshrl.u32 %v5356, 7
    %v5358 = vsub.s32 0, %v5357
    %v5359 = vrot.slane %v5192, %v5358
    %v5360 = vlaneseq
    %v5361 = vshrl.u32 %v5360, 7
    %v5362 = vsub.s32 1, %v5361
    %v5363 = vrot.slane %v5192, %v5362
    %5366 = vmatprep.subr.bf16.mxu0 %v5292
    %5367 = vmatpush1.bf16.msra.mxu0 %v5291
    %5368 = vmatprep.subr.bf16.mxu0 %v5294
    %5369 = vmatpush1.bf16.msra.mxu0 %v5293
    %5370 = vmatprep.subr.bf16.mxu0 %v5296
    %5371 = vmatpush1.bf16.msra.mxu0 %v5295
    %5372 = vmatprep.subr.bf16.mxu0 %v5298
    %5373 = vmatpush1.bf16.msra.mxu0 %v5297
    %5374 = vmatprep.subr.bf16.mxu0 %v5300
    %5375 = vmatpush1.bf16.msra.mxu0 %v5299
    %5376 = vmatprep.subr.bf16.mxu0 %v5302
    %5377 = vmatpush1.bf16.msra.mxu0 %v5301
    %5378 = vmatprep.subr.bf16.mxu0 %v5304
    %5379 = vmatpush1.bf16.msra.mxu0 %v5303
    %5380 = vmatprep.subr.bf16.mxu0 %v5306
    %5381 = vmatpush1.bf16.msra.mxu0 %v5305
    %5382 = vmatprep.subr.bf16.mxu0 %v5308
    %5383 = vmatpush1.bf16.msra.mxu0 %v5307
    %5384 = vmatprep.subr.bf16.mxu0 %v5310
    %5385 = vmatpush1.bf16.msra.mxu0 %v5309
    %5386 = vmatprep.subr.bf16.mxu0 %v5312
    %5387 = vmatpush1.bf16.msra.mxu0 %v5311
    %5388 = vmatprep.subr.bf16.mxu0 %v5314
    %5389 = vmatpush1.bf16.msra.mxu0 %v5313
    %5390 = vmatprep.subr.bf16.mxu0 %v5316
    %5391 = vmatpush1.bf16.msra.mxu0 %v5315
    %5392 = vmatprep.subr.bf16.mxu0 %v5318
    %5393 = vmatpush1.bf16.msra.mxu0 %v5317
    %5394 = vmatprep.subr.bf16.mxu0 %v5320
    %5395 = vmatpush1.bf16.msra.mxu0 %v5319
    %5396 = vmatprep.subr.bf16.mxu0 %v5322
    %5397 = vmatpush1.bf16.msra.mxu0 %v5321
    %5398 = vmatprep.mubr.bf16.mxu0 %v5194
    %5399 = vmatmul.mubr.bf16.gmra.mrb[0].mxu0 %v5193
    %v5400 = vpop.f32.mrb[0].mxu0
    %v5401 = vadd.f32 %v5359, %v5400
    %v5402 = vpop.f32.mrb[0].mxu0
    %v5403 = vadd.f32 %v5363, %v5402
    %v5404 = vpop.f32.mrb[0].mxu0
    %v5405 = vpop.f32.mrb[0].mxu0
    %5406 = vdwg.mxu0
    %v5407 = vmax.f32 %v5401, 0.0
    %v5408 = vmax.f32 %v5403, 0.0
    %s5409 = smul.addr %s4892, 4
    %s5410 = scalar_lea.vmem [#allocation26], %s5409
    %v5411 = vld [vmem:[%s5410] sm:$0xff]
    %v5412 = vld [vmem:[%s5410 + $0x8] sm:$0xff]
    %v5413 = vld [vmem:[%s5410 + $0x10] sm:$0xff]
    %v5414 = vld [vmem:[%s5410 + $0x18] sm:$0xff]
    %v5415 = vld [vmem:[%s5410 + $0x20] sm:$0xff]
    %v5416 = vld [vmem:[%s5410 + $0x28] sm:$0xff]
    %v5417 = vld [vmem:[%s5410 + $0x30] sm:$0xff]
    %v5418 = vld [vmem:[%s5410 + $0x38] sm:$0xff]
    %v5419 = vld [vmem:[%s5410 + $0x40] sm:$0xff]
    %v5420 = vld [vmem:[%s5410 + $0x48] sm:$0xff]
    %v5421 = vld [vmem:[%s5410 + $0x50] sm:$0xff]
    %v5422 = vld [vmem:[%s5410 + $0x58] sm:$0xff]
    %v5423 = vld [vmem:[%s5410 + $0x60] sm:$0xff]
    %v5424 = vld [vmem:[%s5410 + $0x68] sm:$0xff]
    %v5425 = vld [vmem:[%s5410 + $0x70] sm:$0xff]
    %v5426 = vld [vmem:[%s5410 + $0x78] sm:$0xff]
    %v5427 = vld [vmem:[%s5410 + $0x80] sm:$0xff]
    %v5428 = vld [vmem:[%s5410 + $0x88] sm:$0xff]
    %v5429 = vld [vmem:[%s5410 + $0x90] sm:$0xff]
    %v5430 = vld [vmem:[%s5410 + $0x98] sm:$0xff]
    %v5431 = vld [vmem:[%s5410 + $0xa0] sm:$0xff]
    %v5432 = vld [vmem:[%s5410 + $0xa8] sm:$0xff]
    %v5433 = vld [vmem:[%s5410 + $0xb0] sm:$0xff]
    %v5434 = vld [vmem:[%s5410 + $0xb8] sm:$0xff]
    %v5435 = vld [vmem:[%s5410 + $0xc0] sm:$0xff]
    %v5436 = vld [vmem:[%s5410 + $0xc8] sm:$0xff]
    %v5437 = vld [vmem:[%s5410 + $0xd0] sm:$0xff]
    %v5438 = vld [vmem:[%s5410 + $0xd8] sm:$0xff]
    %v5439 = vld [vmem:[%s5410 + $0xe0] sm:$0xff]
    %v5440 = vld [vmem:[%s5410 + $0xe8] sm:$0xff]
    %v5441 = vld [vmem:[%s5410 + $0xf0] sm:$0xff]
    %v5442 = vld [vmem:[%s5410 + $0xf8] sm:$0xff]
    %s5443 = scalar_lea.vmem [#allocation28], %s4927
    %v5444 = vld [vmem:[%s5443] sm:$0x3]
    %v5445 = vpack.c.bf16 %v5407, %v5407
    %v5446 = vpack.c.bf16 %v5408, %v5408
    %v5479 = vunpack.c.l.b16 %v5411
    %v5480 = vunpack.c.h.b16 %v5411
    %v5481 = vunpack.c.l.b16 %v5412
    %v5482 = vunpack.c.h.b16 %v5412
    %v5483 = vunpack.c.l.b16 %v5413
    %v5484 = vunpack.c.h.b16 %v5413
    %v5485 = vunpack.c.l.b16 %v5414
    %v5486 = vunpack.c.h.b16 %v5414
    %v5487 = vunpack.c.l.b16 %v5415
    %v5488 = vunpack.c.h.b16 %v5415
    %v5489 = vunpack.c.l.b16 %v5416
    %v5490 = vunpack.c.h.b16 %v5416
    %v5491 = vunpack.c.l.b16 %v5417
    %v5492 = vunpack.c.h.b16 %v5417
    %v5493 = vunpack.c.l.b16 %v5418
    %v5494 = vunpack.c.h.b16 %v5418
    %v5495 = vunpack.c.l.b16 %v5419
    %v5496 = vunpack.c.h.b16 %v5419
    %v5497 = vunpack.c.l.b16 %v5420
    %v5498 = vunpack.c.h.b16 %v5420
    %v5499 = vunpack.c.l.b16 %v5421
    %v5500 = vunpack.c.h.b16 %v5421
    %v5501 = vunpack.c.l.b16 %v5422
    %v5502 = vunpack.c.h.b16 %v5422
    %v5503 = vunpack.c.l.b16 %v5423
    %v5504 = vunpack.c.h.b16 %v5423
    %v5505 = vunpack.c.l.b16 %v5424
    %v5506 = vunpack.c.h.b16 %v5424
    %v5507 = vunpack.c.l.b16 %v5425
    %v5508 = vunpack.c.h.b16 %v5425
    %v5509 = vunpack.c.l.b16 %v5426
    %v5510 = vunpack.c.h.b16 %v5426
    %v5511 = vunpack.c.l.b16 %v5427
    %v5512 = vunpack.c.h.b16 %v5427
    %v5513 = vunpack.c.l.b16 %v5428
    %v5514 = vunpack.c.h.b16 %v5428
    %v5515 = vunpack.c.l.b16 %v5429
    %v5516 = vunpack.c.h.b16 %v5429
    %v5517 = vunpack.c.l.b16 %v5430
    %v5518 = vunpack.c.h.b16 %v5430
    %v5519 = vunpack.c.l.b16 %v5431
    %v5520 = vunpack.c.h.b16 %v5431
    %v5521 = vunpack.c.l.b16 %v5432
    %v5522 = vunpack.c.h.b16 %v5432
    %v5523 = vunpack.c.l.b16 %v5433
    %v5524 = vunpack.c.h.b16 %v5433
    %v5525 = vunpack.c.l.b16 %v5434
    %v5526 = vunpack.c.h.b16 %v5434
    %v5527 = vunpack.c.l.b16 %v5435
    %v5528 = vunpack.c.h.b16 %v5435
    %v5529 = vunpack.c.l.b16 %v5436
    %v5530 = vunpack.c.h.b16 %v5436
    %v5531 = vunpack.c.l.b16 %v5437
    %v5532 = vunpack.c.h.b16 %v5437
    %v5533 = vunpack.c.l.b16 %v5438
    %v5534 = vunpack.c.h.b16 %v5438
    %v5535 = vunpack.c.l.b16 %v5439
    %v5536 = vunpack.c.h.b16 %v5439
    %v5537 = vunpack.c.l.b16 %v5440
    %v5538 = vunpack.c.h.b16 %v5440
    %v5539 = vunpack.c.l.b16 %v5441
    %v5540 = vunpack.c.h.b16 %v5441
    %v5541 = vunpack.c.l.b16 %v5442
    %v5542 = vunpack.c.h.b16 %v5442
    %v5543 = vpack.c.b16 %v5481, %v5479
    %v5544 = vpack.c.b16 %v5482, %v5480
    %v5545 = vpack.c.b16 %v5485, %v5483
    %v5546 = vpack.c.b16 %v5486, %v5484
    %v5547 = vpack.c.b16 %v5489, %v5487
    %v5548 = vpack.c.b16 %v5490, %v5488
    %v5549 = vpack.c.b16 %v5493, %v5491
    %v5550 = vpack.c.b16 %v5494, %v5492
    %v5551 = vpack.c.b16 %v5497, %v5495
    %v5552 = vpack.c.b16 %v5498, %v5496
    %v5553 = vpack.c.b16 %v5501, %v5499
    %v5554 = vpack.c.b16 %v5502, %v5500
    %v5555 = vpack.c.b16 %v5505, %v5503
    %v5556 = vpack.c.b16 %v5506, %v5504
    %v5557 = vpack.c.b16 %v5509, %v5507
    %v5558 = vpack.c.b16 %v5510, %v5508
    %v5559 = vpack.c.b16 %v5513, %v5511
    %v5560 = vpack.c.b16 %v5514, %v5512
    %v5561 = vpack.c.b16 %v5517, %v5515
    %v5562 = vpack.c.b16 %v5518, %v5516
    %v5563 = vpack.c.b16 %v5521, %v5519
    %v5564 = vpack.c.b16 %v5522, %v5520
    %v5565 = vpack.c.b16 %v5525, %v5523
    %v5566 = vpack.c.b16 %v5526, %v5524
    %v5567 = vpack.c.b16 %v5529, %v5527
    %v5568 = vpack.c.b16 %v5530, %v5528
    %v5569 = vpack.c.b16 %v5533, %v5531
    %v5570 = vpack.c.b16 %v5534, %v5532
    %v5571 = vpack.c.b16 %v5537, %v5535
    %v5572 = vpack.c.b16 %v5538, %v5536
    %v5573 = vpack.c.b16 %v5541, %v5539
    %v5574 = vpack.c.b16 %v5542, %v5540
    %v5608 = vlaneseq
    %v5609 = vshrl.u32 %v5608, 7
    %v5610 = vsub.s32 0, %v5609
    %v5611 = vrot.slane %v5444, %v5610
    %v5612 = vlaneseq
    %v5613 = vshrl.u32 %v5612, 7
    %v5614 = vsub.s32 1, %v5613
    %v5615 = vrot.slane %v5444, %v5614
    %5618 = vmatprep.subr.bf16.mxu0 %v5544
    %5619 = vmatpush1.bf16.msra.mxu0 %v5543
    %5620 = vmatprep.subr.bf16.mxu0 %v5546
    %5621 = vmatpush1.bf16.msra.mxu0 %v5545
    %5622 = vmatprep.subr.bf16.mxu0 %v5548
    %5623 = vmatpush1.bf16.msra.mxu0 %v5547
    %5624 = vmatprep.subr.bf16.mxu0 %v5550
    %5625 = vmatpush1.bf16.msra.mxu0 %v5549
    %5626 = vmatprep.subr.bf16.mxu0 %v5552
    %5627 = vmatpush1.bf16.msra.mxu0 %v5551
    %5628 = vmatprep.subr.bf16.mxu0 %v5554
    %5629 = vmatpush1.bf16.msra.mxu0 %v5553
    %5630 = vmatprep.subr.bf16.mxu0 %v5556
    %5631 = vmatpush1.bf16.msra.mxu0 %v5555
    %5632 = vmatprep.subr.bf16.mxu0 %v5558
    %5633 = vmatpush1.bf16.msra.mxu0 %v5557
    %5634 = vmatprep.subr.bf16.mxu0 %v5560
    %5635 = vmatpush1.bf16.msra.mxu0 %v5559
    %5636 = vmatprep.subr.bf16.mxu0 %v5562
    %5637 = vmatpush1.bf16.msra.mxu0 %v5561
    %5638 = vmatprep.subr.bf16.mxu0 %v5564
    %5639 = vmatpush1.bf16.msra.mxu0 %v5563
    %5640 = vmatprep.subr.bf16.mxu0 %v5566
    %5641 = vmatpush1.bf16.msra.mxu0 %v5565
    %5642 = vmatprep.subr.bf16.mxu0 %v5568
    %5643 = vmatpush1.bf16.msra.mxu0 %v5567
    %5644 = vmatprep.subr.bf16.mxu0 %v5570
    %5645 = vmatpush1.bf16.msra.mxu0 %v5569
    %5646 = vmatprep.subr.bf16.mxu0 %v5572
    %5647 = vmatpush1.bf16.msra.mxu0 %v5571
    %5648 = vmatprep.subr.bf16.mxu0 %v5574
    %5649 = vmatpush1.bf16.msra.mxu0 %v5573
    %5650 = vmatprep.mubr.bf16.mxu0 %v5446
    %5651 = vmatmul.mubr.bf16.gmra.mrb[0].mxu0 %v5445
    %v5652 = vpop.f32.mrb[0].mxu0
    %v5653 = vadd.f32 %v5611, %v5652
    %v5654 = vpop.f32.mrb[0].mxu0
    %v5655 = vadd.f32 %v5615, %v5654
    %v5656 = vpop.f32.mrb[0].mxu0
    %v5657 = vpop.f32.mrb[0].mxu0
    %5658 = vdwg.mxu0
    %v5659 = vmax.f32 %v5653, 0.0
    %v5660 = vmax.f32 %v5655, 0.0
    %s5661 = smul.u32 %s4889, 32
    %s5662 = smul.addr %s5661, 4
    %s5663 = scalar_lea.vmem %s16, %s5662
    %v5664 = vld [vmem:[%s5663] sm:$0xf]
    %v5665 = vld [vmem:[%s5663 + $0x4] sm:$0xf]
    %v5666 = vld [vmem:[%s5663 + $0x8] sm:$0xf]
    %v5667 = vld [vmem:[%s5663 + $0xc] sm:$0xf]
    %v5668 = vld [vmem:[%s5663 + $0x10] sm:$0xf]
    %v5669 = vld [vmem:[%s5663 + $0x14] sm:$0xf]
    %v5670 = vld [vmem:[%s5663 + $0x18] sm:$0xf]
    %v5671 = vld [vmem:[%s5663 + $0x1c] sm:$0xf]
    %v5672 = vld [vmem:[%s5663 + $0x20] sm:$0xf]
    %v5673 = vld [vmem:[%s5663 + $0x24] sm:$0xf]
    %v5674 = vld [vmem:[%s5663 + $0x28] sm:$0xf]
    %v5675 = vld [vmem:[%s5663 + $0x2c] sm:$0xf]
    %v5676 = vld [vmem:[%s5663 + $0x30] sm:$0xf]
    %v5677 = vld [vmem:[%s5663 + $0x34] sm:$0xf]
    %v5678 = vld [vmem:[%s5663 + $0x38] sm:$0xf]
    %v5679 = vld [vmem:[%s5663 + $0x3c] sm:$0xf]
    %v5680 = vld [vmem:[%s5663 + $0x40] sm:$0xf]
    %v5681 = vld [vmem:[%s5663 + $0x44] sm:$0xf]
    %v5682 = vld [vmem:[%s5663 + $0x48] sm:$0xf]
    %v5683 = vld [vmem:[%s5663 + $0x4c] sm:$0xf]
    %v5684 = vld [vmem:[%s5663 + $0x50] sm:$0xf]
    %v5685 = vld [vmem:[%s5663 + $0x54] sm:$0xf]
    %v5686 = vld [vmem:[%s5663 + $0x58] sm:$0xf]
    %v5687 = vld [vmem:[%s5663 + $0x5c] sm:$0xf]
    %v5688 = vld [vmem:[%s5663 + $0x60] sm:$0xf]
    %v5689 = vld [vmem:[%s5663 + $0x64] sm:$0xf]
    %v5690 = vld [vmem:[%s5663 + $0x68] sm:$0xf]
    %v5691 = vld [vmem:[%s5663 + $0x6c] sm:$0xf]
    %v5692 = vld [vmem:[%s5663 + $0x70] sm:$0xf]
    %v5693 = vld [vmem:[%s5663 + $0x74] sm:$0xf]
    %v5694 = vld [vmem:[%s5663 + $0x78] sm:$0xf]
    %v5695 = vld [vmem:[%s5663 + $0x7c] sm:$0xf]
    %s5696 = scalar_lea.vmem [#allocation29], %s4889
    %v5697 = vld [vmem:[%s5696] sm:$0x1]
    %v5698 = vpack.c.bf16 %v5659, %v5659
    %v5699 = vpack.c.bf16 %v5660, %v5660
    %v5732 = vunpack.c.l.b16 %v5664
    %v5733 = vunpack.c.l.b16 %v5665
    %v5734 = vunpack.c.l.b16 %v5666
    %v5735 = vunpack.c.l.b16 %v5667
    %v5736 = vunpack.c.l.b16 %v5668
    %v5737 = vunpack.c.l.b16 %v5669
    %v5738 = vunpack.c.l.b16 %v5670
    %v5739 = vunpack.c.l.b16 %v5671
    %v5740 = vunpack.c.l.b16 %v5672
    %v5741 = vunpack.c.l.b16 %v5673
    %v5742 = vunpack.c.l.b16 %v5674
    %v5743 = vunpack.c.l.b16 %v5675
    %v5744 = vunpack.c.l.b16 %v5676
    %v5745 = vunpack.c.l.b16 %v5677
    %v5746 = vunpack.c.l.b16 %v5678
    %v5747 = vunpack.c.l.b16 %v5679
    %v5748 = vunpack.c.l.b16 %v5680
    %v5749 = vunpack.c.l.b16 %v5681
    %v5750 = vunpack.c.l.b16 %v5682
    %v5751 = vunpack.c.l.b16 %v5683
    %v5752 = vunpack.c.l.b16 %v5684
    %v5753 = vunpack.c.l.b16 %v5685
    %v5754 = vunpack.c.l.b16 %v5686
    %v5755 = vunpack.c.l.b16 %v5687
    %v5756 = vunpack.c.l.b16 %v5688
    %v5757 = vunpack.c.l.b16 %v5689
    %v5758 = vunpack.c.l.b16 %v5690
    %v5759 = vunpack.c.l.b16 %v5691
    %v5760 = vunpack.c.l.b16 %v5692
    %v5761 = vunpack.c.l.b16 %v5693
    %v5762 = vunpack.c.l.b16 %v5694
    %v5763 = vunpack.c.l.b16 %v5695
    %v5764 = vpack.c.b16 %v5733, %v5732
    %v5765 = vpack.c.b16 %v5735, %v5734
    %v5766 = vpack.c.b16 %v5737, %v5736
    %v5767 = vpack.c.b16 %v5739, %v5738
    %v5768 = vpack.c.b16 %v5741, %v5740
    %v5769 = vpack.c.b16 %v5743, %v5742
    %v5770 = vpack.c.b16 %v5745, %v5744
    %v5771 = vpack.c.b16 %v5747, %v5746
    %v5772 = vpack.c.b16 %v5749, %v5748
    %v5773 = vpack.c.b16 %v5751, %v5750
    %v5774 = vpack.c.b16 %v5753, %v5752
    %v5775 = vpack.c.b16 %v5755, %v5754
    %v5776 = vpack.c.b16 %v5757, %v5756
    %v5777 = vpack.c.b16 %v5759, %v5758
    %v5778 = vpack.c.b16 %v5761, %v5760
    %v5779 = vpack.c.b16 %v5763, %v5762
    %5796 = vmatprep.subr.bf16.mxu0 0
    %5797 = vmatpush1.bf16.msra.mxu0 %v5764
    %5798 = vmatprep.subr.bf16.mxu0 0
    %5799 = vmatpush1.bf16.msra.mxu0 %v5765
    %5800 = vmatprep.subr.bf16.mxu0 0
    %5801 = vmatpush1.bf16.msra.mxu0 %v5766
    %5802 = vmatprep.subr.bf16.mxu0 0
    %5803 = vmatpush1.bf16.msra.mxu0 %v5767
    %5804 = vmatprep.subr.bf16.mxu0 0
    %5805 = vmatpush1.bf16.msra.mxu0 %v5768
    %5806 = vmatprep.subr.bf16.mxu0 0
    %5807 = vmatpush1.bf16.msra.mxu0 %v5769
    %5808 = vmatprep.subr.bf16.mxu0 0
    %5809 = vmatpush1.bf16.msra.mxu0 %v5770
    %5810 = vmatprep.subr.bf16.mxu0 0
    %5811 = vmatpush1.bf16.msra.mxu0 %v5771
    %5812 = vmatprep.subr.bf16.mxu0 0
    %5813 = vmatpush1.bf16.msra.mxu0 %v5772
    %5814 = vmatprep.subr.bf16.mxu0 0
    %5815 = vmatpush1.bf16.msra.mxu0 %v5773
    %5816 = vmatprep.subr.bf16.mxu0 0
    %5817 = vmatpush1.bf16.msra.mxu0 %v5774
    %5818 = vmatprep.subr.bf16.mxu0 0
    %5819 = vmatpush1.bf16.msra.mxu0 %v5775
    %5820 = vmatprep.subr.bf16.mxu0 0
    %5821 = vmatpush1.bf16.msra.mxu0 %v5776
    %5822 = vmatprep.subr.bf16.mxu0 0
    %5823 = vmatpush1.bf16.msra.mxu0 %v5777
    %5824 = vmatprep.subr.bf16.mxu0 0
    %5825 = vmatpush1.bf16.msra.mxu0 %v5778
    %5826 = vmatprep.subr.bf16.mxu0 0
    %5827 = vmatpush1.bf16.msra.mxu0 %v5779
    %5828 = vmatprep.mubr.bf16.mxu0 %v5699
    %5829 = vmatmul.mubr.bf16.gmra.mrb[0].mxu0 %v5698
    %v5830 = vpop.f32.mrb[0].mxu0
    %v5831 = vadd.f32 %v5697, %v5830
    %v5832 = vpop.f32.mrb[0].mxu0
    %v5833 = vpop.f32.mrb[0].mxu0
    %v5834 = vpop.f32.mrb[0].mxu0
    %5835 = vdwg.mxu0
    %5836 = vst.msk [vmem:[#allocation31 + $0x4] sm:$0x1] %vm2039, %v5831
    %s5837 = sadd.s32 %s270, 5
    %s5838 = sld [smem:[#allocation4 + %s5837]]
    %s5839 = scalar_lea.vmem [#allocation2], 5
    %v5840 = vld [vmem:[%s5839] ss:$8 sm:$0x3]
    %s5841 = smul.u32 %s5838, 64
    %s5842 = smul.addr %s5841, 4
    %s5843 = scalar_lea.vmem [#allocation20], %s5842
    %v5844 = vld [vmem:[%s5843] sm:$0xff]
    %v5845 = vld [vmem:[%s5843 + $0x8] sm:$0xff]
    %v5846 = vld [vmem:[%s5843 + $0x10] sm:$0xff]
    %v5847 = vld [vmem:[%s5843 + $0x18] sm:$0xff]
    %v5848 = vld [vmem:[%s5843 + $0x20] sm:$0xff]
    %v5849 = vld [vmem:[%s5843 + $0x28] sm:$0xff]
    %v5850 = vld [vmem:[%s5843 + $0x30] sm:$0xff]
    %v5851 = vld [vmem:[%s5843 + $0x38] sm:$0xff]
    %v5852 = vld [vmem:[%s5843 + $0x40] sm:$0xff]
    %v5853 = vld [vmem:[%s5843 + $0x48] sm:$0xff]
    %v5854 = vld [vmem:[%s5843 + $0x50] sm:$0xff]
    %v5855 = vld [vmem:[%s5843 + $0x58] sm:$0xff]
    %v5856 = vld [vmem:[%s5843 + $0x60] sm:$0xff]
    %v5857 = vld [vmem:[%s5843 + $0x68] sm:$0xff]
    %v5858 = vld [vmem:[%s5843 + $0x70] sm:$0xff]
    %v5859 = vld [vmem:[%s5843 + $0x78] sm:$0xff]
    %v5860 = vld [vmem:[%s5843 + $0x80] sm:$0xff]
    %v5861 = vld [vmem:[%s5843 + $0x88] sm:$0xff]
    %v5862 = vld [vmem:[%s5843 + $0x90] sm:$0xff]
    %v5863 = vld [vmem:[%s5843 + $0x98] sm:$0xff]
    %v5864 = vld [vmem:[%s5843 + $0xa0] sm:$0xff]
    %v5865 = vld [vmem:[%s5843 + $0xa8] sm:$0xff]
    %v5866 = vld [vmem:[%s5843 + $0xb0] sm:$0xff]
    %v5867 = vld [vmem:[%s5843 + $0xb8] sm:$0xff]
    %v5868 = vld [vmem:[%s5843 + $0xc0] sm:$0xff]
    %v5869 = vld [vmem:[%s5843 + $0xc8] sm:$0xff]
    %v5870 = vld [vmem:[%s5843 + $0xd0] sm:$0xff]
    %v5871 = vld [vmem:[%s5843 + $0xd8] sm:$0xff]
    %v5872 = vld [vmem:[%s5843 + $0xe0] sm:$0xff]
    %v5873 = vld [vmem:[%s5843 + $0xe8] sm:$0xff]
    %v5874 = vld [vmem:[%s5843 + $0xf0] sm:$0xff]
    %v5875 = vld [vmem:[%s5843 + $0xf8] sm:$0xff]
    %s5876 = smul.u32 %s5838, 2
    %s5877 = scalar_lea.vmem [#allocation22], %s5876
    %v5878 = vld [vmem:[%s5877] sm:$0x3]
    %v5880 = vlaneseq
    %v5881 = vshrl.u32 %v5880, 7
    %v5882 = vsub.s32 0, %v5881
    %v5883 = vrot.slane %v5840, %v5882
    %v5884 = vlaneseq
    %v5885 = vshrl.u32 %v5884, 7
    %v5886 = vsub.s32 1, %v5885
    %v5887 = vrot.slane %v5840, %v5886
    %v5890 = vpack.c.bf16 %v5883, %v5883
    %v5891 = vpack.c.bf16 %v5887, %v5887
    %v5924 = vunpack.c.l.b16 %v5844
    %v5925 = vunpack.c.h.b16 %v5844
    %v5926 = vunpack.c.l.b16 %v5845
    %v5927 = vunpack.c.h.b16 %v5845
    %v5928 = vunpack.c.l.b16 %v5846
    %v5929 = vunpack.c.h.b16 %v5846
    %v5930 = vunpack.c.l.b16 %v5847
    %v5931 = vunpack.c.h.b16 %v5847
    %v5932 = vunpack.c.l.b16 %v5848
    %v5933 = vunpack.c.h.b16 %v5848
    %v5934 = vunpack.c.l.b16 %v5849
    %v5935 = vunpack.c.h.b16 %v5849
    %v5936 = vunpack.c.l.b16 %v5850
    %v5937 = vunpack.c.h.b16 %v5850
    %v5938 = vunpack.c.l.b16 %v5851
    %v5939 = vunpack.c.h.b16 %v5851
    %v5940 = vunpack.c.l.b16 %v5852
    %v5941 = vunpack.c.h.b16 %v5852
    %v5942 = vunpack.c.l.b16 %v5853
    %v5943 = vunpack.c.h.b16 %v5853
    %v5944 = vunpack.c.l.b16 %v5854
    %v5945 = vunpack.c.h.b16 %v5854
    %v5946 = vunpack.c.l.b16 %v5855
    %v5947 = vunpack.c.h.b16 %v5855
    %v5948 = vunpack.c.l.b16 %v5856
    %v5949 = vunpack.c.h.b16 %v5856
    %v5950 = vunpack.c.l.b16 %v5857
    %v5951 = vunpack.c.h.b16 %v5857
    %v5952 = vunpack.c.l.b16 %v5858
    %v5953 = vunpack.c.h.b16 %v5858
    %v5954 = vunpack.c.l.b16 %v5859
    %v5955 = vunpack.c.h.b16 %v5859
    %v5956 = vunpack.c.l.b16 %v5860
    %v5957 = vunpack.c.h.b16 %v5860
    %v5958 = vunpack.c.l.b16 %v5861
    %v5959 = vunpack.c.h.b16 %v5861
    %v5960 = vunpack.c.l.b16 %v5862
    %v5961 = vunpack.c.h.b16 %v5862
    %v5962 = vunpack.c.l.b16 %v5863
    %v5963 = vunpack.c.h.b16 %v5863
    %v5964 = vunpack.c.l.b16 %v5864
    %v5965 = vunpack.c.h.b16 %v5864
    %v5966 = vunpack.c.l.b16 %v5865
    %v5967 = vunpack.c.h.b16 %v5865
    %v5968 = vunpack.c.l.b16 %v5866
    %v5969 = vunpack.c.h.b16 %v5866
    %v5970 = vunpack.c.l.b16 %v5867
    %v5971 = vunpack.c.h.b16 %v5867
    %v5972 = vunpack.c.l.b16 %v5868
    %v5973 = vunpack.c.h.b16 %v5868
    %v5974 = vunpack.c.l.b16 %v5869
    %v5975 = vunpack.c.h.b16 %v5869
    %v5976 = vunpack.c.l.b16 %v5870
    %v5977 = vunpack.c.h.b16 %v5870
    %v5978 = vunpack.c.l.b16 %v5871
    %v5979 = vunpack.c.h.b16 %v5871
    %v5980 = vunpack.c.l.b16 %v5872
    %v5981 = vunpack.c.h.b16 %v5872
    %v5982 = vunpack.c.l.b16 %v5873
    %v5983 = vunpack.c.h.b16 %v5873
    %v5984 = vunpack.c.l.b16 %v5874
    %v5985 = vunpack.c.h.b16 %v5874
    %v5986 = vunpack.c.l.b16 %v5875
    %v5987 = vunpack.c.h.b16 %v5875
    %v5988 = vpack.c.b16 %v5926, %v5924
    %v5989 = vpack.c.b16 %v5927, %v5925
    %v5990 = vpack.c.b16 %v5930, %v5928
    %v5991 = vpack.c.b16 %v5931, %v5929
    %v5992 = vpack.c.b16 %v5934, %v5932
    %v5993 = vpack.c.b16 %v5935, %v5933
    %v5994 = vpack.c.b16 %v5938, %v5936
    %v5995 = vpack.c.b16 %v5939, %v5937
    %v5996 = vpack.c.b16 %v5942, %v5940
    %v5997 = vpack.c.b16 %v5943, %v5941
    %v5998 = vpack.c.b16 %v5946, %v5944
    %v5999 = vpack.c.b16 %v5947, %v5945
    %v6000 = vpack.c.b16 %v5950, %v5948
    %v6001 = vpack.c.b16 %v5951, %v5949
    %v6002 = vpack.c.b16 %v5954, %v5952
    %v6003 = vpack.c.b16 %v5955, %v5953
    %v6004 = vpack.c.b16 %v5958, %v5956
    %v6005 = vpack.c.b16 %v5959, %v5957
    %v6006 = vpack.c.b16 %v5962, %v5960
    %v6007 = vpack.c.b16 %v5963, %v5961
    %v6008 = vpack.c.b16 %v5966, %v5964
    %v6009 = vpack.c.b16 %v5967, %v5965
    %v6010 = vpack.c.b16 %v5970, %v5968
    %v6011 = vpack.c.b16 %v5971, %v5969
    %v6012 = vpack.c.b16 %v5974, %v5972
    %v6013 = vpack.c.b16 %v5975, %v5973
    %v6014 = vpack.c.b16 %v5978, %v5976
    %v6015 = vpack.c.b16 %v5979, %v5977
    %v6016 = vpack.c.b16 %v5982, %v5980
    %v6017 = vpack.c.b16 %v5983, %v5981
    %v6018 = vpack.c.b16 %v5986, %v5984
    %v6019 = vpack.c.b16 %v5987, %v5985
    %v6053 = vlaneseq
    %v6054 = vshrl.u32 %v6053, 7
    %v6055 = vsub.s32 0, %v6054
    %v6056 = vrot.slane %v5878, %v6055
    %v6057 = vlaneseq
    %v6058 = vshrl.u32 %v6057, 7
    %v6059 = vsub.s32 1, %v6058
    %v6060 = vrot.slane %v5878, %v6059
    %6063 = vmatprep.subr.bf16.mxu0 %v5989
    %6064 = vmatpush1.bf16.msra.mxu0 %v5988
    %6065 = vmatprep.subr.bf16.mxu0 %v5991
    %6066 = vmatpush1.bf16.msra.mxu0 %v5990
    %6067 = vmatprep.subr.bf16.mxu0 %v5993
    %6068 = vmatpush1.bf16.msra.mxu0 %v5992
    %6069 = vmatprep.subr.bf16.mxu0 %v5995
    %6070 = vmatpush1.bf16.msra.mxu0 %v5994
    %6071 = vmatprep.subr.bf16.mxu0 %v5997
    %6072 = vmatpush1.bf16.msra.mxu0 %v5996
    %6073 = vmatprep.subr.bf16.mxu0 %v5999
    %6074 = vmatpush1.bf16.msra.mxu0 %v5998
    %6075 = vmatprep.subr.bf16.mxu0 %v6001
    %6076 = vmatpush1.bf16.msra.mxu0 %v6000
    %6077 = vmatprep.subr.bf16.mxu0 %v6003
    %6078 = vmatpush1.bf16.msra.mxu0 %v6002
    %6079 = vmatprep.subr.bf16.mxu0 %v6005
    %6080 = vmatpush1.bf16.msra.mxu0 %v6004
    %6081 = vmatprep.subr.bf16.mxu0 %v6007
    %6082 = vmatpush1.bf16.msra.mxu0 %v6006
    %6083 = vmatprep.subr.bf16.mxu0 %v6009
    %6084 = vmatpush1.bf16.msra.mxu0 %v6008
    %6085 = vmatprep.subr.bf16.mxu0 %v6011
    %6086 = vmatpush1.bf16.msra.mxu0 %v6010
    %6087 = vmatprep.subr.bf16.mxu0 %v6013
    %6088 = vmatpush1.bf16.msra.mxu0 %v6012
    %6089 = vmatprep.subr.bf16.mxu0 %v6015
    %6090 = vmatpush1.bf16.msra.mxu0 %v6014
    %6091 = vmatprep.subr.bf16.mxu0 %v6017
    %6092 = vmatpush1.bf16.msra.mxu0 %v6016
    %6093 = vmatprep.subr.bf16.mxu0 %v6019
    %6094 = vmatpush1.bf16.msra.mxu0 %v6018
    %6095 = vmatprep.mubr.bf16.mxu0 %v5891
    %6096 = vmatmul.mubr.bf16.gmra.mrb[0].mxu0 %v5890
    %v6097 = vpop.f32.mrb[0].mxu0
    %v6098 = vadd.f32 %v6056, %v6097
    %v6099 = vpop.f32.mrb[0].mxu0
    %v6100 = vadd.f32 %v6060, %v6099
    %v6101 = vpop.f32.mrb[0].mxu0
    %v6102 = vpop.f32.mrb[0].mxu0
    %6103 = vdwg.mxu0
    %v6104 = vmax.f32 %v6098, 0.0
    %v6105 = vmax.f32 %v6100, 0.0
    %s6106 = smul.addr %s5841, 4
    %s6107 = scalar_lea.vmem [#allocation23], %s6106
    %v6108 = vld [vmem:[%s6107] sm:$0xff]
    %v6109 = vld [vmem:[%s6107 + $0x8] sm:$0xff]
    %v6110 = vld [vmem:[%s6107 + $0x10] sm:$0xff]
    %v6111 = vld [vmem:[%s6107 + $0x18] sm:$0xff]
    %v6112 = vld [vmem:[%s6107 + $0x20] sm:$0xff]
    %v6113 = vld [vmem:[%s6107 + $0x28] sm:$0xff]
    %v6114 = vld [vmem:[%s6107 + $0x30] sm:$0xff]
    %v6115 = vld [vmem:[%s6107 + $0x38] sm:$0xff]
    %v6116 = vld [vmem:[%s6107 + $0x40] sm:$0xff]
    %v6117 = vld [vmem:[%s6107 + $0x48] sm:$0xff]
    %v6118 = vld [vmem:[%s6107 + $0x50] sm:$0xff]
    %v6119 = vld [vmem:[%s6107 + $0x58] sm:$0xff]
    %v6120 = vld [vmem:[%s6107 + $0x60] sm:$0xff]
    %v6121 = vld [vmem:[%s6107 + $0x68] sm:$0xff]
    %v6122 = vld [vmem:[%s6107 + $0x70] sm:$0xff]
    %v6123 = vld [vmem:[%s6107 + $0x78] sm:$0xff]
    %v6124 = vld [vmem:[%s6107 + $0x80] sm:$0xff]
    %v6125 = vld [vmem:[%s6107 + $0x88] sm:$0xff]
    %v6126 = vld [vmem:[%s6107 + $0x90] sm:$0xff]
    %v6127 = vld [vmem:[%s6107 + $0x98] sm:$0xff]
    %v6128 = vld [vmem:[%s6107 + $0xa0] sm:$0xff]
    %v6129 = vld [vmem:[%s6107 + $0xa8] sm:$0xff]
    %v6130 = vld [vmem:[%s6107 + $0xb0] sm:$0xff]
    %v6131 = vld [vmem:[%s6107 + $0xb8] sm:$0xff]
    %v6132 = vld [vmem:[%s6107 + $0xc0] sm:$0xff]
    %v6133 = vld [vmem:[%s6107 + $0xc8] sm:$0xff]
    %v6134 = vld [vmem:[%s6107 + $0xd0] sm:$0xff]
    %v6135 = vld [vmem:[%s6107 + $0xd8] sm:$0xff]
    %v6136 = vld [vmem:[%s6107 + $0xe0] sm:$0xff]
    %v6137 = vld [vmem:[%s6107 + $0xe8] sm:$0xff]
    %v6138 = vld [vmem:[%s6107 + $0xf0] sm:$0xff]
    %v6139 = vld [vmem:[%s6107 + $0xf8] sm:$0xff]
    %s6140 = scalar_lea.vmem [#allocation25], %s5876
    %v6141 = vld [vmem:[%s6140] sm:$0x3]
    %v6142 = vpack.c.bf16 %v6104, %v6104
    %v6143 = vpack.c.bf16 %v6105, %v6105
    %v6176 = vunpack.c.l.b16 %v6108
    %v6177 = vunpack.c.h.b16 %v6108
    %v6178 = vunpack.c.l.b16 %v6109
    %v6179 = vunpack.c.h.b16 %v6109
    %v6180 = vunpack.c.l.b16 %v6110
    %v6181 = vunpack.c.h.b16 %v6110
    %v6182 = vunpack.c.l.b16 %v6111
    %v6183 = vunpack.c.h.b16 %v6111
    %v6184 = vunpack.c.l.b16 %v6112
    %v6185 = vunpack.c.h.b16 %v6112
    %v6186 = vunpack.c.l.b16 %v6113
    %v6187 = vunpack.c.h.b16 %v6113
    %v6188 = vunpack.c.l.b16 %v6114
    %v6189 = vunpack.c.h.b16 %v6114
    %v6190 = vunpack.c.l.b16 %v6115
    %v6191 = vunpack.c.h.b16 %v6115
    %v6192 = vunpack.c.l.b16 %v6116
    %v6193 = vunpack.c.h.b16 %v6116
    %v6194 = vunpack.c.l.b16 %v6117
    %v6195 = vunpack.c.h.b16 %v6117
    %v6196 = vunpack.c.l.b16 %v6118
    %v6197 = vunpack.c.h.b16 %v6118
    %v6198 = vunpack.c.l.b16 %v6119
    %v6199 = vunpack.c.h.b16 %v6119
    %v6200 = vunpack.c.l.b16 %v6120
    %v6201 = vunpack.c.h.b16 %v6120
    %v6202 = vunpack.c.l.b16 %v6121
    %v6203 = vunpack.c.h.b16 %v6121
    %v6204 = vunpack.c.l.b16 %v6122
    %v6205 = vunpack.c.h.b16 %v6122
    %v6206 = vunpack.c.l.b16 %v6123
    %v6207 = vunpack.c.h.b16 %v6123
    %v6208 = vunpack.c.l.b16 %v6124
    %v6209 = vunpack.c.h.b16 %v6124
    %v6210 = vunpack.c.l.b16 %v6125
    %v6211 = vunpack.c.h.b16 %v6125
    %v6212 = vunpack.c.l.b16 %v6126
    %v6213 = vunpack.c.h.b16 %v6126
    %v6214 = vunpack.c.l.b16 %v6127
    %v6215 = vunpack.c.h.b16 %v6127
    %v6216 = vunpack.c.l.b16 %v6128
    %v6217 = vunpack.c.h.b16 %v6128
    %v6218 = vunpack.c.l.b16 %v6129
    %v6219 = vunpack.c.h.b16 %v6129
    %v6220 = vunpack.c.l.b16 %v6130
    %v6221 = vunpack.c.h.b16 %v6130
    %v6222 = vunpack.c.l.b16 %v6131
    %v6223 = vunpack.c.h.b16 %v6131
    %v6224 = vunpack.c.l.b16 %v6132
    %v6225 = vunpack.c.h.b16 %v6132
    %v6226 = vunpack.c.l.b16 %v6133
    %v6227 = vunpack.c.h.b16 %v6133
    %v6228 = vunpack.c.l.b16 %v6134
    %v6229 = vunpack.c.h.b16 %v6134
    %v6230 = vunpack.c.l.b16 %v6135
    %v6231 = vunpack.c.h.b16 %v6135
    %v6232 = vunpack.c.l.b16 %v6136
    %v6233 = vunpack.c.h.b16 %v6136
    %v6234 = vunpack.c.l.b16 %v6137
    %v6235 = vunpack.c.h.b16 %v6137
    %v6236 = vunpack.c.l.b16 %v6138
    %v6237 = vunpack.c.h.b16 %v6138
    %v6238 = vunpack.c.l.b16 %v6139
    %v6239 = vunpack.c.h.b16 %v6139
    %v6240 = vpack.c.b16 %v6178, %v6176
    %v6241 = vpack.c.b16 %v6179, %v6177
    %v6242 = vpack.c.b16 %v6182, %v6180
    %v6243 = vpack.c.b16 %v6183, %v6181
    %v6244 = vpack.c.b16 %v6186, %v6184
    %v6245 = vpack.c.b16 %v6187, %v6185
    %v6246 = vpack.c.b16 %v6190, %v6188
    %v6247 = vpack.c.b16 %v6191, %v6189
    %v6248 = vpack.c.b16 %v6194, %v6192
    %v6249 = vpack.c.b16 %v6195, %v6193
    %v6250 = vpack.c.b16 %v6198, %v6196
    %v6251 = vpack.c.b16 %v6199, %v6197
    %v6252 = vpack.c.b16 %v6202, %v6200
    %v6253 = vpack.c.b16 %v6203, %v6201
    %v6254 = vpack.c.b16 %v6206, %v6204
    %v6255 = vpack.c.b16 %v6207, %v6205
    %v6256 = vpack.c.b16 %v6210, %v6208
    %v6257 = vpack.c.b16 %v6211, %v6209
    %v6258 = vpack.c.b16 %v6214, %v6212
    %v6259 = vpack.c.b16 %v6215, %v6213
    %v6260 = vpack.c.b16 %v6218, %v6216
    %v6261 = vpack.c.b16 %v6219, %v6217
    %v6262 = vpack.c.b16 %v6222, %v6220
    %v6263 = vpack.c.b16 %v6223, %v6221
    %v6264 = vpack.c.b16 %v6226, %v6224
    %v6265 = vpack.c.b16 %v6227, %v6225
    %v6266 = vpack.c.b16 %v6230, %v6228
    %v6267 = vpack.c.b16 %v6231, %v6229
    %v6268 = vpack.c.b16 %v6234, %v6232
    %v6269 = vpack.c.b16 %v6235, %v6233
    %v6270 = vpack.c.b16 %v6238, %v6236
    %v6271 = vpack.c.b16 %v6239, %v6237
    %v6305 = vlaneseq
    %v6306 = vshrl.u32 %v6305, 7
    %v6307 = vsub.s32 0, %v6306
    %v6308 = vrot.slane %v6141, %v6307
    %v6309 = vlaneseq
    %v6310 = vshrl.u32 %v6309, 7
    %v6311 = vsub.s32 1, %v6310
    %v6312 = vrot.slane %v6141, %v6311
    %6315 = vmatprep.subr.bf16.mxu0 %v6241
    %6316 = vmatpush1.bf16.msra.mxu0 %v6240
    %6317 = vmatprep.subr.bf16.mxu0 %v6243
    %6318 = vmatpush1.bf16.msra.mxu0 %v6242
    %6319 = vmatprep.subr.bf16.mxu0 %v6245
    %6320 = vmatpush1.bf16.msra.mxu0 %v6244
    %6321 = vmatprep.subr.bf16.mxu0 %v6247
    %6322 = vmatpush1.bf16.msra.mxu0 %v6246
    %6323 = vmatprep.subr.bf16.mxu0 %v6249
    %6324 = vmatpush1.bf16.msra.mxu0 %v6248
    %6325 = vmatprep.subr.bf16.mxu0 %v6251
    %6326 = vmatpush1.bf16.msra.mxu0 %v6250
    %6327 = vmatprep.subr.bf16.mxu0 %v6253
    %6328 = vmatpush1.bf16.msra.mxu0 %v6252
    %6329 = vmatprep.subr.bf16.mxu0 %v6255
    %6330 = vmatpush1.bf16.msra.mxu0 %v6254
    %6331 = vmatprep.subr.bf16.mxu0 %v6257
    %6332 = vmatpush1.bf16.msra.mxu0 %v6256
    %6333 = vmatprep.subr.bf16.mxu0 %v6259
    %6334 = vmatpush1.bf16.msra.mxu0 %v6258
    %6335 = vmatprep.subr.bf16.mxu0 %v6261
    %6336 = vmatpush1.bf16.msra.mxu0 %v6260
    %6337 = vmatprep.subr.bf16.mxu0 %v6263
    %6338 = vmatpush1.bf16.msra.mxu0 %v6262
    %6339 = vmatprep.subr.bf16.mxu0 %v6265
    %6340 = vmatpush1.bf16.msra.mxu0 %v6264
    %6341 = vmatprep.subr.bf16.mxu0 %v6267
    %6342 = vmatpush1.bf16.msra.mxu0 %v6266
    %6343 = vmatprep.subr.bf16.mxu0 %v6269
    %6344 = vmatpush1.bf16.msra.mxu0 %v6268
    %6345 = vmatprep.subr.bf16.mxu0 %v6271
    %6346 = vmatpush1.bf16.msra.mxu0 %v6270
    %6347 = vmatprep.mubr.bf16.mxu0 %v6143
    %6348 = vmatmul.mubr.bf16.gmra.mrb[0].mxu0 %v6142
    %v6349 = vpop.f32.mrb[0].mxu0
    %v6350 = vadd.f32 %v6308, %v6349
    %v6351 = vpop.f32.mrb[0].mxu0
    %v6352 = vadd.f32 %v6312, %v6351
    %v6353 = vpop.f32.mrb[0].mxu0
    %v6354 = vpop.f32.mrb[0].mxu0
    %6355 = vdwg.mxu0
    %v6356 = vmax.f32 %v6350, 0.0
    %v6357 = vmax.f32 %v6352, 0.0
    %s6358 = smul.addr %s5841, 4
    %s6359 = scalar_lea.vmem [#allocation26], %s6358
    %v6360 = vld [vmem:[%s6359] sm:$0xff]
    %v6361 = vld [vmem:[%s6359 + $0x8] sm:$0xff]
    %v6362 = vld [vmem:[%s6359 + $0x10] sm:$0xff]
    %v6363 = vld [vmem:[%s6359 + $0x18] sm:$0xff]
    %v6364 = vld [vmem:[%s6359 + $0x20] sm:$0xff]
    %v6365 = vld [vmem:[%s6359 + $0x28] sm:$0xff]
    %v6366 = vld [vmem:[%s6359 + $0x30] sm:$0xff]
    %v6367 = vld [vmem:[%s6359 + $0x38] sm:$0xff]
    %v6368 = vld [vmem:[%s6359 + $0x40] sm:$0xff]
    %v6369 = vld [vmem:[%s6359 + $0x48] sm:$0xff]
    %v6370 = vld [vmem:[%s6359 + $0x50] sm:$0xff]
    %v6371 = vld [vmem:[%s6359 + $0x58] sm:$0xff]
    %v6372 = vld [vmem:[%s6359 + $0x60] sm:$0xff]
    %v6373 = vld [vmem:[%s6359 + $0x68] sm:$0xff]
    %v6374 = vld [vmem:[%s6359 + $0x70] sm:$0xff]
    %v6375 = vld [vmem:[%s6359 + $0x78] sm:$0xff]
    %v6376 = vld [vmem:[%s6359 + $0x80] sm:$0xff]
    %v6377 = vld [vmem:[%s6359 + $0x88] sm:$0xff]
    %v6378 = vld [vmem:[%s6359 + $0x90] sm:$0xff]
    %v6379 = vld [vmem:[%s6359 + $0x98] sm:$0xff]
    %v6380 = vld [vmem:[%s6359 + $0xa0] sm:$0xff]
    %v6381 = vld [vmem:[%s6359 + $0xa8] sm:$0xff]
    %v6382 = vld [vmem:[%s6359 + $0xb0] sm:$0xff]
    %v6383 = vld [vmem:[%s6359 + $0xb8] sm:$0xff]
    %v6384 = vld [vmem:[%s6359 + $0xc0] sm:$0xff]
    %v6385 = vld [vmem:[%s6359 + $0xc8] sm:$0xff]
    %v6386 = vld [vmem:[%s6359 + $0xd0] sm:$0xff]
    %v6387 = vld [vmem:[%s6359 + $0xd8] sm:$0xff]
    %v6388 = vld [vmem:[%s6359 + $0xe0] sm:$0xff]
    %v6389 = vld [vmem:[%s6359 + $0xe8] sm:$0xff]
    %v6390 = vld [vmem:[%s6359 + $0xf0] sm:$0xff]
    %v6391 = vld [vmem:[%s6359 + $0xf8] sm:$0xff]
    %s6392 = scalar_lea.vmem [#allocation28], %s5876
    %v6393 = vld [vmem:[%s6392] sm:$0x3]
    %v6394 = vpack.c.bf16 %v6356, %v6356
    %v6395 = vpack.c.bf16 %v6357, %v6357
    %v6428 = vunpack.c.l.b16 %v6360
    %v6429 = vunpack.c.h.b16 %v6360
    %v6430 = vunpack.c.l.b16 %v6361
    %v6431 = vunpack.c.h.b16 %v6361
    %v6432 = vunpack.c.l.b16 %v6362
    %v6433 = vunpack.c.h.b16 %v6362
    %v6434 = vunpack.c.l.b16 %v6363
    %v6435 = vunpack.c.h.b16 %v6363
    %v6436 = vunpack.c.l.b16 %v6364
    %v6437 = vunpack.c.h.b16 %v6364
    %v6438 = vunpack.c.l.b16 %v6365
    %v6439 = vunpack.c.h.b16 %v6365
    %v6440 = vunpack.c.l.b16 %v6366
    %v6441 = vunpack.c.h.b16 %v6366
    %v6442 = vunpack.c.l.b16 %v6367
    %v6443 = vunpack.c.h.b16 %v6367
    %v6444 = vunpack.c.l.b16 %v6368
    %v6445 = vunpack.c.h.b16 %v6368
    %v6446 = vunpack.c.l.b16 %v6369
    %v6447 = vunpack.c.h.b16 %v6369
    %v6448 = vunpack.c.l.b16 %v6370
    %v6449 = vunpack.c.h.b16 %v6370
    %v6450 = vunpack.c.l.b16 %v6371
    %v6451 = vunpack.c.h.b16 %v6371
    %v6452 = vunpack.c.l.b16 %v6372
    %v6453 = vunpack.c.h.b16 %v6372
    %v6454 = vunpack.c.l.b16 %v6373
    %v6455 = vunpack.c.h.b16 %v6373
    %v6456 = vunpack.c.l.b16 %v6374
    %v6457 = vunpack.c.h.b16 %v6374
    %v6458 = vunpack.c.l.b16 %v6375
    %v6459 = vunpack.c.h.b16 %v6375
    %v6460 = vunpack.c.l.b16 %v6376
    %v6461 = vunpack.c.h.b16 %v6376
    %v6462 = vunpack.c.l.b16 %v6377
    %v6463 = vunpack.c.h.b16 %v6377
    %v6464 = vunpack.c.l.b16 %v6378
    %v6465 = vunpack.c.h.b16 %v6378
    %v6466 = vunpack.c.l.b16 %v6379
    %v6467 = vunpack.c.h.b16 %v6379
    %v6468 = vunpack.c.l.b16 %v6380
    %v6469 = vunpack.c.h.b16 %v6380
    %v6470 = vunpack.c.l.b16 %v6381
    %v6471 = vunpack.c.h.b16 %v6381
    %v6472 = vunpack.c.l.b16 %v6382
    %v6473 = vunpack.c.h.b16 %v6382
    %v6474 = vunpack.c.l.b16 %v6383
    %v6475 = vunpack.c.h.b16 %v6383
    %v6476 = vunpack.c.l.b16 %v6384
    %v6477 = vunpack.c.h.b16 %v6384
    %v6478 = vunpack.c.l.b16 %v6385
    %v6479 = vunpack.c.h.b16 %v6385
    %v6480 = vunpack.c.l.b16 %v6386
    %v6481 = vunpack.c.h.b16 %v6386
    %v6482 = vunpack.c.l.b16 %v6387
    %v6483 = vunpack.c.h.b16 %v6387
    %v6484 = vunpack.c.l.b16 %v6388
    %v6485 = vunpack.c.h.b16 %v6388
    %v6486 = vunpack.c.l.b16 %v6389
    %v6487 = vunpack.c.h.b16 %v6389
    %v6488 = vunpack.c.l.b16 %v6390
    %v6489 = vunpack.c.h.b16 %v6390
    %v6490 = vunpack.c.l.b16 %v6391
    %v6491 = vunpack.c.h.b16 %v6391
    %v6492 = vpack.c.b16 %v6430, %v6428
    %v6493 = vpack.c.b16 %v6431, %v6429
    %v6494 = vpack.c.b16 %v6434, %v6432
    %v6495 = vpack.c.b16 %v6435, %v6433
    %v6496 = vpack.c.b16 %v6438, %v6436
    %v6497 = vpack.c.b16 %v6439, %v6437
    %v6498 = vpack.c.b16 %v6442, %v6440
    %v6499 = vpack.c.b16 %v6443, %v6441
    %v6500 = vpack.c.b16 %v6446, %v6444
    %v6501 = vpack.c.b16 %v6447, %v6445
    %v6502 = vpack.c.b16 %v6450, %v6448
    %v6503 = vpack.c.b16 %v6451, %v6449
    %v6504 = vpack.c.b16 %v6454, %v6452
    %v6505 = vpack.c.b16 %v6455, %v6453
    %v6506 = vpack.c.b16 %v6458, %v6456
    %v6507 = vpack.c.b16 %v6459, %v6457
    %v6508 = vpack.c.b16 %v6462, %v6460
    %v6509 = vpack.c.b16 %v6463, %v6461
    %v6510 = vpack.c.b16 %v6466, %v6464
    %v6511 = vpack.c.b16 %v6467, %v6465
    %v6512 = vpack.c.b16 %v6470, %v6468
    %v6513 = vpack.c.b16 %v6471, %v6469
    %v6514 = vpack.c.b16 %v6474, %v6472
    %v6515 = vpack.c.b16 %v6475, %v6473
    %v6516 = vpack.c.b16 %v6478, %v6476
    %v6517 = vpack.c.b16 %v6479, %v6477
    %v6518 = vpack.c.b16 %v6482, %v6480
    %v6519 = vpack.c.b16 %v6483, %v6481
    %v6520 = vpack.c.b16 %v6486, %v6484
    %v6521 = vpack.c.b16 %v6487, %v6485
    %v6522 = vpack.c.b16 %v6490, %v6488
    %v6523 = vpack.c.b16 %v6491, %v6489
    %v6557 = vlaneseq
    %v6558 = vshrl.u32 %v6557, 7
    %v6559 = vsub.s32 0, %v6558
    %v6560 = vrot.slane %v6393, %v6559
    %v6561 = vlaneseq
    %v6562 = vshrl.u32 %v6561, 7
    %v6563 = vsub.s32 1, %v6562
    %v6564 = vrot.slane %v6393, %v6563
    %6567 = vmatprep.subr.bf16.mxu0 %v6493
    %6568 = vmatpush1.bf16.msra.mxu0 %v6492
    %6569 = vmatprep.subr.bf16.mxu0 %v6495
    %6570 = vmatpush1.bf16.msra.mxu0 %v6494
    %6571 = vmatprep.subr.bf16.mxu0 %v6497
    %6572 = vmatpush1.bf16.msra.mxu0 %v6496
    %6573 = vmatprep.subr.bf16.mxu0 %v6499
    %6574 = vmatpush1.bf16.msra.mxu0 %v6498
    %6575 = vmatprep.subr.bf16.mxu0 %v6501
    %6576 = vmatpush1.bf16.msra.mxu0 %v6500
    %6577 = vmatprep.subr.bf16.mxu0 %v6503
    %6578 = vmatpush1.bf16.msra.mxu0 %v6502
    %6579 = vmatprep.subr.bf16.mxu0 %v6505
    %6580 = vmatpush1.bf16.msra.mxu0 %v6504
    %6581 = vmatprep.subr.bf16.mxu0 %v6507
    %6582 = vmatpush1.bf16.msra.mxu0 %v6506
    %6583 = vmatprep.subr.bf16.mxu0 %v6509
    %6584 = vmatpush1.bf16.msra.mxu0 %v6508
    %6585 = vmatprep.subr.bf16.mxu0 %v6511
    %6586 = vmatpush1.bf16.msra.mxu0 %v6510
    %6587 = vmatprep.subr.bf16.mxu0 %v6513
    %6588 = vmatpush1.bf16.msra.mxu0 %v6512
    %6589 = vmatprep.subr.bf16.mxu0 %v6515
    %6590 = vmatpush1.bf16.msra.mxu0 %v6514
    %6591 = vmatprep.subr.bf16.mxu0 %v6517
    %6592 = vmatpush1.bf16.msra.mxu0 %v6516
    %6593 = vmatprep.subr.bf16.mxu0 %v6519
    %6594 = vmatpush1.bf16.msra.mxu0 %v6518
    %6595 = vmatprep.subr.bf16.mxu0 %v6521
    %6596 = vmatpush1.bf16.msra.mxu0 %v6520
    %6597 = vmatprep.subr.bf16.mxu0 %v6523
    %6598 = vmatpush1.bf16.msra.mxu0 %v6522
    %6599 = vmatprep.mubr.bf16.mxu0 %v6395
    %6600 = vmatmul.mubr.bf16.gmra.mrb[0].mxu0 %v6394
    %v6601 = vpop.f32.mrb[0].mxu0
    %v6602 = vadd.f32 %v6560, %v6601
    %v6603 = vpop.f32.mrb[0].mxu0
    %v6604 = vadd.f32 %v6564, %v6603
    %v6605 = vpop.f32.mrb[0].mxu0
    %v6606 = vpop.f32.mrb[0].mxu0
    %6607 = vdwg.mxu0
    %v6608 = vmax.f32 %v6602, 0.0
    %v6609 = vmax.f32 %v6604, 0.0
    %s6610 = smul.u32 %s5838, 32
    %s6611 = smul.addr %s6610, 4
    %s6612 = scalar_lea.vmem %s16, %s6611
    %v6613 = vld [vmem:[%s6612] sm:$0xf]
    %v6614 = vld [vmem:[%s6612 + $0x4] sm:$0xf]
    %v6615 = vld [vmem:[%s6612 + $0x8] sm:$0xf]
    %v6616 = vld [vmem:[%s6612 + $0xc] sm:$0xf]
    %v6617 = vld [vmem:[%s6612 + $0x10] sm:$0xf]
    %v6618 = vld [vmem:[%s6612 + $0x14] sm:$0xf]
    %v6619 = vld [vmem:[%s6612 + $0x18] sm:$0xf]
    %v6620 = vld [vmem:[%s6612 + $0x1c] sm:$0xf]
    %v6621 = vld [vmem:[%s6612 + $0x20] sm:$0xf]
    %v6622 = vld [vmem:[%s6612 + $0x24] sm:$0xf]
    %v6623 = vld [vmem:[%s6612 + $0x28] sm:$0xf]
    %v6624 = vld [vmem:[%s6612 + $0x2c] sm:$0xf]
    %v6625 = vld [vmem:[%s6612 + $0x30] sm:$0xf]
    %v6626 = vld [vmem:[%s6612 + $0x34] sm:$0xf]
    %v6627 = vld [vmem:[%s6612 + $0x38] sm:$0xf]
    %v6628 = vld [vmem:[%s6612 + $0x3c] sm:$0xf]
    %v6629 = vld [vmem:[%s6612 + $0x40] sm:$0xf]
    %v6630 = vld [vmem:[%s6612 + $0x44] sm:$0xf]
    %v6631 = vld [vmem:[%s6612 + $0x48] sm:$0xf]
    %v6632 = vld [vmem:[%s6612 + $0x4c] sm:$0xf]
    %v6633 = vld [vmem:[%s6612 + $0x50] sm:$0xf]
    %v6634 = vld [vmem:[%s6612 + $0x54] sm:$0xf]
    %v6635 = vld [vmem:[%s6612 + $0x58] sm:$0xf]
    %v6636 = vld [vmem:[%s6612 + $0x5c] sm:$0xf]
    %v6637 = vld [vmem:[%s6612 + $0x60] sm:$0xf]
    %v6638 = vld [vmem:[%s6612 + $0x64] sm:$0xf]
    %v6639 = vld [vmem:[%s6612 + $0x68] sm:$0xf]
    %v6640 = vld [vmem:[%s6612 + $0x6c] sm:$0xf]
    %v6641 = vld [vmem:[%s6612 + $0x70] sm:$0xf]
    %v6642 = vld [vmem:[%s6612 + $0x74] sm:$0xf]
    %v6643 = vld [vmem:[%s6612 + $0x78] sm:$0xf]
    %v6644 = vld [vmem:[%s6612 + $0x7c] sm:$0xf]
    %s6645 = scalar_lea.vmem [#allocation29], %s5838
    %v6646 = vld [vmem:[%s6645] sm:$0x1]
    %v6647 = vpack.c.bf16 %v6608, %v6608
    %v6648 = vpack.c.bf16 %v6609, %v6609
    %v6681 = vunpack.c.l.b16 %v6613
    %v6682 = vunpack.c.l.b16 %v6614
    %v6683 = vunpack.c.l.b16 %v6615
    %v6684 = vunpack.c.l.b16 %v6616
    %v6685 = vunpack.c.l.b16 %v6617
    %v6686 = vunpack.c.l.b16 %v6618
    %v6687 = vunpack.c.l.b16 %v6619
    %v6688 = vunpack.c.l.b16 %v6620
    %v6689 = vunpack.c.l.b16 %v6621
    %v6690 = vunpack.c.l.b16 %v6622
    %v6691 = vunpack.c.l.b16 %v6623
    %v6692 = vunpack.c.l.b16 %v6624
    %v6693 = vunpack.c.l.b16 %v6625
    %v6694 = vunpack.c.l.b16 %v6626
    %v6695 = vunpack.c.l.b16 %v6627
    %v6696 = vunpack.c.l.b16 %v6628
    %v6697 = vunpack.c.l.b16 %v6629
    %v6698 = vunpack.c.l.b16 %v6630
    %v6699 = vunpack.c.l.b16 %v6631
    %v6700 = vunpack.c.l.b16 %v6632
    %v6701 = vunpack.c.l.b16 %v6633
    %v6702 = vunpack.c.l.b16 %v6634
    %v6703 = vunpack.c.l.b16 %v6635
    %v6704 = vunpack.c.l.b16 %v6636
    %v6705 = vunpack.c.l.b16 %v6637
    %v6706 = vunpack.c.l.b16 %v6638
    %v6707 = vunpack.c.l.b16 %v6639
    %v6708 = vunpack.c.l.b16 %v6640
    %v6709 = vunpack.c.l.b16 %v6641
    %v6710 = vunpack.c.l.b16 %v6642
    %v6711 = vunpack.c.l.b16 %v6643
    %v6712 = vunpack.c.l.b16 %v6644
    %v6713 = vpack.c.b16 %v6682, %v6681
    %v6714 = vpack.c.b16 %v6684, %v6683
    %v6715 = vpack.c.b16 %v6686, %v6685
    %v6716 = vpack.c.b16 %v6688, %v6687
    %v6717 = vpack.c.b16 %v6690, %v6689
    %v6718 = vpack.c.b16 %v6692, %v6691
    %v6719 = vpack.c.b16 %v6694, %v6693
    %v6720 = vpack.c.b16 %v6696, %v6695
    %v6721 = vpack.c.b16 %v6698, %v6697
    %v6722 = vpack.c.b16 %v6700, %v6699
    %v6723 = vpack.c.b16 %v6702, %v6701
    %v6724 = vpack.c.b16 %v6704, %v6703
    %v6725 = vpack.c.b16 %v6706, %v6705
    %v6726 = vpack.c.b16 %v6708, %v6707
    %v6727 = vpack.c.b16 %v6710, %v6709
    %v6728 = vpack.c.b16 %v6712, %v6711
    %6745 = vmatprep.subr.bf16.mxu0 0
    %6746 = vmatpush1.bf16.msra.mxu0 %v6713
    %6747 = vmatprep.subr.bf16.mxu0 0
    %6748 = vmatpush1.bf16.msra.mxu0 %v6714
    %6749 = vmatprep.subr.bf16.mxu0 0
    %6750 = vmatpush1.bf16.msra.mxu0 %v6715
    %6751 = vmatprep.subr.bf16.mxu0 0
    %6752 = vmatpush1.bf16.msra.mxu0 %v6716
    %6753 = vmatprep.subr.bf16.mxu0 0
    %6754 = vmatpush1.bf16.msra.mxu0 %v6717
    %6755 = vmatprep.subr.bf16.mxu0 0
    %6756 = vmatpush1.bf16.msra.mxu0 %v6718
    %6757 = vmatprep.subr.bf16.mxu0 0
    %6758 = vmatpush1.bf16.msra.mxu0 %v6719
    %6759 = vmatprep.subr.bf16.mxu0 0
    %6760 = vmatpush1.bf16.msra.mxu0 %v6720
    %6761 = vmatprep.subr.bf16.mxu0 0
    %6762 = vmatpush1.bf16.msra.mxu0 %v6721
    %6763 = vmatprep.subr.bf16.mxu0 0
    %6764 = vmatpush1.bf16.msra.mxu0 %v6722
    %6765 = vmatprep.subr.bf16.mxu0 0
    %6766 = vmatpush1.bf16.msra.mxu0 %v6723
    %6767 = vmatprep.subr.bf16.mxu0 0
    %6768 = vmatpush1.bf16.msra.mxu0 %v6724
    %6769 = vmatprep.subr.bf16.mxu0 0
    %6770 = vmatpush1.bf16.msra.mxu0 %v6725
    %6771 = vmatprep.subr.bf16.mxu0 0
    %6772 = vmatpush1.bf16.msra.mxu0 %v6726
    %6773 = vmatprep.subr.bf16.mxu0 0
    %6774 = vmatpush1.bf16.msra.mxu0 %v6727
    %6775 = vmatprep.subr.bf16.mxu0 0
    %6776 = vmatpush1.bf16.msra.mxu0 %v6728
    %6777 = vmatprep.mubr.bf16.mxu0 %v6648
    %6778 = vmatmul.mubr.bf16.gmra.mrb[0].mxu0 %v6647
    %v6779 = vpop.f32.mrb[0].mxu0
    %v6780 = vadd.f32 %v6646, %v6779
    %v6781 = vpop.f32.mrb[0].mxu0
    %v6782 = vpop.f32.mrb[0].mxu0
    %v6783 = vpop.f32.mrb[0].mxu0
    %6784 = vdwg.mxu0
    %6785 = vst.msk [vmem:[#allocation31 + $0x5] sm:$0x1] %vm2039, %v6780
    %s6786 = sadd.s32 %s270, 6
    %s6787 = sld [smem:[#allocation4 + %s6786]]
    %s6788 = scalar_lea.vmem [#allocation2], 6
    %v6789 = vld [vmem:[%s6788] ss:$8 sm:$0x3]
    %s6790 = smul.u32 %s6787, 64
    %s6791 = smul.addr %s6790, 4
    %s6792 = scalar_lea.vmem [#allocation20], %s6791
    %v6793 = vld [vmem:[%s6792] sm:$0xff]
    %v6794 = vld [vmem:[%s6792 + $0x8] sm:$0xff]
    %v6795 = vld [vmem:[%s6792 + $0x10] sm:$0xff]
    %v6796 = vld [vmem:[%s6792 + $0x18] sm:$0xff]
    %v6797 = vld [vmem:[%s6792 + $0x20] sm:$0xff]
    %v6798 = vld [vmem:[%s6792 + $0x28] sm:$0xff]
    %v6799 = vld [vmem:[%s6792 + $0x30] sm:$0xff]
    %v6800 = vld [vmem:[%s6792 + $0x38] sm:$0xff]
    %v6801 = vld [vmem:[%s6792 + $0x40] sm:$0xff]
    %v6802 = vld [vmem:[%s6792 + $0x48] sm:$0xff]
    %v6803 = vld [vmem:[%s6792 + $0x50] sm:$0xff]
    %v6804 = vld [vmem:[%s6792 + $0x58] sm:$0xff]
    %v6805 = vld [vmem:[%s6792 + $0x60] sm:$0xff]
    %v6806 = vld [vmem:[%s6792 + $0x68] sm:$0xff]
    %v6807 = vld [vmem:[%s6792 + $0x70] sm:$0xff]
    %v6808 = vld [vmem:[%s6792 + $0x78] sm:$0xff]
    %v6809 = vld [vmem:[%s6792 + $0x80] sm:$0xff]
    %v6810 = vld [vmem:[%s6792 + $0x88] sm:$0xff]
    %v6811 = vld [vmem:[%s6792 + $0x90] sm:$0xff]
    %v6812 = vld [vmem:[%s6792 + $0x98] sm:$0xff]
    %v6813 = vld [vmem:[%s6792 + $0xa0] sm:$0xff]
    %v6814 = vld [vmem:[%s6792 + $0xa8] sm:$0xff]
    %v6815 = vld [vmem:[%s6792 + $0xb0] sm:$0xff]
    %v6816 = vld [vmem:[%s6792 + $0xb8] sm:$0xff]
    %v6817 = vld [vmem:[%s6792 + $0xc0] sm:$0xff]
    %v6818 = vld [vmem:[%s6792 + $0xc8] sm:$0xff]
    %v6819 = vld [vmem:[%s6792 + $0xd0] sm:$0xff]
    %v6820 = vld [vmem:[%s6792 + $0xd8] sm:$0xff]
    %v6821 = vld [vmem:[%s6792 + $0xe0] sm:$0xff]
    %v6822 = vld [vmem:[%s6792 + $0xe8] sm:$0xff]
    %v6823 = vld [vmem:[%s6792 + $0xf0] sm:$0xff]
    %v6824 = vld [vmem:[%s6792 + $0xf8] sm:$0xff]
    %s6825 = smul.u32 %s6787, 2
    %s6826 = scalar_lea.vmem [#allocation22], %s6825
    %v6827 = vld [vmem:[%s6826] sm:$0x3]
    %v6829 = vlaneseq
    %v6830 = vshrl.u32 %v6829, 7
    %v6831 = vsub.s32 0, %v6830
    %v6832 = vrot.slane %v6789, %v6831
    %v6833 = vlaneseq
    %v6834 = vshrl.u32 %v6833, 7
    %v6835 = vsub.s32 1, %v6834
    %v6836 = vrot.slane %v6789, %v6835
    %v6839 = vpack.c.bf16 %v6832, %v6832
    %v6840 = vpack.c.bf16 %v6836, %v6836
    %v6873 = vunpack.c.l.b16 %v6793
    %v6874 = vunpack.c.h.b16 %v6793
    %v6875 = vunpack.c.l.b16 %v6794
    %v6876 = vunpack.c.h.b16 %v6794
    %v6877 = vunpack.c.l.b16 %v6795
    %v6878 = vunpack.c.h.b16 %v6795
    %v6879 = vunpack.c.l.b16 %v6796
    %v6880 = vunpack.c.h.b16 %v6796
    %v6881 = vunpack.c.l.b16 %v6797
    %v6882 = vunpack.c.h.b16 %v6797
    %v6883 = vunpack.c.l.b16 %v6798
    %v6884 = vunpack.c.h.b16 %v6798
    %v6885 = vunpack.c.l.b16 %v6799
    %v6886 = vunpack.c.h.b16 %v6799
    %v6887 = vunpack.c.l.b16 %v6800
    %v6888 = vunpack.c.h.b16 %v6800
    %v6889 = vunpack.c.l.b16 %v6801
    %v6890 = vunpack.c.h.b16 %v6801
    %v6891 = vunpack.c.l.b16 %v6802
    %v6892 = vunpack.c.h.b16 %v6802
    %v6893 = vunpack.c.l.b16 %v6803
    %v6894 = vunpack.c.h.b16 %v6803
    %v6895 = vunpack.c.l.b16 %v6804
    %v6896 = vunpack.c.h.b16 %v6804
    %v6897 = vunpack.c.l.b16 %v6805
    %v6898 = vunpack.c.h.b16 %v6805
    %v6899 = vunpack.c.l.b16 %v6806
    %v6900 = vunpack.c.h.b16 %v6806
    %v6901 = vunpack.c.l.b16 %v6807
    %v6902 = vunpack.c.h.b16 %v6807
    %v6903 = vunpack.c.l.b16 %v6808
    %v6904 = vunpack.c.h.b16 %v6808
    %v6905 = vunpack.c.l.b16 %v6809
    %v6906 = vunpack.c.h.b16 %v6809
    %v6907 = vunpack.c.l.b16 %v6810
    %v6908 = vunpack.c.h.b16 %v6810
    %v6909 = vunpack.c.l.b16 %v6811
    %v6910 = vunpack.c.h.b16 %v6811
    %v6911 = vunpack.c.l.b16 %v6812
    %v6912 = vunpack.c.h.b16 %v6812
    %v6913 = vunpack.c.l.b16 %v6813
    %v6914 = vunpack.c.h.b16 %v6813
    %v6915 = vunpack.c.l.b16 %v6814
    %v6916 = vunpack.c.h.b16 %v6814
    %v6917 = vunpack.c.l.b16 %v6815
    %v6918 = vunpack.c.h.b16 %v6815
    %v6919 = vunpack.c.l.b16 %v6816
    %v6920 = vunpack.c.h.b16 %v6816
    %v6921 = vunpack.c.l.b16 %v6817
    %v6922 = vunpack.c.h.b16 %v6817
    %v6923 = vunpack.c.l.b16 %v6818
    %v6924 = vunpack.c.h.b16 %v6818
    %v6925 = vunpack.c.l.b16 %v6819
    %v6926 = vunpack.c.h.b16 %v6819
    %v6927 = vunpack.c.l.b16 %v6820
    %v6928 = vunpack.c.h.b16 %v6820
    %v6929 = vunpack.c.l.b16 %v6821
    %v6930 = vunpack.c.h.b16 %v6821
    %v6931 = vunpack.c.l.b16 %v6822
    %v6932 = vunpack.c.h.b16 %v6822
    %v6933 = vunpack.c.l.b16 %v6823
    %v6934 = vunpack.c.h.b16 %v6823
    %v6935 = vunpack.c.l.b16 %v6824
    %v6936 = vunpack.c.h.b16 %v6824
    %v6937 = vpack.c.b16 %v6875, %v6873
    %v6938 = vpack.c.b16 %v6876, %v6874
    %v6939 = vpack.c.b16 %v6879, %v6877
    %v6940 = vpack.c.b16 %v6880, %v6878
    %v6941 = vpack.c.b16 %v6883, %v6881
    %v6942 = vpack.c.b16 %v6884, %v6882
    %v6943 = vpack.c.b16 %v6887, %v6885
    %v6944 = vpack.c.b16 %v6888, %v6886
    %v6945 = vpack.c.b16 %v6891, %v6889
    %v6946 = vpack.c.b16 %v6892, %v6890
    %v6947 = vpack.c.b16 %v6895, %v6893
    %v6948 = vpack.c.b16 %v6896, %v6894
    %v6949 = vpack.c.b16 %v6899, %v6897
    %v6950 = vpack.c.b16 %v6900, %v6898
    %v6951 = vpack.c.b16 %v6903, %v6901
    %v6952 = vpack.c.b16 %v6904, %v6902
    %v6953 = vpack.c.b16 %v6907, %v6905
    %v6954 = vpack.c.b16 %v6908, %v6906
    %v6955 = vpack.c.b16 %v6911, %v6909
    %v6956 = vpack.c.b16 %v6912, %v6910
    %v6957 = vpack.c.b16 %v6915, %v6913
    %v6958 = vpack.c.b16 %v6916, %v6914
    %v6959 = vpack.c.b16 %v6919, %v6917
    %v6960 = vpack.c.b16 %v6920, %v6918
    %v6961 = vpack.c.b16 %v6923, %v6921
    %v6962 = vpack.c.b16 %v6924, %v6922
    %v6963 = vpack.c.b16 %v6927, %v6925
    %v6964 = vpack.c.b16 %v6928, %v6926
    %v6965 = vpack.c.b16 %v6931, %v6929
    %v6966 = vpack.c.b16 %v6932, %v6930
    %v6967 = vpack.c.b16 %v6935, %v6933
    %v6968 = vpack.c.b16 %v6936, %v6934
    %v7002 = vlaneseq
    %v7003 = vshrl.u32 %v7002, 7
    %v7004 = vsub.s32 0, %v7003
    %v7005 = vrot.slane %v6827, %v7004
    %v7006 = vlaneseq
    %v7007 = vshrl.u32 %v7006, 7
    %v7008 = vsub.s32 1, %v7007
    %v7009 = vrot.slane %v6827, %v7008
    %7012 = vmatprep.subr.bf16.mxu0 %v6938
    %7013 = vmatpush1.bf16.msra.mxu0 %v6937
    %7014 = vmatprep.subr.bf16.mxu0 %v6940
    %7015 = vmatpush1.bf16.msra.mxu0 %v6939
    %7016 = vmatprep.subr.bf16.mxu0 %v6942
    %7017 = vmatpush1.bf16.msra.mxu0 %v6941
    %7018 = vmatprep.subr.bf16.mxu0 %v6944
    %7019 = vmatpush1.bf16.msra.mxu0 %v6943
    %7020 = vmatprep.subr.bf16.mxu0 %v6946
    %7021 = vmatpush1.bf16.msra.mxu0 %v6945
    %7022 = vmatprep.subr.bf16.mxu0 %v6948
    %7023 = vmatpush1.bf16.msra.mxu0 %v6947
    %7024 = vmatprep.subr.bf16.mxu0 %v6950
    %7025 = vmatpush1.bf16.msra.mxu0 %v6949
    %7026 = vmatprep.subr.bf16.mxu0 %v6952
    %7027 = vmatpush1.bf16.msra.mxu0 %v6951
    %7028 = vmatprep.subr.bf16.mxu0 %v6954
    %7029 = vmatpush1.bf16.msra.mxu0 %v6953
    %7030 = vmatprep.subr.bf16.mxu0 %v6956
    %7031 = vmatpush1.bf16.msra.mxu0 %v6955
    %7032 = vmatprep.subr.bf16.mxu0 %v6958
    %7033 = vmatpush1.bf16.msra.mxu0 %v6957
    %7034 = vmatprep.subr.bf16.mxu0 %v6960
    %7035 = vmatpush1.bf16.msra.mxu0 %v6959
    %7036 = vmatprep.subr.bf16.mxu0 %v6962
    %7037 = vmatpush1.bf16.msra.mxu0 %v6961
    %7038 = vmatprep.subr.bf16.mxu0 %v6964
    %7039 = vmatpush1.bf16.msra.mxu0 %v6963
    %7040 = vmatprep.subr.bf16.mxu0 %v6966
    %7041 = vmatpush1.bf16.msra.mxu0 %v6965
    %7042 = vmatprep.subr.bf16.mxu0 %v6968
    %7043 = vmatpush1.bf16.msra.mxu0 %v6967
    %7044 = vmatprep.mubr.bf16.mxu0 %v6840
    %7045 = vmatmul.mubr.bf16.gmra.mrb[0].mxu0 %v6839
    %v7046 = vpop.f32.mrb[0].mxu0
    %v7047 = vadd.f32 %v7005, %v7046
    %v7048 = vpop.f32.mrb[0].mxu0
    %v7049 = vadd.f32 %v7009, %v7048
    %v7050 = vpop.f32.mrb[0].mxu0
    %v7051 = vpop.f32.mrb[0].mxu0
    %7052 = vdwg.mxu0
    %v7053 = vmax.f32 %v7047, 0.0
    %v7054 = vmax.f32 %v7049, 0.0
    %s7055 = smul.addr %s6790, 4
    %s7056 = scalar_lea.vmem [#allocation23], %s7055
    %v7057 = vld [vmem:[%s7056] sm:$0xff]
    %v7058 = vld [vmem:[%s7056 + $0x8] sm:$0xff]
    %v7059 = vld [vmem:[%s7056 + $0x10] sm:$0xff]
    %v7060 = vld [vmem:[%s7056 + $0x18] sm:$0xff]
    %v7061 = vld [vmem:[%s7056 + $0x20] sm:$0xff]
    %v7062 = vld [vmem:[%s7056 + $0x28] sm:$0xff]
    %v7063 = vld [vmem:[%s7056 + $0x30] sm:$0xff]
    %v7064 = vld [vmem:[%s7056 + $0x38] sm:$0xff]
    %v7065 = vld [vmem:[%s7056 + $0x40] sm:$0xff]
    %v7066 = vld [vmem:[%s7056 + $0x48] sm:$0xff]
    %v7067 = vld [vmem:[%s7056 + $0x50] sm:$0xff]
    %v7068 = vld [vmem:[%s7056 + $0x58] sm:$0xff]
    %v7069 = vld [vmem:[%s7056 + $0x60] sm:$0xff]
    %v7070 = vld [vmem:[%s7056 + $0x68] sm:$0xff]
    %v7071 = vld [vmem:[%s7056 + $0x70] sm:$0xff]
    %v7072 = vld [vmem:[%s7056 + $0x78] sm:$0xff]
    %v7073 = vld [vmem:[%s7056 + $0x80] sm:$0xff]
    %v7074 = vld [vmem:[%s7056 + $0x88] sm:$0xff]
    %v7075 = vld [vmem:[%s7056 + $0x90] sm:$0xff]
    %v7076 = vld [vmem:[%s7056 + $0x98] sm:$0xff]
    %v7077 = vld [vmem:[%s7056 + $0xa0] sm:$0xff]
    %v7078 = vld [vmem:[%s7056 + $0xa8] sm:$0xff]
    %v7079 = vld [vmem:[%s7056 + $0xb0] sm:$0xff]
    %v7080 = vld [vmem:[%s7056 + $0xb8] sm:$0xff]
    %v7081 = vld [vmem:[%s7056 + $0xc0] sm:$0xff]
    %v7082 = vld [vmem:[%s7056 + $0xc8] sm:$0xff]
    %v7083 = vld [vmem:[%s7056 + $0xd0] sm:$0xff]
    %v7084 = vld [vmem:[%s7056 + $0xd8] sm:$0xff]
    %v7085 = vld [vmem:[%s7056 + $0xe0] sm:$0xff]
    %v7086 = vld [vmem:[%s7056 + $0xe8] sm:$0xff]
    %v7087 = vld [vmem:[%s7056 + $0xf0] sm:$0xff]
    %v7088 = vld [vmem:[%s7056 + $0xf8] sm:$0xff]
    %s7089 = scalar_lea.vmem [#allocation25], %s6825
    %v7090 = vld [vmem:[%s7089] sm:$0x3]
    %v7091 = vpack.c.bf16 %v7053, %v7053
    %v7092 = vpack.c.bf16 %v7054, %v7054
    %v7125 = vunpack.c.l.b16 %v7057
    %v7126 = vunpack.c.h.b16 %v7057
    %v7127 = vunpack.c.l.b16 %v7058
    %v7128 = vunpack.c.h.b16 %v7058
    %v7129 = vunpack.c.l.b16 %v7059
    %v7130 = vunpack.c.h.b16 %v7059
    %v7131 = vunpack.c.l.b16 %v7060
    %v7132 = vunpack.c.h.b16 %v7060
    %v7133 = vunpack.c.l.b16 %v7061
    %v7134 = vunpack.c.h.b16 %v7061
    %v7135 = vunpack.c.l.b16 %v7062
    %v7136 = vunpack.c.h.b16 %v7062
    %v7137 = vunpack.c.l.b16 %v7063
    %v7138 = vunpack.c.h.b16 %v7063
    %v7139 = vunpack.c.l.b16 %v7064
    %v7140 = vunpack.c.h.b16 %v7064
    %v7141 = vunpack.c.l.b16 %v7065
    %v7142 = vunpack.c.h.b16 %v7065
    %v7143 = vunpack.c.l.b16 %v7066
    %v7144 = vunpack.c.h.b16 %v7066
    %v7145 = vunpack.c.l.b16 %v7067
    %v7146 = vunpack.c.h.b16 %v7067
    %v7147 = vunpack.c.l.b16 %v7068
    %v7148 = vunpack.c.h.b16 %v7068
    %v7149 = vunpack.c.l.b16 %v7069
    %v7150 = vunpack.c.h.b16 %v7069
    %v7151 = vunpack.c.l.b16 %v7070
    %v7152 = vunpack.c.h.b16 %v7070
    %v7153 = vunpack.c.l.b16 %v7071
    %v7154 = vunpack.c.h.b16 %v7071
    %v7155 = vunpack.c.l.b16 %v7072
    %v7156 = vunpack.c.h.b16 %v7072
    %v7157 = vunpack.c.l.b16 %v7073
    %v7158 = vunpack.c.h.b16 %v7073
    %v7159 = vunpack.c.l.b16 %v7074
    %v7160 = vunpack.c.h.b16 %v7074
    %v7161 = vunpack.c.l.b16 %v7075
    %v7162 = vunpack.c.h.b16 %v7075
    %v7163 = vunpack.c.l.b16 %v7076
    %v7164 = vunpack.c.h.b16 %v7076
    %v7165 = vunpack.c.l.b16 %v7077
    %v7166 = vunpack.c.h.b16 %v7077
    %v7167 = vunpack.c.l.b16 %v7078
    %v7168 = vunpack.c.h.b16 %v7078
    %v7169 = vunpack.c.l.b16 %v7079
    %v7170 = vunpack.c.h.b16 %v7079
    %v7171 = vunpack.c.l.b16 %v7080
    %v7172 = vunpack.c.h.b16 %v7080
    %v7173 = vunpack.c.l.b16 %v7081
    %v7174 = vunpack.c.h.b16 %v7081
    %v7175 = vunpack.c.l.b16 %v7082
    %v7176 = vunpack.c.h.b16 %v7082
    %v7177 = vunpack.c.l.b16 %v7083
    %v7178 = vunpack.c.h.b16 %v7083
    %v7179 = vunpack.c.l.b16 %v7084
    %v7180 = vunpack.c.h.b16 %v7084
    %v7181 = vunpack.c.l.b16 %v7085
    %v7182 = vunpack.c.h.b16 %v7085
    %v7183 = vunpack.c.l.b16 %v7086
    %v7184 = vunpack.c.h.b16 %v7086
    %v7185 = vunpack.c.l.b16 %v7087
    %v7186 = vunpack.c.h.b16 %v7087
    %v7187 = vunpack.c.l.b16 %v7088
    %v7188 = vunpack.c.h.b16 %v7088
    %v7189 = vpack.c.b16 %v7127, %v7125
    %v7190 = vpack.c.b16 %v7128, %v7126
    %v7191 = vpack.c.b16 %v7131, %v7129
    %v7192 = vpack.c.b16 %v7132, %v7130
    %v7193 = vpack.c.b16 %v7135, %v7133
    %v7194 = vpack.c.b16 %v7136, %v7134
    %v7195 = vpack.c.b16 %v7139, %v7137
    %v7196 = vpack.c.b16 %v7140, %v7138
    %v7197 = vpack.c.b16 %v7143, %v7141
    %v7198 = vpack.c.b16 %v7144, %v7142
    %v7199 = vpack.c.b16 %v7147, %v7145
    %v7200 = vpack.c.b16 %v7148, %v7146
    %v7201 = vpack.c.b16 %v7151, %v7149
    %v7202 = vpack.c.b16 %v7152, %v7150
    %v7203 = vpack.c.b16 %v7155, %v7153
    %v7204 = vpack.c.b16 %v7156, %v7154
    %v7205 = vpack.c.b16 %v7159, %v7157
    %v7206 = vpack.c.b16 %v7160, %v7158
    %v7207 = vpack.c.b16 %v7163, %v7161
    %v7208 = vpack.c.b16 %v7164, %v7162
    %v7209 = vpack.c.b16 %v7167, %v7165
    %v7210 = vpack.c.b16 %v7168, %v7166
    %v7211 = vpack.c.b16 %v7171, %v7169
    %v7212 = vpack.c.b16 %v7172, %v7170
    %v7213 = vpack.c.b16 %v7175, %v7173
    %v7214 = vpack.c.b16 %v7176, %v7174
    %v7215 = vpack.c.b16 %v7179, %v7177
    %v7216 = vpack.c.b16 %v7180, %v7178
    %v7217 = vpack.c.b16 %v7183, %v7181
    %v7218 = vpack.c.b16 %v7184, %v7182
    %v7219 = vpack.c.b16 %v7187, %v7185
    %v7220 = vpack.c.b16 %v7188, %v7186
    %v7254 = vlaneseq
    %v7255 = vshrl.u32 %v7254, 7
    %v7256 = vsub.s32 0, %v7255
    %v7257 = vrot.slane %v7090, %v7256
    %v7258 = vlaneseq
    %v7259 = vshrl.u32 %v7258, 7
    %v7260 = vsub.s32 1, %v7259
    %v7261 = vrot.slane %v7090, %v7260
    %7264 = vmatprep.subr.bf16.mxu0 %v7190
    %7265 = vmatpush1.bf16.msra.mxu0 %v7189
    %7266 = vmatprep.subr.bf16.mxu0 %v7192
    %7267 = vmatpush1.bf16.msra.mxu0 %v7191
    %7268 = vmatprep.subr.bf16.mxu0 %v7194
    %7269 = vmatpush1.bf16.msra.mxu0 %v7193
    %7270 = vmatprep.subr.bf16.mxu0 %v7196
    %7271 = vmatpush1.bf16.msra.mxu0 %v7195
    %7272 = vmatprep.subr.bf16.mxu0 %v7198
    %7273 = vmatpush1.bf16.msra.mxu0 %v7197
    %7274 = vmatprep.subr.bf16.mxu0 %v7200
    %7275 = vmatpush1.bf16.msra.mxu0 %v7199
    %7276 = vmatprep.subr.bf16.mxu0 %v7202
    %7277 = vmatpush1.bf16.msra.mxu0 %v7201
    %7278 = vmatprep.subr.bf16.mxu0 %v7204
    %7279 = vmatpush1.bf16.msra.mxu0 %v7203
    %7280 = vmatprep.subr.bf16.mxu0 %v7206
    %7281 = vmatpush1.bf16.msra.mxu0 %v7205
    %7282 = vmatprep.subr.bf16.mxu0 %v7208
    %7283 = vmatpush1.bf16.msra.mxu0 %v7207
    %7284 = vmatprep.subr.bf16.mxu0 %v7210
    %7285 = vmatpush1.bf16.msra.mxu0 %v7209
    %7286 = vmatprep.subr.bf16.mxu0 %v7212
    %7287 = vmatpush1.bf16.msra.mxu0 %v7211
    %7288 = vmatprep.subr.bf16.mxu0 %v7214
    %7289 = vmatpush1.bf16.msra.mxu0 %v7213
    %7290 = vmatprep.subr.bf16.mxu0 %v7216
    %7291 = vmatpush1.bf16.msra.mxu0 %v7215
    %7292 = vmatprep.subr.bf16.mxu0 %v7218
    %7293 = vmatpush1.bf16.msra.mxu0 %v7217
    %7294 = vmatprep.subr.bf16.mxu0 %v7220
    %7295 = vmatpush1.bf16.msra.mxu0 %v7219
    %7296 = vmatprep.mubr.bf16.mxu0 %v7092
    %7297 = vmatmul.mubr.bf16.gmra.mrb[0].mxu0 %v7091
    %v7298 = vpop.f32.mrb[0].mxu0
    %v7299 = vadd.f32 %v7257, %v7298
    %v7300 = vpop.f32.mrb[0].mxu0
    %v7301 = vadd.f32 %v7261, %v7300
    %v7302 = vpop.f32.mrb[0].mxu0
    %v7303 = vpop.f32.mrb[0].mxu0
    %7304 = vdwg.mxu0
    %v7305 = vmax.f32 %v7299, 0.0
    %v7306 = vmax.f32 %v7301, 0.0
    %s7307 = smul.addr %s6790, 4
    %s7308 = scalar_lea.vmem [#allocation26], %s7307
    %v7309 = vld [vmem:[%s7308] sm:$0xff]
    %v7310 = vld [vmem:[%s7308 + $0x8] sm:$0xff]
    %v7311 = vld [vmem:[%s7308 + $0x10] sm:$0xff]
    %v7312 = vld [vmem:[%s7308 + $0x18] sm:$0xff]
    %v7313 = vld [vmem:[%s7308 + $0x20] sm:$0xff]
    %v7314 = vld [vmem:[%s7308 + $0x28] sm:$0xff]
    %v7315 = vld [vmem:[%s7308 + $0x30] sm:$0xff]
    %v7316 = vld [vmem:[%s7308 + $0x38] sm:$0xff]
    %v7317 = vld [vmem:[%s7308 + $0x40] sm:$0xff]
    %v7318 = vld [vmem:[%s7308 + $0x48] sm:$0xff]
    %v7319 = vld [vmem:[%s7308 + $0x50] sm:$0xff]
    %v7320 = vld [vmem:[%s7308 + $0x58] sm:$0xff]
    %v7321 = vld [vmem:[%s7308 + $0x60] sm:$0xff]
    %v7322 = vld [vmem:[%s7308 + $0x68] sm:$0xff]
    %v7323 = vld [vmem:[%s7308 + $0x70] sm:$0xff]
    %v7324 = vld [vmem:[%s7308 + $0x78] sm:$0xff]
    %v7325 = vld [vmem:[%s7308 + $0x80] sm:$0xff]
    %v7326 = vld [vmem:[%s7308 + $0x88] sm:$0xff]
    %v7327 = vld [vmem:[%s7308 + $0x90] sm:$0xff]
    %v7328 = vld [vmem:[%s7308 + $0x98] sm:$0xff]
    %v7329 = vld [vmem:[%s7308 + $0xa0] sm:$0xff]
    %v7330 = vld [vmem:[%s7308 + $0xa8] sm:$0xff]
    %v7331 = vld [vmem:[%s7308 + $0xb0] sm:$0xff]
    %v7332 = vld [vmem:[%s7308 + $0xb8] sm:$0xff]
    %v7333 = vld [vmem:[%s7308 + $0xc0] sm:$0xff]
    %v7334 = vld [vmem:[%s7308 + $0xc8] sm:$0xff]
    %v7335 = vld [vmem:[%s7308 + $0xd0] sm:$0xff]
    %v7336 = vld [vmem:[%s7308 + $0xd8] sm:$0xff]
    %v7337 = vld [vmem:[%s7308 + $0xe0] sm:$0xff]
    %v7338 = vld [vmem:[%s7308 + $0xe8] sm:$0xff]
    %v7339 = vld [vmem:[%s7308 + $0xf0] sm:$0xff]
    %v7340 = vld [vmem:[%s7308 + $0xf8] sm:$0xff]
    %s7341 = scalar_lea.vmem [#allocation28], %s6825
    %v7342 = vld [vmem:[%s7341] sm:$0x3]
    %v7343 = vpack.c.bf16 %v7305, %v7305
    %v7344 = vpack.c.bf16 %v7306, %v7306
    %v7377 = vunpack.c.l.b16 %v7309
    %v7378 = vunpack.c.h.b16 %v7309
    %v7379 = vunpack.c.l.b16 %v7310
    %v7380 = vunpack.c.h.b16 %v7310
    %v7381 = vunpack.c.l.b16 %v7311
    %v7382 = vunpack.c.h.b16 %v7311
    %v7383 = vunpack.c.l.b16 %v7312
    %v7384 = vunpack.c.h.b16 %v7312
    %v7385 = vunpack.c.l.b16 %v7313
    %v7386 = vunpack.c.h.b16 %v7313
    %v7387 = vunpack.c.l.b16 %v7314
    %v7388 = vunpack.c.h.b16 %v7314
    %v7389 = vunpack.c.l.b16 %v7315
    %v7390 = vunpack.c.h.b16 %v7315
    %v7391 = vunpack.c.l.b16 %v7316
    %v7392 = vunpack.c.h.b16 %v7316
    %v7393 = vunpack.c.l.b16 %v7317
    %v7394 = vunpack.c.h.b16 %v7317
    %v7395 = vunpack.c.l.b16 %v7318
    %v7396 = vunpack.c.h.b16 %v7318
    %v7397 = vunpack.c.l.b16 %v7319
    %v7398 = vunpack.c.h.b16 %v7319
    %v7399 = vunpack.c.l.b16 %v7320
    %v7400 = vunpack.c.h.b16 %v7320
    %v7401 = vunpack.c.l.b16 %v7321
    %v7402 = vunpack.c.h.b16 %v7321
    %v7403 = vunpack.c.l.b16 %v7322
    %v7404 = vunpack.c.h.b16 %v7322
    %v7405 = vunpack.c.l.b16 %v7323
    %v7406 = vunpack.c.h.b16 %v7323
    %v7407 = vunpack.c.l.b16 %v7324
    %v7408 = vunpack.c.h.b16 %v7324
    %v7409 = vunpack.c.l.b16 %v7325
    %v7410 = vunpack.c.h.b16 %v7325
    %v7411 = vunpack.c.l.b16 %v7326
    %v7412 = vunpack.c.h.b16 %v7326
    %v7413 = vunpack.c.l.b16 %v7327
    %v7414 = vunpack.c.h.b16 %v7327
    %v7415 = vunpack.c.l.b16 %v7328
    %v7416 = vunpack.c.h.b16 %v7328
    %v7417 = vunpack.c.l.b16 %v7329
    %v7418 = vunpack.c.h.b16 %v7329
    %v7419 = vunpack.c.l.b16 %v7330
    %v7420 = vunpack.c.h.b16 %v7330
    %v7421 = vunpack.c.l.b16 %v7331
    %v7422 = vunpack.c.h.b16 %v7331
    %v7423 = vunpack.c.l.b16 %v7332
    %v7424 = vunpack.c.h.b16 %v7332
    %v7425 = vunpack.c.l.b16 %v7333
    %v7426 = vunpack.c.h.b16 %v7333
    %v7427 = vunpack.c.l.b16 %v7334
    %v7428 = vunpack.c.h.b16 %v7334
    %v7429 = vunpack.c.l.b16 %v7335
    %v7430 = vunpack.c.h.b16 %v7335
    %v7431 = vunpack.c.l.b16 %v7336
    %v7432 = vunpack.c.h.b16 %v7336
    %v7433 = vunpack.c.l.b16 %v7337
    %v7434 = vunpack.c.h.b16 %v7337
    %v7435 = vunpack.c.l.b16 %v7338
    %v7436 = vunpack.c.h.b16 %v7338
    %v7437 = vunpack.c.l.b16 %v7339
    %v7438 = vunpack.c.h.b16 %v7339
    %v7439 = vunpack.c.l.b16 %v7340
    %v7440 = vunpack.c.h.b16 %v7340
    %v7441 = vpack.c.b16 %v7379, %v7377
    %v7442 = vpack.c.b16 %v7380, %v7378
    %v7443 = vpack.c.b16 %v7383, %v7381
    %v7444 = vpack.c.b16 %v7384, %v7382
    %v7445 = vpack.c.b16 %v7387, %v7385
    %v7446 = vpack.c.b16 %v7388, %v7386
    %v7447 = vpack.c.b16 %v7391, %v7389
    %v7448 = vpack.c.b16 %v7392, %v7390
    %v7449 = vpack.c.b16 %v7395, %v7393
    %v7450 = vpack.c.b16 %v7396, %v7394
    %v7451 = vpack.c.b16 %v7399, %v7397
    %v7452 = vpack.c.b16 %v7400, %v7398
    %v7453 = vpack.c.b16 %v7403, %v7401
    %v7454 = vpack.c.b16 %v7404, %v7402
    %v7455 = vpack.c.b16 %v7407, %v7405
    %v7456 = vpack.c.b16 %v7408, %v7406
    %v7457 = vpack.c.b16 %v7411, %v7409
    %v7458 = vpack.c.b16 %v7412, %v7410
    %v7459 = vpack.c.b16 %v7415, %v7413
    %v7460 = vpack.c.b16 %v7416, %v7414
    %v7461 = vpack.c.b16 %v7419, %v7417
    %v7462 = vpack.c.b16 %v7420, %v7418
    %v7463 = vpack.c.b16 %v7423, %v7421
    %v7464 = vpack.c.b16 %v7424, %v7422
    %v7465 = vpack.c.b16 %v7427, %v7425
    %v7466 = vpack.c.b16 %v7428, %v7426
    %v7467 = vpack.c.b16 %v7431, %v7429
    %v7468 = vpack.c.b16 %v7432, %v7430
    %v7469 = vpack.c.b16 %v7435, %v7433
    %v7470 = vpack.c.b16 %v7436, %v7434
    %v7471 = vpack.c.b16 %v7439, %v7437
    %v7472 = vpack.c.b16 %v7440, %v7438
    %v7506 = vlaneseq
    %v7507 = vshrl.u32 %v7506, 7
    %v7508 = vsub.s32 0, %v7507
    %v7509 = vrot.slane %v7342, %v7508
    %v7510 = vlaneseq
    %v7511 = vshrl.u32 %v7510, 7
    %v7512 = vsub.s32 1, %v7511
    %v7513 = vrot.slane %v7342, %v7512
    %7516 = vmatprep.subr.bf16.mxu0 %v7442
    %7517 = vmatpush1.bf16.msra.mxu0 %v7441
    %7518 = vmatprep.subr.bf16.mxu0 %v7444
    %7519 = vmatpush1.bf16.msra.mxu0 %v7443
    %7520 = vmatprep.subr.bf16.mxu0 %v7446
    %7521 = vmatpush1.bf16.msra.mxu0 %v7445
    %7522 = vmatprep.subr.bf16.mxu0 %v7448
    %7523 = vmatpush1.bf16.msra.mxu0 %v7447
    %7524 = vmatprep.subr.bf16.mxu0 %v7450
    %7525 = vmatpush1.bf16.msra.mxu0 %v7449
    %7526 = vmatprep.subr.bf16.mxu0 %v7452
    %7527 = vmatpush1.bf16.msra.mxu0 %v7451
    %7528 = vmatprep.subr.bf16.mxu0 %v7454
    %7529 = vmatpush1.bf16.msra.mxu0 %v7453
    %7530 = vmatprep.subr.bf16.mxu0 %v7456
    %7531 = vmatpush1.bf16.msra.mxu0 %v7455
    %7532 = vmatprep.subr.bf16.mxu0 %v7458
    %7533 = vmatpush1.bf16.msra.mxu0 %v7457
    %7534 = vmatprep.subr.bf16.mxu0 %v7460
    %7535 = vmatpush1.bf16.msra.mxu0 %v7459
    %7536 = vmatprep.subr.bf16.mxu0 %v7462
    %7537 = vmatpush1.bf16.msra.mxu0 %v7461
    %7538 = vmatprep.subr.bf16.mxu0 %v7464
    %7539 = vmatpush1.bf16.msra.mxu0 %v7463
    %7540 = vmatprep.subr.bf16.mxu0 %v7466
    %7541 = vmatpush1.bf16.msra.mxu0 %v7465
    %7542 = vmatprep.subr.bf16.mxu0 %v7468
    %7543 = vmatpush1.bf16.msra.mxu0 %v7467
    %7544 = vmatprep.subr.bf16.mxu0 %v7470
    %7545 = vmatpush1.bf16.msra.mxu0 %v7469
    %7546 = vmatprep.subr.bf16.mxu0 %v7472
    %7547 = vmatpush1.bf16.msra.mxu0 %v7471
    %7548 = vmatprep.mubr.bf16.mxu0 %v7344
    %7549 = vmatmul.mubr.bf16.gmra.mrb[0].mxu0 %v7343
    %v7550 = vpop.f32.mrb[0].mxu0
    %v7551 = vadd.f32 %v7509, %v7550
    %v7552 = vpop.f32.mrb[0].mxu0
    %v7553 = vadd.f32 %v7513, %v7552
    %v7554 = vpop.f32.mrb[0].mxu0
    %v7555 = vpop.f32.mrb[0].mxu0
    %7556 = vdwg.mxu0
    %v7557 = vmax.f32 %v7551, 0.0
    %v7558 = vmax.f32 %v7553, 0.0
    %s7559 = smul.u32 %s6787, 32
    %s7560 = smul.addr %s7559, 4
    %s7561 = scalar_lea.vmem %s16, %s7560
    %v7562 = vld [vmem:[%s7561] sm:$0xf]
    %v7563 = vld [vmem:[%s7561 + $0x4] sm:$0xf]
    %v7564 = vld [vmem:[%s7561 + $0x8] sm:$0xf]
    %v7565 = vld [vmem:[%s7561 + $0xc] sm:$0xf]
    %v7566 = vld [vmem:[%s7561 + $0x10] sm:$0xf]
    %v7567 = vld [vmem:[%s7561 + $0x14] sm:$0xf]
    %v7568 = vld [vmem:[%s7561 + $0x18] sm:$0xf]
    %v7569 = vld [vmem:[%s7561 + $0x1c] sm:$0xf]
    %v7570 = vld [vmem:[%s7561 + $0x20] sm:$0xf]
    %v7571 = vld [vmem:[%s7561 + $0x24] sm:$0xf]
    %v7572 = vld [vmem:[%s7561 + $0x28] sm:$0xf]
    %v7573 = vld [vmem:[%s7561 + $0x2c] sm:$0xf]
    %v7574 = vld [vmem:[%s7561 + $0x30] sm:$0xf]
    %v7575 = vld [vmem:[%s7561 + $0x34] sm:$0xf]
    %v7576 = vld [vmem:[%s7561 + $0x38] sm:$0xf]
    %v7577 = vld [vmem:[%s7561 + $0x3c] sm:$0xf]
    %v7578 = vld [vmem:[%s7561 + $0x40] sm:$0xf]
    %v7579 = vld [vmem:[%s7561 + $0x44] sm:$0xf]
    %v7580 = vld [vmem:[%s7561 + $0x48] sm:$0xf]
    %v7581 = vld [vmem:[%s7561 + $0x4c] sm:$0xf]
    %v7582 = vld [vmem:[%s7561 + $0x50] sm:$0xf]
    %v7583 = vld [vmem:[%s7561 + $0x54] sm:$0xf]
    %v7584 = vld [vmem:[%s7561 + $0x58] sm:$0xf]
    %v7585 = vld [vmem:[%s7561 + $0x5c] sm:$0xf]
    %v7586 = vld [vmem:[%s7561 + $0x60] sm:$0xf]
    %v7587 = vld [vmem:[%s7561 + $0x64] sm:$0xf]
    %v7588 = vld [vmem:[%s7561 + $0x68] sm:$0xf]
    %v7589 = vld [vmem:[%s7561 + $0x6c] sm:$0xf]
    %v7590 = vld [vmem:[%s7561 + $0x70] sm:$0xf]
    %v7591 = vld [vmem:[%s7561 + $0x74] sm:$0xf]
    %v7592 = vld [vmem:[%s7561 + $0x78] sm:$0xf]
    %v7593 = vld [vmem:[%s7561 + $0x7c] sm:$0xf]
    %s7594 = scalar_lea.vmem [#allocation29], %s6787
    %v7595 = vld [vmem:[%s7594] sm:$0x1]
    %v7596 = vpack.c.bf16 %v7557, %v7557
    %v7597 = vpack.c.bf16 %v7558, %v7558
    %v7630 = vunpack.c.l.b16 %v7562
    %v7631 = vunpack.c.l.b16 %v7563
    %v7632 = vunpack.c.l.b16 %v7564
    %v7633 = vunpack.c.l.b16 %v7565
    %v7634 = vunpack.c.l.b16 %v7566
    %v7635 = vunpack.c.l.b16 %v7567
    %v7636 = vunpack.c.l.b16 %v7568
    %v7637 = vunpack.c.l.b16 %v7569
    %v7638 = vunpack.c.l.b16 %v7570
    %v7639 = vunpack.c.l.b16 %v7571
    %v7640 = vunpack.c.l.b16 %v7572
    %v7641 = vunpack.c.l.b16 %v7573
    %v7642 = vunpack.c.l.b16 %v7574
    %v7643 = vunpack.c.l.b16 %v7575
    %v7644 = vunpack.c.l.b16 %v7576
    %v7645 = vunpack.c.l.b16 %v7577
    %v7646 = vunpack.c.l.b16 %v7578
    %v7647 = vunpack.c.l.b16 %v7579
    %v7648 = vunpack.c.l.b16 %v7580
    %v7649 = vunpack.c.l.b16 %v7581
    %v7650 = vunpack.c.l.b16 %v7582
    %v7651 = vunpack.c.l.b16 %v7583
    %v7652 = vunpack.c.l.b16 %v7584
    %v7653 = vunpack.c.l.b16 %v7585
    %v7654 = vunpack.c.l.b16 %v7586
    %v7655 = vunpack.c.l.b16 %v7587
    %v7656 = vunpack.c.l.b16 %v7588
    %v7657 = vunpack.c.l.b16 %v7589
    %v7658 = vunpack.c.l.b16 %v7590
    %v7659 = vunpack.c.l.b16 %v7591
    %v7660 = vunpack.c.l.b16 %v7592
    %v7661 = vunpack.c.l.b16 %v7593
    %v7662 = vpack.c.b16 %v7631, %v7630
    %v7663 = vpack.c.b16 %v7633, %v7632
    %v7664 = vpack.c.b16 %v7635, %v7634
    %v7665 = vpack.c.b16 %v7637, %v7636
    %v7666 = vpack.c.b16 %v7639, %v7638
    %v7667 = vpack.c.b16 %v7641, %v7640
    %v7668 = vpack.c.b16 %v7643, %v7642
    %v7669 = vpack.c.b16 %v7645, %v7644
    %v7670 = vpack.c.b16 %v7647, %v7646
    %v7671 = vpack.c.b16 %v7649, %v7648
    %v7672 = vpack.c.b16 %v7651, %v7650
    %v7673 = vpack.c.b16 %v7653, %v7652
    %v7674 = vpack.c.b16 %v7655, %v7654
    %v7675 = vpack.c.b16 %v7657, %v7656
    %v7676 = vpack.c.b16 %v7659, %v7658
    %v7677 = vpack.c.b16 %v7661, %v7660
    %7694 = vmatprep.subr.bf16.mxu0 0
    %7695 = vmatpush1.bf16.msra.mxu0 %v7662
    %7696 = vmatprep.subr.bf16.mxu0 0
    %7697 = vmatpush1.bf16.msra.mxu0 %v7663
    %7698 = vmatprep.subr.bf16.mxu0 0
    %7699 = vmatpush1.bf16.msra.mxu0 %v7664
    %7700 = vmatprep.subr.bf16.mxu0 0
    %7701 = vmatpush1.bf16.msra.mxu0 %v7665
    %7702 = vmatprep.subr.bf16.mxu0 0
    %7703 = vmatpush1.bf16.msra.mxu0 %v7666
    %7704 = vmatprep.subr.bf16.mxu0 0
    %7705 = vmatpush1.bf16.msra.mxu0 %v7667
    %7706 = vmatprep.subr.bf16.mxu0 0
    %7707 = vmatpush1.bf16.msra.mxu0 %v7668
    %7708 = vmatprep.subr.bf16.mxu0 0
    %7709 = vmatpush1.bf16.msra.mxu0 %v7669
    %7710 = vmatprep.subr.bf16.mxu0 0
    %7711 = vmatpush1.bf16.msra.mxu0 %v7670
    %7712 = vmatprep.subr.bf16.mxu0 0
    %7713 = vmatpush1.bf16.msra.mxu0 %v7671
    %7714 = vmatprep.subr.bf16.mxu0 0
    %7715 = vmatpush1.bf16.msra.mxu0 %v7672
    %7716 = vmatprep.subr.bf16.mxu0 0
    %7717 = vmatpush1.bf16.msra.mxu0 %v7673
    %7718 = vmatprep.subr.bf16.mxu0 0
    %7719 = vmatpush1.bf16.msra.mxu0 %v7674
    %7720 = vmatprep.subr.bf16.mxu0 0
    %7721 = vmatpush1.bf16.msra.mxu0 %v7675
    %7722 = vmatprep.subr.bf16.mxu0 0
    %7723 = vmatpush1.bf16.msra.mxu0 %v7676
    %7724 = vmatprep.subr.bf16.mxu0 0
    %7725 = vmatpush1.bf16.msra.mxu0 %v7677
    %7726 = vmatprep.mubr.bf16.mxu0 %v7597
    %7727 = vmatmul.mubr.bf16.gmra.mrb[0].mxu0 %v7596
    %v7728 = vpop.f32.mrb[0].mxu0
    %v7729 = vadd.f32 %v7595, %v7728
    %v7730 = vpop.f32.mrb[0].mxu0
    %v7731 = vpop.f32.mrb[0].mxu0
    %v7732 = vpop.f32.mrb[0].mxu0
    %7733 = vdwg.mxu0
    %7734 = vst.msk [vmem:[#allocation31 + $0x6] sm:$0x1] %vm2039, %v7729
    %s7735 = sadd.s32 %s270, 7
    %s7736 = sld [smem:[#allocation4 + %s7735]]
    %s7737 = scalar_lea.vmem [#allocation2], 7
    %v7738 = vld [vmem:[%s7737] ss:$8 sm:$0x3]
    %s7739 = smul.u32 %s7736, 64
    %s7740 = smul.addr %s7739, 4
    %s7741 = scalar_lea.vmem [#allocation20], %s7740
    %v7742 = vld [vmem:[%s7741] sm:$0xff]
    %v7743 = vld [vmem:[%s7741 + $0x8] sm:$0xff]
    %v7744 = vld [vmem:[%s7741 + $0x10] sm:$0xff]
    %v7745 = vld [vmem:[%s7741 + $0x18] sm:$0xff]
    %v7746 = vld [vmem:[%s7741 + $0x20] sm:$0xff]
    %v7747 = vld [vmem:[%s7741 + $0x28] sm:$0xff]
    %v7748 = vld [vmem:[%s7741 + $0x30] sm:$0xff]
    %v7749 = vld [vmem:[%s7741 + $0x38] sm:$0xff]
    %v7750 = vld [vmem:[%s7741 + $0x40] sm:$0xff]
    %v7751 = vld [vmem:[%s7741 + $0x48] sm:$0xff]
    %v7752 = vld [vmem:[%s7741 + $0x50] sm:$0xff]
    %v7753 = vld [vmem:[%s7741 + $0x58] sm:$0xff]
    %v7754 = vld [vmem:[%s7741 + $0x60] sm:$0xff]
    %v7755 = vld [vmem:[%s7741 + $0x68] sm:$0xff]
    %v7756 = vld [vmem:[%s7741 + $0x70] sm:$0xff]
    %v7757 = vld [vmem:[%s7741 + $0x78] sm:$0xff]
    %v7758 = vld [vmem:[%s7741 + $0x80] sm:$0xff]
    %v7759 = vld [vmem:[%s7741 + $0x88] sm:$0xff]
    %v7760 = vld [vmem:[%s7741 + $0x90] sm:$0xff]
    %v7761 = vld [vmem:[%s7741 + $0x98] sm:$0xff]
    %v7762 = vld [vmem:[%s7741 + $0xa0] sm:$0xff]
    %v7763 = vld [vmem:[%s7741 + $0xa8] sm:$0xff]
    %v7764 = vld [vmem:[%s7741 + $0xb0] sm:$0xff]
    %v7765 = vld [vmem:[%s7741 + $0xb8] sm:$0xff]
    %v7766 = vld [vmem:[%s7741 + $0xc0] sm:$0xff]
    %v7767 = vld [vmem:[%s7741 + $0xc8] sm:$0xff]
    %v7768 = vld [vmem:[%s7741 + $0xd0] sm:$0xff]
    %v7769 = vld [vmem:[%s7741 + $0xd8] sm:$0xff]
    %v7770 = vld [vmem:[%s7741 + $0xe0] sm:$0xff]
    %v7771 = vld [vmem:[%s7741 + $0xe8] sm:$0xff]
    %v7772 = vld [vmem:[%s7741 + $0xf0] sm:$0xff]
    %v7773 = vld [vmem:[%s7741 + $0xf8] sm:$0xff]
    %s7774 = smul.u32 %s7736, 2
    %s7775 = scalar_lea.vmem [#allocation22], %s7774
    %v7776 = vld [vmem:[%s7775] sm:$0x3]
    %v7778 = vlaneseq
    %v7779 = vshrl.u32 %v7778, 7
    %v7780 = vsub.s32 0, %v7779
    %v7781 = vrot.slane %v7738, %v7780
    %v7782 = vlaneseq
    %v7783 = vshrl.u32 %v7782, 7
    %v7784 = vsub.s32 1, %v7783
    %v7785 = vrot.slane %v7738, %v7784
    %v7788 = vpack.c.bf16 %v7781, %v7781
    %v7789 = vpack.c.bf16 %v7785, %v7785
    %v7822 = vunpack.c.l.b16 %v7742
    %v7823 = vunpack.c.h.b16 %v7742
    %v7824 = vunpack.c.l.b16 %v7743
    %v7825 = vunpack.c.h.b16 %v7743
    %v7826 = vunpack.c.l.b16 %v7744
    %v7827 = vunpack.c.h.b16 %v7744
    %v7828 = vunpack.c.l.b16 %v7745
    %v7829 = vunpack.c.h.b16 %v7745
    %v7830 = vunpack.c.l.b16 %v7746
    %v7831 = vunpack.c.h.b16 %v7746
    %v7832 = vunpack.c.l.b16 %v7747
    %v7833 = vunpack.c.h.b16 %v7747
    %v7834 = vunpack.c.l.b16 %v7748
    %v7835 = vunpack.c.h.b16 %v7748
    %v7836 = vunpack.c.l.b16 %v7749
    %v7837 = vunpack.c.h.b16 %v7749
    %v7838 = vunpack.c.l.b16 %v7750
    %v7839 = vunpack.c.h.b16 %v7750
    %v7840 = vunpack.c.l.b16 %v7751
    %v7841 = vunpack.c.h.b16 %v7751
    %v7842 = vunpack.c.l.b16 %v7752
    %v7843 = vunpack.c.h.b16 %v7752
    %v7844 = vunpack.c.l.b16 %v7753
    %v7845 = vunpack.c.h.b16 %v7753
    %v7846 = vunpack.c.l.b16 %v7754
    %v7847 = vunpack.c.h.b16 %v7754
    %v7848 = vunpack.c.l.b16 %v7755
    %v7849 = vunpack.c.h.b16 %v7755
    %v7850 = vunpack.c.l.b16 %v7756
    %v7851 = vunpack.c.h.b16 %v7756
    %v7852 = vunpack.c.l.b16 %v7757
    %v7853 = vunpack.c.h.b16 %v7757
    %v7854 = vunpack.c.l.b16 %v7758
    %v7855 = vunpack.c.h.b16 %v7758
    %v7856 = vunpack.c.l.b16 %v7759
    %v7857 = vunpack.c.h.b16 %v7759
    %v7858 = vunpack.c.l.b16 %v7760
    %v7859 = vunpack.c.h.b16 %v7760
    %v7860 = vunpack.c.l.b16 %v7761
    %v7861 = vunpack.c.h.b16 %v7761
    %v7862 = vunpack.c.l.b16 %v7762
    %v7863 = vunpack.c.h.b16 %v7762
    %v7864 = vunpack.c.l.b16 %v7763
    %v7865 = vunpack.c.h.b16 %v7763
    %v7866 = vunpack.c.l.b16 %v7764
    %v7867 = vunpack.c.h.b16 %v7764
    %v7868 = vunpack.c.l.b16 %v7765
    %v7869 = vunpack.c.h.b16 %v7765
    %v7870 = vunpack.c.l.b16 %v7766
    %v7871 = vunpack.c.h.b16 %v7766
    %v7872 = vunpack.c.l.b16 %v7767
    %v7873 = vunpack.c.h.b16 %v7767
    %v7874 = vunpack.c.l.b16 %v7768
    %v7875 = vunpack.c.h.b16 %v7768
    %v7876 = vunpack.c.l.b16 %v7769
    %v7877 = vunpack.c.h.b16 %v7769
    %v7878 = vunpack.c.l.b16 %v7770
    %v7879 = vunpack.c.h.b16 %v7770
    %v7880 = vunpack.c.l.b16 %v7771
    %v7881 = vunpack.c.h.b16 %v7771
    %v7882 = vunpack.c.l.b16 %v7772
    %v7883 = vunpack.c.h.b16 %v7772
    %v7884 = vunpack.c.l.b16 %v7773
    %v7885 = vunpack.c.h.b16 %v7773
    %v7886 = vpack.c.b16 %v7824, %v7822
    %v7887 = vpack.c.b16 %v7825, %v7823
    %v7888 = vpack.c.b16 %v7828, %v7826
    %v7889 = vpack.c.b16 %v7829, %v7827
    %v7890 = vpack.c.b16 %v7832, %v7830
    %v7891 = vpack.c.b16 %v7833, %v7831
    %v7892 = vpack.c.b16 %v7836, %v7834
    %v7893 = vpack.c.b16 %v7837, %v7835
    %v7894 = vpack.c.b16 %v7840, %v7838
    %v7895 = vpack.c.b16 %v7841, %v7839
    %v7896 = vpack.c.b16 %v7844, %v7842
    %v7897 = vpack.c.b16 %v7845, %v7843
    %v7898 = vpack.c.b16 %v7848, %v7846
    %v7899 = vpack.c.b16 %v7849, %v7847
    %v7900 = vpack.c.b16 %v7852, %v7850
    %v7901 = vpack.c.b16 %v7853, %v7851
    %v7902 = vpack.c.b16 %v7856, %v7854
    %v7903 = vpack.c.b16 %v7857, %v7855
    %v7904 = vpack.c.b16 %v7860, %v7858
    %v7905 = vpack.c.b16 %v7861, %v7859
    %v7906 = vpack.c.b16 %v7864, %v7862
    %v7907 = vpack.c.b16 %v7865, %v7863
    %v7908 = vpack.c.b16 %v7868, %v7866
    %v7909 = vpack.c.b16 %v7869, %v7867
    %v7910 = vpack.c.b16 %v7872, %v7870
    %v7911 = vpack.c.b16 %v7873, %v7871
    %v7912 = vpack.c.b16 %v7876, %v7874
    %v7913 = vpack.c.b16 %v7877, %v7875
    %v7914 = vpack.c.b16 %v7880, %v7878
    %v7915 = vpack.c.b16 %v7881, %v7879
    %v7916 = vpack.c.b16 %v7884, %v7882
    %v7917 = vpack.c.b16 %v7885, %v7883
    %v7951 = vlaneseq
    %v7952 = vshrl.u32 %v7951, 7
    %v7953 = vsub.s32 0, %v7952
    %v7954 = vrot.slane %v7776, %v7953
    %v7955 = vlaneseq
    %v7956 = vshrl.u32 %v7955, 7
    %v7957 = vsub.s32 1, %v7956
    %v7958 = vrot.slane %v7776, %v7957
    %7961 = vmatprep.subr.bf16.mxu0 %v7887
    %7962 = vmatpush1.bf16.msra.mxu0 %v7886
    %7963 = vmatprep.subr.bf16.mxu0 %v7889
    %7964 = vmatpush1.bf16.msra.mxu0 %v7888
    %7965 = vmatprep.subr.bf16.mxu0 %v7891
    %7966 = vmatpush1.bf16.msra.mxu0 %v7890
    %7967 = vmatprep.subr.bf16.mxu0 %v7893
    %7968 = vmatpush1.bf16.msra.mxu0 %v7892
    %7969 = vmatprep.subr.bf16.mxu0 %v7895
    %7970 = vmatpush1.bf16.msra.mxu0 %v7894
    %7971 = vmatprep.subr.bf16.mxu0 %v7897
    %7972 = vmatpush1.bf16.msra.mxu0 %v7896
    %7973 = vmatprep.subr.bf16.mxu0 %v7899
    %7974 = vmatpush1.bf16.msra.mxu0 %v7898
    %7975 = vmatprep.subr.bf16.mxu0 %v7901
    %7976 = vmatpush1.bf16.msra.mxu0 %v7900
    %7977 = vmatprep.subr.bf16.mxu0 %v7903
    %7978 = vmatpush1.bf16.msra.mxu0 %v7902
    %7979 = vmatprep.subr.bf16.mxu0 %v7905
    %7980 = vmatpush1.bf16.msra.mxu0 %v7904
    %7981 = vmatprep.subr.bf16.mxu0 %v7907
    %7982 = vmatpush1.bf16.msra.mxu0 %v7906
    %7983 = vmatprep.subr.bf16.mxu0 %v7909
    %7984 = vmatpush1.bf16.msra.mxu0 %v7908
    %7985 = vmatprep.subr.bf16.mxu0 %v7911
    %7986 = vmatpush1.bf16.msra.mxu0 %v7910
    %7987 = vmatprep.subr.bf16.mxu0 %v7913
    %7988 = vmatpush1.bf16.msra.mxu0 %v7912
    %7989 = vmatprep.subr.bf16.mxu0 %v7915
    %7990 = vmatpush1.bf16.msra.mxu0 %v7914
    %7991 = vmatprep.subr.bf16.mxu0 %v7917
    %7992 = vmatpush1.bf16.msra.mxu0 %v7916
    %7993 = vmatprep.mubr.bf16.mxu0 %v7789
    %7994 = vmatmul.mubr.bf16.gmra.mrb[0].mxu0 %v7788
    %v7995 = vpop.f32.mrb[0].mxu0
    %v7996 = vadd.f32 %v7954, %v7995
    %v7997 = vpop.f32.mrb[0].mxu0
    %v7998 = vadd.f32 %v7958, %v7997
    %v7999 = vpop.f32.mrb[0].mxu0
    %v8000 = vpop.f32.mrb[0].mxu0
    %8001 = vdwg.mxu0
    %v8002 = vmax.f32 %v7996, 0.0
    %v8003 = vmax.f32 %v7998, 0.0
    %s8004 = smul.addr %s7739, 4
    %s8005 = scalar_lea.vmem [#allocation23], %s8004
    %v8006 = vld [vmem:[%s8005] sm:$0xff]
    %v8007 = vld [vmem:[%s8005 + $0x8] sm:$0xff]
    %v8008 = vld [vmem:[%s8005 + $0x10] sm:$0xff]
    %v8009 = vld [vmem:[%s8005 + $0x18] sm:$0xff]
    %v8010 = vld [vmem:[%s8005 + $0x20] sm:$0xff]
    %v8011 = vld [vmem:[%s8005 + $0x28] sm:$0xff]
    %v8012 = vld [vmem:[%s8005 + $0x30] sm:$0xff]
    %v8013 = vld [vmem:[%s8005 + $0x38] sm:$0xff]
    %v8014 = vld [vmem:[%s8005 + $0x40] sm:$0xff]
    %v8015 = vld [vmem:[%s8005 + $0x48] sm:$0xff]
    %v8016 = vld [vmem:[%s8005 + $0x50] sm:$0xff]
    %v8017 = vld [vmem:[%s8005 + $0x58] sm:$0xff]
    %v8018 = vld [vmem:[%s8005 + $0x60] sm:$0xff]
    %v8019 = vld [vmem:[%s8005 + $0x68] sm:$0xff]
    %v8020 = vld [vmem:[%s8005 + $0x70] sm:$0xff]
    %v8021 = vld [vmem:[%s8005 + $0x78] sm:$0xff]
    %v8022 = vld [vmem:[%s8005 + $0x80] sm:$0xff]
    %v8023 = vld [vmem:[%s8005 + $0x88] sm:$0xff]
    %v8024 = vld [vmem:[%s8005 + $0x90] sm:$0xff]
    %v8025 = vld [vmem:[%s8005 + $0x98] sm:$0xff]
    %v8026 = vld [vmem:[%s8005 + $0xa0] sm:$0xff]
    %v8027 = vld [vmem:[%s8005 + $0xa8] sm:$0xff]
    %v8028 = vld [vmem:[%s8005 + $0xb0] sm:$0xff]
    %v8029 = vld [vmem:[%s8005 + $0xb8] sm:$0xff]
    %v8030 = vld [vmem:[%s8005 + $0xc0] sm:$0xff]
    %v8031 = vld [vmem:[%s8005 + $0xc8] sm:$0xff]
    %v8032 = vld [vmem:[%s8005 + $0xd0] sm:$0xff]
    %v8033 = vld [vmem:[%s8005 + $0xd8] sm:$0xff]
    %v8034 = vld [vmem:[%s8005 + $0xe0] sm:$0xff]
    %v8035 = vld [vmem:[%s8005 + $0xe8] sm:$0xff]
    %v8036 = vld [vmem:[%s8005 + $0xf0] sm:$0xff]
    %v8037 = vld [vmem:[%s8005 + $0xf8] sm:$0xff]
    %s8038 = scalar_lea.vmem [#allocation25], %s7774
    %v8039 = vld [vmem:[%s8038] sm:$0x3]
    %v8040 = vpack.c.bf16 %v8002, %v8002
    %v8041 = vpack.c.bf16 %v8003, %v8003
    %v8074 = vunpack.c.l.b16 %v8006
    %v8075 = vunpack.c.h.b16 %v8006
    %v8076 = vunpack.c.l.b16 %v8007
    %v8077 = vunpack.c.h.b16 %v8007
    %v8078 = vunpack.c.l.b16 %v8008
    %v8079 = vunpack.c.h.b16 %v8008
    %v8080 = vunpack.c.l.b16 %v8009
    %v8081 = vunpack.c.h.b16 %v8009
    %v8082 = vunpack.c.l.b16 %v8010
    %v8083 = vunpack.c.h.b16 %v8010
    %v8084 = vunpack.c.l.b16 %v8011
    %v8085 = vunpack.c.h.b16 %v8011
    %v8086 = vunpack.c.l.b16 %v8012
    %v8087 = vunpack.c.h.b16 %v8012
    %v8088 = vunpack.c.l.b16 %v8013
    %v8089 = vunpack.c.h.b16 %v8013
    %v8090 = vunpack.c.l.b16 %v8014
    %v8091 = vunpack.c.h.b16 %v8014
    %v8092 = vunpack.c.l.b16 %v8015
    %v8093 = vunpack.c.h.b16 %v8015
    %v8094 = vunpack.c.l.b16 %v8016
    %v8095 = vunpack.c.h.b16 %v8016
    %v8096 = vunpack.c.l.b16 %v8017
    %v8097 = vunpack.c.h.b16 %v8017
    %v8098 = vunpack.c.l.b16 %v8018
    %v8099 = vunpack.c.h.b16 %v8018
    %v8100 = vunpack.c.l.b16 %v8019
    %v8101 = vunpack.c.h.b16 %v8019
    %v8102 = vunpack.c.l.b16 %v8020
    %v8103 = vunpack.c.h.b16 %v8020
    %v8104 = vunpack.c.l.b16 %v8021
    %v8105 = vunpack.c.h.b16 %v8021
    %v8106 = vunpack.c.l.b16 %v8022
    %v8107 = vunpack.c.h.b16 %v8022
    %v8108 = vunpack.c.l.b16 %v8023
    %v8109 = vunpack.c.h.b16 %v8023
    %v8110 = vunpack.c.l.b16 %v8024
    %v8111 = vunpack.c.h.b16 %v8024
    %v8112 = vunpack.c.l.b16 %v8025
    %v8113 = vunpack.c.h.b16 %v8025
    %v8114 = vunpack.c.l.b16 %v8026
    %v8115 = vunpack.c.h.b16 %v8026
    %v8116 = vunpack.c.l.b16 %v8027
    %v8117 = vunpack.c.h.b16 %v8027
    %v8118 = vunpack.c.l.b16 %v8028
    %v8119 = vunpack.c.h.b16 %v8028
    %v8120 = vunpack.c.l.b16 %v8029
    %v8121 = vunpack.c.h.b16 %v8029
    %v8122 = vunpack.c.l.b16 %v8030
    %v8123 = vunpack.c.h.b16 %v8030
    %v8124 = vunpack.c.l.b16 %v8031
    %v8125 = vunpack.c.h.b16 %v8031
    %v8126 = vunpack.c.l.b16 %v8032
    %v8127 = vunpack.c.h.b16 %v8032
    %v8128 = vunpack.c.l.b16 %v8033
    %v8129 = vunpack.c.h.b16 %v8033
    %v8130 = vunpack.c.l.b16 %v8034
    %v8131 = vunpack.c.h.b16 %v8034
    %v8132 = vunpack.c.l.b16 %v8035
    %v8133 = vunpack.c.h.b16 %v8035
    %v8134 = vunpack.c.l.b16 %v8036
    %v8135 = vunpack.c.h.b16 %v8036
    %v8136 = vunpack.c.l.b16 %v8037
    %v8137 = vunpack.c.h.b16 %v8037
    %v8138 = vpack.c.b16 %v8076, %v8074
    %v8139 = vpack.c.b16 %v8077, %v8075
    %v8140 = vpack.c.b16 %v8080, %v8078
    %v8141 = vpack.c.b16 %v8081, %v8079
    %v8142 = vpack.c.b16 %v8084, %v8082
    %v8143 = vpack.c.b16 %v8085, %v8083
    %v8144 = vpack.c.b16 %v8088, %v8086
    %v8145 = vpack.c.b16 %v8089, %v8087
    %v8146 = vpack.c.b16 %v8092, %v8090
    %v8147 = vpack.c.b16 %v8093, %v8091
    %v8148 = vpack.c.b16 %v8096, %v8094
    %v8149 = vpack.c.b16 %v8097, %v8095
    %v8150 = vpack.c.b16 %v8100, %v8098
    %v8151 = vpack.c.b16 %v8101, %v8099
    %v8152 = vpack.c.b16 %v8104, %v8102
    %v8153 = vpack.c.b16 %v8105, %v8103
    %v8154 = vpack.c.b16 %v8108, %v8106
    %v8155 = vpack.c.b16 %v8109, %v8107
    %v8156 = vpack.c.b16 %v8112, %v8110
    %v8157 = vpack.c.b16 %v8113, %v8111
    %v8158 = vpack.c.b16 %v8116, %v8114
    %v8159 = vpack.c.b16 %v8117, %v8115
    %v8160 = vpack.c.b16 %v8120, %v8118
    %v8161 = vpack.c.b16 %v8121, %v8119
    %v8162 = vpack.c.b16 %v8124, %v8122
    %v8163 = vpack.c.b16 %v8125, %v8123
    %v8164 = vpack.c.b16 %v8128, %v8126
    %v8165 = vpack.c.b16 %v8129, %v8127
    %v8166 = vpack.c.b16 %v8132, %v8130
    %v8167 = vpack.c.b16 %v8133, %v8131
    %v8168 = vpack.c.b16 %v8136, %v8134
    %v8169 = vpack.c.b16 %v8137, %v8135
    %v8203 = vlaneseq
    %v8204 = vshrl.u32 %v8203, 7
    %v8205 = vsub.s32 0, %v8204
    %v8206 = vrot.slane %v8039, %v8205
    %v8207 = vlaneseq
    %v8208 = vshrl.u32 %v8207, 7
    %v8209 = vsub.s32 1, %v8208
    %v8210 = vrot.slane %v8039, %v8209
    %8213 = vmatprep.subr.bf16.mxu0 %v8139
    %8214 = vmatpush1.bf16.msra.mxu0 %v8138
    %8215 = vmatprep.subr.bf16.mxu0 %v8141
    %8216 = vmatpush1.bf16.msra.mxu0 %v8140
    %8217 = vmatprep.subr.bf16.mxu0 %v8143
    %8218 = vmatpush1.bf16.msra.mxu0 %v8142
    %8219 = vmatprep.subr.bf16.mxu0 %v8145
    %8220 = vmatpush1.bf16.msra.mxu0 %v8144
    %8221 = vmatprep.subr.bf16.mxu0 %v8147
    %8222 = vmatpush1.bf16.msra.mxu0 %v8146
    %8223 = vmatprep.subr.bf16.mxu0 %v8149
    %8224 = vmatpush1.bf16.msra.mxu0 %v8148
    %8225 = vmatprep.subr.bf16.mxu0 %v8151
    %8226 = vmatpush1.bf16.msra.mxu0 %v8150
    %8227 = vmatprep.subr.bf16.mxu0 %v8153
    %8228 = vmatpush1.bf16.msra.mxu0 %v8152
    %8229 = vmatprep.subr.bf16.mxu0 %v8155
    %8230 = vmatpush1.bf16.msra.mxu0 %v8154
    %8231 = vmatprep.subr.bf16.mxu0 %v8157
    %8232 = vmatpush1.bf16.msra.mxu0 %v8156
    %8233 = vmatprep.subr.bf16.mxu0 %v8159
    %8234 = vmatpush1.bf16.msra.mxu0 %v8158
    %8235 = vmatprep.subr.bf16.mxu0 %v8161
    %8236 = vmatpush1.bf16.msra.mxu0 %v8160
    %8237 = vmatprep.subr.bf16.mxu0 %v8163
    %8238 = vmatpush1.bf16.msra.mxu0 %v8162
    %8239 = vmatprep.subr.bf16.mxu0 %v8165
    %8240 = vmatpush1.bf16.msra.mxu0 %v8164
    %8241 = vmatprep.subr.bf16.mxu0 %v8167
    %8242 = vmatpush1.bf16.msra.mxu0 %v8166
    %8243 = vmatprep.subr.bf16.mxu0 %v8169
    %8244 = vmatpush1.bf16.msra.mxu0 %v8168
    %8245 = vmatprep.mubr.bf16.mxu0 %v8041
    %8246 = vmatmul.mubr.bf16.gmra.mrb[0].mxu0 %v8040
    %v8247 = vpop.f32.mrb[0].mxu0
    %v8248 = vadd.f32 %v8206, %v8247
    %v8249 = vpop.f32.mrb[0].mxu0
    %v8250 = vadd.f32 %v8210, %v8249
    %v8251 = vpop.f32.mrb[0].mxu0
    %v8252 = vpop.f32.mrb[0].mxu0
    %8253 = vdwg.mxu0
    %v8254 = vmax.f32 %v8248, 0.0
    %v8255 = vmax.f32 %v8250, 0.0
    %s8256 = smul.addr %s7739, 4
    %s8257 = scalar_lea.vmem [#allocation26], %s8256
    %v8258 = vld [vmem:[%s8257] sm:$0xff]
    %v8259 = vld [vmem:[%s8257 + $0x8] sm:$0xff]
    %v8260 = vld [vmem:[%s8257 + $0x10] sm:$0xff]
    %v8261 = vld [vmem:[%s8257 + $0x18] sm:$0xff]
    %v8262 = vld [vmem:[%s8257 + $0x20] sm:$0xff]
    %v8263 = vld [vmem:[%s8257 + $0x28] sm:$0xff]
    %v8264 = vld [vmem:[%s8257 + $0x30] sm:$0xff]
    %v8265 = vld [vmem:[%s8257 + $0x38] sm:$0xff]
    %v8266 = vld [vmem:[%s8257 + $0x40] sm:$0xff]
    %v8267 = vld [vmem:[%s8257 + $0x48] sm:$0xff]
    %v8268 = vld [vmem:[%s8257 + $0x50] sm:$0xff]
    %v8269 = vld [vmem:[%s8257 + $0x58] sm:$0xff]
    %v8270 = vld [vmem:[%s8257 + $0x60] sm:$0xff]
    %v8271 = vld [vmem:[%s8257 + $0x68] sm:$0xff]
    %v8272 = vld [vmem:[%s8257 + $0x70] sm:$0xff]
    %v8273 = vld [vmem:[%s8257 + $0x78] sm:$0xff]
    %v8274 = vld [vmem:[%s8257 + $0x80] sm:$0xff]
    %v8275 = vld [vmem:[%s8257 + $0x88] sm:$0xff]
    %v8276 = vld [vmem:[%s8257 + $0x90] sm:$0xff]
    %v8277 = vld [vmem:[%s8257 + $0x98] sm:$0xff]
    %v8278 = vld [vmem:[%s8257 + $0xa0] sm:$0xff]
    %v8279 = vld [vmem:[%s8257 + $0xa8] sm:$0xff]
    %v8280 = vld [vmem:[%s8257 + $0xb0] sm:$0xff]
    %v8281 = vld [vmem:[%s8257 + $0xb8] sm:$0xff]
    %v8282 = vld [vmem:[%s8257 + $0xc0] sm:$0xff]
    %v8283 = vld [vmem:[%s8257 + $0xc8] sm:$0xff]
    %v8284 = vld [vmem:[%s8257 + $0xd0] sm:$0xff]
    %v8285 = vld [vmem:[%s8257 + $0xd8] sm:$0xff]
    %v8286 = vld [vmem:[%s8257 + $0xe0] sm:$0xff]
    %v8287 = vld [vmem:[%s8257 + $0xe8] sm:$0xff]
    %v8288 = vld [vmem:[%s8257 + $0xf0] sm:$0xff]
    %v8289 = vld [vmem:[%s8257 + $0xf8] sm:$0xff]
    %s8290 = scalar_lea.vmem [#allocation28], %s7774
    %v8291 = vld [vmem:[%s8290] sm:$0x3]
    %v8292 = vpack.c.bf16 %v8254, %v8254
    %v8293 = vpack.c.bf16 %v8255, %v8255
    %v8326 = vunpack.c.l.b16 %v8258
    %v8327 = vunpack.c.h.b16 %v8258
    %v8328 = vunpack.c.l.b16 %v8259
    %v8329 = vunpack.c.h.b16 %v8259
    %v8330 = vunpack.c.l.b16 %v8260
    %v8331 = vunpack.c.h.b16 %v8260
    %v8332 = vunpack.c.l.b16 %v8261
    %v8333 = vunpack.c.h.b16 %v8261
    %v8334 = vunpack.c.l.b16 %v8262
    %v8335 = vunpack.c.h.b16 %v8262
    %v8336 = vunpack.c.l.b16 %v8263
    %v8337 = vunpack.c.h.b16 %v8263
    %v8338 = vunpack.c.l.b16 %v8264
    %v8339 = vunpack.c.h.b16 %v8264
    %v8340 = vunpack.c.l.b16 %v8265
    %v8341 = vunpack.c.h.b16 %v8265
    %v8342 = vunpack.c.l.b16 %v8266
    %v8343 = vunpack.c.h.b16 %v8266
    %v8344 = vunpack.c.l.b16 %v8267
    %v8345 = vunpack.c.h.b16 %v8267
    %v8346 = vunpack.c.l.b16 %v8268
    %v8347 = vunpack.c.h.b16 %v8268
    %v8348 = vunpack.c.l.b16 %v8269
    %v8349 = vunpack.c.h.b16 %v8269
    %v8350 = vunpack.c.l.b16 %v8270
    %v8351 = vunpack.c.h.b16 %v8270
    %v8352 = vunpack.c.l.b16 %v8271
    %v8353 = vunpack.c.h.b16 %v8271
    %v8354 = vunpack.c.l.b16 %v8272
    %v8355 = vunpack.c.h.b16 %v8272
    %v8356 = vunpack.c.l.b16 %v8273
    %v8357 = vunpack.c.h.b16 %v8273
    %v8358 = vunpack.c.l.b16 %v8274
    %v8359 = vunpack.c.h.b16 %v8274
    %v8360 = vunpack.c.l.b16 %v8275
    %v8361 = vunpack.c.h.b16 %v8275
    %v8362 = vunpack.c.l.b16 %v8276
    %v8363 = vunpack.c.h.b16 %v8276
    %v8364 = vunpack.c.l.b16 %v8277
    %v8365 = vunpack.c.h.b16 %v8277
    %v8366 = vunpack.c.l.b16 %v8278
    %v8367 = vunpack.c.h.b16 %v8278
    %v8368 = vunpack.c.l.b16 %v8279
    %v8369 = vunpack.c.h.b16 %v8279
    %v8370 = vunpack.c.l.b16 %v8280
    %v8371 = vunpack.c.h.b16 %v8280
    %v8372 = vunpack.c.l.b16 %v8281
    %v8373 = vunpack.c.h.b16 %v8281
    %v8374 = vunpack.c.l.b16 %v8282
    %v8375 = vunpack.c.h.b16 %v8282
    %v8376 = vunpack.c.l.b16 %v8283
    %v8377 = vunpack.c.h.b16 %v8283
    %v8378 = vunpack.c.l.b16 %v8284
    %v8379 = vunpack.c.h.b16 %v8284
    %v8380 = vunpack.c.l.b16 %v8285
    %v8381 = vunpack.c.h.b16 %v8285
    %v8382 = vunpack.c.l.b16 %v8286
    %v8383 = vunpack.c.h.b16 %v8286
    %v8384 = vunpack.c.l.b16 %v8287
    %v8385 = vunpack.c.h.b16 %v8287
    %v8386 = vunpack.c.l.b16 %v8288
    %v8387 = vunpack.c.h.b16 %v8288
    %v8388 = vunpack.c.l.b16 %v8289
    %v8389 = vunpack.c.h.b16 %v8289
    %v8390 = vpack.c.b16 %v8328, %v8326
    %v8391 = vpack.c.b16 %v8329, %v8327
    %v8392 = vpack.c.b16 %v8332, %v8330
    %v8393 = vpack.c.b16 %v8333, %v8331
    %v8394 = vpack.c.b16 %v8336, %v8334
    %v8395 = vpack.c.b16 %v8337, %v8335
    %v8396 = vpack.c.b16 %v8340, %v8338
    %v8397 = vpack.c.b16 %v8341, %v8339
    %v8398 = vpack.c.b16 %v8344, %v8342
    %v8399 = vpack.c.b16 %v8345, %v8343
    %v8400 = vpack.c.b16 %v8348, %v8346
    %v8401 = vpack.c.b16 %v8349, %v8347
    %v8402 = vpack.c.b16 %v8352, %v8350
    %v8403 = vpack.c.b16 %v8353, %v8351
    %v8404 = vpack.c.b16 %v8356, %v8354
    %v8405 = vpack.c.b16 %v8357, %v8355
    %v8406 = vpack.c.b16 %v8360, %v8358
    %v8407 = vpack.c.b16 %v8361, %v8359
    %v8408 = vpack.c.b16 %v8364, %v8362
    %v8409 = vpack.c.b16 %v8365, %v8363
    %v8410 = vpack.c.b16 %v8368, %v8366
    %v8411 = vpack.c.b16 %v8369, %v8367
    %v8412 = vpack.c.b16 %v8372, %v8370
    %v8413 = vpack.c.b16 %v8373, %v8371
    %v8414 = vpack.c.b16 %v8376, %v8374
    %v8415 = vpack.c.b16 %v8377, %v8375
    %v8416 = vpack.c.b16 %v8380, %v8378
    %v8417 = vpack.c.b16 %v8381, %v8379
    %v8418 = vpack.c.b16 %v8384, %v8382
    %v8419 = vpack.c.b16 %v8385, %v8383
    %v8420 = vpack.c.b16 %v8388, %v8386
    %v8421 = vpack.c.b16 %v8389, %v8387
    %v8455 = vlaneseq
    %v8456 = vshrl.u32 %v8455, 7
    %v8457 = vsub.s32 0, %v8456
    %v8458 = vrot.slane %v8291, %v8457
    %v8459 = vlaneseq
    %v8460 = vshrl.u32 %v8459, 7
    %v8461 = vsub.s32 1, %v8460
    %v8462 = vrot.slane %v8291, %v8461
    %8465 = vmatprep.subr.bf16.mxu0 %v8391
    %8466 = vmatpush1.bf16.msra.mxu0 %v8390
    %8467 = vmatprep.subr.bf16.mxu0 %v8393
    %8468 = vmatpush1.bf16.msra.mxu0 %v8392
    %8469 = vmatprep.subr.bf16.mxu0 %v8395
    %8470 = vmatpush1.bf16.msra.mxu0 %v8394
    %8471 = vmatprep.subr.bf16.mxu0 %v8397
    %8472 = vmatpush1.bf16.msra.mxu0 %v8396
    %8473 = vmatprep.subr.bf16.mxu0 %v8399
    %8474 = vmatpush1.bf16.msra.mxu0 %v8398
    %8475 = vmatprep.subr.bf16.mxu0 %v8401
    %8476 = vmatpush1.bf16.msra.mxu0 %v8400
    %8477 = vmatprep.subr.bf16.mxu0 %v8403
    %8478 = vmatpush1.bf16.msra.mxu0 %v8402
    %8479 = vmatprep.subr.bf16.mxu0 %v8405
    %8480 = vmatpush1.bf16.msra.mxu0 %v8404
    %8481 = vmatprep.subr.bf16.mxu0 %v8407
    %8482 = vmatpush1.bf16.msra.mxu0 %v8406
    %8483 = vmatprep.subr.bf16.mxu0 %v8409
    %8484 = vmatpush1.bf16.msra.mxu0 %v8408
    %8485 = vmatprep.subr.bf16.mxu0 %v8411
    %8486 = vmatpush1.bf16.msra.mxu0 %v8410
    %8487 = vmatprep.subr.bf16.mxu0 %v8413
    %8488 = vmatpush1.bf16.msra.mxu0 %v8412
    %8489 = vmatprep.subr.bf16.mxu0 %v8415
    %8490 = vmatpush1.bf16.msra.mxu0 %v8414
    %8491 = vmatprep.subr.bf16.mxu0 %v8417
    %8492 = vmatpush1.bf16.msra.mxu0 %v8416
    %8493 = vmatprep.subr.bf16.mxu0 %v8419
    %8494 = vmatpush1.bf16.msra.mxu0 %v8418
    %8495 = vmatprep.subr.bf16.mxu0 %v8421
    %8496 = vmatpush1.bf16.msra.mxu0 %v8420
    %8497 = vmatprep.mubr.bf16.mxu0 %v8293
    %8498 = vmatmul.mubr.bf16.gmra.mrb[0].mxu0 %v8292
    %v8499 = vpop.f32.mrb[0].mxu0
    %v8500 = vadd.f32 %v8458, %v8499
    %v8501 = vpop.f32.mrb[0].mxu0
    %v8502 = vadd.f32 %v8462, %v8501
    %v8503 = vpop.f32.mrb[0].mxu0
    %v8504 = vpop.f32.mrb[0].mxu0
    %8505 = vdwg.mxu0
    %v8506 = vmax.f32 %v8500, 0.0
    %v8507 = vmax.f32 %v8502, 0.0
    %s8508 = smul.u32 %s7736, 32
    %s8509 = smul.addr %s8508, 4
    %s8510 = scalar_lea.vmem %s16, %s8509
    %v8511 = vld [vmem:[%s8510] sm:$0xf]
    %v8512 = vld [vmem:[%s8510 + $0x4] sm:$0xf]
    %v8513 = vld [vmem:[%s8510 + $0x8] sm:$0xf]
    %v8514 = vld [vmem:[%s8510 + $0xc] sm:$0xf]
    %v8515 = vld [vmem:[%s8510 + $0x10] sm:$0xf]
    %v8516 = vld [vmem:[%s8510 + $0x14] sm:$0xf]
    %v8517 = vld [vmem:[%s8510 + $0x18] sm:$0xf]
    %v8518 = vld [vmem:[%s8510 + $0x1c] sm:$0xf]
    %v8519 = vld [vmem:[%s8510 + $0x20] sm:$0xf]
    %v8520 = vld [vmem:[%s8510 + $0x24] sm:$0xf]
    %v8521 = vld [vmem:[%s8510 + $0x28] sm:$0xf]
    %v8522 = vld [vmem:[%s8510 + $0x2c] sm:$0xf]
    %v8523 = vld [vmem:[%s8510 + $0x30] sm:$0xf]
    %v8524 = vld [vmem:[%s8510 + $0x34] sm:$0xf]
    %v8525 = vld [vmem:[%s8510 + $0x38] sm:$0xf]
    %v8526 = vld [vmem:[%s8510 + $0x3c] sm:$0xf]
    %v8527 = vld [vmem:[%s8510 + $0x40] sm:$0xf]
    %v8528 = vld [vmem:[%s8510 + $0x44] sm:$0xf]
    %v8529 = vld [vmem:[%s8510 + $0x48] sm:$0xf]
    %v8530 = vld [vmem:[%s8510 + $0x4c] sm:$0xf]
    %v8531 = vld [vmem:[%s8510 + $0x50] sm:$0xf]
    %v8532 = vld [vmem:[%s8510 + $0x54] sm:$0xf]
    %v8533 = vld [vmem:[%s8510 + $0x58] sm:$0xf]
    %v8534 = vld [vmem:[%s8510 + $0x5c] sm:$0xf]
    %v8535 = vld [vmem:[%s8510 + $0x60] sm:$0xf]
    %v8536 = vld [vmem:[%s8510 + $0x64] sm:$0xf]
    %v8537 = vld [vmem:[%s8510 + $0x68] sm:$0xf]
    %v8538 = vld [vmem:[%s8510 + $0x6c] sm:$0xf]
    %v8539 = vld [vmem:[%s8510 + $0x70] sm:$0xf]
    %v8540 = vld [vmem:[%s8510 + $0x74] sm:$0xf]
    %v8541 = vld [vmem:[%s8510 + $0x78] sm:$0xf]
    %v8542 = vld [vmem:[%s8510 + $0x7c] sm:$0xf]
    %s8543 = scalar_lea.vmem [#allocation29], %s7736
    %v8544 = vld [vmem:[%s8543] sm:$0x1]
    %v8545 = vpack.c.bf16 %v8506, %v8506
    %v8546 = vpack.c.bf16 %v8507, %v8507
    %v8579 = vunpack.c.l.b16 %v8511
    %v8580 = vunpack.c.l.b16 %v8512
    %v8581 = vunpack.c.l.b16 %v8513
    %v8582 = vunpack.c.l.b16 %v8514
    %v8583 = vunpack.c.l.b16 %v8515
    %v8584 = vunpack.c.l.b16 %v8516
    %v8585 = vunpack.c.l.b16 %v8517
    %v8586 = vunpack.c.l.b16 %v8518
    %v8587 = vunpack.c.l.b16 %v8519
    %v8588 = vunpack.c.l.b16 %v8520
    %v8589 = vunpack.c.l.b16 %v8521
    %v8590 = vunpack.c.l.b16 %v8522
    %v8591 = vunpack.c.l.b16 %v8523
    %v8592 = vunpack.c.l.b16 %v8524
    %v8593 = vunpack.c.l.b16 %v8525
    %v8594 = vunpack.c.l.b16 %v8526
    %v8595 = vunpack.c.l.b16 %v8527
    %v8596 = vunpack.c.l.b16 %v8528
    %v8597 = vunpack.c.l.b16 %v8529
    %v8598 = vunpack.c.l.b16 %v8530
    %v8599 = vunpack.c.l.b16 %v8531
    %v8600 = vunpack.c.l.b16 %v8532
    %v8601 = vunpack.c.l.b16 %v8533
    %v8602 = vunpack.c.l.b16 %v8534
    %v8603 = vunpack.c.l.b16 %v8535
    %v8604 = vunpack.c.l.b16 %v8536
    %v8605 = vunpack.c.l.b16 %v8537
    %v8606 = vunpack.c.l.b16 %v8538
    %v8607 = vunpack.c.l.b16 %v8539
    %v8608 = vunpack.c.l.b16 %v8540
    %v8609 = vunpack.c.l.b16 %v8541
    %v8610 = vunpack.c.l.b16 %v8542
    %v8611 = vpack.c.b16 %v8580, %v8579
    %v8612 = vpack.c.b16 %v8582, %v8581
    %v8613 = vpack.c.b16 %v8584, %v8583
    %v8614 = vpack.c.b16 %v8586, %v8585
    %v8615 = vpack.c.b16 %v8588, %v8587
    %v8616 = vpack.c.b16 %v8590, %v8589
    %v8617 = vpack.c.b16 %v8592, %v8591
    %v8618 = vpack.c.b16 %v8594, %v8593
    %v8619 = vpack.c.b16 %v8596, %v8595
    %v8620 = vpack.c.b16 %v8598, %v8597
    %v8621 = vpack.c.b16 %v8600, %v8599
    %v8622 = vpack.c.b16 %v8602, %v8601
    %v8623 = vpack.c.b16 %v8604, %v8603
    %v8624 = vpack.c.b16 %v8606, %v8605
    %v8625 = vpack.c.b16 %v8608, %v8607
    %v8626 = vpack.c.b16 %v8610, %v8609
    %8643 = vmatprep.subr.bf16.mxu0 0
    %8644 = vmatpush1.bf16.msra.mxu0 %v8611
    %8645 = vmatprep.subr.bf16.mxu0 0
    %8646 = vmatpush1.bf16.msra.mxu0 %v8612
    %8647 = vmatprep.subr.bf16.mxu0 0
    %8648 = vmatpush1.bf16.msra.mxu0 %v8613
    %8649 = vmatprep.subr.bf16.mxu0 0
    %8650 = vmatpush1.bf16.msra.mxu0 %v8614
    %8651 = vmatprep.subr.bf16.mxu0 0
    %8652 = vmatpush1.bf16.msra.mxu0 %v8615
    %8653 = vmatprep.subr.bf16.mxu0 0
    %8654 = vmatpush1.bf16.msra.mxu0 %v8616
    %8655 = vmatprep.subr.bf16.mxu0 0
    %8656 = vmatpush1.bf16.msra.mxu0 %v8617
    %8657 = vmatprep.subr.bf16.mxu0 0
    %8658 = vmatpush1.bf16.msra.mxu0 %v8618
    %8659 = vmatprep.subr.bf16.mxu0 0
    %8660 = vmatpush1.bf16.msra.mxu0 %v8619
    %8661 = vmatprep.subr.bf16.mxu0 0
    %8662 = vmatpush1.bf16.msra.mxu0 %v8620
    %8663 = vmatprep.subr.bf16.mxu0 0
    %8664 = vmatpush1.bf16.msra.mxu0 %v8621
    %8665 = vmatprep.subr.bf16.mxu0 0
    %8666 = vmatpush1.bf16.msra.mxu0 %v8622
    %8667 = vmatprep.subr.bf16.mxu0 0
    %8668 = vmatpush1.bf16.msra.mxu0 %v8623
    %8669 = vmatprep.subr.bf16.mxu0 0
    %8670 = vmatpush1.bf16.msra.mxu0 %v8624
    %8671 = vmatprep.subr.bf16.mxu0 0
    %8672 = vmatpush1.bf16.msra.mxu0 %v8625
    %8673 = vmatprep.subr.bf16.mxu0 0
    %8674 = vmatpush1.bf16.msra.mxu0 %v8626
    %8675 = vmatprep.mubr.bf16.mxu0 %v8546
    %8676 = vmatmul.mubr.bf16.gmra.mrb[0].mxu0 %v8545
    %v8677 = vpop.f32.mrb[0].mxu0
    %v8678 = vadd.f32 %v8544, %v8677
    %v8679 = vpop.f32.mrb[0].mxu0
    %v8680 = vpop.f32.mrb[0].mxu0
    %v8681 = vpop.f32.mrb[0].mxu0
    %8682 = vdwg.mxu0
    %8683 = vst.msk [vmem:[#allocation31 + $0x7] sm:$0x1] %vm2039, %v8678
    // Predicated region
    $region134: #{tpu_custom_call.1} parent=1 // pred_check
      _
    $region135: #{tpu_custom_call.1} parent=1 // pred_check_branch
      %8685 = sbr.rel (0) target = $region137
    $region136: #{tpu_custom_call.1} parent=1 // pred_region
      %s8687 = ssub.s32 128, 128
      %8688 = vsyncadd [#allocation7], %s8687
      %s8690 = sshll.u32 [#allocation31], 4
      %s8691 = int_to_ptr.vmem [resolvable:$true] %s8690
      %8693 = dma.vmem_to_hbm [thread:$0]  %s8691, 128, %s18, [#allocation7]
    $region137: #{tpu_custom_call.1} parent=1 // pred_fallthru
      _
    // Predicated region
    $region138: #{tpu_custom_call.1} parent=1 // pred_check
      _
    $region139: #{tpu_custom_call.1} parent=1 // pred_check_branch
      %8695 = sbr.rel (0) target = $region141
    $region140: #{tpu_custom_call.1} parent=1 // pred_region
      %8696 = dma.done [#allocation7], 128
    $region141: #{tpu_custom_call.1} parent=1 // pred_fallthru
      _
    %8697 = vsyncpa [#allocation6], 1
    %8698 = vsyncpa [#allocation9], 1
    %8699 = vsyncpa [#allocation12], 1
    %8700 = vsyncpa [#allocation15], 1
    %8701 = vsyncpa [#allocation18], 1
    %8702 = vsyncpa [#allocation21], 1
    %8703 = vsyncpa [#allocation24], 1
    %8704 = vsyncpa [#allocation27], 1
    %8705 = vsyncpa [#allocation30], 1
    %8706 = vsyncpa [#allocation7], 1

</llo_original>
